<compile_context>
chip_gen: v7x
topology: tpu7x:2x2x1
jax: 0.10.0
libtpu: 0.0.40
codegen_flags: <defaults>
</compile_context>

<pallas_src>
import jax
import jax.numpy as jnp
from jax.experimental import pallas as pl
from jax.experimental.pallas import tpu as pltpu


def _round_up(x, m):
    return ((x + m - 1) // m) * m


def _const_index_map(ndim):
    zeros = (0,) * ndim
    return lambda i: zeros


def _sigmoid_kernel(x):
    # stable logistic: exp on EUP + approximate reciprocal on EUP (VALU stays free)
    z = jnp.exp(-jnp.abs(x))
    r = pl.reciprocal(1.0 + z, approx=True)
    return jnp.where(x >= 0.0, r, z * r)


def _make_kernel(n_layers, d_out, d_hidden):
    has_hidden = n_layers > 1
    bf16 = jnp.bfloat16
    f32 = jnp.float32

    def kernel(*refs):
        it = iter(refs)
        small_ref = next(it)                       # (T, 16)  f32  [pts|nrm|vdir|0]
        feat_ref = next(it)                        # (T, F)   bf16
        w16_ref = next(it)                         # (16, 2H) bf16
        wfeat_ref = next(it)                       # (F, H)   bf16
        whb_ref = next(it) if has_hidden else None  # (L-1, H, H) bf16
        wob_ref = next(it)                         # (H, d_out) bf16
        wcb_ref = next(it)                         # (d_out, H) bf16
        wxh_ref = next(it)                         # (H, H)   bf16
        whv_ref = next(it) if has_hidden else None  # (L-1, H, H) bf16
        wov_ref = next(it)                         # (H, d_out+n_blend) bf16
        bhid_ref = next(it)                        # (2L, H)  f32
        bout_ref = next(it)                        # (1, 2*d_out+n_blend) f32
        out_ref = next(it)                         # (T, 2*d_out+n_blend)

        small = small_ref[...].astype(bf16)
        feat = feat_ref[...]
        b_hid = bhid_ref[...]
        b_out = bout_ref[...]

        # First layers of BOTH MLPs from the packed small input in a single dot.
        sc = jnp.dot(small, w16_ref[...], preferred_element_type=f32)   # (T, 2H)
        x0_small = sc[:, :d_hidden]
        v_small = sc[:, d_hidden:]

        # ---------------- base MLP ----------------
        x = x0_small + jnp.dot(feat, wfeat_ref[...], preferred_element_type=f32)
        x = jnp.maximum(x + b_hid[0:1, :], 0.0)
        for l in range(1, n_layers):
            x = jnp.dot(x.astype(bf16), whb_ref[l - 1],
                        preferred_element_type=f32) + b_hid[l:l + 1, :]
            x = jnp.maximum(x, 0.0)
        x_hidden = x
        cb_pre = jnp.dot(x.astype(bf16), wob_ref[...],
                         preferred_element_type=f32) + b_out[:, :d_out]
        color_base = _sigmoid_kernel(cb_pre)                              # (T, d_out)

        # ---------------- view / residual MLP ----------------
        y = (v_small
             + jnp.dot(color_base.astype(bf16), wcb_ref[...], preferred_element_type=f32)
             + jnp.dot(x_hidden.astype(bf16), wxh_ref[...], preferred_element_type=f32)
             + b_hid[n_layers:n_layers + 1, :])
        y = jnp.maximum(y, 0.0)
        for l in range(1, n_layers):
            y = jnp.dot(y.astype(bf16), whv_ref[l - 1],
                        preferred_element_type=f32) + b_hid[n_layers + l:n_layers + l + 1, :]
            y = jnp.maximum(y, 0.0)
        out2 = jnp.dot(y.astype(bf16), wov_ref[...],
                       preferred_element_type=f32) + b_out[:, d_out:]

        # sigmoid only on the first d_out lanes (color); blending lanes stay raw.
        col = jax.lax.broadcasted_iota(jnp.int32, out2.shape, 1)
        out2 = jnp.where(col < d_out, _sigmoid_kernel(out2), out2)

        out_ref[...] = jnp.concatenate([color_base, out2], axis=-1).astype(out_ref.dtype)

    return kernel


def residual_rendering_forward(points, normals, view_dirs, feature_vectors,
                               base_layers, view_layers, *,
                               d_out, n_blend, mode="idr",
                               tile_n=512, vmem_limit_bytes=None):
    """base_layers / view_layers: lists of (W[in,out], b[1,out]) effective
    (post-weight-norm) parameters in PyTorch layer order."""
    use_normals = (mode != "no_normal")
    n_layers = len(base_layers) - 1
    d_feature = feature_vectors.shape[-1]
    d_hidden = base_layers[0][0].shape[1]
    bf16 = jnp.bfloat16
    f32 = jnp.float32

    # ---- split / repack first-layer weights (done once, wrapper side) ----
    w0b, b0b = base_layers[0]
    if use_normals:
        wp = w0b[0:3]
        wn_eff = w0b[3:6] - w0b[6:9]          # fold the (-normals) block
        wf = w0b[9:]
    else:
        wp = w0b[0:3]
        wn_eff = jnp.zeros((3, d_hidden), f32)
        wf = w0b[3:]
    w0v, b0v = view_layers[0]
    wv = w0v[0:3]
    wc = w0v[3:3 + d_out]
    wh = w0v[3 + d_out:]

    # one (16, 2H) weight feeding BOTH first layers from the packed small input
    w16 = jnp.zeros((16, 2 * d_hidden), f32)
    w16 = w16.at[0:3, :d_hidden].set(wp.astype(f32))
    w16 = w16.at[3:6, :d_hidden].set(wn_eff.astype(f32))
    w16 = w16.at[6:9, d_hidden:].set(wv.astype(f32))

    w_out_base, b_out_base = base_layers[n_layers]
    w_out_view, b_out_view = view_layers[n_layers]

    flat_w = [w16.astype(bf16), wf.astype(bf16)]
    if n_layers > 1:
        whb = jnp.stack([base_layers[l][0] for l in range(1, n_layers)])
        flat_w.append(whb.astype(bf16))
    flat_w += [w_out_base.astype(bf16), wc.astype(bf16), wh.astype(bf16)]
    if n_layers > 1:
        whv = jnp.stack([view_layers[l][0] for l in range(1, n_layers)])
        flat_w.append(whv.astype(bf16))
    flat_w.append(w_out_view.astype(bf16))
    b_hid = jnp.concatenate(
        [b0b] + [base_layers[l][1] for l in range(1, n_layers)]
        + [b0v] + [view_layers[l][1] for l in range(1, n_layers)], axis=0).astype(f32)
    b_out = jnp.concatenate([b_out_base, b_out_view], axis=1).astype(f32)
    flat_w += [b_hid, b_out]

    # ---- pack the tiny per-point streams into one lane-packed (N,16) array ----
    n = points.shape[0]
    small = jnp.zeros((n, 16), f32)
    small = small.at[:, 0:3].set(points.astype(f32))
    if use_normals:
        small = small.at[:, 3:6].set(normals.astype(f32))
    small = small.at[:, 6:9].set(view_dirs.astype(f32))
    feat = feature_vectors.astype(bf16)

    # ---- tile / pad the point batch (tile is a multiple of 256 when possible) ----
    tile_n = int(min(tile_n, _round_up(max(n, 8), 256)))
    n_pad = _round_up(n, tile_n)
    if n_pad != n:
        small = jnp.pad(small, ((0, n_pad - n), (0, 0)))
        feat = jnp.pad(feat, ((0, n_pad - n), (0, 0)))

    in_specs = [
        pl.BlockSpec((tile_n, 16), lambda i: (i, 0)),
        pl.BlockSpec((tile_n, d_feature), lambda i: (i, 0)),
    ] + [pl.BlockSpec(w.shape, _const_index_map(w.ndim)) for w in flat_w]

    out_width = 2 * d_out + n_blend
    out_shape = jax.ShapeDtypeStruct((n_pad, out_width), f32)
    out_specs = pl.BlockSpec((tile_n, out_width), lambda i: (i, 0))

    cp_kwargs = dict(dimension_semantics=("parallel",))
    if vmem_limit_bytes is not None:
        cp_kwargs["vmem_limit_bytes"] = vmem_limit_bytes

    packed = pl.pallas_call(
        _make_kernel(n_layers, d_out, d_hidden),
        out_shape=out_shape,
        grid=(n_pad // tile_n,),
        in_specs=in_specs,
        out_specs=out_specs,
        compiler_params=pltpu.CompilerParams(**cp_kwargs),
    )(small, feat, *flat_w)

    color_base = packed[:n, :d_out]
    color = packed[:n, d_out:2 * d_out]
    if n_blend > 0:
        return color_base, color, packed[:n, 2 * d_out:]
    return color_base, color


# ----------------------------- helpers / reference -----------------------------

def weight_norm_linear(v, g, b):
    """Effective parameters of nn.utils.weight_norm(nn.Linear) (dim=0).
    v: (out, in), g: (out,), b: (out,). Returns (W[in, out], b[1, out])."""
    norm = jnp.sqrt(jnp.sum(v * v, axis=1, keepdims=True))
    w = v * (g[:, None] / norm)
    return w.T.astype(jnp.float32), b.reshape(1, -1).astype(jnp.float32)


def reference_forward(points, normals, view_dirs, feats,
                      base_layers, view_layers, d_out, mode):
    """Pure-JAX (f32) transcription of ResidualRenderingNetwork.forward."""
    if mode == "no_normal":
        x = jnp.concatenate([points, feats], axis=-1)
    else:
        x = jnp.concatenate([points, normals, -normals, feats], axis=-1)
    n_lin = len(base_layers)
    x_hidden = None
    for l, (w, b) in enumerate(base_layers):
        x = x @ w + b
        if l < n_lin - 1:
            x = jnp.maximum(x, 0.0)
        if l == n_lin - 2:
            x_hidden = x
    color_base = jax.nn.sigmoid(x[:, :d_out])
    y = jnp.concatenate([view_dirs, color_base, x_hidden], axis=-1)
    for l, (w, b) in enumerate(view_layers):
        y = y @ w + b
        if l < n_lin - 1:
            y = jnp.maximum(y, 0.0)
    color = jax.nn.sigmoid(y[:, :d_out])
    blending = y[:, d_out:]
    return color_base, color, blending


if __name__ == "__main__":
    key = jax.random.PRNGKey(0)

    # Small-but-representative module configuration.
    d_feature = 256
    d_in = 12                 # -> dims_base[0] = d_in - 3 + d_feature = 9 + d_feature
    d_out = 3
    d_hidden = 256
    n_layers = 2
    n_blend = 10              # blending_cand_views
    mode = "idr"              # any mode other than 'no_normal'
    # TODO(synk): multires_view > 0 (positional view-dir embedding via get_embedder)
    # is not implemented; this uses multires_view=0 (embedview_fn=None path).

    n_points = 1024           # 2 grid steps at tile_n=512

    dims_base = [d_in - 3 + d_feature] + [d_hidden] * n_layers + [d_out]
    dims_view = [d_hidden + d_out + 3] + [d_hidden] * n_layers + [d_out + n_blend]

    def init_mlp(key, dims):
        layers = []
        for l in range(len(dims) - 1):
            key, kv, kg, kb = jax.random.split(key, 4)
            v = 0.1 * jax.random.normal(kv, (dims[l + 1], dims[l]), jnp.float32)
            g = 1.0 + 0.1 * jax.random.normal(kg, (dims[l + 1],), jnp.float32)
            b = 0.01 * jax.random.normal(kb, (dims[l + 1],), jnp.float32)
            layers.append(weight_norm_linear(v, g, b))
        return key, layers

    key, base_layers = init_mlp(key, dims_base)
    key, view_layers = init_mlp(key, dims_view)

    key, kp, kn, kd, kf = jax.random.split(key, 5)
    points = jax.random.normal(kp, (n_points, 3), jnp.float32)
    normals = jax.random.normal(kn, (n_points, 3), jnp.float32)
    normals = normals / jnp.linalg.norm(normals, axis=-1, keepdims=True)
    view_dirs = jax.random.normal(kd, (n_points, 3), jnp.float32)
    view_dirs = view_dirs / jnp.linalg.norm(view_dirs, axis=-1, keepdims=True)
    feats = jax.random.normal(kf, (n_points, d_feature), jnp.float32)

    color_base, color, blending = residual_rendering_forward(
        points, normals, view_dirs, feats, base_layers, view_layers,
        d_out=d_out, n_blend=n_blend, mode=mode, tile_n=512)
    jax.block_until_ready((color_base, color, blending))

    ref_cb, ref_c, ref_bw = reference_forward(
        points, normals, view_dirs, feats, base_layers, view_layers, d_out, mode)

    assert color_base.shape == (n_points, d_out)
    assert color.shape == (n_points, d_out)
    assert blending.shape == (n_points, n_blend)
    # bf16 MXU operands with f32 accumulation -> loosened tolerances
    assert jnp.allclose(color_base, ref_cb, rtol=5e-2, atol=5e-2)
    assert jnp.allclose(color, ref_c, rtol=5e-2, atol=5e-2)
    assert jnp.allclose(blending, ref_bw, rtol=5e-2, atol=5e-2)

    print("KERNEL_OK")
</pallas_src>

<mosaic_0001>
module attributes {stable_mosaic.version = 11 : i64} {
  func.func @kernel(%arg0: i32, %arg1: memref<512x16xf32, #tpu.memory_space<vmem>>, %arg2: memref<512x256xbf16, #tpu.memory_space<vmem>>, %arg3: memref<16x512xbf16, #tpu.memory_space<vmem>>, %arg4: memref<256x256xbf16, #tpu.memory_space<vmem>>, %arg5: memref<1x256x256xbf16, #tpu.memory_space<vmem>>, %arg6: memref<256x3xbf16, #tpu.memory_space<vmem>>, %arg7: memref<3x256xbf16, #tpu.memory_space<vmem>>, %arg8: memref<256x256xbf16, #tpu.memory_space<vmem>>, %arg9: memref<1x256x256xbf16, #tpu.memory_space<vmem>>, %arg10: memref<256x13xbf16, #tpu.memory_space<vmem>>, %arg11: memref<4x256xf32, #tpu.memory_space<vmem>>, %arg12: memref<1x16xf32, #tpu.memory_space<vmem>>, %arg13: memref<512x16xf32, #tpu.memory_space<vmem>>) attributes {dimension_semantics = [#tpu.dimension_semantics<parallel>], iteration_bounds = array<i64: 2>, scalar_prefetch = 0 : i64, scratch_operands = 0 : i64, tpu.core_type = #tpu.core_type<tc>, window_params = [{transform_indices = @transform_0, window_bounds = array<i64: 512, 16>}, {transform_indices = @transform_1, window_bounds = array<i64: 512, 256>}, {pipeline_mode = #tpu.pipeline_mode<synchronous>, transform_indices = @transform_2, window_bounds = array<i64: 16, 512>}, {pipeline_mode = #tpu.pipeline_mode<synchronous>, transform_indices = @transform_3, window_bounds = array<i64: 256, 256>}, {pipeline_mode = #tpu.pipeline_mode<synchronous>, transform_indices = @transform_4, window_bounds = array<i64: 1, 256, 256>}, {pipeline_mode = #tpu.pipeline_mode<synchronous>, transform_indices = @transform_5, window_bounds = array<i64: 256, 3>}, {pipeline_mode = #tpu.pipeline_mode<synchronous>, transform_indices = @transform_6, window_bounds = array<i64: 3, 256>}, {pipeline_mode = #tpu.pipeline_mode<synchronous>, transform_indices = @transform_7, window_bounds = array<i64: 256, 256>}, {pipeline_mode = #tpu.pipeline_mode<synchronous>, transform_indices = @transform_8, window_bounds = array<i64: 1, 256, 256>}, {pipeline_mode = #tpu.pipeline_mode<synchronous>, transform_indices = @transform_9, window_bounds = array<i64: 256, 13>}, {pipeline_mode = #tpu.pipeline_mode<synchronous>, transform_indices = @transform_10, window_bounds = array<i64: 4, 256>}, {pipeline_mode = #tpu.pipeline_mode<synchronous>, transform_indices = @transform_11, window_bounds = array<i64: 1, 16>}, {transform_indices = @transform_12, window_bounds = array<i64: 512, 16>}]} {
    %c0 = arith.constant 0 : index
    %c0_0 = arith.constant 0 : index
    %0 = vector.load %arg1[%c0, %c0_0] : memref<512x16xf32, #tpu.memory_space<vmem>>, vector<512x16xf32>
    %1 = arith.truncf %0 : vector<512x16xf32> to vector<512x16xbf16>
    %c0_1 = arith.constant 0 : index
    %c0_2 = arith.constant 0 : index
    %2 = vector.load %arg2[%c0_1, %c0_2] : memref<512x256xbf16, #tpu.memory_space<vmem>>, vector<512x256xbf16>
    %c0_3 = arith.constant 0 : index
    %c0_4 = arith.constant 0 : index
    %3 = vector.load %arg11[%c0_3, %c0_4] : memref<4x256xf32, #tpu.memory_space<vmem>>, vector<4x256xf32>
    %c0_5 = arith.constant 0 : index
    %c0_6 = arith.constant 0 : index
    %4 = vector.load %arg12[%c0_5, %c0_6] : memref<1x16xf32, #tpu.memory_space<vmem>>, vector<1x16xf32>
    %c0_7 = arith.constant 0 : index
    %c0_8 = arith.constant 0 : index
    %5 = vector.load %arg3[%c0_7, %c0_8] : memref<16x512xbf16, #tpu.memory_space<vmem>>, vector<16x512xbf16>
    %cst = arith.constant dense<0.000000e+00> : vector<512x512xf32>
    %6 = tpu.matmul %1, %5, %cst {dimension_numbers = #tpu.dot_dimension_numbers<[1], [0], [0], [1], [0, 0, 1, 1], [], []>} : vector<512x16xbf16>, vector<16x512xbf16>, vector<512x512xf32> -> vector<512x512xf32>
    %7 = vector.extract_strided_slice %6 {offsets = [0, 0], sizes = [512, 256], strides = [1, 1]} : vector<512x512xf32> to vector<512x256xf32>
    %8 = vector.extract_strided_slice %6 {offsets = [0, 256], sizes = [512, 256], strides = [1, 1]} : vector<512x512xf32> to vector<512x256xf32>
    %c0_9 = arith.constant 0 : index
    %c0_10 = arith.constant 0 : index
    %9 = vector.load %arg4[%c0_9, %c0_10] : memref<256x256xbf16, #tpu.memory_space<vmem>>, vector<256x256xbf16>
    %cst_11 = arith.constant dense<0.000000e+00> : vector<512x256xf32>
    %10 = tpu.matmul %2, %9, %cst_11 {dimension_numbers = #tpu.dot_dimension_numbers<[1], [0], [0], [1], [0, 0, 1, 1], [], []>} : vector<512x256xbf16>, vector<256x256xbf16>, vector<512x256xf32> -> vector<512x256xf32>
    %11 = arith.addf %7, %10 : vector<512x256xf32>
    %12 = vector.extract_strided_slice %3 {offsets = [0, 0], sizes = [1, 256], strides = [1, 1]} : vector<4x256xf32> to vector<1x256xf32>
    %13 = vector.broadcast %12 : vector<1x256xf32> to vector<512x256xf32>
    %14 = arith.addf %11, %13 : vector<512x256xf32>
    %cst_12 = arith.constant 0.000000e+00 : f32
    %15 = vector.broadcast %cst_12 : f32 to vector<512x256xf32>
    %16 = arith.maximumf %14, %15 : vector<512x256xf32>
    %17 = arith.truncf %16 : vector<512x256xf32> to vector<512x256xbf16>
    %c0_13 = arith.constant 0 : index
    %c0_14 = arith.constant 0 : index
    %c0_15 = arith.constant 0 : index
    %18 = vector.load %arg5[%c0_13, %c0_14, %c0_15] : memref<1x256x256xbf16, #tpu.memory_space<vmem>>, vector<1x256x256xbf16>
    %19 = vector.shape_cast %18 : vector<1x256x256xbf16> to vector<256x256xbf16>
    %cst_16 = arith.constant dense<0.000000e+00> : vector<512x256xf32>
    %20 = tpu.matmul %17, %19, %cst_16 {dimension_numbers = #tpu.dot_dimension_numbers<[1], [0], [0], [1], [0, 0, 1, 1], [], []>} : vector<512x256xbf16>, vector<256x256xbf16>, vector<512x256xf32> -> vector<512x256xf32>
    %21 = vector.extract_strided_slice %3 {offsets = [1, 0], sizes = [1, 256], strides = [1, 1]} : vector<4x256xf32> to vector<1x256xf32>
    %22 = vector.broadcast %21 : vector<1x256xf32> to vector<512x256xf32>
    %23 = arith.addf %20, %22 : vector<512x256xf32>
    %cst_17 = arith.constant 0.000000e+00 : f32
    %24 = vector.broadcast %cst_17 : f32 to vector<512x256xf32>
    %25 = arith.maximumf %23, %24 : vector<512x256xf32>
    %26 = arith.truncf %25 : vector<512x256xf32> to vector<512x256xbf16>
    %c0_18 = arith.constant 0 : index
    %c0_19 = arith.constant 0 : index
    %27 = vector.load %arg6[%c0_18, %c0_19] : memref<256x3xbf16, #tpu.memory_space<vmem>>, vector<256x3xbf16>
    %cst_20 = arith.constant dense<0.000000e+00> : vector<512x3xf32>
    %28 = tpu.matmul %26, %27, %cst_20 {dimension_numbers = #tpu.dot_dimension_numbers<[1], [0], [0], [1], [0, 0, 1, 1], [], []>} : vector<512x256xbf16>, vector<256x3xbf16>, vector<512x3xf32> -> vector<512x3xf32>
    %29 = vector.extract_strided_slice %4 {offsets = [0, 0], sizes = [1, 3], strides = [1, 1]} : vector<1x16xf32> to vector<1x3xf32>
    %30 = vector.broadcast %29 : vector<1x3xf32> to vector<512x3xf32>
    %31 = arith.addf %28, %30 : vector<512x3xf32>
    %32 = math.absf %31 : vector<512x3xf32>
    %cst_21 = arith.constant 0.000000e+00 : f32
    %33 = vector.broadcast %cst_21 : f32 to vector<512x3xf32>
    %34 = arith.subf %33, %32 : vector<512x3xf32>
    %35 = math.exp %34 : vector<512x3xf32>
    %cst_22 = arith.constant 1.000000e+00 : f32
    %36 = vector.broadcast %cst_22 : f32 to vector<512x3xf32>
    %37 = arith.addf %36, %35 : vector<512x3xf32>
    %38 = tpu.reciprocal %37 {approx = true} : vector<512x3xf32> -> vector<512x3xf32>
    %cst_23 = arith.constant 0.000000e+00 : f32
    %39 = vector.broadcast %cst_23 : f32 to vector<512x3xf32>
    %40 = arith.cmpf oge, %31, %39 : vector<512x3xf32>
    %41 = arith.mulf %35, %38 : vector<512x3xf32>
    %42 = arith.select %40, %38, %41 : vector<512x3xi1>, vector<512x3xf32>
    %43 = arith.truncf %42 : vector<512x3xf32> to vector<512x3xbf16>
    %c0_24 = arith.constant 0 : index
    %c0_25 = arith.constant 0 : index
    %44 = vector.load %arg7[%c0_24, %c0_25] : memref<3x256xbf16, #tpu.memory_space<vmem>>, vector<3x256xbf16>
    %cst_26 = arith.constant dense<0.000000e+00> : vector<512x256xf32>
    %45 = tpu.matmul %43, %44, %cst_26 {dimension_numbers = #tpu.dot_dimension_numbers<[1], [0], [0], [1], [0, 0, 1, 1], [], []>} : vector<512x3xbf16>, vector<3x256xbf16>, vector<512x256xf32> -> vector<512x256xf32>
    %46 = arith.addf %8, %45 : vector<512x256xf32>
    %47 = arith.truncf %25 : vector<512x256xf32> to vector<512x256xbf16>
    %c0_27 = arith.constant 0 : index
    %c0_28 = arith.constant 0 : index
    %48 = vector.load %arg8[%c0_27, %c0_28] : memref<256x256xbf16, #tpu.memory_space<vmem>>, vector<256x256xbf16>
    %cst_29 = arith.constant dense<0.000000e+00> : vector<512x256xf32>
    %49 = tpu.matmul %47, %48, %cst_29 {dimension_numbers = #tpu.dot_dimension_numbers<[1], [0], [0], [1], [0, 0, 1, 1], [], []>} : vector<512x256xbf16>, vector<256x256xbf16>, vector<512x256xf32> -> vector<512x256xf32>
    %50 = arith.addf %46, %49 : vector<512x256xf32>
    %51 = vector.extract_strided_slice %3 {offsets = [2, 0], sizes = [1, 256], strides = [1, 1]} : vector<4x256xf32> to vector<1x256xf32>
    %52 = vector.broadcast %51 : vector<1x256xf32> to vector<512x256xf32>
    %53 = arith.addf %50, %52 : vector<512x256xf32>
    %cst_30 = arith.constant 0.000000e+00 : f32
    %54 = vector.broadcast %cst_30 : f32 to vector<512x256xf32>
    %55 = arith.maximumf %53, %54 : vector<512x256xf32>
    %56 = arith.truncf %55 : vector<512x256xf32> to vector<512x256xbf16>
    %c0_31 = arith.constant 0 : index
    %c0_32 = arith.constant 0 : index
    %c0_33 = arith.constant 0 : index
    %57 = vector.load %arg9[%c0_31, %c0_32, %c0_33] : memref<1x256x256xbf16, #tpu.memory_space<vmem>>, vector<1x256x256xbf16>
    %58 = vector.shape_cast %57 : vector<1x256x256xbf16> to vector<256x256xbf16>
    %cst_34 = arith.constant dense<0.000000e+00> : vector<512x256xf32>
    %59 = tpu.matmul %56, %58, %cst_34 {dimension_numbers = #tpu.dot_dimension_numbers<[1], [0], [0], [1], [0, 0, 1, 1], [], []>} : vector<512x256xbf16>, vector<256x256xbf16>, vector<512x256xf32> -> vector<512x256xf32>
    %60 = vector.extract_strided_slice %3 {offsets = [3, 0], sizes = [1, 256], strides = [1, 1]} : vector<4x256xf32> to vector<1x256xf32>
    %61 = vector.broadcast %60 : vector<1x256xf32> to vector<512x256xf32>
    %62 = arith.addf %59, %61 : vector<512x256xf32>
    %cst_35 = arith.constant 0.000000e+00 : f32
    %63 = vector.broadcast %cst_35 : f32 to vector<512x256xf32>
    %64 = arith.maximumf %62, %63 : vector<512x256xf32>
    %65 = arith.truncf %64 : vector<512x256xf32> to vector<512x256xbf16>
    %c0_36 = arith.constant 0 : index
    %c0_37 = arith.constant 0 : index
    %66 = vector.load %arg10[%c0_36, %c0_37] : memref<256x13xbf16, #tpu.memory_space<vmem>>, vector<256x13xbf16>
    %cst_38 = arith.constant dense<0.000000e+00> : vector<512x13xf32>
    %67 = tpu.matmul %65, %66, %cst_38 {dimension_numbers = #tpu.dot_dimension_numbers<[1], [0], [0], [1], [0, 0, 1, 1], [], []>} : vector<512x256xbf16>, vector<256x13xbf16>, vector<512x13xf32> -> vector<512x13xf32>
    %68 = vector.extract_strided_slice %4 {offsets = [0, 3], sizes = [1, 13], strides = [1, 1]} : vector<1x16xf32> to vector<1x13xf32>
    %69 = vector.broadcast %68 : vector<1x13xf32> to vector<512x13xf32>
    %70 = arith.addf %67, %69 : vector<512x13xf32>
    %71 = tpu.iota {dimensions = array<i32: 1>} : vector<512x13xi32>
    %c3_i32 = arith.constant 3 : i32
    %72 = vector.broadcast %c3_i32 : i32 to vector<512x13xi32>
    %73 = arith.cmpi slt, %71, %72 : vector<512x13xi32>
    %74 = math.absf %70 : vector<512x13xf32>
    %cst_39 = arith.constant 0.000000e+00 : f32
    %75 = vector.broadcast %cst_39 : f32 to vector<512x13xf32>
    %76 = arith.subf %75, %74 : vector<512x13xf32>
    %77 = math.exp %76 : vector<512x13xf32>
    %cst_40 = arith.constant 1.000000e+00 : f32
    %78 = vector.broadcast %cst_40 : f32 to vector<512x13xf32>
    %79 = arith.addf %78, %77 : vector<512x13xf32>
    %80 = tpu.reciprocal %79 {approx = true} : vector<512x13xf32> -> vector<512x13xf32>
    %cst_41 = arith.constant 0.000000e+00 : f32
    %81 = vector.broadcast %cst_41 : f32 to vector<512x13xf32>
    %82 = arith.cmpf oge, %70, %81 : vector<512x13xf32>
    %83 = arith.mulf %77, %80 : vector<512x13xf32>
    %84 = arith.select %82, %80, %83 : vector<512x13xi1>, vector<512x13xf32>
    %85 = arith.select %73, %84, %70 : vector<512x13xi1>, vector<512x13xf32>
    %86 = tpu.concatenate %42, %85 in 1 : vector<512x3xf32>, vector<512x13xf32> -> vector<512x16xf32>
    %c0_42 = arith.constant 0 : index
    %c0_43 = arith.constant 0 : index
    %87 = vector.load %arg13[%c0_42, %c0_43] : memref<512x16xf32, #tpu.memory_space<vmem>>, vector<512x16xf32>
    tpu.vector_store %arg13[%c0_42, %c0_43], %86 {strides = array<i32>} : memref<512x16xf32, #tpu.memory_space<vmem>>, vector<512x16xf32>,
    return
  }
  func.func @transform_0(%arg0: i32) -> (i32, i32) {
    %c0_i32 = arith.constant 0 : i32
    %c0_i32_0 = arith.constant 0 : i32
    return %arg0, %c0_i32 : i32, i32
  }
  func.func @transform_1(%arg0: i32) -> (i32, i32) {
    %c0_i32 = arith.constant 0 : i32
    %c0_i32_0 = arith.constant 0 : i32
    return %arg0, %c0_i32 : i32, i32
  }
  func.func @transform_2(%arg0: i32) -> (i32, i32) {
    %c0_i32 = arith.constant 0 : i32
    %c0_i32_0 = arith.constant 0 : i32
    %c0_i32_1 = arith.constant 0 : i32
    return %c0_i32, %c0_i32_0 : i32, i32
  }
  func.func @transform_3(%arg0: i32) -> (i32, i32) {
    %c0_i32 = arith.constant 0 : i32
    %c0_i32_0 = arith.constant 0 : i32
    %c0_i32_1 = arith.constant 0 : i32
    return %c0_i32, %c0_i32_0 : i32, i32
  }
  func.func @transform_4(%arg0: i32) -> (i32, i32, i32) {
    %c0_i32 = arith.constant 0 : i32
    %c0_i32_0 = arith.constant 0 : i32
    %c0_i32_1 = arith.constant 0 : i32
    %c0_i32_2 = arith.constant 0 : i32
    return %c0_i32, %c0_i32_0, %c0_i32_1 : i32, i32, i32
  }
  func.func @transform_5(%arg0: i32) -> (i32, i32) {
    %c0_i32 = arith.constant 0 : i32
    %c0_i32_0 = arith.constant 0 : i32
    %c0_i32_1 = arith.constant 0 : i32
    return %c0_i32, %c0_i32_0 : i32, i32
  }
  func.func @transform_6(%arg0: i32) -> (i32, i32) {
    %c0_i32 = arith.constant 0 : i32
    %c0_i32_0 = arith.constant 0 : i32
    %c0_i32_1 = arith.constant 0 : i32
    return %c0_i32, %c0_i32_0 : i32, i32
  }
  func.func @transform_7(%arg0: i32) -> (i32, i32) {
    %c0_i32 = arith.constant 0 : i32
    %c0_i32_0 = arith.constant 0 : i32
    %c0_i32_1 = arith.constant 0 : i32
    return %c0_i32, %c0_i32_0 : i32, i32
  }
  func.func @transform_8(%arg0: i32) -> (i32, i32, i32) {
    %c0_i32 = arith.constant 0 : i32
    %c0_i32_0 = arith.constant 0 : i32
    %c0_i32_1 = arith.constant 0 : i32
    %c0_i32_2 = arith.constant 0 : i32
    return %c0_i32, %c0_i32_0, %c0_i32_1 : i32, i32, i32
  }
  func.func @transform_9(%arg0: i32) -> (i32, i32) {
    %c0_i32 = arith.constant 0 : i32
    %c0_i32_0 = arith.constant 0 : i32
    %c0_i32_1 = arith.constant 0 : i32
    return %c0_i32, %c0_i32_0 : i32, i32
  }
  func.func @transform_10(%arg0: i32) -> (i32, i32) {
    %c0_i32 = arith.constant 0 : i32
    %c0_i32_0 = arith.constant 0 : i32
    %c0_i32_1 = arith.constant 0 : i32
    return %c0_i32, %c0_i32_0 : i32, i32
  }
  func.func @transform_11(%arg0: i32) -> (i32, i32) {
    %c0_i32 = arith.constant 0 : i32
    %c0_i32_0 = arith.constant 0 : i32
    %c0_i32_1 = arith.constant 0 : i32
    return %c0_i32, %c0_i32_0 : i32, i32
  }
  func.func @transform_12(%arg0: i32) -> (i32, i32) {
    %c0_i32 = arith.constant 0 : i32
    %c0_i32_0 = arith.constant 0 : i32
    return %arg0, %c0_i32 : i32, i32
  }
}

</mosaic_0001>

<llo_original>
// kernel: tpu_custom_call.1
$region0: #{tpu_custom_call.1}
  #allocation0 [shape = 'u32[]', space=smem, size = 0x4, offset = 0x4, fixed_abs, tag = 'smem constant byte address 0x4 - core index']
  #allocation1 [shape = 'u32[144,128]{1,0:T(1,128)}', space=vmem, size = 0x12000, scoped, tag = 'internal scratch']
  %s0 = inlined_call_operand.vmem [shape: f32[1024,16], index: 0, kind: input, shape index: {}]
  %s1 = inlined_call_operand.vmem [shape: bf16[1024,256], index: 1, kind: input, shape index: {}]
  %s2 = inlined_call_operand.vmem [shape: bf16[16,512], index: 2, kind: input, shape index: {}]
  %s3 = inlined_call_operand.vmem [shape: bf16[256,256], index: 3, kind: input, shape index: {}]
  %s4 = inlined_call_operand.hbm [shape: bf16[1,256,256], index: 4, kind: input, shape index: {}]
  %s5 = inlined_call_operand.vmem [shape: bf16[256,3], index: 5, kind: input, shape index: {}]
  %s6 = inlined_call_operand.vmem [shape: bf16[3,256], index: 6, kind: input, shape index: {}]
  %s7 = inlined_call_operand.hbm [shape: bf16[256,256], index: 7, kind: input, shape index: {}]
  %s8 = inlined_call_operand.hbm [shape: bf16[1,256,256], index: 8, kind: input, shape index: {}]
  %s9 = inlined_call_operand.vmem [shape: bf16[256,13], index: 9, kind: input, shape index: {}]
  %s10 = inlined_call_operand.vmem [shape: f32[4,256], index: 10, kind: input, shape index: {}]
  %s11 = inlined_call_operand.vmem [shape: f32[1,16], index: 11, kind: input, shape index: {}]
  %s12 = inlined_call_operand.vmem [shape: f32[1024,16], index: 12, kind: output, shape index: {}]
  %s13 = sld [smem:[#allocation0]]
  $region93: #{tpu_custom_call.1} parent=0
    _
  %s15 = ssub.s32 1, %s13
  %s16 = scalar_select 0, %s15, %s13
  $region1: #{tpu_custom_call.1} parent=0
    #allocation2 [shape = 'u8[131072]{0}', space=vmem, size = 0x20000, scoped, tag = 'input window, operand 4, single buffered']
    #allocation3 [shape = 's32[2]{0}', space=sflag, size = 0x8, scoped, tag = 'scoped memory for tpu_custom_call.1']
    #allocation4 [shape = 'u8[131072]{0}', space=vmem, size = 0x20000, scoped, tag = 'input window, operand 7, single buffered']
    #allocation5 [shape = 's32[1]{0}', space=sflag, size = 0x4, scoped, tag = 'scoped memory for tpu_custom_call.1']
    #allocation6 [shape = 'u8[131072]{0}', space=vmem, size = 0x20000, scoped, tag = 'input window, operand 8, single buffered']
    %17 = vsyncpa [#allocation3], 0
    %18 = vsyncpa [#allocation5], 0
    loop: start=0, step=1, limit=4
    $region2: #{tpu_custom_call.1} parent=1 // loop_pre_header
      _
    $region3: #{tpu_custom_call.1} parent=1 // loop_header
      %s20 = sphi 0, %s24
      %p21 = scmp.ge.s32.totalorder %s20, 4
      %s30 = sphi 0, %s32
      %s33 = sphi 0, %s30
      %s34 = sphi 0, %s33
      %s50 = sphi 0, %s34
      %s56 = sphi 0, %s58
      %s59 = sphi 0, %s56
      %s60 = sphi 0, %s59
      %s76 = sphi 0, %s60
      %s80 = sphi 0, %s80
      %s82 = sphi 0, %s80
      %s83 = sphi 0, %s82
      %s97 = sphi 0, %s83
      %s101 = sphi 0, %s101
      %s103 = sphi 0, %s101
      %s104 = sphi 0, %s103
      %s118 = sphi 0, %s104
      %s122 = sphi 0, %s122
      %s124 = sphi 0, %s122
      %s125 = sphi 0, %s124
      %s139 = sphi 0, %s125
      %s143 = sphi 0, %s143
      %s145 = sphi 0, %s143
      %s146 = sphi 0, %s145
      %s160 = sphi 0, %s146
      %s164 = sphi 0, %s164
      %s166 = sphi 0, %s164
      %s167 = sphi 0, %s166
      %s181 = sphi 0, %s167
      %s185 = sphi 0, %s185
      %s187 = sphi 0, %s185
      %s188 = sphi 0, %s187
      %s202 = sphi 0, %s188
      %s206 = sphi 0, %s206
      %s208 = sphi 0, %s206
      %s209 = sphi 0, %s208
      %s223 = sphi 0, %s209
      %s227 = sphi 0, %s227
      %s229 = sphi 0, %s227
      %s230 = sphi 0, %s229
      %s244 = sphi 0, %s230
      %s248 = sphi 0, %s248
      %s250 = sphi 0, %s248
      %s251 = sphi 0, %s250
      %s265 = sphi 0, %s251
      %s269 = sphi 0, %s269
      %s271 = sphi 0, %s269
      %s272 = sphi 0, %s271
      %s286 = sphi 0, %s272
      %s292 = sphi 0, %s294
      %s295 = sphi 0, %s292
      %s296 = sphi 0, %s295
      %s312 = sphi 0, %s296
    $region4: #{tpu_custom_call.1} parent=1 // loop_header_branch
      %23 = sbr.rel (%p21) target = $region8
    $region5: #{tpu_custom_call.1} parent=1 // loop_body
      %s25 = ssub.s32 %s20, 1
      %s26 = ssub.s32 %s20, 2
      %s27 = sadd.s32 %s20, 1
      %s28 = ssub.s32 %s20, %s27
      %p29 = scmp.eq.s32.totalorder %s28, 0
      %s31 = sadd.s32 %s30, 1
      %s32 = scalar_select %p29, %s30, %s31
      %p35 = pneg %p29
      %p36 = scmp.eq.s32.totalorder %s20, 1
      %p37 = por %p35, %p36
      %p38 = scmp.ne.s32.totalorder %s30, %s33
      %p39 = scmp.eq.s32.totalorder %s20, 0
      %p40 = por %p38, %p39
      %p41 = scmp.ne.s32.totalorder %s30, %s33
      %p42 = scmp.eq.s32.totalorder %s25, 1
      %p43 = por %p41, %p42
      %p44 = scmp.ne.s32.totalorder %s33, %s34
      %p45 = scmp.eq.s32.totalorder %s25, 0
      %p46 = por %p44, %p45
      %p47 = scmp.ne.s32.totalorder %s33, %s34
      %p48 = scmp.eq.s32.totalorder %s26, 1
      %p49 = por %p47, %p48
      %p51 = scmp.ne.s32.totalorder %s34, %s50
      %p52 = scmp.eq.s32.totalorder %s26, 0
      %p53 = por %p51, %p52
      %s54 = ssub.s32 %s20, %s27
      %p55 = scmp.eq.s32.totalorder %s54, 0
      %s57 = sadd.s32 %s56, 1
      %s58 = scalar_select %p55, %s56, %s57
      %p61 = pneg %p55
      %p62 = scmp.eq.s32.totalorder %s20, 1
      %p63 = por %p61, %p62
      %p64 = scmp.ne.s32.totalorder %s56, %s59
      %p65 = scmp.eq.s32.totalorder %s20, 0
      %p66 = por %p64, %p65
      %p67 = scmp.ne.s32.totalorder %s56, %s59
      %p68 = scmp.eq.s32.totalorder %s25, 1
      %p69 = por %p67, %p68
      %p70 = scmp.ne.s32.totalorder %s59, %s60
      %p71 = scmp.eq.s32.totalorder %s25, 0
      %p72 = por %p70, %p71
      %p73 = scmp.ne.s32.totalorder %s59, %s60
      %p74 = scmp.eq.s32.totalorder %s26, 1
      %p75 = por %p73, %p74
      %p77 = scmp.ne.s32.totalorder %s60, %s76
      %p78 = scmp.eq.s32.totalorder %s26, 0
      %p79 = por %p77, %p78
      %s81 = sadd.s32 %s80, 1
      %p84 = scmp.eq.s32.totalorder %s20, 1
      %p85 = scmp.ne.s32.totalorder %s80, %s82
      %p86 = scmp.eq.s32.totalorder %s20, 0
      %p87 = por %p85, %p86
      %p88 = scmp.ne.s32.totalorder %s80, %s82
      %p89 = scmp.eq.s32.totalorder %s25, 1
      %p90 = por %p88, %p89
      %p91 = scmp.ne.s32.totalorder %s82, %s83
      %p92 = scmp.eq.s32.totalorder %s25, 0
      %p93 = por %p91, %p92
      %p94 = scmp.ne.s32.totalorder %s82, %s83
      %p95 = scmp.eq.s32.totalorder %s26, 1
      %p96 = por %p94, %p95
      %p98 = scmp.ne.s32.totalorder %s83, %s97
      %p99 = scmp.eq.s32.totalorder %s26, 0
      %p100 = por %p98, %p99
      %s102 = sadd.s32 %s101, 1
      %p105 = scmp.eq.s32.totalorder %s20, 1
      %p106 = scmp.ne.s32.totalorder %s101, %s103
      %p107 = scmp.eq.s32.totalorder %s20, 0
      %p108 = por %p106, %p107
      %p109 = scmp.ne.s32.totalorder %s101, %s103
      %p110 = scmp.eq.s32.totalorder %s25, 1
      %p111 = por %p109, %p110
      %p112 = scmp.ne.s32.totalorder %s103, %s104
      %p113 = scmp.eq.s32.totalorder %s25, 0
      %p114 = por %p112, %p113
      %p115 = scmp.ne.s32.totalorder %s103, %s104
      %p116 = scmp.eq.s32.totalorder %s26, 1
      %p117 = por %p115, %p116
      %p119 = scmp.ne.s32.totalorder %s104, %s118
      %p120 = scmp.eq.s32.totalorder %s26, 0
      %p121 = por %p119, %p120
      %s123 = sadd.s32 %s122, 1
      %p126 = scmp.eq.s32.totalorder %s20, 1
      %p127 = scmp.ne.s32.totalorder %s122, %s124
      %p128 = scmp.eq.s32.totalorder %s20, 0
      %p129 = por %p127, %p128
      %p130 = scmp.ne.s32.totalorder %s122, %s124
      %p131 = scmp.eq.s32.totalorder %s25, 1
      %p132 = por %p130, %p131
      %p133 = scmp.ne.s32.totalorder %s124, %s125
      %p134 = scmp.eq.s32.totalorder %s25, 0
      %p135 = por %p133, %p134
      %p136 = scmp.ne.s32.totalorder %s124, %s125
      %p137 = scmp.eq.s32.totalorder %s26, 1
      %p138 = por %p136, %p137
      %p140 = scmp.ne.s32.totalorder %s125, %s139
      %p141 = scmp.eq.s32.totalorder %s26, 0
      %p142 = por %p140, %p141
      %s144 = sadd.s32 %s143, 1
      %p147 = scmp.eq.s32.totalorder %s20, 1
      %p148 = scmp.ne.s32.totalorder %s143, %s145
      %p149 = scmp.eq.s32.totalorder %s20, 0
      %p150 = por %p148, %p149
      %p151 = scmp.ne.s32.totalorder %s143, %s145
      %p152 = scmp.eq.s32.totalorder %s25, 1
      %p153 = por %p151, %p152
      %p154 = scmp.ne.s32.totalorder %s145, %s146
      %p155 = scmp.eq.s32.totalorder %s25, 0
      %p156 = por %p154, %p155
      %p157 = scmp.ne.s32.totalorder %s145, %s146
      %p158 = scmp.eq.s32.totalorder %s26, 1
      %p159 = por %p157, %p158
      %p161 = scmp.ne.s32.totalorder %s146, %s160
      %p162 = scmp.eq.s32.totalorder %s26, 0
      %p163 = por %p161, %p162
      %s165 = sadd.s32 %s164, 1
      %p168 = scmp.eq.s32.totalorder %s20, 1
      %p169 = scmp.ne.s32.totalorder %s164, %s166
      %p170 = scmp.eq.s32.totalorder %s20, 0
      %p171 = por %p169, %p170
      %p172 = scmp.ne.s32.totalorder %s164, %s166
      %p173 = scmp.eq.s32.totalorder %s25, 1
      %p174 = por %p172, %p173
      %p175 = scmp.ne.s32.totalorder %s166, %s167
      %p176 = scmp.eq.s32.totalorder %s25, 0
      %p177 = por %p175, %p176
      %p178 = scmp.ne.s32.totalorder %s166, %s167
      %p179 = scmp.eq.s32.totalorder %s26, 1
      %p180 = por %p178, %p179
      %p182 = scmp.ne.s32.totalorder %s167, %s181
      %p183 = scmp.eq.s32.totalorder %s26, 0
      %p184 = por %p182, %p183
      %s186 = sadd.s32 %s185, 1
      %p189 = scmp.eq.s32.totalorder %s20, 1
      %p190 = scmp.ne.s32.totalorder %s185, %s187
      %p191 = scmp.eq.s32.totalorder %s20, 0
      %p192 = por %p190, %p191
      %p193 = scmp.ne.s32.totalorder %s185, %s187
      %p194 = scmp.eq.s32.totalorder %s25, 1
      %p195 = por %p193, %p194
      %p196 = scmp.ne.s32.totalorder %s187, %s188
      %p197 = scmp.eq.s32.totalorder %s25, 0
      %p198 = por %p196, %p197
      %p199 = scmp.ne.s32.totalorder %s187, %s188
      %p200 = scmp.eq.s32.totalorder %s26, 1
      %p201 = por %p199, %p200
      %p203 = scmp.ne.s32.totalorder %s188, %s202
      %p204 = scmp.eq.s32.totalorder %s26, 0
      %p205 = por %p203, %p204
      %s207 = sadd.s32 %s206, 1
      %p210 = scmp.eq.s32.totalorder %s20, 1
      %p211 = scmp.ne.s32.totalorder %s206, %s208
      %p212 = scmp.eq.s32.totalorder %s20, 0
      %p213 = por %p211, %p212
      %p214 = scmp.ne.s32.totalorder %s206, %s208
      %p215 = scmp.eq.s32.totalorder %s25, 1
      %p216 = por %p214, %p215
      %p217 = scmp.ne.s32.totalorder %s208, %s209
      %p218 = scmp.eq.s32.totalorder %s25, 0
      %p219 = por %p217, %p218
      %p220 = scmp.ne.s32.totalorder %s208, %s209
      %p221 = scmp.eq.s32.totalorder %s26, 1
      %p222 = por %p220, %p221
      %p224 = scmp.ne.s32.totalorder %s209, %s223
      %p225 = scmp.eq.s32.totalorder %s26, 0
      %p226 = por %p224, %p225
      %s228 = sadd.s32 %s227, 1
      %p231 = scmp.eq.s32.totalorder %s20, 1
      %p232 = scmp.ne.s32.totalorder %s227, %s229
      %p233 = scmp.eq.s32.totalorder %s20, 0
      %p234 = por %p232, %p233
      %p235 = scmp.ne.s32.totalorder %s227, %s229
      %p236 = scmp.eq.s32.totalorder %s25, 1
      %p237 = por %p235, %p236
      %p238 = scmp.ne.s32.totalorder %s229, %s230
      %p239 = scmp.eq.s32.totalorder %s25, 0
      %p240 = por %p238, %p239
      %p241 = scmp.ne.s32.totalorder %s229, %s230
      %p242 = scmp.eq.s32.totalorder %s26, 1
      %p243 = por %p241, %p242
      %p245 = scmp.ne.s32.totalorder %s230, %s244
      %p246 = scmp.eq.s32.totalorder %s26, 0
      %p247 = por %p245, %p246
      %s249 = sadd.s32 %s248, 1
      %p252 = scmp.eq.s32.totalorder %s20, 1
      %p253 = scmp.ne.s32.totalorder %s248, %s250
      %p254 = scmp.eq.s32.totalorder %s20, 0
      %p255 = por %p253, %p254
      %p256 = scmp.ne.s32.totalorder %s248, %s250
      %p257 = scmp.eq.s32.totalorder %s25, 1
      %p258 = por %p256, %p257
      %p259 = scmp.ne.s32.totalorder %s250, %s251
      %p260 = scmp.eq.s32.totalorder %s25, 0
      %p261 = por %p259, %p260
      %p262 = scmp.ne.s32.totalorder %s250, %s251
      %p263 = scmp.eq.s32.totalorder %s26, 1
      %p264 = por %p262, %p263
      %p266 = scmp.ne.s32.totalorder %s251, %s265
      %p267 = scmp.eq.s32.totalorder %s26, 0
      %p268 = por %p266, %p267
      %s270 = sadd.s32 %s269, 1
      %p273 = scmp.eq.s32.totalorder %s20, 1
      %p274 = scmp.ne.s32.totalorder %s269, %s271
      %p275 = scmp.eq.s32.totalorder %s20, 0
      %p276 = por %p274, %p275
      %p277 = scmp.ne.s32.totalorder %s269, %s271
      %p278 = scmp.eq.s32.totalorder %s25, 1
      %p279 = por %p277, %p278
      %p280 = scmp.ne.s32.totalorder %s271, %s272
      %p281 = scmp.eq.s32.totalorder %s25, 0
      %p282 = por %p280, %p281
      %p283 = scmp.ne.s32.totalorder %s271, %s272
      %p284 = scmp.eq.s32.totalorder %s26, 1
      %p285 = por %p283, %p284
      %p287 = scmp.ne.s32.totalorder %s272, %s286
      %p288 = scmp.eq.s32.totalorder %s26, 0
      %p289 = por %p287, %p288
      %s290 = ssub.s32 %s20, %s27
      %p291 = scmp.eq.s32.totalorder %s290, 0
      %s293 = sadd.s32 %s292, 1
      %s294 = scalar_select %p291, %s292, %s293
      %p297 = pneg %p291
      %p298 = scmp.eq.s32.totalorder %s20, 1
      %p299 = por %p297, %p298
      %p300 = scmp.ne.s32.totalorder %s292, %s295
      %p301 = scmp.eq.s32.totalorder %s20, 0
      %p302 = por %p300, %p301
      %p303 = scmp.ne.s32.totalorder %s292, %s295
      %p304 = scmp.eq.s32.totalorder %s25, 1
      %p305 = por %p303, %p304
      %p306 = scmp.ne.s32.totalorder %s295, %s296
      %p307 = scmp.eq.s32.totalorder %s25, 0
      %p308 = por %p306, %p307
      %p309 = scmp.ne.s32.totalorder %s295, %s296
      %p310 = scmp.eq.s32.totalorder %s26, 1
      %p311 = por %p309, %p310
      %p313 = scmp.ne.s32.totalorder %s296, %s312
      %p314 = scmp.eq.s32.totalorder %s26, 0
      %p315 = por %p313, %p314
      %p316 = scmp.le.s32.totalorder 1, %s20
      %p317 = scmp.lt.s32.totalorder %s20, 3
      %p318 = pnand %p316, %p317
      %p319 = pneg %p318
      // Predicated region
      $region9: #{tpu_custom_call.1} parent=5 // pred_check
        _
      $region10: #{tpu_custom_call.1} parent=5 // pred_check_branch
        %321 = sbr.rel (%p318) target = $region12
      $region11: #{tpu_custom_call.1} parent=5 // pred_region
        %s322 = ssub.s32 %s20, 1
        // Predicated region
        $region13: #{tpu_custom_call.1} parent=11 // pred_check
          %p323 = pneg %p93
        $region14: #{tpu_custom_call.1} parent=11 // pred_check_branch
          %325 = sbr.rel (%p323) target = $region16
        $region15: #{tpu_custom_call.1} parent=11 // pred_region
          _
        $region16: #{tpu_custom_call.1} parent=11 // pred_fallthru
          _
        // Predicated region
        $region17: #{tpu_custom_call.1} parent=11 // pred_check
          %p326 = pneg %p114
        $region18: #{tpu_custom_call.1} parent=11 // pred_check_branch
          %328 = sbr.rel (%p326) target = $region20
        $region19: #{tpu_custom_call.1} parent=11 // pred_region
          _
        $region20: #{tpu_custom_call.1} parent=11 // pred_fallthru
          _
        // Predicated region
        $region21: #{tpu_custom_call.1} parent=11 // pred_check
          %p329 = pneg %p135
        $region22: #{tpu_custom_call.1} parent=11 // pred_check_branch
          %331 = sbr.rel (%p329) target = $region24
        $region23: #{tpu_custom_call.1} parent=11 // pred_region
          %s333 = ssub.s32 4096, 4096
          %334 = vsyncadd [#allocation3], %s333
          %s335 = sshll.u32 [#allocation2], 4
          %s336 = int_to_ptr.vmem [resolvable:$true] %s335
          %341 = dma.hbm_to_vmem [thread:$0]  %s4, 4096, %s336, [#allocation3], 128, 128, 8
        $region24: #{tpu_custom_call.1} parent=11 // pred_fallthru
          _
        // Predicated region
        $region25: #{tpu_custom_call.1} parent=11 // pred_check
          %p342 = pneg %p156
        $region26: #{tpu_custom_call.1} parent=11 // pred_check_branch
          %344 = sbr.rel (%p342) target = $region28
        $region27: #{tpu_custom_call.1} parent=11 // pred_region
          _
        $region28: #{tpu_custom_call.1} parent=11 // pred_fallthru
          _
        // Predicated region
        $region29: #{tpu_custom_call.1} parent=11 // pred_check
          %p345 = pneg %p177
        $region30: #{tpu_custom_call.1} parent=11 // pred_check_branch
          %347 = sbr.rel (%p345) target = $region32
        $region31: #{tpu_custom_call.1} parent=11 // pred_region
          _
        $region32: #{tpu_custom_call.1} parent=11 // pred_fallthru
          _
        // Predicated region
        $region33: #{tpu_custom_call.1} parent=11 // pred_check
          %p348 = pneg %p198
        $region34: #{tpu_custom_call.1} parent=11 // pred_check_branch
          %350 = sbr.rel (%p348) target = $region36
        $region35: #{tpu_custom_call.1} parent=11 // pred_region
          %s352 = ssub.s32 4096, 4096
          %353 = vsyncadd [#allocation5], %s352
          %s354 = sshll.u32 [#allocation4], 4
          %s355 = int_to_ptr.vmem [resolvable:$true] %s354
          %360 = dma.hbm_to_vmem [thread:$0]  %s7, 4096, %s355, [#allocation5], 128, 128, 8
        $region36: #{tpu_custom_call.1} parent=11 // pred_fallthru
          _
        // Predicated region
        $region37: #{tpu_custom_call.1} parent=11 // pred_check
          %p361 = pneg %p219
        $region38: #{tpu_custom_call.1} parent=11 // pred_check_branch
          %363 = sbr.rel (%p361) target = $region40
        $region39: #{tpu_custom_call.1} parent=11 // pred_region
          %s365 = ssub.s32 4096, 4096
          %366 = vsyncadd [#allocation5], %s365
          %s367 = sshll.u32 [#allocation6], 4
          %s368 = int_to_ptr.vmem [resolvable:$true] %s367
          %373 = dma.hbm_to_vmem [thread:$0]  %s8, 4096, %s368, [#allocation5], 128, 128, 8
        $region40: #{tpu_custom_call.1} parent=11 // pred_fallthru
          _
        // Predicated region
        $region41: #{tpu_custom_call.1} parent=11 // pred_check
          %p374 = pneg %p240
        $region42: #{tpu_custom_call.1} parent=11 // pred_check_branch
          %376 = sbr.rel (%p374) target = $region44
        $region43: #{tpu_custom_call.1} parent=11 // pred_region
          _
        $region44: #{tpu_custom_call.1} parent=11 // pred_fallthru
          _
        // Predicated region
        $region45: #{tpu_custom_call.1} parent=11 // pred_check
          %p377 = pneg %p261
        $region46: #{tpu_custom_call.1} parent=11 // pred_check_branch
          %379 = sbr.rel (%p377) target = $region48
        $region47: #{tpu_custom_call.1} parent=11 // pred_region
          _
        $region48: #{tpu_custom_call.1} parent=11 // pred_fallthru
          _
        // Predicated region
        $region49: #{tpu_custom_call.1} parent=11 // pred_check
          %p380 = pneg %p282
        $region50: #{tpu_custom_call.1} parent=11 // pred_check_branch
          %382 = sbr.rel (%p380) target = $region52
        $region51: #{tpu_custom_call.1} parent=11 // pred_region
          _
        $region52: #{tpu_custom_call.1} parent=11 // pred_fallthru
          _
      $region12: #{tpu_custom_call.1} parent=5 // pred_fallthru
        _
      %p383 = scmp.lt.s32.totalorder %s20, 2
      // Predicated region
      $region53: #{tpu_custom_call.1} parent=5 // pred_check
        %p384 = pneg %p383
      $region54: #{tpu_custom_call.1} parent=5 // pred_check_branch
        %386 = sbr.rel (%p384) target = $region56
      $region55: #{tpu_custom_call.1} parent=5 // pred_region
        // Predicated region
        $region57: #{tpu_custom_call.1} parent=55 // pred_check
          %p387 = pneg %p40
        $region58: #{tpu_custom_call.1} parent=55 // pred_check_branch
          %389 = sbr.rel (%p387) target = $region60
        $region59: #{tpu_custom_call.1} parent=55 // pred_region
          %s390 = smul.u32 64, %s20
          %p391 = scmp.lt.s32.totalorder %s390, 127
          %s392 = scalar_select %p391, %s390, 127
          %s393 = smul.addr %s392, 8
          %s394 = scalar_lea.vmem %s0, %s393
          %s395 = smul.u32 64, %s20
        $region60: #{tpu_custom_call.1} parent=55 // pred_fallthru
          _
        // Predicated region
        $region61: #{tpu_custom_call.1} parent=55 // pred_check
          %p396 = pneg %p66
        $region62: #{tpu_custom_call.1} parent=55 // pred_check_branch
          %398 = sbr.rel (%p396) target = $region64
        $region63: #{tpu_custom_call.1} parent=55 // pred_region
          %s399 = smul.u32 64, %s20
          %p400 = scmp.lt.s32.totalorder %s399, 127
          %s401 = scalar_select %p400, %s399, 127
          %s402 = smul.addr %s401, 2
          %s403 = smul.addr %s402, 4
          %s404 = scalar_lea.vmem %s1, %s403
          %s405 = smul.u32 64, %s20
        $region64: #{tpu_custom_call.1} parent=55 // pred_fallthru
          _
      $region56: #{tpu_custom_call.1} parent=5 // pred_fallthru
        _
      %p406 = scmp.le.s32.totalorder 1, %s20
      %p407 = scmp.lt.s32.totalorder %s20, 3
      %p408 = pnand %p406, %p407
      %p409 = pneg %p408
      // Predicated region
      $region65: #{tpu_custom_call.1} parent=5 // pred_check
        _
      $region66: #{tpu_custom_call.1} parent=5 // pred_check_branch
        %411 = sbr.rel (%p408) target = $region68
      $region67: #{tpu_custom_call.1} parent=5 // pred_region
        %s412 = ssub.s32 %s20, 1
        // Predicated region
        $region69: #{tpu_custom_call.1} parent=67 // pred_check
          %p413 = pneg %p135
        $region70: #{tpu_custom_call.1} parent=67 // pred_check_branch
          %415 = sbr.rel (%p413) target = $region72
        $region71: #{tpu_custom_call.1} parent=67 // pred_region
          %416 = dma.done [#allocation3], 4096
        $region72: #{tpu_custom_call.1} parent=67 // pred_fallthru
          _
        // Predicated region
        $region73: #{tpu_custom_call.1} parent=67 // pred_check
          %p417 = pneg %p198
        $region74: #{tpu_custom_call.1} parent=67 // pred_check_branch
          %419 = sbr.rel (%p417) target = $region76
        $region75: #{tpu_custom_call.1} parent=67 // pred_region
          %420 = dma.done [#allocation5], 4096
        $region76: #{tpu_custom_call.1} parent=67 // pred_fallthru
          _
        // Predicated region
        $region77: #{tpu_custom_call.1} parent=67 // pred_check
          %p421 = pneg %p219
        $region78: #{tpu_custom_call.1} parent=67 // pred_check_branch
          %423 = sbr.rel (%p421) target = $region80
        $region79: #{tpu_custom_call.1} parent=67 // pred_region
          %424 = dma.done [#allocation5], 4096
        $region80: #{tpu_custom_call.1} parent=67 // pred_fallthru
          _
        %s425 = smul.u32 64, %s25
        %p426 = scmp.lt.s32.totalorder %s425, 127
        %s427 = scalar_select %p426, %s425, 127
        %s428 = smul.addr %s427, 8
        %s429 = scalar_lea.vmem %s0, %s428
        %p430 = pneg %p46
        %p431 = pneg %p43
        %s432 = smul.u32 64, %s25
        %p433 = scmp.lt.s32.totalorder %s432, 127
        %s434 = scalar_select %p433, %s432, 127
        %s435 = smul.addr %s434, 2
        %s436 = smul.addr %s435, 4
        %s437 = scalar_lea.vmem %s1, %s436
        %p438 = pneg %p72
        %p439 = pneg %p69
        %p440 = pneg %p93
        %p441 = pneg %p90
        %p442 = pneg %p114
        %p443 = pneg %p111
        %p444 = pneg %p135
        %p445 = pneg %p132
        %p446 = pneg %p156
        %p447 = pneg %p153
        %p448 = pneg %p177
        %p449 = pneg %p174
        %p450 = pneg %p198
        %p451 = pneg %p195
        %p452 = pneg %p219
        %p453 = pneg %p216
        %p454 = pneg %p240
        %p455 = pneg %p237
        %p456 = pneg %p261
        %p457 = pneg %p258
        %p458 = pneg %p282
        %p459 = pneg %p279
        %p460 = pneg %p308
        %p461 = pneg %p305
        %s462 = smul.u32 64, %s25
        %p463 = scmp.lt.s32.totalorder %s462, 127
        %s464 = scalar_select %p463, %s462, 127
        %s465 = smul.addr %s464, 8
        %s466 = scalar_lea.vmem %s12, %s465
        %s467 = smul.u32 64, %s25
        %p468 = scmp.lt.s32.totalorder %s467, 127
        %s469 = scalar_select %p468, %s467, 127
        %s470 = smul.addr %s469, 8
        %s471 = scalar_lea.vmem %s0, %s470
        %s472 = smul.u32 64, %s25
        %s473 = smul.u32 64, %s25
        %p474 = scmp.lt.s32.totalorder %s473, 127
        %s475 = scalar_select %p474, %s473, 127
        %s476 = smul.addr %s475, 2
        %s477 = smul.addr %s476, 4
        %s478 = scalar_lea.vmem %s1, %s477
        %s479 = smul.u32 64, %s25
        %s480 = smul.u32 64, %s25
        %p481 = scmp.lt.s32.totalorder %s480, 127
        %s482 = scalar_select %p481, %s480, 127
        %s483 = smul.addr %s482, 8
        %s484 = scalar_lea.vmem %s12, %s483
        %s485 = smul.u32 64, %s25
        %v487 = vld [vmem:[%s471] sm:$0xff]
        %v488 = vld [vmem:[%s471 + $0x8] sm:$0xff]
        %v489 = vld [vmem:[%s471 + $0x10] sm:$0xff]
        %v490 = vld [vmem:[%s471 + $0x18] sm:$0xff]
        %v491 = vld [vmem:[%s471 + $0x20] sm:$0xff]
        %v492 = vld [vmem:[%s471 + $0x28] sm:$0xff]
        %v493 = vld [vmem:[%s471 + $0x30] sm:$0xff]
        %v494 = vld [vmem:[%s471 + $0x38] sm:$0xff]
        %v495 = vld [vmem:[%s471 + $0x40] sm:$0xff]
        %v496 = vld [vmem:[%s471 + $0x48] sm:$0xff]
        %v497 = vld [vmem:[%s471 + $0x50] sm:$0xff]
        %v498 = vld [vmem:[%s471 + $0x58] sm:$0xff]
        %v499 = vld [vmem:[%s471 + $0x60] sm:$0xff]
        %v500 = vld [vmem:[%s471 + $0x68] sm:$0xff]
        %v501 = vld [vmem:[%s471 + $0x70] sm:$0xff]
        %v502 = vld [vmem:[%s471 + $0x78] sm:$0xff]
        %v503 = vld [vmem:[%s471 + $0x80] sm:$0xff]
        %v504 = vld [vmem:[%s471 + $0x88] sm:$0xff]
        %v505 = vld [vmem:[%s471 + $0x90] sm:$0xff]
        %v506 = vld [vmem:[%s471 + $0x98] sm:$0xff]
        %v507 = vld [vmem:[%s471 + $0xa0] sm:$0xff]
        %v508 = vld [vmem:[%s471 + $0xa8] sm:$0xff]
        %v509 = vld [vmem:[%s471 + $0xb0] sm:$0xff]
        %v510 = vld [vmem:[%s471 + $0xb8] sm:$0xff]
        %v511 = vld [vmem:[%s471 + $0xc0] sm:$0xff]
        %v512 = vld [vmem:[%s471 + $0xc8] sm:$0xff]
        %v513 = vld [vmem:[%s471 + $0xd0] sm:$0xff]
        %v514 = vld [vmem:[%s471 + $0xd8] sm:$0xff]
        %v515 = vld [vmem:[%s471 + $0xe0] sm:$0xff]
        %v516 = vld [vmem:[%s471 + $0xe8] sm:$0xff]
        %v517 = vld [vmem:[%s471 + $0xf0] sm:$0xff]
        %v518 = vld [vmem:[%s471 + $0xf8] sm:$0xff]
        %v519 = vld [vmem:[%s471 + $0x100] sm:$0xff]
        %v520 = vld [vmem:[%s471 + $0x108] sm:$0xff]
        %v521 = vld [vmem:[%s471 + $0x110] sm:$0xff]
        %v522 = vld [vmem:[%s471 + $0x118] sm:$0xff]
        %v523 = vld [vmem:[%s471 + $0x120] sm:$0xff]
        %v524 = vld [vmem:[%s471 + $0x128] sm:$0xff]
        %v525 = vld [vmem:[%s471 + $0x130] sm:$0xff]
        %v526 = vld [vmem:[%s471 + $0x138] sm:$0xff]
        %v527 = vld [vmem:[%s471 + $0x140] sm:$0xff]
        %v528 = vld [vmem:[%s471 + $0x148] sm:$0xff]
        %v529 = vld [vmem:[%s471 + $0x150] sm:$0xff]
        %v530 = vld [vmem:[%s471 + $0x158] sm:$0xff]
        %v531 = vld [vmem:[%s471 + $0x160] sm:$0xff]
        %v532 = vld [vmem:[%s471 + $0x168] sm:$0xff]
        %v533 = vld [vmem:[%s471 + $0x170] sm:$0xff]
        %v534 = vld [vmem:[%s471 + $0x178] sm:$0xff]
        %v535 = vld [vmem:[%s471 + $0x180] sm:$0xff]
        %v536 = vld [vmem:[%s471 + $0x188] sm:$0xff]
        %v537 = vld [vmem:[%s471 + $0x190] sm:$0xff]
        %v538 = vld [vmem:[%s471 + $0x198] sm:$0xff]
        %v539 = vld [vmem:[%s471 + $0x1a0] sm:$0xff]
        %v540 = vld [vmem:[%s471 + $0x1a8] sm:$0xff]
        %v541 = vld [vmem:[%s471 + $0x1b0] sm:$0xff]
        %v542 = vld [vmem:[%s471 + $0x1b8] sm:$0xff]
        %v543 = vld [vmem:[%s471 + $0x1c0] sm:$0xff]
        %v544 = vld [vmem:[%s471 + $0x1c8] sm:$0xff]
        %v545 = vld [vmem:[%s471 + $0x1d0] sm:$0xff]
        %v546 = vld [vmem:[%s471 + $0x1d8] sm:$0xff]
        %v547 = vld [vmem:[%s471 + $0x1e0] sm:$0xff]
        %v548 = vld [vmem:[%s471 + $0x1e8] sm:$0xff]
        %v549 = vld [vmem:[%s471 + $0x1f0] sm:$0xff]
        %v550 = vld [vmem:[%s471 + $0x1f8] sm:$0xff]
        %v551 = vpack.c.bf16 %v488, %v487
        %v552 = vpack.c.bf16 %v490, %v489
        %v553 = vpack.c.bf16 %v492, %v491
        %v554 = vpack.c.bf16 %v494, %v493
        %v555 = vpack.c.bf16 %v496, %v495
        %v556 = vpack.c.bf16 %v498, %v497
        %v557 = vpack.c.bf16 %v500, %v499
        %v558 = vpack.c.bf16 %v502, %v501
        %v559 = vpack.c.bf16 %v504, %v503
        %v560 = vpack.c.bf16 %v506, %v505
        %v561 = vpack.c.bf16 %v508, %v507
        %v562 = vpack.c.bf16 %v510, %v509
        %v563 = vpack.c.bf16 %v512, %v511
        %v564 = vpack.c.bf16 %v514, %v513
        %v565 = vpack.c.bf16 %v516, %v515
        %v566 = vpack.c.bf16 %v518, %v517
        %v567 = vpack.c.bf16 %v520, %v519
        %v568 = vpack.c.bf16 %v522, %v521
        %v569 = vpack.c.bf16 %v524, %v523
        %v570 = vpack.c.bf16 %v526, %v525
        %v571 = vpack.c.bf16 %v528, %v527
        %v572 = vpack.c.bf16 %v530, %v529
        %v573 = vpack.c.bf16 %v532, %v531
        %v574 = vpack.c.bf16 %v534, %v533
        %v575 = vpack.c.bf16 %v536, %v535
        %v576 = vpack.c.bf16 %v538, %v537
        %v577 = vpack.c.bf16 %v540, %v539
        %v578 = vpack.c.bf16 %v542, %v541
        %v579 = vpack.c.bf16 %v544, %v543
        %v580 = vpack.c.bf16 %v546, %v545
        %v581 = vpack.c.bf16 %v548, %v547
        %v582 = vpack.c.bf16 %v550, %v549
        %v583 = vld [vmem:[%s478] sm:$0xff]
        %v584 = vld [vmem:[%s478 + $0x8] sm:$0xff]
        %v585 = vld [vmem:[%s478 + $0x10] sm:$0xff]
        %v586 = vld [vmem:[%s478 + $0x18] sm:$0xff]
        %v587 = vld [vmem:[%s478 + $0x20] sm:$0xff]
        %v588 = vld [vmem:[%s478 + $0x28] sm:$0xff]
        %v589 = vld [vmem:[%s478 + $0x30] sm:$0xff]
        %v590 = vld [vmem:[%s478 + $0x38] sm:$0xff]
        %v591 = vld [vmem:[%s478 + $0x40] sm:$0xff]
        %v592 = vld [vmem:[%s478 + $0x48] sm:$0xff]
        %v593 = vld [vmem:[%s478 + $0x50] sm:$0xff]
        %v594 = vld [vmem:[%s478 + $0x58] sm:$0xff]
        %v595 = vld [vmem:[%s478 + $0x60] sm:$0xff]
        %v596 = vld [vmem:[%s478 + $0x68] sm:$0xff]
        %v597 = vld [vmem:[%s478 + $0x70] sm:$0xff]
        %v598 = vld [vmem:[%s478 + $0x78] sm:$0xff]
        %v599 = vld [vmem:[%s478 + $0x80] sm:$0xff]
        %v600 = vld [vmem:[%s478 + $0x88] sm:$0xff]
        %v601 = vld [vmem:[%s478 + $0x90] sm:$0xff]
        %v602 = vld [vmem:[%s478 + $0x98] sm:$0xff]
        %v603 = vld [vmem:[%s478 + $0xa0] sm:$0xff]
        %v604 = vld [vmem:[%s478 + $0xa8] sm:$0xff]
        %v605 = vld [vmem:[%s478 + $0xb0] sm:$0xff]
        %v606 = vld [vmem:[%s478 + $0xb8] sm:$0xff]
        %v607 = vld [vmem:[%s478 + $0xc0] sm:$0xff]
        %v608 = vld [vmem:[%s478 + $0xc8] sm:$0xff]
        %v609 = vld [vmem:[%s478 + $0xd0] sm:$0xff]
        %v610 = vld [vmem:[%s478 + $0xd8] sm:$0xff]
        %v611 = vld [vmem:[%s478 + $0xe0] sm:$0xff]
        %v612 = vld [vmem:[%s478 + $0xe8] sm:$0xff]
        %v613 = vld [vmem:[%s478 + $0xf0] sm:$0xff]
        %v614 = vld [vmem:[%s478 + $0xf8] sm:$0xff]
        %v615 = vld [vmem:[%s478 + $0x100] sm:$0xff]
        %v616 = vld [vmem:[%s478 + $0x108] sm:$0xff]
        %v617 = vld [vmem:[%s478 + $0x110] sm:$0xff]
        %v618 = vld [vmem:[%s478 + $0x118] sm:$0xff]
        %v619 = vld [vmem:[%s478 + $0x120] sm:$0xff]
        %v620 = vld [vmem:[%s478 + $0x128] sm:$0xff]
        %v621 = vld [vmem:[%s478 + $0x130] sm:$0xff]
        %v622 = vld [vmem:[%s478 + $0x138] sm:$0xff]
        %v623 = vld [vmem:[%s478 + $0x140] sm:$0xff]
        %v624 = vld [vmem:[%s478 + $0x148] sm:$0xff]
        %v625 = vld [vmem:[%s478 + $0x150] sm:$0xff]
        %v626 = vld [vmem:[%s478 + $0x158] sm:$0xff]
        %v627 = vld [vmem:[%s478 + $0x160] sm:$0xff]
        %v628 = vld [vmem:[%s478 + $0x168] sm:$0xff]
        %v629 = vld [vmem:[%s478 + $0x170] sm:$0xff]
        %v630 = vld [vmem:[%s478 + $0x178] sm:$0xff]
        %v631 = vld [vmem:[%s478 + $0x180] sm:$0xff]
        %v632 = vld [vmem:[%s478 + $0x188] sm:$0xff]
        %v633 = vld [vmem:[%s478 + $0x190] sm:$0xff]
        %v634 = vld [vmem:[%s478 + $0x198] sm:$0xff]
        %v635 = vld [vmem:[%s478 + $0x1a0] sm:$0xff]
        %v636 = vld [vmem:[%s478 + $0x1a8] sm:$0xff]
        %v637 = vld [vmem:[%s478 + $0x1b0] sm:$0xff]
        %v638 = vld [vmem:[%s478 + $0x1b8] sm:$0xff]
        %v639 = vld [vmem:[%s478 + $0x1c0] sm:$0xff]
        %v640 = vld [vmem:[%s478 + $0x1c8] sm:$0xff]
        %v641 = vld [vmem:[%s478 + $0x1d0] sm:$0xff]
        %v642 = vld [vmem:[%s478 + $0x1d8] sm:$0xff]
        %v643 = vld [vmem:[%s478 + $0x1e0] sm:$0xff]
        %v644 = vld [vmem:[%s478 + $0x1e8] sm:$0xff]
        %v645 = vld [vmem:[%s478 + $0x1f0] sm:$0xff]
        %v646 = vld [vmem:[%s478 + $0x1f8] sm:$0xff]
        %v647 = vld [vmem:[%s10] sm:$0xff]
        %v648 = vld [vmem:[%s11] sm:$0x1]
        %v649 = vld [vmem:[%s2] sm:$0xff]
        %v650 = vld [vmem:[%s2 + $0x8] sm:$0xff]
        %v651 = vld [vmem:[%s2 + $0x10] sm:$0xff]
        %v652 = vld [vmem:[%s2 + $0x18] sm:$0xff]
        %v657 = vunpack.c.l.b16 %v649
        %v658 = vunpack.c.h.b16 %v649
        %v659 = vunpack.c.l.b16 %v650
        %v660 = vunpack.c.h.b16 %v650
        %v661 = vunpack.c.l.b16 %v651
        %v662 = vunpack.c.h.b16 %v651
        %v663 = vunpack.c.l.b16 %v652
        %v664 = vunpack.c.h.b16 %v652
        %v665 = vpack.c.b16 %v661, %v657
        %v666 = vpack.c.b16 %v662, %v658
        %v667 = vpack.c.b16 %v663, %v659
        %v668 = vpack.c.b16 %v664, %v660
        %vm673 = vcmask 130048
        %v675 = vsel %vm673, %v551, 0
        %v678 = vsel %vm673, %v552, 0
        %v681 = vsel %vm673, %v553, 0
        %v684 = vsel %vm673, %v554, 0
        %v687 = vsel %vm673, %v555, 0
        %v690 = vsel %vm673, %v556, 0
        %v693 = vsel %vm673, %v557, 0
        %v696 = vsel %vm673, %v558, 0
        %v699 = vsel %vm673, %v559, 0
        %v702 = vsel %vm673, %v560, 0
        %v705 = vsel %vm673, %v561, 0
        %v708 = vsel %vm673, %v562, 0
        %v711 = vsel %vm673, %v563, 0
        %v714 = vsel %vm673, %v564, 0
        %v717 = vsel %vm673, %v565, 0
        %v720 = vsel %vm673, %v566, 0
        %v723 = vsel %vm673, %v567, 0
        %v726 = vsel %vm673, %v568, 0
        %v729 = vsel %vm673, %v569, 0
        %v732 = vsel %vm673, %v570, 0
        %v735 = vsel %vm673, %v571, 0
        %v738 = vsel %vm673, %v572, 0
        %v741 = vsel %vm673, %v573, 0
        %v744 = vsel %vm673, %v574, 0
        %v747 = vsel %vm673, %v575, 0
        %v750 = vsel %vm673, %v576, 0
        %v753 = vsel %vm673, %v577, 0
        %v756 = vsel %vm673, %v578, 0
        %v759 = vsel %vm673, %v579, 0
        %v762 = vsel %vm673, %v580, 0
        %v765 = vsel %vm673, %v581, 0
        %v768 = vsel %vm673, %v582, 0
        %770 = vmatprep.subr.bf16.mxu0 %v666
        %771 = vmatpush1.bf16.msra.mxu0 %v665
        %772 = vmatprep.subr.bf16.mxu0 0
        %773 = vmatpush1.bf16.msra.mxu0 0
        %774 = vmatprep.subr.bf16.mxu0 0
        %775 = vmatpush1.bf16.msra.mxu0 0
        %776 = vmatprep.subr.bf16.mxu0 0
        %777 = vmatpush1.bf16.msra.mxu0 0
        %778 = vmatprep.subr.bf16.mxu0 0
        %779 = vmatpush1.bf16.msra.mxu0 0
        %780 = vmatprep.subr.bf16.mxu0 0
        %781 = vmatpush1.bf16.msra.mxu0 0
        %782 = vmatprep.subr.bf16.mxu0 0
        %783 = vmatpush1.bf16.msra.mxu0 0
        %784 = vmatprep.subr.bf16.mxu0 0
        %785 = vmatpush1.bf16.msra.mxu0 0
        %786 = vmatprep.subr.bf16.mxu0 0
        %787 = vmatpush1.bf16.msra.mxu0 0
        %788 = vmatprep.subr.bf16.mxu0 0
        %789 = vmatpush1.bf16.msra.mxu0 0
        %790 = vmatprep.subr.bf16.mxu0 0
        %791 = vmatpush1.bf16.msra.mxu0 0
        %792 = vmatprep.subr.bf16.mxu0 0
        %793 = vmatpush1.bf16.msra.mxu0 0
        %794 = vmatprep.subr.bf16.mxu0 0
        %795 = vmatpush1.bf16.msra.mxu0 0
        %796 = vmatprep.subr.bf16.mxu0 0
        %797 = vmatpush1.bf16.msra.mxu0 0
        %798 = vmatprep.subr.bf16.mxu0 0
        %799 = vmatpush1.bf16.msra.mxu0 0
        %800 = vmatprep.subr.bf16.mxu0 0
        %801 = vmatpush1.bf16.msra.mxu0 0
        %802 = vmatprep.mubr.bf16.mxu0 0
        %803 = vmatmul.mubr.bf16.gmra.mrb[0].mxu0 %v675
        %v804 = vpop.f32.mrb[0].mxu0
        %v805 = vadd.f32 0.0, %v804
        %v806 = vpop.f32.mrb[0].mxu0
        %v807 = vadd.f32 0.0, %v806
        %v808 = vpop.f32.mrb[0].mxu0
        %v809 = vadd.f32 0.0, %v808
        %v810 = vpop.f32.mrb[0].mxu0
        %v811 = vadd.f32 0.0, %v810
        %812 = vmatprep.mubr.bf16.mxu0 0
        %813 = vmatmul.mubr.bf16.gmra.mrb[0].mxu0 %v678
        %v814 = vpop.f32.mrb[0].mxu0
        %v815 = vadd.f32 0.0, %v814
        %v816 = vpop.f32.mrb[0].mxu0
        %v817 = vadd.f32 0.0, %v816
        %v818 = vpop.f32.mrb[0].mxu0
        %v819 = vadd.f32 0.0, %v818
        %v820 = vpop.f32.mrb[0].mxu0
        %v821 = vadd.f32 0.0, %v820
        %822 = vmatprep.mubr.bf16.mxu0 0
        %823 = vmatmul.mubr.bf16.gmra.mrb[0].mxu0 %v681
        %v824 = vpop.f32.mrb[0].mxu0
        %v825 = vadd.f32 0.0, %v824
        %v826 = vpop.f32.mrb[0].mxu0
        %v827 = vadd.f32 0.0, %v826
        %v828 = vpop.f32.mrb[0].mxu0
        %v829 = vadd.f32 0.0, %v828
        %v830 = vpop.f32.mrb[0].mxu0
        %v831 = vadd.f32 0.0, %v830
        %832 = vmatprep.mubr.bf16.mxu0 0
        %833 = vmatmul.mubr.bf16.gmra.mrb[0].mxu0 %v684
        %v834 = vpop.f32.mrb[0].mxu0
        %v835 = vadd.f32 0.0, %v834
        %v836 = vpop.f32.mrb[0].mxu0
        %v837 = vadd.f32 0.0, %v836
        %v838 = vpop.f32.mrb[0].mxu0
        %v839 = vadd.f32 0.0, %v838
        %v840 = vpop.f32.mrb[0].mxu0
        %v841 = vadd.f32 0.0, %v840
        %842 = vmatprep.mubr.bf16.mxu0 0
        %843 = vmatmul.mubr.bf16.gmra.mrb[0].mxu0 %v687
        %v844 = vpop.f32.mrb[0].mxu0
        %v845 = vadd.f32 0.0, %v844
        %v846 = vpop.f32.mrb[0].mxu0
        %v847 = vadd.f32 0.0, %v846
        %v848 = vpop.f32.mrb[0].mxu0
        %v849 = vadd.f32 0.0, %v848
        %v850 = vpop.f32.mrb[0].mxu0
        %v851 = vadd.f32 0.0, %v850
        %852 = vmatprep.mubr.bf16.mxu0 0
        %853 = vmatmul.mubr.bf16.gmra.mrb[0].mxu0 %v690
        %v854 = vpop.f32.mrb[0].mxu0
        %v855 = vadd.f32 0.0, %v854
        %v856 = vpop.f32.mrb[0].mxu0
        %v857 = vadd.f32 0.0, %v856
        %v858 = vpop.f32.mrb[0].mxu0
        %v859 = vadd.f32 0.0, %v858
        %v860 = vpop.f32.mrb[0].mxu0
        %v861 = vadd.f32 0.0, %v860
        %862 = vmatprep.mubr.bf16.mxu0 0
        %863 = vmatmul.mubr.bf16.gmra.mrb[0].mxu0 %v693
        %v864 = vpop.f32.mrb[0].mxu0
        %v865 = vadd.f32 0.0, %v864
        %v866 = vpop.f32.mrb[0].mxu0
        %v867 = vadd.f32 0.0, %v866
        %v868 = vpop.f32.mrb[0].mxu0
        %v869 = vadd.f32 0.0, %v868
        %v870 = vpop.f32.mrb[0].mxu0
        %v871 = vadd.f32 0.0, %v870
        %872 = vmatprep.mubr.bf16.mxu0 0
        %873 = vmatmul.mubr.bf16.gmra.mrb[0].mxu0 %v696
        %v874 = vpop.f32.mrb[0].mxu0
        %v875 = vadd.f32 0.0, %v874
        %v876 = vpop.f32.mrb[0].mxu0
        %v877 = vadd.f32 0.0, %v876
        %v878 = vpop.f32.mrb[0].mxu0
        %v879 = vadd.f32 0.0, %v878
        %v880 = vpop.f32.mrb[0].mxu0
        %v881 = vadd.f32 0.0, %v880
        %882 = vmatprep.mubr.bf16.mxu0 0
        %883 = vmatmul.mubr.bf16.gmra.mrb[0].mxu0 %v699
        %v884 = vpop.f32.mrb[0].mxu0
        %v885 = vadd.f32 0.0, %v884
        %v886 = vpop.f32.mrb[0].mxu0
        %v887 = vadd.f32 0.0, %v886
        %v888 = vpop.f32.mrb[0].mxu0
        %v889 = vadd.f32 0.0, %v888
        %v890 = vpop.f32.mrb[0].mxu0
        %v891 = vadd.f32 0.0, %v890
        %892 = vmatprep.mubr.bf16.mxu0 0
        %893 = vmatmul.mubr.bf16.gmra.mrb[0].mxu0 %v702
        %v894 = vpop.f32.mrb[0].mxu0
        %v895 = vadd.f32 0.0, %v894
        %v896 = vpop.f32.mrb[0].mxu0
        %v897 = vadd.f32 0.0, %v896
        %v898 = vpop.f32.mrb[0].mxu0
        %v899 = vadd.f32 0.0, %v898
        %v900 = vpop.f32.mrb[0].mxu0
        %v901 = vadd.f32 0.0, %v900
        %902 = vmatprep.mubr.bf16.mxu0 0
        %903 = vmatmul.mubr.bf16.gmra.mrb[0].mxu0 %v705
        %v904 = vpop.f32.mrb[0].mxu0
        %v905 = vadd.f32 0.0, %v904
        %v906 = vpop.f32.mrb[0].mxu0
        %v907 = vadd.f32 0.0, %v906
        %v908 = vpop.f32.mrb[0].mxu0
        %v909 = vadd.f32 0.0, %v908
        %v910 = vpop.f32.mrb[0].mxu0
        %v911 = vadd.f32 0.0, %v910
        %912 = vmatprep.mubr.bf16.mxu0 0
        %913 = vmatmul.mubr.bf16.gmra.mrb[0].mxu0 %v708
        %v914 = vpop.f32.mrb[0].mxu0
        %v915 = vadd.f32 0.0, %v914
        %v916 = vpop.f32.mrb[0].mxu0
        %v917 = vadd.f32 0.0, %v916
        %v918 = vpop.f32.mrb[0].mxu0
        %v919 = vadd.f32 0.0, %v918
        %v920 = vpop.f32.mrb[0].mxu0
        %v921 = vadd.f32 0.0, %v920
        %922 = vmatprep.mubr.bf16.mxu0 0
        %923 = vmatmul.mubr.bf16.gmra.mrb[0].mxu0 %v711
        %v924 = vpop.f32.mrb[0].mxu0
        %v925 = vadd.f32 0.0, %v924
        %v926 = vpop.f32.mrb[0].mxu0
        %v927 = vadd.f32 0.0, %v926
        %v928 = vpop.f32.mrb[0].mxu0
        %v929 = vadd.f32 0.0, %v928
        %v930 = vpop.f32.mrb[0].mxu0
        %v931 = vadd.f32 0.0, %v930
        %932 = vmatprep.mubr.bf16.mxu0 0
        %933 = vmatmul.mubr.bf16.gmra.mrb[0].mxu0 %v714
        %v934 = vpop.f32.mrb[0].mxu0
        %v935 = vadd.f32 0.0, %v934
        %v936 = vpop.f32.mrb[0].mxu0
        %v937 = vadd.f32 0.0, %v936
        %v938 = vpop.f32.mrb[0].mxu0
        %v939 = vadd.f32 0.0, %v938
        %v940 = vpop.f32.mrb[0].mxu0
        %v941 = vadd.f32 0.0, %v940
        %942 = vmatprep.mubr.bf16.mxu0 0
        %943 = vmatmul.mubr.bf16.gmra.mrb[0].mxu0 %v717
        %v944 = vpop.f32.mrb[0].mxu0
        %v945 = vadd.f32 0.0, %v944
        %v946 = vpop.f32.mrb[0].mxu0
        %v947 = vadd.f32 0.0, %v946
        %v948 = vpop.f32.mrb[0].mxu0
        %v949 = vadd.f32 0.0, %v948
        %v950 = vpop.f32.mrb[0].mxu0
        %v951 = vadd.f32 0.0, %v950
        %952 = vmatprep.mubr.bf16.mxu0 0
        %953 = vmatmul.mubr.bf16.gmra.mrb[0].mxu0 %v720
        %v954 = vpop.f32.mrb[0].mxu0
        %v955 = vadd.f32 0.0, %v954
        %v956 = vpop.f32.mrb[0].mxu0
        %v957 = vadd.f32 0.0, %v956
        %v958 = vpop.f32.mrb[0].mxu0
        %v959 = vadd.f32 0.0, %v958
        %v960 = vpop.f32.mrb[0].mxu0
        %v961 = vadd.f32 0.0, %v960
        %962 = vmatprep.mubr.bf16.mxu0 0
        %963 = vmatmul.mubr.bf16.gmra.mrb[0].mxu0 %v723
        %v964 = vpop.f32.mrb[0].mxu0
        %v965 = vadd.f32 0.0, %v964
        %v966 = vpop.f32.mrb[0].mxu0
        %v967 = vadd.f32 0.0, %v966
        %v968 = vpop.f32.mrb[0].mxu0
        %v969 = vadd.f32 0.0, %v968
        %v970 = vpop.f32.mrb[0].mxu0
        %v971 = vadd.f32 0.0, %v970
        %972 = vmatprep.mubr.bf16.mxu0 0
        %973 = vmatmul.mubr.bf16.gmra.mrb[0].mxu0 %v726
        %v974 = vpop.f32.mrb[0].mxu0
        %v975 = vadd.f32 0.0, %v974
        %v976 = vpop.f32.mrb[0].mxu0
        %v977 = vadd.f32 0.0, %v976
        %v978 = vpop.f32.mrb[0].mxu0
        %v979 = vadd.f32 0.0, %v978
        %v980 = vpop.f32.mrb[0].mxu0
        %v981 = vadd.f32 0.0, %v980
        %982 = vmatprep.mubr.bf16.mxu0 0
        %983 = vmatmul.mubr.bf16.gmra.mrb[0].mxu0 %v729
        %v984 = vpop.f32.mrb[0].mxu0
        %v985 = vadd.f32 0.0, %v984
        %v986 = vpop.f32.mrb[0].mxu0
        %v987 = vadd.f32 0.0, %v986
        %v988 = vpop.f32.mrb[0].mxu0
        %v989 = vadd.f32 0.0, %v988
        %v990 = vpop.f32.mrb[0].mxu0
        %v991 = vadd.f32 0.0, %v990
        %992 = vmatprep.mubr.bf16.mxu0 0
        %993 = vmatmul.mubr.bf16.gmra.mrb[0].mxu0 %v732
        %v994 = vpop.f32.mrb[0].mxu0
        %v995 = vadd.f32 0.0, %v994
        %v996 = vpop.f32.mrb[0].mxu0
        %v997 = vadd.f32 0.0, %v996
        %v998 = vpop.f32.mrb[0].mxu0
        %v999 = vadd.f32 0.0, %v998
        %v1000 = vpop.f32.mrb[0].mxu0
        %v1001 = vadd.f32 0.0, %v1000
        %1002 = vmatprep.mubr.bf16.mxu0 0
        %1003 = vmatmul.mubr.bf16.gmra.mrb[0].mxu0 %v735
        %v1004 = vpop.f32.mrb[0].mxu0
        %v1005 = vadd.f32 0.0, %v1004
        %v1006 = vpop.f32.mrb[0].mxu0
        %v1007 = vadd.f32 0.0, %v1006
        %v1008 = vpop.f32.mrb[0].mxu0
        %v1009 = vadd.f32 0.0, %v1008
        %v1010 = vpop.f32.mrb[0].mxu0
        %v1011 = vadd.f32 0.0, %v1010
        %1012 = vmatprep.mubr.bf16.mxu0 0
        %1013 = vmatmul.mubr.bf16.gmra.mrb[0].mxu0 %v738
        %v1014 = vpop.f32.mrb[0].mxu0
        %v1015 = vadd.f32 0.0, %v1014
        %v1016 = vpop.f32.mrb[0].mxu0
        %v1017 = vadd.f32 0.0, %v1016
        %v1018 = vpop.f32.mrb[0].mxu0
        %v1019 = vadd.f32 0.0, %v1018
        %v1020 = vpop.f32.mrb[0].mxu0
        %v1021 = vadd.f32 0.0, %v1020
        %1022 = vmatprep.mubr.bf16.mxu0 0
        %1023 = vmatmul.mubr.bf16.gmra.mrb[0].mxu0 %v741
        %v1024 = vpop.f32.mrb[0].mxu0
        %v1025 = vadd.f32 0.0, %v1024
        %v1026 = vpop.f32.mrb[0].mxu0
        %v1027 = vadd.f32 0.0, %v1026
        %v1028 = vpop.f32.mrb[0].mxu0
        %v1029 = vadd.f32 0.0, %v1028
        %v1030 = vpop.f32.mrb[0].mxu0
        %v1031 = vadd.f32 0.0, %v1030
        %1032 = vmatprep.mubr.bf16.mxu0 0
        %1033 = vmatmul.mubr.bf16.gmra.mrb[0].mxu0 %v744
        %v1034 = vpop.f32.mrb[0].mxu0
        %v1035 = vadd.f32 0.0, %v1034
        %v1036 = vpop.f32.mrb[0].mxu0
        %v1037 = vadd.f32 0.0, %v1036
        %v1038 = vpop.f32.mrb[0].mxu0
        %v1039 = vadd.f32 0.0, %v1038
        %v1040 = vpop.f32.mrb[0].mxu0
        %v1041 = vadd.f32 0.0, %v1040
        %1042 = vmatprep.mubr.bf16.mxu0 0
        %1043 = vmatmul.mubr.bf16.gmra.mrb[0].mxu0 %v747
        %v1044 = vpop.f32.mrb[0].mxu0
        %v1045 = vadd.f32 0.0, %v1044
        %v1046 = vpop.f32.mrb[0].mxu0
        %v1047 = vadd.f32 0.0, %v1046
        %v1048 = vpop.f32.mrb[0].mxu0
        %v1049 = vadd.f32 0.0, %v1048
        %v1050 = vpop.f32.mrb[0].mxu0
        %v1051 = vadd.f32 0.0, %v1050
        %1052 = vmatprep.mubr.bf16.mxu0 0
        %1053 = vmatmul.mubr.bf16.gmra.mrb[0].mxu0 %v750
        %v1054 = vpop.f32.mrb[0].mxu0
        %v1055 = vadd.f32 0.0, %v1054
        %v1056 = vpop.f32.mrb[0].mxu0
        %v1057 = vadd.f32 0.0, %v1056
        %v1058 = vpop.f32.mrb[0].mxu0
        %v1059 = vadd.f32 0.0, %v1058
        %v1060 = vpop.f32.mrb[0].mxu0
        %v1061 = vadd.f32 0.0, %v1060
        %1062 = vmatprep.mubr.bf16.mxu0 0
        %1063 = vmatmul.mubr.bf16.gmra.mrb[0].mxu0 %v753
        %v1064 = vpop.f32.mrb[0].mxu0
        %v1065 = vadd.f32 0.0, %v1064
        %v1066 = vpop.f32.mrb[0].mxu0
        %v1067 = vadd.f32 0.0, %v1066
        %v1068 = vpop.f32.mrb[0].mxu0
        %v1069 = vadd.f32 0.0, %v1068
        %v1070 = vpop.f32.mrb[0].mxu0
        %v1071 = vadd.f32 0.0, %v1070
        %1072 = vmatprep.mubr.bf16.mxu0 0
        %1073 = vmatmul.mubr.bf16.gmra.mrb[0].mxu0 %v756
        %v1074 = vpop.f32.mrb[0].mxu0
        %v1075 = vadd.f32 0.0, %v1074
        %v1076 = vpop.f32.mrb[0].mxu0
        %v1077 = vadd.f32 0.0, %v1076
        %v1078 = vpop.f32.mrb[0].mxu0
        %v1079 = vadd.f32 0.0, %v1078
        %v1080 = vpop.f32.mrb[0].mxu0
        %v1081 = vadd.f32 0.0, %v1080
        %1082 = vmatprep.mubr.bf16.mxu0 0
        %1083 = vmatmul.mubr.bf16.gmra.mrb[0].mxu0 %v759
        %v1084 = vpop.f32.mrb[0].mxu0
        %v1085 = vadd.f32 0.0, %v1084
        %v1086 = vpop.f32.mrb[0].mxu0
        %v1087 = vadd.f32 0.0, %v1086
        %v1088 = vpop.f32.mrb[0].mxu0
        %v1089 = vadd.f32 0.0, %v1088
        %v1090 = vpop.f32.mrb[0].mxu0
        %v1091 = vadd.f32 0.0, %v1090
        %1092 = vmatprep.mubr.bf16.mxu0 0
        %1093 = vmatmul.mubr.bf16.gmra.mrb[0].mxu0 %v762
        %v1094 = vpop.f32.mrb[0].mxu0
        %v1095 = vadd.f32 0.0, %v1094
        %v1096 = vpop.f32.mrb[0].mxu0
        %v1097 = vadd.f32 0.0, %v1096
        %v1098 = vpop.f32.mrb[0].mxu0
        %v1099 = vadd.f32 0.0, %v1098
        %v1100 = vpop.f32.mrb[0].mxu0
        %v1101 = vadd.f32 0.0, %v1100
        %1102 = vmatprep.mubr.bf16.mxu0 0
        %1103 = vmatmul.mubr.bf16.gmra.mrb[0].mxu0 %v765
        %v1104 = vpop.f32.mrb[0].mxu0
        %v1105 = vadd.f32 0.0, %v1104
        %v1106 = vpop.f32.mrb[0].mxu0
        %v1107 = vadd.f32 0.0, %v1106
        %v1108 = vpop.f32.mrb[0].mxu0
        %v1109 = vadd.f32 0.0, %v1108
        %v1110 = vpop.f32.mrb[0].mxu0
        %v1111 = vadd.f32 0.0, %v1110
        %1112 = vmatprep.mubr.bf16.mxu0 0
        %1113 = vmatmul.mubr.bf16.gmra.mrb[0].mxu0 %v768
        %v1114 = vpop.f32.mrb[0].mxu0
        %v1115 = vadd.f32 0.0, %v1114
        %v1116 = vpop.f32.mrb[0].mxu0
        %v1117 = vadd.f32 0.0, %v1116
        %v1118 = vpop.f32.mrb[0].mxu0
        %v1119 = vadd.f32 0.0, %v1118
        %v1120 = vpop.f32.mrb[0].mxu0
        %v1121 = vadd.f32 0.0, %v1120
        %1122 = vdwg.mxu0
        %1123 = vmatprep.subr.bf16.mxu0 %v668
        %1124 = vmatpush1.bf16.msra.mxu0 %v667
        %1125 = vmatprep.subr.bf16.mxu0 0
        %1126 = vmatpush1.bf16.msra.mxu0 0
        %1127 = vmatprep.subr.bf16.mxu0 0
        %1128 = vmatpush1.bf16.msra.mxu0 0
        %1129 = vmatprep.subr.bf16.mxu0 0
        %1130 = vmatpush1.bf16.msra.mxu0 0
        %1131 = vmatprep.subr.bf16.mxu0 0
        %1132 = vmatpush1.bf16.msra.mxu0 0
        %1133 = vmatprep.subr.bf16.mxu0 0
        %1134 = vmatpush1.bf16.msra.mxu0 0
        %1135 = vmatprep.subr.bf16.mxu0 0
        %1136 = vmatpush1.bf16.msra.mxu0 0
        %1137 = vmatprep.subr.bf16.mxu0 0
        %1138 = vmatpush1.bf16.msra.mxu0 0
        %1139 = vmatprep.subr.bf16.mxu0 0
        %1140 = vmatpush1.bf16.msra.mxu0 0
        %1141 = vmatprep.subr.bf16.mxu0 0
        %1142 = vmatpush1.bf16.msra.mxu0 0
        %1143 = vmatprep.subr.bf16.mxu0 0
        %1144 = vmatpush1.bf16.msra.mxu0 0
        %1145 = vmatprep.subr.bf16.mxu0 0
        %1146 = vmatpush1.bf16.msra.mxu0 0
        %1147 = vmatprep.subr.bf16.mxu0 0
        %1148 = vmatpush1.bf16.msra.mxu0 0
        %1149 = vmatprep.subr.bf16.mxu0 0
        %1150 = vmatpush1.bf16.msra.mxu0 0
        %1151 = vmatprep.subr.bf16.mxu0 0
        %1152 = vmatpush1.bf16.msra.mxu0 0
        %1153 = vmatprep.subr.bf16.mxu0 0
        %1154 = vmatpush1.bf16.msra.mxu0 0
        %1155 = vmatprep.mubr.bf16.mxu0 0
        %1156 = vmatmul.mubr.bf16.gmra.mrb[0].mxu0 %v675
        %v1157 = vpop.f32.mrb[0].mxu0
        %v1158 = vadd.f32 0.0, %v1157
        %v1159 = vpop.f32.mrb[0].mxu0
        %v1160 = vadd.f32 0.0, %v1159
        %v1161 = vpop.f32.mrb[0].mxu0
        %v1162 = vadd.f32 0.0, %v1161
        %v1163 = vpop.f32.mrb[0].mxu0
        %v1164 = vadd.f32 0.0, %v1163
        %1165 = vmatprep.mubr.bf16.mxu0 0
        %1166 = vmatmul.mubr.bf16.gmra.mrb[0].mxu0 %v678
        %v1167 = vpop.f32.mrb[0].mxu0
        %v1168 = vadd.f32 0.0, %v1167
        %v1169 = vpop.f32.mrb[0].mxu0
        %v1170 = vadd.f32 0.0, %v1169
        %v1171 = vpop.f32.mrb[0].mxu0
        %v1172 = vadd.f32 0.0, %v1171
        %v1173 = vpop.f32.mrb[0].mxu0
        %v1174 = vadd.f32 0.0, %v1173
        %1175 = vmatprep.mubr.bf16.mxu0 0
        %1176 = vmatmul.mubr.bf16.gmra.mrb[0].mxu0 %v681
        %v1177 = vpop.f32.mrb[0].mxu0
        %v1178 = vadd.f32 0.0, %v1177
        %v1179 = vpop.f32.mrb[0].mxu0
        %v1180 = vadd.f32 0.0, %v1179
        %v1181 = vpop.f32.mrb[0].mxu0
        %v1182 = vadd.f32 0.0, %v1181
        %v1183 = vpop.f32.mrb[0].mxu0
        %v1184 = vadd.f32 0.0, %v1183
        %1185 = vmatprep.mubr.bf16.mxu0 0
        %1186 = vmatmul.mubr.bf16.gmra.mrb[0].mxu0 %v684
        %v1187 = vpop.f32.mrb[0].mxu0
        %v1188 = vadd.f32 0.0, %v1187
        %v1189 = vpop.f32.mrb[0].mxu0
        %v1190 = vadd.f32 0.0, %v1189
        %v1191 = vpop.f32.mrb[0].mxu0
        %v1192 = vadd.f32 0.0, %v1191
        %v1193 = vpop.f32.mrb[0].mxu0
        %v1194 = vadd.f32 0.0, %v1193
        %1195 = vmatprep.mubr.bf16.mxu0 0
        %1196 = vmatmul.mubr.bf16.gmra.mrb[0].mxu0 %v687
        %v1197 = vpop.f32.mrb[0].mxu0
        %v1198 = vadd.f32 0.0, %v1197
        %v1199 = vpop.f32.mrb[0].mxu0
        %v1200 = vadd.f32 0.0, %v1199
        %v1201 = vpop.f32.mrb[0].mxu0
        %v1202 = vadd.f32 0.0, %v1201
        %v1203 = vpop.f32.mrb[0].mxu0
        %v1204 = vadd.f32 0.0, %v1203
        %1205 = vmatprep.mubr.bf16.mxu0 0
        %1206 = vmatmul.mubr.bf16.gmra.mrb[0].mxu0 %v690
        %v1207 = vpop.f32.mrb[0].mxu0
        %v1208 = vadd.f32 0.0, %v1207
        %v1209 = vpop.f32.mrb[0].mxu0
        %v1210 = vadd.f32 0.0, %v1209
        %v1211 = vpop.f32.mrb[0].mxu0
        %v1212 = vadd.f32 0.0, %v1211
        %v1213 = vpop.f32.mrb[0].mxu0
        %v1214 = vadd.f32 0.0, %v1213
        %1215 = vmatprep.mubr.bf16.mxu0 0
        %1216 = vmatmul.mubr.bf16.gmra.mrb[0].mxu0 %v693
        %v1217 = vpop.f32.mrb[0].mxu0
        %v1218 = vadd.f32 0.0, %v1217
        %v1219 = vpop.f32.mrb[0].mxu0
        %v1220 = vadd.f32 0.0, %v1219
        %v1221 = vpop.f32.mrb[0].mxu0
        %v1222 = vadd.f32 0.0, %v1221
        %v1223 = vpop.f32.mrb[0].mxu0
        %v1224 = vadd.f32 0.0, %v1223
        %1225 = vmatprep.mubr.bf16.mxu0 0
        %1226 = vmatmul.mubr.bf16.gmra.mrb[0].mxu0 %v696
        %v1227 = vpop.f32.mrb[0].mxu0
        %v1228 = vadd.f32 0.0, %v1227
        %v1229 = vpop.f32.mrb[0].mxu0
        %v1230 = vadd.f32 0.0, %v1229
        %v1231 = vpop.f32.mrb[0].mxu0
        %v1232 = vadd.f32 0.0, %v1231
        %v1233 = vpop.f32.mrb[0].mxu0
        %v1234 = vadd.f32 0.0, %v1233
        %1235 = vmatprep.mubr.bf16.mxu0 0
        %1236 = vmatmul.mubr.bf16.gmra.mrb[0].mxu0 %v699
        %v1237 = vpop.f32.mrb[0].mxu0
        %v1238 = vadd.f32 0.0, %v1237
        %v1239 = vpop.f32.mrb[0].mxu0
        %v1240 = vadd.f32 0.0, %v1239
        %v1241 = vpop.f32.mrb[0].mxu0
        %v1242 = vadd.f32 0.0, %v1241
        %v1243 = vpop.f32.mrb[0].mxu0
        %v1244 = vadd.f32 0.0, %v1243
        %1245 = vmatprep.mubr.bf16.mxu0 0
        %1246 = vmatmul.mubr.bf16.gmra.mrb[0].mxu0 %v702
        %v1247 = vpop.f32.mrb[0].mxu0
        %v1248 = vadd.f32 0.0, %v1247
        %v1249 = vpop.f32.mrb[0].mxu0
        %v1250 = vadd.f32 0.0, %v1249
        %v1251 = vpop.f32.mrb[0].mxu0
        %v1252 = vadd.f32 0.0, %v1251
        %v1253 = vpop.f32.mrb[0].mxu0
        %v1254 = vadd.f32 0.0, %v1253
        %1255 = vmatprep.mubr.bf16.mxu0 0
        %1256 = vmatmul.mubr.bf16.gmra.mrb[0].mxu0 %v705
        %v1257 = vpop.f32.mrb[0].mxu0
        %v1258 = vadd.f32 0.0, %v1257
        %v1259 = vpop.f32.mrb[0].mxu0
        %v1260 = vadd.f32 0.0, %v1259
        %v1261 = vpop.f32.mrb[0].mxu0
        %v1262 = vadd.f32 0.0, %v1261
        %v1263 = vpop.f32.mrb[0].mxu0
        %v1264 = vadd.f32 0.0, %v1263
        %1265 = vmatprep.mubr.bf16.mxu0 0
        %1266 = vmatmul.mubr.bf16.gmra.mrb[0].mxu0 %v708
        %v1267 = vpop.f32.mrb[0].mxu0
        %v1268 = vadd.f32 0.0, %v1267
        %v1269 = vpop.f32.mrb[0].mxu0
        %v1270 = vadd.f32 0.0, %v1269
        %v1271 = vpop.f32.mrb[0].mxu0
        %v1272 = vadd.f32 0.0, %v1271
        %v1273 = vpop.f32.mrb[0].mxu0
        %v1274 = vadd.f32 0.0, %v1273
        %1275 = vmatprep.mubr.bf16.mxu0 0
        %1276 = vmatmul.mubr.bf16.gmra.mrb[0].mxu0 %v711
        %v1277 = vpop.f32.mrb[0].mxu0
        %v1278 = vadd.f32 0.0, %v1277
        %v1279 = vpop.f32.mrb[0].mxu0
        %v1280 = vadd.f32 0.0, %v1279
        %v1281 = vpop.f32.mrb[0].mxu0
        %v1282 = vadd.f32 0.0, %v1281
        %v1283 = vpop.f32.mrb[0].mxu0
        %v1284 = vadd.f32 0.0, %v1283
        %1285 = vmatprep.mubr.bf16.mxu0 0
        %1286 = vmatmul.mubr.bf16.gmra.mrb[0].mxu0 %v714
        %v1287 = vpop.f32.mrb[0].mxu0
        %v1288 = vadd.f32 0.0, %v1287
        %v1289 = vpop.f32.mrb[0].mxu0
        %v1290 = vadd.f32 0.0, %v1289
        %v1291 = vpop.f32.mrb[0].mxu0
        %v1292 = vadd.f32 0.0, %v1291
        %v1293 = vpop.f32.mrb[0].mxu0
        %v1294 = vadd.f32 0.0, %v1293
        %1295 = vmatprep.mubr.bf16.mxu0 0
        %1296 = vmatmul.mubr.bf16.gmra.mrb[0].mxu0 %v717
        %v1297 = vpop.f32.mrb[0].mxu0
        %v1298 = vadd.f32 0.0, %v1297
        %v1299 = vpop.f32.mrb[0].mxu0
        %v1300 = vadd.f32 0.0, %v1299
        %v1301 = vpop.f32.mrb[0].mxu0
        %v1302 = vadd.f32 0.0, %v1301
        %v1303 = vpop.f32.mrb[0].mxu0
        %v1304 = vadd.f32 0.0, %v1303
        %1305 = vmatprep.mubr.bf16.mxu0 0
        %1306 = vmatmul.mubr.bf16.gmra.mrb[0].mxu0 %v720
        %v1307 = vpop.f32.mrb[0].mxu0
        %v1308 = vadd.f32 0.0, %v1307
        %v1309 = vpop.f32.mrb[0].mxu0
        %v1310 = vadd.f32 0.0, %v1309
        %v1311 = vpop.f32.mrb[0].mxu0
        %v1312 = vadd.f32 0.0, %v1311
        %v1313 = vpop.f32.mrb[0].mxu0
        %v1314 = vadd.f32 0.0, %v1313
        %1315 = vmatprep.mubr.bf16.mxu0 0
        %1316 = vmatmul.mubr.bf16.gmra.mrb[0].mxu0 %v723
        %v1317 = vpop.f32.mrb[0].mxu0
        %v1318 = vadd.f32 0.0, %v1317
        %v1319 = vpop.f32.mrb[0].mxu0
        %v1320 = vadd.f32 0.0, %v1319
        %v1321 = vpop.f32.mrb[0].mxu0
        %v1322 = vadd.f32 0.0, %v1321
        %v1323 = vpop.f32.mrb[0].mxu0
        %v1324 = vadd.f32 0.0, %v1323
        %1325 = vmatprep.mubr.bf16.mxu0 0
        %1326 = vmatmul.mubr.bf16.gmra.mrb[0].mxu0 %v726
        %v1327 = vpop.f32.mrb[0].mxu0
        %v1328 = vadd.f32 0.0, %v1327
        %v1329 = vpop.f32.mrb[0].mxu0
        %v1330 = vadd.f32 0.0, %v1329
        %v1331 = vpop.f32.mrb[0].mxu0
        %v1332 = vadd.f32 0.0, %v1331
        %v1333 = vpop.f32.mrb[0].mxu0
        %v1334 = vadd.f32 0.0, %v1333
        %1335 = vmatprep.mubr.bf16.mxu0 0
        %1336 = vmatmul.mubr.bf16.gmra.mrb[0].mxu0 %v729
        %v1337 = vpop.f32.mrb[0].mxu0
        %v1338 = vadd.f32 0.0, %v1337
        %v1339 = vpop.f32.mrb[0].mxu0
        %v1340 = vadd.f32 0.0, %v1339
        %v1341 = vpop.f32.mrb[0].mxu0
        %v1342 = vadd.f32 0.0, %v1341
        %v1343 = vpop.f32.mrb[0].mxu0
        %v1344 = vadd.f32 0.0, %v1343
        %1345 = vmatprep.mubr.bf16.mxu0 0
        %1346 = vmatmul.mubr.bf16.gmra.mrb[0].mxu0 %v732
        %v1347 = vpop.f32.mrb[0].mxu0
        %v1348 = vadd.f32 0.0, %v1347
        %v1349 = vpop.f32.mrb[0].mxu0
        %v1350 = vadd.f32 0.0, %v1349
        %v1351 = vpop.f32.mrb[0].mxu0
        %v1352 = vadd.f32 0.0, %v1351
        %v1353 = vpop.f32.mrb[0].mxu0
        %v1354 = vadd.f32 0.0, %v1353
        %1355 = vmatprep.mubr.bf16.mxu0 0
        %1356 = vmatmul.mubr.bf16.gmra.mrb[0].mxu0 %v735
        %v1357 = vpop.f32.mrb[0].mxu0
        %v1358 = vadd.f32 0.0, %v1357
        %v1359 = vpop.f32.mrb[0].mxu0
        %v1360 = vadd.f32 0.0, %v1359
        %v1361 = vpop.f32.mrb[0].mxu0
        %v1362 = vadd.f32 0.0, %v1361
        %v1363 = vpop.f32.mrb[0].mxu0
        %v1364 = vadd.f32 0.0, %v1363
        %1365 = vmatprep.mubr.bf16.mxu0 0
        %1366 = vmatmul.mubr.bf16.gmra.mrb[0].mxu0 %v738
        %v1367 = vpop.f32.mrb[0].mxu0
        %v1368 = vadd.f32 0.0, %v1367
        %v1369 = vpop.f32.mrb[0].mxu0
        %v1370 = vadd.f32 0.0, %v1369
        %v1371 = vpop.f32.mrb[0].mxu0
        %v1372 = vadd.f32 0.0, %v1371
        %v1373 = vpop.f32.mrb[0].mxu0
        %v1374 = vadd.f32 0.0, %v1373
        %1375 = vmatprep.mubr.bf16.mxu0 0
        %1376 = vmatmul.mubr.bf16.gmra.mrb[0].mxu0 %v741
        %v1377 = vpop.f32.mrb[0].mxu0
        %v1378 = vadd.f32 0.0, %v1377
        %v1379 = vpop.f32.mrb[0].mxu0
        %v1380 = vadd.f32 0.0, %v1379
        %v1381 = vpop.f32.mrb[0].mxu0
        %v1382 = vadd.f32 0.0, %v1381
        %v1383 = vpop.f32.mrb[0].mxu0
        %v1384 = vadd.f32 0.0, %v1383
        %1385 = vmatprep.mubr.bf16.mxu0 0
        %1386 = vmatmul.mubr.bf16.gmra.mrb[0].mxu0 %v744
        %v1387 = vpop.f32.mrb[0].mxu0
        %v1388 = vadd.f32 0.0, %v1387
        %v1389 = vpop.f32.mrb[0].mxu0
        %v1390 = vadd.f32 0.0, %v1389
        %v1391 = vpop.f32.mrb[0].mxu0
        %v1392 = vadd.f32 0.0, %v1391
        %v1393 = vpop.f32.mrb[0].mxu0
        %v1394 = vadd.f32 0.0, %v1393
        %1395 = vmatprep.mubr.bf16.mxu0 0
        %1396 = vmatmul.mubr.bf16.gmra.mrb[0].mxu0 %v747
        %v1397 = vpop.f32.mrb[0].mxu0
        %v1398 = vadd.f32 0.0, %v1397
        %v1399 = vpop.f32.mrb[0].mxu0
        %v1400 = vadd.f32 0.0, %v1399
        %v1401 = vpop.f32.mrb[0].mxu0
        %v1402 = vadd.f32 0.0, %v1401
        %v1403 = vpop.f32.mrb[0].mxu0
        %v1404 = vadd.f32 0.0, %v1403
        %1405 = vmatprep.mubr.bf16.mxu0 0
        %1406 = vmatmul.mubr.bf16.gmra.mrb[0].mxu0 %v750
        %v1407 = vpop.f32.mrb[0].mxu0
        %v1408 = vadd.f32 0.0, %v1407
        %v1409 = vpop.f32.mrb[0].mxu0
        %v1410 = vadd.f32 0.0, %v1409
        %v1411 = vpop.f32.mrb[0].mxu0
        %v1412 = vadd.f32 0.0, %v1411
        %v1413 = vpop.f32.mrb[0].mxu0
        %v1414 = vadd.f32 0.0, %v1413
        %1415 = vmatprep.mubr.bf16.mxu0 0
        %1416 = vmatmul.mubr.bf16.gmra.mrb[0].mxu0 %v753
        %v1417 = vpop.f32.mrb[0].mxu0
        %v1418 = vadd.f32 0.0, %v1417
        %v1419 = vpop.f32.mrb[0].mxu0
        %v1420 = vadd.f32 0.0, %v1419
        %v1421 = vpop.f32.mrb[0].mxu0
        %v1422 = vadd.f32 0.0, %v1421
        %v1423 = vpop.f32.mrb[0].mxu0
        %v1424 = vadd.f32 0.0, %v1423
        %1425 = vmatprep.mubr.bf16.mxu0 0
        %1426 = vmatmul.mubr.bf16.gmra.mrb[0].mxu0 %v756
        %v1427 = vpop.f32.mrb[0].mxu0
        %v1428 = vadd.f32 0.0, %v1427
        %v1429 = vpop.f32.mrb[0].mxu0
        %v1430 = vadd.f32 0.0, %v1429
        %v1431 = vpop.f32.mrb[0].mxu0
        %v1432 = vadd.f32 0.0, %v1431
        %v1433 = vpop.f32.mrb[0].mxu0
        %v1434 = vadd.f32 0.0, %v1433
        %1435 = vmatprep.mubr.bf16.mxu0 0
        %1436 = vmatmul.mubr.bf16.gmra.mrb[0].mxu0 %v759
        %v1437 = vpop.f32.mrb[0].mxu0
        %v1438 = vadd.f32 0.0, %v1437
        %v1439 = vpop.f32.mrb[0].mxu0
        %v1440 = vadd.f32 0.0, %v1439
        %v1441 = vpop.f32.mrb[0].mxu0
        %v1442 = vadd.f32 0.0, %v1441
        %v1443 = vpop.f32.mrb[0].mxu0
        %v1444 = vadd.f32 0.0, %v1443
        %1445 = vmatprep.mubr.bf16.mxu0 0
        %1446 = vmatmul.mubr.bf16.gmra.mrb[0].mxu0 %v762
        %v1447 = vpop.f32.mrb[0].mxu0
        %v1448 = vadd.f32 0.0, %v1447
        %v1449 = vpop.f32.mrb[0].mxu0
        %v1450 = vadd.f32 0.0, %v1449
        %v1451 = vpop.f32.mrb[0].mxu0
        %v1452 = vadd.f32 0.0, %v1451
        %v1453 = vpop.f32.mrb[0].mxu0
        %v1454 = vadd.f32 0.0, %v1453
        %1455 = vmatprep.mubr.bf16.mxu0 0
        %1456 = vmatmul.mubr.bf16.gmra.mrb[0].mxu0 %v765
        %v1457 = vpop.f32.mrb[0].mxu0
        %v1458 = vadd.f32 0.0, %v1457
        %v1459 = vpop.f32.mrb[0].mxu0
        %v1460 = vadd.f32 0.0, %v1459
        %v1461 = vpop.f32.mrb[0].mxu0
        %v1462 = vadd.f32 0.0, %v1461
        %v1463 = vpop.f32.mrb[0].mxu0
        %v1464 = vadd.f32 0.0, %v1463
        %1465 = vmatprep.mubr.bf16.mxu0 0
        %1466 = vmatmul.mubr.bf16.gmra.mrb[0].mxu0 %v768
        %v1467 = vpop.f32.mrb[0].mxu0
        %v1468 = vadd.f32 0.0, %v1467
        %v1469 = vpop.f32.mrb[0].mxu0
        %v1470 = vadd.f32 0.0, %v1469
        %v1471 = vpop.f32.mrb[0].mxu0
        %v1472 = vadd.f32 0.0, %v1471
        %v1473 = vpop.f32.mrb[0].mxu0
        %v1474 = vadd.f32 0.0, %v1473
        %1475 = vdwg.mxu0
        %v1476 = vld [vmem:[%s3] sm:$0xff]
        %v1477 = vld [vmem:[%s3 + $0x8] sm:$0xff]
        %v1478 = vld [vmem:[%s3 + $0x10] sm:$0xff]
        %v1479 = vld [vmem:[%s3 + $0x18] sm:$0xff]
        %v1480 = vld [vmem:[%s3 + $0x20] sm:$0xff]
        %v1481 = vld [vmem:[%s3 + $0x28] sm:$0xff]
        %v1482 = vld [vmem:[%s3 + $0x30] sm:$0xff]
        %v1483 = vld [vmem:[%s3 + $0x38] sm:$0xff]
        %v1484 = vld [vmem:[%s3 + $0x40] sm:$0xff]
        %v1485 = vld [vmem:[%s3 + $0x48] sm:$0xff]
        %v1486 = vld [vmem:[%s3 + $0x50] sm:$0xff]
        %v1487 = vld [vmem:[%s3 + $0x58] sm:$0xff]
        %v1488 = vld [vmem:[%s3 + $0x60] sm:$0xff]
        %v1489 = vld [vmem:[%s3 + $0x68] sm:$0xff]
        %v1490 = vld [vmem:[%s3 + $0x70] sm:$0xff]
        %v1491 = vld [vmem:[%s3 + $0x78] sm:$0xff]
        %v1492 = vld [vmem:[%s3 + $0x80] sm:$0xff]
        %v1493 = vld [vmem:[%s3 + $0x88] sm:$0xff]
        %v1494 = vld [vmem:[%s3 + $0x90] sm:$0xff]
        %v1495 = vld [vmem:[%s3 + $0x98] sm:$0xff]
        %v1496 = vld [vmem:[%s3 + $0xa0] sm:$0xff]
        %v1497 = vld [vmem:[%s3 + $0xa8] sm:$0xff]
        %v1498 = vld [vmem:[%s3 + $0xb0] sm:$0xff]
        %v1499 = vld [vmem:[%s3 + $0xb8] sm:$0xff]
        %v1500 = vld [vmem:[%s3 + $0xc0] sm:$0xff]
        %v1501 = vld [vmem:[%s3 + $0xc8] sm:$0xff]
        %v1502 = vld [vmem:[%s3 + $0xd0] sm:$0xff]
        %v1503 = vld [vmem:[%s3 + $0xd8] sm:$0xff]
        %v1504 = vld [vmem:[%s3 + $0xe0] sm:$0xff]
        %v1505 = vld [vmem:[%s3 + $0xe8] sm:$0xff]
        %v1506 = vld [vmem:[%s3 + $0xf0] sm:$0xff]
        %v1507 = vld [vmem:[%s3 + $0xf8] sm:$0xff]
        %v1572 = vunpack.c.l.b16 %v583
        %v1573 = vunpack.c.h.b16 %v583
        %v1574 = vunpack.c.l.b16 %v584
        %v1575 = vunpack.c.h.b16 %v584
        %v1576 = vunpack.c.l.b16 %v585
        %v1577 = vunpack.c.h.b16 %v585
        %v1578 = vunpack.c.l.b16 %v586
        %v1579 = vunpack.c.h.b16 %v586
        %v1580 = vunpack.c.l.b16 %v587
        %v1581 = vunpack.c.h.b16 %v587
        %v1582 = vunpack.c.l.b16 %v588
        %v1583 = vunpack.c.h.b16 %v588
        %v1584 = vunpack.c.l.b16 %v589
        %v1585 = vunpack.c.h.b16 %v589
        %v1586 = vunpack.c.l.b16 %v590
        %v1587 = vunpack.c.h.b16 %v590
        %v1588 = vunpack.c.l.b16 %v591
        %v1589 = vunpack.c.h.b16 %v591
        %v1590 = vunpack.c.l.b16 %v592
        %v1591 = vunpack.c.h.b16 %v592
        %v1592 = vunpack.c.l.b16 %v593
        %v1593 = vunpack.c.h.b16 %v593
        %v1594 = vunpack.c.l.b16 %v594
        %v1595 = vunpack.c.h.b16 %v594
        %v1596 = vunpack.c.l.b16 %v595
        %v1597 = vunpack.c.h.b16 %v595
        %v1598 = vunpack.c.l.b16 %v596
        %v1599 = vunpack.c.h.b16 %v596
        %v1600 = vunpack.c.l.b16 %v597
        %v1601 = vunpack.c.h.b16 %v597
        %v1602 = vunpack.c.l.b16 %v598
        %v1603 = vunpack.c.h.b16 %v598
        %v1604 = vunpack.c.l.b16 %v599
        %v1605 = vunpack.c.h.b16 %v599
        %v1606 = vunpack.c.l.b16 %v600
        %v1607 = vunpack.c.h.b16 %v600
        %v1608 = vunpack.c.l.b16 %v601
        %v1609 = vunpack.c.h.b16 %v601
        %v1610 = vunpack.c.l.b16 %v602
        %v1611 = vunpack.c.h.b16 %v602
        %v1612 = vunpack.c.l.b16 %v603
        %v1613 = vunpack.c.h.b16 %v603
        %v1614 = vunpack.c.l.b16 %v604
        %v1615 = vunpack.c.h.b16 %v604
        %v1616 = vunpack.c.l.b16 %v605
        %v1617 = vunpack.c.h.b16 %v605
        %v1618 = vunpack.c.l.b16 %v606
        %v1619 = vunpack.c.h.b16 %v606
        %v1620 = vunpack.c.l.b16 %v607
        %v1621 = vunpack.c.h.b16 %v607
        %v1622 = vunpack.c.l.b16 %v608
        %v1623 = vunpack.c.h.b16 %v608
        %v1624 = vunpack.c.l.b16 %v609
        %v1625 = vunpack.c.h.b16 %v609
        %v1626 = vunpack.c.l.b16 %v610
        %v1627 = vunpack.c.h.b16 %v610
        %v1628 = vunpack.c.l.b16 %v611
        %v1629 = vunpack.c.h.b16 %v611
        %v1630 = vunpack.c.l.b16 %v612
        %v1631 = vunpack.c.h.b16 %v612
        %v1632 = vunpack.c.l.b16 %v613
        %v1633 = vunpack.c.h.b16 %v613
        %v1634 = vunpack.c.l.b16 %v614
        %v1635 = vunpack.c.h.b16 %v614
        %v1636 = vunpack.c.l.b16 %v615
        %v1637 = vunpack.c.h.b16 %v615
        %v1638 = vunpack.c.l.b16 %v616
        %v1639 = vunpack.c.h.b16 %v616
        %v1640 = vunpack.c.l.b16 %v617
        %v1641 = vunpack.c.h.b16 %v617
        %v1642 = vunpack.c.l.b16 %v618
        %v1643 = vunpack.c.h.b16 %v618
        %v1644 = vunpack.c.l.b16 %v619
        %v1645 = vunpack.c.h.b16 %v619
        %v1646 = vunpack.c.l.b16 %v620
        %v1647 = vunpack.c.h.b16 %v620
        %v1648 = vunpack.c.l.b16 %v621
        %v1649 = vunpack.c.h.b16 %v621
        %v1650 = vunpack.c.l.b16 %v622
        %v1651 = vunpack.c.h.b16 %v622
        %v1652 = vunpack.c.l.b16 %v623
        %v1653 = vunpack.c.h.b16 %v623
        %v1654 = vunpack.c.l.b16 %v624
        %v1655 = vunpack.c.h.b16 %v624
        %v1656 = vunpack.c.l.b16 %v625
        %v1657 = vunpack.c.h.b16 %v625
        %v1658 = vunpack.c.l.b16 %v626
        %v1659 = vunpack.c.h.b16 %v626
        %v1660 = vunpack.c.l.b16 %v627
        %v1661 = vunpack.c.h.b16 %v627
        %v1662 = vunpack.c.l.b16 %v628
        %v1663 = vunpack.c.h.b16 %v628
        %v1664 = vunpack.c.l.b16 %v629
        %v1665 = vunpack.c.h.b16 %v629
        %v1666 = vunpack.c.l.b16 %v630
        %v1667 = vunpack.c.h.b16 %v630
        %v1668 = vunpack.c.l.b16 %v631
        %v1669 = vunpack.c.h.b16 %v631
        %v1670 = vunpack.c.l.b16 %v632
        %v1671 = vunpack.c.h.b16 %v632
        %v1672 = vunpack.c.l.b16 %v633
        %v1673 = vunpack.c.h.b16 %v633
        %v1674 = vunpack.c.l.b16 %v634
        %v1675 = vunpack.c.h.b16 %v634
        %v1676 = vunpack.c.l.b16 %v635
        %v1677 = vunpack.c.h.b16 %v635
        %v1678 = vunpack.c.l.b16 %v636
        %v1679 = vunpack.c.h.b16 %v636
        %v1680 = vunpack.c.l.b16 %v637
        %v1681 = vunpack.c.h.b16 %v637
        %v1682 = vunpack.c.l.b16 %v638
        %v1683 = vunpack.c.h.b16 %v638
        %v1684 = vunpack.c.l.b16 %v639
        %v1685 = vunpack.c.h.b16 %v639
        %v1686 = vunpack.c.l.b16 %v640
        %v1687 = vunpack.c.h.b16 %v640
        %v1688 = vunpack.c.l.b16 %v641
        %v1689 = vunpack.c.h.b16 %v641
        %v1690 = vunpack.c.l.b16 %v642
        %v1691 = vunpack.c.h.b16 %v642
        %v1692 = vunpack.c.l.b16 %v643
        %v1693 = vunpack.c.h.b16 %v643
        %v1694 = vunpack.c.l.b16 %v644
        %v1695 = vunpack.c.h.b16 %v644
        %v1696 = vunpack.c.l.b16 %v645
        %v1697 = vunpack.c.h.b16 %v645
        %v1698 = vunpack.c.l.b16 %v646
        %v1699 = vunpack.c.h.b16 %v646
        %v1700 = vpack.c.b16 %v1574, %v1572
        %v1701 = vpack.c.b16 %v1575, %v1573
        %v1702 = vpack.c.b16 %v1578, %v1576
        %v1703 = vpack.c.b16 %v1579, %v1577
        %v1704 = vpack.c.b16 %v1582, %v1580
        %v1705 = vpack.c.b16 %v1583, %v1581
        %v1706 = vpack.c.b16 %v1586, %v1584
        %v1707 = vpack.c.b16 %v1587, %v1585
        %v1708 = vpack.c.b16 %v1590, %v1588
        %v1709 = vpack.c.b16 %v1591, %v1589
        %v1710 = vpack.c.b16 %v1594, %v1592
        %v1711 = vpack.c.b16 %v1595, %v1593
        %v1712 = vpack.c.b16 %v1598, %v1596
        %v1713 = vpack.c.b16 %v1599, %v1597
        %v1714 = vpack.c.b16 %v1602, %v1600
        %v1715 = vpack.c.b16 %v1603, %v1601
        %v1716 = vpack.c.b16 %v1606, %v1604
        %v1717 = vpack.c.b16 %v1607, %v1605
        %v1718 = vpack.c.b16 %v1610, %v1608
        %v1719 = vpack.c.b16 %v1611, %v1609
        %v1720 = vpack.c.b16 %v1614, %v1612
        %v1721 = vpack.c.b16 %v1615, %v1613
        %v1722 = vpack.c.b16 %v1618, %v1616
        %v1723 = vpack.c.b16 %v1619, %v1617
        %v1724 = vpack.c.b16 %v1622, %v1620
        %v1725 = vpack.c.b16 %v1623, %v1621
        %v1726 = vpack.c.b16 %v1626, %v1624
        %v1727 = vpack.c.b16 %v1627, %v1625
        %v1728 = vpack.c.b16 %v1630, %v1628
        %v1729 = vpack.c.b16 %v1631, %v1629
        %v1730 = vpack.c.b16 %v1634, %v1632
        %v1731 = vpack.c.b16 %v1635, %v1633
        %v1732 = vpack.c.b16 %v1638, %v1636
        %v1733 = vpack.c.b16 %v1639, %v1637
        %v1734 = vpack.c.b16 %v1642, %v1640
        %v1735 = vpack.c.b16 %v1643, %v1641
        %v1736 = vpack.c.b16 %v1646, %v1644
        %v1737 = vpack.c.b16 %v1647, %v1645
        %v1738 = vpack.c.b16 %v1650, %v1648
        %v1739 = vpack.c.b16 %v1651, %v1649
        %v1740 = vpack.c.b16 %v1654, %v1652
        %v1741 = vpack.c.b16 %v1655, %v1653
        %v1742 = vpack.c.b16 %v1658, %v1656
        %v1743 = vpack.c.b16 %v1659, %v1657
        %v1744 = vpack.c.b16 %v1662, %v1660
        %v1745 = vpack.c.b16 %v1663, %v1661
        %v1746 = vpack.c.b16 %v1666, %v1664
        %v1747 = vpack.c.b16 %v1667, %v1665
        %v1748 = vpack.c.b16 %v1670, %v1668
        %v1749 = vpack.c.b16 %v1671, %v1669
        %v1750 = vpack.c.b16 %v1674, %v1672
        %v1751 = vpack.c.b16 %v1675, %v1673
        %v1752 = vpack.c.b16 %v1678, %v1676
        %v1753 = vpack.c.b16 %v1679, %v1677
        %v1754 = vpack.c.b16 %v1682, %v1680
        %v1755 = vpack.c.b16 %v1683, %v1681
        %v1756 = vpack.c.b16 %v1686, %v1684
        %v1757 = vpack.c.b16 %v1687, %v1685
        %v1758 = vpack.c.b16 %v1690, %v1688
        %v1759 = vpack.c.b16 %v1691, %v1689
        %v1760 = vpack.c.b16 %v1694, %v1692
        %v1761 = vpack.c.b16 %v1695, %v1693
        %v1762 = vpack.c.b16 %v1698, %v1696
        %v1763 = vpack.c.b16 %v1699, %v1697
        %v1860 = vunpack.c.l.b16 %v1476
        %v1861 = vunpack.c.h.b16 %v1476
        %v1862 = vunpack.c.l.b16 %v1477
        %v1863 = vunpack.c.h.b16 %v1477
        %v1864 = vunpack.c.l.b16 %v1478
        %v1865 = vunpack.c.h.b16 %v1478
        %v1866 = vunpack.c.l.b16 %v1479
        %v1867 = vunpack.c.h.b16 %v1479
        %v1868 = vunpack.c.l.b16 %v1480
        %v1869 = vunpack.c.h.b16 %v1480
        %v1870 = vunpack.c.l.b16 %v1481
        %v1871 = vunpack.c.h.b16 %v1481
        %v1872 = vunpack.c.l.b16 %v1482
        %v1873 = vunpack.c.h.b16 %v1482
        %v1874 = vunpack.c.l.b16 %v1483
        %v1875 = vunpack.c.h.b16 %v1483
        %v1876 = vunpack.c.l.b16 %v1484
        %v1877 = vunpack.c.h.b16 %v1484
        %v1878 = vunpack.c.l.b16 %v1485
        %v1879 = vunpack.c.h.b16 %v1485
        %v1880 = vunpack.c.l.b16 %v1486
        %v1881 = vunpack.c.h.b16 %v1486
        %v1882 = vunpack.c.l.b16 %v1487
        %v1883 = vunpack.c.h.b16 %v1487
        %v1884 = vunpack.c.l.b16 %v1488
        %v1885 = vunpack.c.h.b16 %v1488
        %v1886 = vunpack.c.l.b16 %v1489
        %v1887 = vunpack.c.h.b16 %v1489
        %v1888 = vunpack.c.l.b16 %v1490
        %v1889 = vunpack.c.h.b16 %v1490
        %v1890 = vunpack.c.l.b16 %v1491
        %v1891 = vunpack.c.h.b16 %v1491
        %v1892 = vunpack.c.l.b16 %v1492
        %v1893 = vunpack.c.h.b16 %v1492
        %v1894 = vunpack.c.l.b16 %v1493
        %v1895 = vunpack.c.h.b16 %v1493
        %v1896 = vunpack.c.l.b16 %v1494
        %v1897 = vunpack.c.h.b16 %v1494
        %v1898 = vunpack.c.l.b16 %v1495
        %v1899 = vunpack.c.h.b16 %v1495
        %v1900 = vunpack.c.l.b16 %v1496
        %v1901 = vunpack.c.h.b16 %v1496
        %v1902 = vunpack.c.l.b16 %v1497
        %v1903 = vunpack.c.h.b16 %v1497
        %v1904 = vunpack.c.l.b16 %v1498
        %v1905 = vunpack.c.h.b16 %v1498
        %v1906 = vunpack.c.l.b16 %v1499
        %v1907 = vunpack.c.h.b16 %v1499
        %v1908 = vunpack.c.l.b16 %v1500
        %v1909 = vunpack.c.h.b16 %v1500
        %v1910 = vunpack.c.l.b16 %v1501
        %v1911 = vunpack.c.h.b16 %v1501
        %v1912 = vunpack.c.l.b16 %v1502
        %v1913 = vunpack.c.h.b16 %v1502
        %v1914 = vunpack.c.l.b16 %v1503
        %v1915 = vunpack.c.h.b16 %v1503
        %v1916 = vunpack.c.l.b16 %v1504
        %v1917 = vunpack.c.h.b16 %v1504
        %v1918 = vunpack.c.l.b16 %v1505
        %v1919 = vunpack.c.h.b16 %v1505
        %v1920 = vunpack.c.l.b16 %v1506
        %v1921 = vunpack.c.h.b16 %v1506
        %v1922 = vunpack.c.l.b16 %v1507
        %v1923 = vunpack.c.h.b16 %v1507
        %v1924 = vpack.c.b16 %v1862, %v1860
        %v1925 = vpack.c.b16 %v1863, %v1861
        %v1926 = vpack.c.b16 %v1866, %v1864
        %v1927 = vpack.c.b16 %v1867, %v1865
        %v1928 = vpack.c.b16 %v1870, %v1868
        %v1929 = vpack.c.b16 %v1871, %v1869
        %v1930 = vpack.c.b16 %v1874, %v1872
        %v1931 = vpack.c.b16 %v1875, %v1873
        %v1932 = vpack.c.b16 %v1878, %v1876
        %v1933 = vpack.c.b16 %v1879, %v1877
        %v1934 = vpack.c.b16 %v1882, %v1880
        %v1935 = vpack.c.b16 %v1883, %v1881
        %v1936 = vpack.c.b16 %v1886, %v1884
        %v1937 = vpack.c.b16 %v1887, %v1885
        %v1938 = vpack.c.b16 %v1890, %v1888
        %v1939 = vpack.c.b16 %v1891, %v1889
        %v1940 = vpack.c.b16 %v1894, %v1892
        %v1941 = vpack.c.b16 %v1895, %v1893
        %v1942 = vpack.c.b16 %v1898, %v1896
        %v1943 = vpack.c.b16 %v1899, %v1897
        %v1944 = vpack.c.b16 %v1902, %v1900
        %v1945 = vpack.c.b16 %v1903, %v1901
        %v1946 = vpack.c.b16 %v1906, %v1904
        %v1947 = vpack.c.b16 %v1907, %v1905
        %v1948 = vpack.c.b16 %v1910, %v1908
        %v1949 = vpack.c.b16 %v1911, %v1909
        %v1950 = vpack.c.b16 %v1914, %v1912
        %v1951 = vpack.c.b16 %v1915, %v1913
        %v1952 = vpack.c.b16 %v1918, %v1916
        %v1953 = vpack.c.b16 %v1919, %v1917
        %v1954 = vpack.c.b16 %v1922, %v1920
        %v1955 = vpack.c.b16 %v1923, %v1921
        %1988 = vmatprep.subr.bf16.mxu0 %v1925
        %1989 = vmatpush1.bf16.msra.mxu0 %v1924
        %1990 = vmatprep.subr.bf16.mxu0 %v1927
        %1991 = vmatpush1.bf16.msra.mxu0 %v1926
        %1992 = vmatprep.subr.bf16.mxu0 %v1929
        %1993 = vmatpush1.bf16.msra.mxu0 %v1928
        %1994 = vmatprep.subr.bf16.mxu0 %v1931
        %1995 = vmatpush1.bf16.msra.mxu0 %v1930
        %1996 = vmatprep.subr.bf16.mxu0 %v1933
        %1997 = vmatpush1.bf16.msra.mxu0 %v1932
        %1998 = vmatprep.subr.bf16.mxu0 %v1935
        %1999 = vmatpush1.bf16.msra.mxu0 %v1934
        %2000 = vmatprep.subr.bf16.mxu0 %v1937
        %2001 = vmatpush1.bf16.msra.mxu0 %v1936
        %2002 = vmatprep.subr.bf16.mxu0 %v1939
        %2003 = vmatpush1.bf16.msra.mxu0 %v1938
        %2004 = vmatprep.subr.bf16.mxu0 %v1941
        %2005 = vmatpush1.bf16.msra.mxu0 %v1940
        %2006 = vmatprep.subr.bf16.mxu0 %v1943
        %2007 = vmatpush1.bf16.msra.mxu0 %v1942
        %2008 = vmatprep.subr.bf16.mxu0 %v1945
        %2009 = vmatpush1.bf16.msra.mxu0 %v1944
        %2010 = vmatprep.subr.bf16.mxu0 %v1947
        %2011 = vmatpush1.bf16.msra.mxu0 %v1946
        %2012 = vmatprep.subr.bf16.mxu0 %v1949
        %2013 = vmatpush1.bf16.msra.mxu0 %v1948
        %2014 = vmatprep.subr.bf16.mxu0 %v1951
        %2015 = vmatpush1.bf16.msra.mxu0 %v1950
        %2016 = vmatprep.subr.bf16.mxu0 %v1953
        %2017 = vmatpush1.bf16.msra.mxu0 %v1952
        %2018 = vmatprep.subr.bf16.mxu0 %v1955
        %2019 = vmatpush1.bf16.msra.mxu0 %v1954
        %2020 = vmatprep.mubr.bf16.mxu0 %v1701
        %2021 = vmatmul.mubr.bf16.gmra.mrb[0].mxu0 %v1700
        %v2022 = vpop.f32.mrb[0].mxu0
        %v2023 = vadd.f32 0.0, %v2022
        %v2024 = vpop.f32.mrb[0].mxu0
        %v2025 = vadd.f32 0.0, %v2024
        %v2026 = vpop.f32.mrb[0].mxu0
        %v2027 = vadd.f32 0.0, %v2026
        %v2028 = vpop.f32.mrb[0].mxu0
        %v2029 = vadd.f32 0.0, %v2028
        %2030 = vmatprep.mubr.bf16.mxu0 %v1703
        %2031 = vmatmul.mubr.bf16.gmra.mrb[0].mxu0 %v1702
        %v2032 = vpop.f32.mrb[0].mxu0
        %v2033 = vadd.f32 0.0, %v2032
        %v2034 = vpop.f32.mrb[0].mxu0
        %v2035 = vadd.f32 0.0, %v2034
        %v2036 = vpop.f32.mrb[0].mxu0
        %v2037 = vadd.f32 0.0, %v2036
        %v2038 = vpop.f32.mrb[0].mxu0
        %v2039 = vadd.f32 0.0, %v2038
        %2040 = vmatprep.mubr.bf16.mxu0 %v1705
        %2041 = vmatmul.mubr.bf16.gmra.mrb[0].mxu0 %v1704
        %v2042 = vpop.f32.mrb[0].mxu0
        %v2043 = vadd.f32 0.0, %v2042
        %v2044 = vpop.f32.mrb[0].mxu0
        %v2045 = vadd.f32 0.0, %v2044
        %v2046 = vpop.f32.mrb[0].mxu0
        %v2047 = vadd.f32 0.0, %v2046
        %v2048 = vpop.f32.mrb[0].mxu0
        %v2049 = vadd.f32 0.0, %v2048
        %2050 = vmatprep.mubr.bf16.mxu0 %v1707
        %2051 = vmatmul.mubr.bf16.gmra.mrb[0].mxu0 %v1706
        %v2052 = vpop.f32.mrb[0].mxu0
        %v2053 = vadd.f32 0.0, %v2052
        %v2054 = vpop.f32.mrb[0].mxu0
        %v2055 = vadd.f32 0.0, %v2054
        %v2056 = vpop.f32.mrb[0].mxu0
        %v2057 = vadd.f32 0.0, %v2056
        %v2058 = vpop.f32.mrb[0].mxu0
        %v2059 = vadd.f32 0.0, %v2058
        %2060 = vmatprep.mubr.bf16.mxu0 %v1709
        %2061 = vmatmul.mubr.bf16.gmra.mrb[0].mxu0 %v1708
        %v2062 = vpop.f32.mrb[0].mxu0
        %v2063 = vadd.f32 0.0, %v2062
        %v2064 = vpop.f32.mrb[0].mxu0
        %v2065 = vadd.f32 0.0, %v2064
        %v2066 = vpop.f32.mrb[0].mxu0
        %v2067 = vadd.f32 0.0, %v2066
        %v2068 = vpop.f32.mrb[0].mxu0
        %v2069 = vadd.f32 0.0, %v2068
        %2070 = vmatprep.mubr.bf16.mxu0 %v1711
        %2071 = vmatmul.mubr.bf16.gmra.mrb[0].mxu0 %v1710
        %v2072 = vpop.f32.mrb[0].mxu0
        %v2073 = vadd.f32 0.0, %v2072
        %v2074 = vpop.f32.mrb[0].mxu0
        %v2075 = vadd.f32 0.0, %v2074
        %v2076 = vpop.f32.mrb[0].mxu0
        %v2077 = vadd.f32 0.0, %v2076
        %v2078 = vpop.f32.mrb[0].mxu0
        %v2079 = vadd.f32 0.0, %v2078
        %2080 = vmatprep.mubr.bf16.mxu0 %v1713
        %2081 = vmatmul.mubr.bf16.gmra.mrb[0].mxu0 %v1712
        %v2082 = vpop.f32.mrb[0].mxu0
        %v2083 = vadd.f32 0.0, %v2082
        %v2084 = vpop.f32.mrb[0].mxu0
        %v2085 = vadd.f32 0.0, %v2084
        %v2086 = vpop.f32.mrb[0].mxu0
        %v2087 = vadd.f32 0.0, %v2086
        %v2088 = vpop.f32.mrb[0].mxu0
        %v2089 = vadd.f32 0.0, %v2088
        %2090 = vmatprep.mubr.bf16.mxu0 %v1715
        %2091 = vmatmul.mubr.bf16.gmra.mrb[0].mxu0 %v1714
        %v2092 = vpop.f32.mrb[0].mxu0
        %v2093 = vadd.f32 0.0, %v2092
        %v2094 = vpop.f32.mrb[0].mxu0
        %v2095 = vadd.f32 0.0, %v2094
        %v2096 = vpop.f32.mrb[0].mxu0
        %v2097 = vadd.f32 0.0, %v2096
        %v2098 = vpop.f32.mrb[0].mxu0
        %v2099 = vadd.f32 0.0, %v2098
        %2100 = vmatprep.mubr.bf16.mxu0 %v1717
        %2101 = vmatmul.mubr.bf16.gmra.mrb[0].mxu0 %v1716
        %v2102 = vpop.f32.mrb[0].mxu0
        %v2103 = vadd.f32 0.0, %v2102
        %v2104 = vpop.f32.mrb[0].mxu0
        %v2105 = vadd.f32 0.0, %v2104
        %v2106 = vpop.f32.mrb[0].mxu0
        %v2107 = vadd.f32 0.0, %v2106
        %v2108 = vpop.f32.mrb[0].mxu0
        %v2109 = vadd.f32 0.0, %v2108
        %2110 = vmatprep.mubr.bf16.mxu0 %v1719
        %2111 = vmatmul.mubr.bf16.gmra.mrb[0].mxu0 %v1718
        %v2112 = vpop.f32.mrb[0].mxu0
        %v2113 = vadd.f32 0.0, %v2112
        %v2114 = vpop.f32.mrb[0].mxu0
        %v2115 = vadd.f32 0.0, %v2114
        %v2116 = vpop.f32.mrb[0].mxu0
        %v2117 = vadd.f32 0.0, %v2116
        %v2118 = vpop.f32.mrb[0].mxu0
        %v2119 = vadd.f32 0.0, %v2118
        %2120 = vmatprep.mubr.bf16.mxu0 %v1721
        %2121 = vmatmul.mubr.bf16.gmra.mrb[0].mxu0 %v1720
        %v2122 = vpop.f32.mrb[0].mxu0
        %v2123 = vadd.f32 0.0, %v2122
        %v2124 = vpop.f32.mrb[0].mxu0
        %v2125 = vadd.f32 0.0, %v2124
        %v2126 = vpop.f32.mrb[0].mxu0
        %v2127 = vadd.f32 0.0, %v2126
        %v2128 = vpop.f32.mrb[0].mxu0
        %v2129 = vadd.f32 0.0, %v2128
        %2130 = vmatprep.mubr.bf16.mxu0 %v1723
        %2131 = vmatmul.mubr.bf16.gmra.mrb[0].mxu0 %v1722
        %v2132 = vpop.f32.mrb[0].mxu0
        %v2133 = vadd.f32 0.0, %v2132
        %v2134 = vpop.f32.mrb[0].mxu0
        %v2135 = vadd.f32 0.0, %v2134
        %v2136 = vpop.f32.mrb[0].mxu0
        %v2137 = vadd.f32 0.0, %v2136
        %v2138 = vpop.f32.mrb[0].mxu0
        %v2139 = vadd.f32 0.0, %v2138
        %2140 = vmatprep.mubr.bf16.mxu0 %v1725
        %2141 = vmatmul.mubr.bf16.gmra.mrb[0].mxu0 %v1724
        %v2142 = vpop.f32.mrb[0].mxu0
        %v2143 = vadd.f32 0.0, %v2142
        %v2144 = vpop.f32.mrb[0].mxu0
        %v2145 = vadd.f32 0.0, %v2144
        %v2146 = vpop.f32.mrb[0].mxu0
        %v2147 = vadd.f32 0.0, %v2146
        %v2148 = vpop.f32.mrb[0].mxu0
        %v2149 = vadd.f32 0.0, %v2148
        %2150 = vmatprep.mubr.bf16.mxu0 %v1727
        %2151 = vmatmul.mubr.bf16.gmra.mrb[0].mxu0 %v1726
        %v2152 = vpop.f32.mrb[0].mxu0
        %v2153 = vadd.f32 0.0, %v2152
        %v2154 = vpop.f32.mrb[0].mxu0
        %v2155 = vadd.f32 0.0, %v2154
        %v2156 = vpop.f32.mrb[0].mxu0
        %v2157 = vadd.f32 0.0, %v2156
        %v2158 = vpop.f32.mrb[0].mxu0
        %v2159 = vadd.f32 0.0, %v2158
        %2160 = vmatprep.mubr.bf16.mxu0 %v1729
        %2161 = vmatmul.mubr.bf16.gmra.mrb[0].mxu0 %v1728
        %v2162 = vpop.f32.mrb[0].mxu0
        %v2163 = vadd.f32 0.0, %v2162
        %v2164 = vpop.f32.mrb[0].mxu0
        %v2165 = vadd.f32 0.0, %v2164
        %v2166 = vpop.f32.mrb[0].mxu0
        %v2167 = vadd.f32 0.0, %v2166
        %v2168 = vpop.f32.mrb[0].mxu0
        %v2169 = vadd.f32 0.0, %v2168
        %2170 = vmatprep.mubr.bf16.mxu0 %v1731
        %2171 = vmatmul.mubr.bf16.gmra.mrb[0].mxu0 %v1730
        %v2172 = vpop.f32.mrb[0].mxu0
        %v2173 = vadd.f32 0.0, %v2172
        %v2174 = vpop.f32.mrb[0].mxu0
        %v2175 = vadd.f32 0.0, %v2174
        %v2176 = vpop.f32.mrb[0].mxu0
        %v2177 = vadd.f32 0.0, %v2176
        %v2178 = vpop.f32.mrb[0].mxu0
        %v2179 = vadd.f32 0.0, %v2178
        %2180 = vmatprep.mubr.bf16.mxu0 %v1733
        %2181 = vmatmul.mubr.bf16.gmra.mrb[0].mxu0 %v1732
        %v2182 = vpop.f32.mrb[0].mxu0
        %v2183 = vadd.f32 0.0, %v2182
        %v2184 = vpop.f32.mrb[0].mxu0
        %v2185 = vadd.f32 0.0, %v2184
        %v2186 = vpop.f32.mrb[0].mxu0
        %v2187 = vadd.f32 0.0, %v2186
        %v2188 = vpop.f32.mrb[0].mxu0
        %v2189 = vadd.f32 0.0, %v2188
        %2190 = vmatprep.mubr.bf16.mxu0 %v1735
        %2191 = vmatmul.mubr.bf16.gmra.mrb[0].mxu0 %v1734
        %v2192 = vpop.f32.mrb[0].mxu0
        %v2193 = vadd.f32 0.0, %v2192
        %v2194 = vpop.f32.mrb[0].mxu0
        %v2195 = vadd.f32 0.0, %v2194
        %v2196 = vpop.f32.mrb[0].mxu0
        %v2197 = vadd.f32 0.0, %v2196
        %v2198 = vpop.f32.mrb[0].mxu0
        %v2199 = vadd.f32 0.0, %v2198
        %2200 = vmatprep.mubr.bf16.mxu0 %v1737
        %2201 = vmatmul.mubr.bf16.gmra.mrb[0].mxu0 %v1736
        %v2202 = vpop.f32.mrb[0].mxu0
        %v2203 = vadd.f32 0.0, %v2202
        %v2204 = vpop.f32.mrb[0].mxu0
        %v2205 = vadd.f32 0.0, %v2204
        %v2206 = vpop.f32.mrb[0].mxu0
        %v2207 = vadd.f32 0.0, %v2206
        %v2208 = vpop.f32.mrb[0].mxu0
        %v2209 = vadd.f32 0.0, %v2208
        %2210 = vmatprep.mubr.bf16.mxu0 %v1739
        %2211 = vmatmul.mubr.bf16.gmra.mrb[0].mxu0 %v1738
        %v2212 = vpop.f32.mrb[0].mxu0
        %v2213 = vadd.f32 0.0, %v2212
        %v2214 = vpop.f32.mrb[0].mxu0
        %v2215 = vadd.f32 0.0, %v2214
        %v2216 = vpop.f32.mrb[0].mxu0
        %v2217 = vadd.f32 0.0, %v2216
        %v2218 = vpop.f32.mrb[0].mxu0
        %v2219 = vadd.f32 0.0, %v2218
        %2220 = vmatprep.mubr.bf16.mxu0 %v1741
        %2221 = vmatmul.mubr.bf16.gmra.mrb[0].mxu0 %v1740
        %v2222 = vpop.f32.mrb[0].mxu0
        %v2223 = vadd.f32 0.0, %v2222
        %v2224 = vpop.f32.mrb[0].mxu0
        %v2225 = vadd.f32 0.0, %v2224
        %v2226 = vpop.f32.mrb[0].mxu0
        %v2227 = vadd.f32 0.0, %v2226
        %v2228 = vpop.f32.mrb[0].mxu0
        %v2229 = vadd.f32 0.0, %v2228
        %2230 = vmatprep.mubr.bf16.mxu0 %v1743
        %2231 = vmatmul.mubr.bf16.gmra.mrb[0].mxu0 %v1742
        %v2232 = vpop.f32.mrb[0].mxu0
        %v2233 = vadd.f32 0.0, %v2232
        %v2234 = vpop.f32.mrb[0].mxu0
        %v2235 = vadd.f32 0.0, %v2234
        %v2236 = vpop.f32.mrb[0].mxu0
        %v2237 = vadd.f32 0.0, %v2236
        %v2238 = vpop.f32.mrb[0].mxu0
        %v2239 = vadd.f32 0.0, %v2238
        %2240 = vmatprep.mubr.bf16.mxu0 %v1745
        %2241 = vmatmul.mubr.bf16.gmra.mrb[0].mxu0 %v1744
        %v2242 = vpop.f32.mrb[0].mxu0
        %v2243 = vadd.f32 0.0, %v2242
        %v2244 = vpop.f32.mrb[0].mxu0
        %v2245 = vadd.f32 0.0, %v2244
        %v2246 = vpop.f32.mrb[0].mxu0
        %v2247 = vadd.f32 0.0, %v2246
        %v2248 = vpop.f32.mrb[0].mxu0
        %v2249 = vadd.f32 0.0, %v2248
        %2250 = vmatprep.mubr.bf16.mxu0 %v1747
        %2251 = vmatmul.mubr.bf16.gmra.mrb[0].mxu0 %v1746
        %v2252 = vpop.f32.mrb[0].mxu0
        %v2253 = vadd.f32 0.0, %v2252
        %v2254 = vpop.f32.mrb[0].mxu0
        %v2255 = vadd.f32 0.0, %v2254
        %v2256 = vpop.f32.mrb[0].mxu0
        %v2257 = vadd.f32 0.0, %v2256
        %v2258 = vpop.f32.mrb[0].mxu0
        %v2259 = vadd.f32 0.0, %v2258
        %2260 = vmatprep.mubr.bf16.mxu0 %v1749
        %2261 = vmatmul.mubr.bf16.gmra.mrb[0].mxu0 %v1748
        %v2262 = vpop.f32.mrb[0].mxu0
        %v2263 = vadd.f32 0.0, %v2262
        %v2264 = vpop.f32.mrb[0].mxu0
        %v2265 = vadd.f32 0.0, %v2264
        %v2266 = vpop.f32.mrb[0].mxu0
        %v2267 = vadd.f32 0.0, %v2266
        %v2268 = vpop.f32.mrb[0].mxu0
        %v2269 = vadd.f32 0.0, %v2268
        %2270 = vmatprep.mubr.bf16.mxu0 %v1751
        %2271 = vmatmul.mubr.bf16.gmra.mrb[0].mxu0 %v1750
        %v2272 = vpop.f32.mrb[0].mxu0
        %v2273 = vadd.f32 0.0, %v2272
        %v2274 = vpop.f32.mrb[0].mxu0
        %v2275 = vadd.f32 0.0, %v2274
        %v2276 = vpop.f32.mrb[0].mxu0
        %v2277 = vadd.f32 0.0, %v2276
        %v2278 = vpop.f32.mrb[0].mxu0
        %v2279 = vadd.f32 0.0, %v2278
        %2280 = vmatprep.mubr.bf16.mxu0 %v1753
        %2281 = vmatmul.mubr.bf16.gmra.mrb[0].mxu0 %v1752
        %v2282 = vpop.f32.mrb[0].mxu0
        %v2283 = vadd.f32 0.0, %v2282
        %v2284 = vpop.f32.mrb[0].mxu0
        %v2285 = vadd.f32 0.0, %v2284
        %v2286 = vpop.f32.mrb[0].mxu0
        %v2287 = vadd.f32 0.0, %v2286
        %v2288 = vpop.f32.mrb[0].mxu0
        %v2289 = vadd.f32 0.0, %v2288
        %2290 = vmatprep.mubr.bf16.mxu0 %v1755
        %2291 = vmatmul.mubr.bf16.gmra.mrb[0].mxu0 %v1754
        %v2292 = vpop.f32.mrb[0].mxu0
        %v2293 = vadd.f32 0.0, %v2292
        %v2294 = vpop.f32.mrb[0].mxu0
        %v2295 = vadd.f32 0.0, %v2294
        %v2296 = vpop.f32.mrb[0].mxu0
        %v2297 = vadd.f32 0.0, %v2296
        %v2298 = vpop.f32.mrb[0].mxu0
        %v2299 = vadd.f32 0.0, %v2298
        %2300 = vmatprep.mubr.bf16.mxu0 %v1757
        %2301 = vmatmul.mubr.bf16.gmra.mrb[0].mxu0 %v1756
        %v2302 = vpop.f32.mrb[0].mxu0
        %v2303 = vadd.f32 0.0, %v2302
        %v2304 = vpop.f32.mrb[0].mxu0
        %v2305 = vadd.f32 0.0, %v2304
        %v2306 = vpop.f32.mrb[0].mxu0
        %v2307 = vadd.f32 0.0, %v2306
        %v2308 = vpop.f32.mrb[0].mxu0
        %v2309 = vadd.f32 0.0, %v2308
        %2310 = vmatprep.mubr.bf16.mxu0 %v1759
        %2311 = vmatmul.mubr.bf16.gmra.mrb[0].mxu0 %v1758
        %v2312 = vpop.f32.mrb[0].mxu0
        %v2313 = vadd.f32 0.0, %v2312
        %v2314 = vpop.f32.mrb[0].mxu0
        %v2315 = vadd.f32 0.0, %v2314
        %v2316 = vpop.f32.mrb[0].mxu0
        %v2317 = vadd.f32 0.0, %v2316
        %v2318 = vpop.f32.mrb[0].mxu0
        %v2319 = vadd.f32 0.0, %v2318
        %2320 = vmatprep.mubr.bf16.mxu0 %v1761
        %2321 = vmatmul.mubr.bf16.gmra.mrb[0].mxu0 %v1760
        %v2322 = vpop.f32.mrb[0].mxu0
        %v2323 = vadd.f32 0.0, %v2322
        %v2324 = vpop.f32.mrb[0].mxu0
        %v2325 = vadd.f32 0.0, %v2324
        %v2326 = vpop.f32.mrb[0].mxu0
        %v2327 = vadd.f32 0.0, %v2326
        %v2328 = vpop.f32.mrb[0].mxu0
        %v2329 = vadd.f32 0.0, %v2328
        %2330 = vmatprep.mubr.bf16.mxu0 %v1763
        %2331 = vmatmul.mubr.bf16.gmra.mrb[0].mxu0 %v1762
        %v2332 = vpop.f32.mrb[0].mxu0
        %v2333 = vadd.f32 0.0, %v2332
        %v2334 = vpop.f32.mrb[0].mxu0
        %v2335 = vadd.f32 0.0, %v2334
        %v2336 = vpop.f32.mrb[0].mxu0
        %v2337 = vadd.f32 0.0, %v2336
        %v2338 = vpop.f32.mrb[0].mxu0
        %v2339 = vadd.f32 0.0, %v2338
        %2340 = vdwg.mxu0
        %v2341 = vadd.f32 %v805, %v2023
        %v2342 = vadd.f32 %v807, %v2025
        %v2343 = vadd.f32 %v809, %v2027
        %v2344 = vadd.f32 %v811, %v2029
        %v2345 = vadd.f32 %v815, %v2033
        %v2346 = vadd.f32 %v817, %v2035
        %v2347 = vadd.f32 %v819, %v2037
        %v2348 = vadd.f32 %v821, %v2039
        %v2349 = vadd.f32 %v825, %v2043
        %v2350 = vadd.f32 %v827, %v2045
        %v2351 = vadd.f32 %v829, %v2047
        %v2352 = vadd.f32 %v831, %v2049
        %v2353 = vadd.f32 %v835, %v2053
        %v2354 = vadd.f32 %v837, %v2055
        %v2355 = vadd.f32 %v839, %v2057
        %v2356 = vadd.f32 %v841, %v2059
        %v2357 = vadd.f32 %v845, %v2063
        %v2358 = vadd.f32 %v847, %v2065
        %v2359 = vadd.f32 %v849, %v2067
        %v2360 = vadd.f32 %v851, %v2069
        %v2361 = vadd.f32 %v855, %v2073
        %v2362 = vadd.f32 %v857, %v2075
        %v2363 = vadd.f32 %v859, %v2077
        %v2364 = vadd.f32 %v861, %v2079
        %v2365 = vadd.f32 %v865, %v2083
        %v2366 = vadd.f32 %v867, %v2085
        %v2367 = vadd.f32 %v869, %v2087
        %v2368 = vadd.f32 %v871, %v2089
        %v2369 = vadd.f32 %v875, %v2093
        %v2370 = vadd.f32 %v877, %v2095
        %v2371 = vadd.f32 %v879, %v2097
        %v2372 = vadd.f32 %v881, %v2099
        %v2373 = vadd.f32 %v885, %v2103
        %v2374 = vadd.f32 %v887, %v2105
        %v2375 = vadd.f32 %v889, %v2107
        %v2376 = vadd.f32 %v891, %v2109
        %v2377 = vadd.f32 %v895, %v2113
        %v2378 = vadd.f32 %v897, %v2115
        %v2379 = vadd.f32 %v899, %v2117
        %v2380 = vadd.f32 %v901, %v2119
        %v2381 = vadd.f32 %v905, %v2123
        %v2382 = vadd.f32 %v907, %v2125
        %v2383 = vadd.f32 %v909, %v2127
        %v2384 = vadd.f32 %v911, %v2129
        %v2385 = vadd.f32 %v915, %v2133
        %v2386 = vadd.f32 %v917, %v2135
        %v2387 = vadd.f32 %v919, %v2137
        %v2388 = vadd.f32 %v921, %v2139
        %v2389 = vadd.f32 %v925, %v2143
        %v2390 = vadd.f32 %v927, %v2145
        %v2391 = vadd.f32 %v929, %v2147
        %v2392 = vadd.f32 %v931, %v2149
        %v2393 = vadd.f32 %v935, %v2153
        %v2394 = vadd.f32 %v937, %v2155
        %v2395 = vadd.f32 %v939, %v2157
        %v2396 = vadd.f32 %v941, %v2159
        %v2397 = vadd.f32 %v945, %v2163
        %v2398 = vadd.f32 %v947, %v2165
        %v2399 = vadd.f32 %v949, %v2167
        %v2400 = vadd.f32 %v951, %v2169
        %v2401 = vadd.f32 %v955, %v2173
        %v2402 = vadd.f32 %v957, %v2175
        %v2403 = vadd.f32 %v959, %v2177
        %v2404 = vadd.f32 %v961, %v2179
        %v2405 = vadd.f32 %v965, %v2183
        %v2406 = vadd.f32 %v967, %v2185
        %v2407 = vadd.f32 %v969, %v2187
        %v2408 = vadd.f32 %v971, %v2189
        %v2409 = vadd.f32 %v975, %v2193
        %v2410 = vadd.f32 %v977, %v2195
        %v2411 = vadd.f32 %v979, %v2197
        %v2412 = vadd.f32 %v981, %v2199
        %v2413 = vadd.f32 %v985, %v2203
        %v2414 = vadd.f32 %v987, %v2205
        %v2415 = vadd.f32 %v989, %v2207
        %v2416 = vadd.f32 %v991, %v2209
        %v2417 = vadd.f32 %v995, %v2213
        %v2418 = vadd.f32 %v997, %v2215
        %v2419 = vadd.f32 %v999, %v2217
        %v2420 = vadd.f32 %v1001, %v2219
        %v2421 = vadd.f32 %v1005, %v2223
        %v2422 = vadd.f32 %v1007, %v2225
        %v2423 = vadd.f32 %v1009, %v2227
        %v2424 = vadd.f32 %v1011, %v2229
        %v2425 = vadd.f32 %v1015, %v2233
        %v2426 = vadd.f32 %v1017, %v2235
        %v2427 = vadd.f32 %v1019, %v2237
        %v2428 = vadd.f32 %v1021, %v2239
        %v2429 = vadd.f32 %v1025, %v2243
        %v2430 = vadd.f32 %v1027, %v2245
        %v2431 = vadd.f32 %v1029, %v2247
        %v2432 = vadd.f32 %v1031, %v2249
        %v2433 = vadd.f32 %v1035, %v2253
        %v2434 = vadd.f32 %v1037, %v2255
        %v2435 = vadd.f32 %v1039, %v2257
        %v2436 = vadd.f32 %v1041, %v2259
        %v2437 = vadd.f32 %v1045, %v2263
        %v2438 = vadd.f32 %v1047, %v2265
        %v2439 = vadd.f32 %v1049, %v2267
        %v2440 = vadd.f32 %v1051, %v2269
        %v2441 = vadd.f32 %v1055, %v2273
        %v2442 = vadd.f32 %v1057, %v2275
        %v2443 = vadd.f32 %v1059, %v2277
        %v2444 = vadd.f32 %v1061, %v2279
        %v2445 = vadd.f32 %v1065, %v2283
        %v2446 = vadd.f32 %v1067, %v2285
        %v2447 = vadd.f32 %v1069, %v2287
        %v2448 = vadd.f32 %v1071, %v2289
        %v2449 = vadd.f32 %v1075, %v2293
        %v2450 = vadd.f32 %v1077, %v2295
        %v2451 = vadd.f32 %v1079, %v2297
        %v2452 = vadd.f32 %v1081, %v2299
        %v2453 = vadd.f32 %v1085, %v2303
        %v2454 = vadd.f32 %v1087, %v2305
        %v2455 = vadd.f32 %v1089, %v2307
        %v2456 = vadd.f32 %v1091, %v2309
        %v2457 = vadd.f32 %v1095, %v2313
        %v2458 = vadd.f32 %v1097, %v2315
        %v2459 = vadd.f32 %v1099, %v2317
        %v2460 = vadd.f32 %v1101, %v2319
        %v2461 = vadd.f32 %v1105, %v2323
        %v2462 = vadd.f32 %v1107, %v2325
        %v2463 = vadd.f32 %v1109, %v2327
        %v2464 = vadd.f32 %v1111, %v2329
        %v2465 = vadd.f32 %v1115, %v2333
        %v2466 = vadd.f32 %v1117, %v2335
        %v2467 = vadd.f32 %v1119, %v2337
        %v2468 = vadd.f32 %v1121, %v2339
        %v2470 = vlaneseq
        %v2471 = vshrl.u32 %v2470, 7
        %v2472 = vsub.s32 0, %v2471
        %v2473 = vrot.slane %v647, %v2472
        %v2474 = vlaneseq
        %v2475 = vshrl.u32 %v2474, 7
        %v2476 = vsub.s32 4, %v2475
        %v2477 = vrot.slane %v647, %v2476
        %v2480 = vlaneseq
        %v2481 = vshrl.u32 %v2480, 7
        %v2482 = vsub.s32 0, %v2481
        %v2483 = vrot.slane %v2473, %v2482
        %v2484 = vlaneseq
        %v2485 = vshrl.u32 %v2484, 7
        %v2486 = vsub.s32 0, %v2485
        %v2487 = vrot.slane %v2477, %v2486
        %v2488 = vadd.f32 %v2341, %v2483
        %v2489 = vadd.f32 %v2342, %v2487
        %v2490 = vadd.f32 %v2343, %v2483
        %v2491 = vadd.f32 %v2344, %v2487
        %v2492 = vadd.f32 %v2345, %v2483
        %v2493 = vadd.f32 %v2346, %v2487
        %v2494 = vadd.f32 %v2347, %v2483
        %v2495 = vadd.f32 %v2348, %v2487
        %v2496 = vadd.f32 %v2349, %v2483
        %v2497 = vadd.f32 %v2350, %v2487
        %v2498 = vadd.f32 %v2351, %v2483
        %v2499 = vadd.f32 %v2352, %v2487
        %v2500 = vadd.f32 %v2353, %v2483
        %v2501 = vadd.f32 %v2354, %v2487
        %v2502 = vadd.f32 %v2355, %v2483
        %v2503 = vadd.f32 %v2356, %v2487
        %v2504 = vadd.f32 %v2357, %v2483
        %v2505 = vadd.f32 %v2358, %v2487
        %v2506 = vadd.f32 %v2359, %v2483
        %v2507 = vadd.f32 %v2360, %v2487
        %v2508 = vadd.f32 %v2361, %v2483
        %v2509 = vadd.f32 %v2362, %v2487
        %v2510 = vadd.f32 %v2363, %v2483
        %v2511 = vadd.f32 %v2364, %v2487
        %v2512 = vadd.f32 %v2365, %v2483
        %v2513 = vadd.f32 %v2366, %v2487
        %v2514 = vadd.f32 %v2367, %v2483
        %v2515 = vadd.f32 %v2368, %v2487
        %v2516 = vadd.f32 %v2369, %v2483
        %v2517 = vadd.f32 %v2370, %v2487
        %v2518 = vadd.f32 %v2371, %v2483
        %v2519 = vadd.f32 %v2372, %v2487
        %v2520 = vadd.f32 %v2373, %v2483
        %v2521 = vadd.f32 %v2374, %v2487
        %v2522 = vadd.f32 %v2375, %v2483
        %v2523 = vadd.f32 %v2376, %v2487
        %v2524 = vadd.f32 %v2377, %v2483
        %v2525 = vadd.f32 %v2378, %v2487
        %v2526 = vadd.f32 %v2379, %v2483
        %v2527 = vadd.f32 %v2380, %v2487
        %v2528 = vadd.f32 %v2381, %v2483
        %v2529 = vadd.f32 %v2382, %v2487
        %v2530 = vadd.f32 %v2383, %v2483
        %v2531 = vadd.f32 %v2384, %v2487
        %v2532 = vadd.f32 %v2385, %v2483
        %v2533 = vadd.f32 %v2386, %v2487
        %v2534 = vadd.f32 %v2387, %v2483
        %v2535 = vadd.f32 %v2388, %v2487
        %v2536 = vadd.f32 %v2389, %v2483
        %v2537 = vadd.f32 %v2390, %v2487
        %v2538 = vadd.f32 %v2391, %v2483
        %v2539 = vadd.f32 %v2392, %v2487
        %v2540 = vadd.f32 %v2393, %v2483
        %v2541 = vadd.f32 %v2394, %v2487
        %v2542 = vadd.f32 %v2395, %v2483
        %v2543 = vadd.f32 %v2396, %v2487
        %v2544 = vadd.f32 %v2397, %v2483
        %v2545 = vadd.f32 %v2398, %v2487
        %v2546 = vadd.f32 %v2399, %v2483
        %v2547 = vadd.f32 %v2400, %v2487
        %v2548 = vadd.f32 %v2401, %v2483
        %v2549 = vadd.f32 %v2402, %v2487
        %v2550 = vadd.f32 %v2403, %v2483
        %v2551 = vadd.f32 %v2404, %v2487
        %v2552 = vadd.f32 %v2405, %v2483
        %v2553 = vadd.f32 %v2406, %v2487
        %v2554 = vadd.f32 %v2407, %v2483
        %v2555 = vadd.f32 %v2408, %v2487
        %v2556 = vadd.f32 %v2409, %v2483
        %v2557 = vadd.f32 %v2410, %v2487
        %v2558 = vadd.f32 %v2411, %v2483
        %v2559 = vadd.f32 %v2412, %v2487
        %v2560 = vadd.f32 %v2413, %v2483
        %v2561 = vadd.f32 %v2414, %v2487
        %v2562 = vadd.f32 %v2415, %v2483
        %v2563 = vadd.f32 %v2416, %v2487
        %v2564 = vadd.f32 %v2417, %v2483
        %v2565 = vadd.f32 %v2418, %v2487
        %v2566 = vadd.f32 %v2419, %v2483
        %v2567 = vadd.f32 %v2420, %v2487
        %v2568 = vadd.f32 %v2421, %v2483
        %v2569 = vadd.f32 %v2422, %v2487
        %v2570 = vadd.f32 %v2423, %v2483
        %v2571 = vadd.f32 %v2424, %v2487
        %v2572 = vadd.f32 %v2425, %v2483
        %v2573 = vadd.f32 %v2426, %v2487
        %v2574 = vadd.f32 %v2427, %v2483
        %v2575 = vadd.f32 %v2428, %v2487
        %v2576 = vadd.f32 %v2429, %v2483
        %v2577 = vadd.f32 %v2430, %v2487
        %v2578 = vadd.f32 %v2431, %v2483
        %v2579 = vadd.f32 %v2432, %v2487
        %v2580 = vadd.f32 %v2433, %v2483
        %v2581 = vadd.f32 %v2434, %v2487
        %v2582 = vadd.f32 %v2435, %v2483
        %v2583 = vadd.f32 %v2436, %v2487
        %v2584 = vadd.f32 %v2437, %v2483
        %v2585 = vadd.f32 %v2438, %v2487
        %v2586 = vadd.f32 %v2439, %v2483
        %v2587 = vadd.f32 %v2440, %v2487
        %v2588 = vadd.f32 %v2441, %v2483
        %v2589 = vadd.f32 %v2442, %v2487
        %v2590 = vadd.f32 %v2443, %v2483
        %v2591 = vadd.f32 %v2444, %v2487
        %v2592 = vadd.f32 %v2445, %v2483
        %v2593 = vadd.f32 %v2446, %v2487
        %v2594 = vadd.f32 %v2447, %v2483
        %v2595 = vadd.f32 %v2448, %v2487
        %v2596 = vadd.f32 %v2449, %v2483
        %v2597 = vadd.f32 %v2450, %v2487
        %v2598 = vadd.f32 %v2451, %v2483
        %v2599 = vadd.f32 %v2452, %v2487
        %v2600 = vadd.f32 %v2453, %v2483
        %v2601 = vadd.f32 %v2454, %v2487
        %v2602 = vadd.f32 %v2455, %v2483
        %v2603 = vadd.f32 %v2456, %v2487
        %v2604 = vadd.f32 %v2457, %v2483
        %v2605 = vadd.f32 %v2458, %v2487
        %v2606 = vadd.f32 %v2459, %v2483
        %v2607 = vadd.f32 %v2460, %v2487
        %v2608 = vadd.f32 %v2461, %v2483
        %v2609 = vadd.f32 %v2462, %v2487
        %v2610 = vadd.f32 %v2463, %v2483
        %v2611 = vadd.f32 %v2464, %v2487
        %v2612 = vadd.f32 %v2465, %v2483
        %v2613 = vadd.f32 %v2466, %v2487
        %v2614 = vadd.f32 %v2467, %v2483
        %v2615 = vadd.f32 %v2468, %v2487
        %v2616 = vmax.f32 %v2488, 0.0
        %v2617 = vmax.f32 %v2489, 0.0
        %v2618 = vmax.f32 %v2490, 0.0
        %v2619 = vmax.f32 %v2491, 0.0
        %v2620 = vmax.f32 %v2492, 0.0
        %v2621 = vmax.f32 %v2493, 0.0
        %v2622 = vmax.f32 %v2494, 0.0
        %v2623 = vmax.f32 %v2495, 0.0
        %v2624 = vmax.f32 %v2496, 0.0
        %v2625 = vmax.f32 %v2497, 0.0
        %v2626 = vmax.f32 %v2498, 0.0
        %v2627 = vmax.f32 %v2499, 0.0
        %v2628 = vmax.f32 %v2500, 0.0
        %v2629 = vmax.f32 %v2501, 0.0
        %v2630 = vmax.f32 %v2502, 0.0
        %v2631 = vmax.f32 %v2503, 0.0
        %v2632 = vmax.f32 %v2504, 0.0
        %v2633 = vmax.f32 %v2505, 0.0
        %v2634 = vmax.f32 %v2506, 0.0
        %v2635 = vmax.f32 %v2507, 0.0
        %v2636 = vmax.f32 %v2508, 0.0
        %v2637 = vmax.f32 %v2509, 0.0
        %v2638 = vmax.f32 %v2510, 0.0
        %v2639 = vmax.f32 %v2511, 0.0
        %v2640 = vmax.f32 %v2512, 0.0
        %v2641 = vmax.f32 %v2513, 0.0
        %v2642 = vmax.f32 %v2514, 0.0
        %v2643 = vmax.f32 %v2515, 0.0
        %v2644 = vmax.f32 %v2516, 0.0
        %v2645 = vmax.f32 %v2517, 0.0
        %v2646 = vmax.f32 %v2518, 0.0
        %v2647 = vmax.f32 %v2519, 0.0
        %v2648 = vmax.f32 %v2520, 0.0
        %v2649 = vmax.f32 %v2521, 0.0
        %v2650 = vmax.f32 %v2522, 0.0
        %v2651 = vmax.f32 %v2523, 0.0
        %v2652 = vmax.f32 %v2524, 0.0
        %v2653 = vmax.f32 %v2525, 0.0
        %v2654 = vmax.f32 %v2526, 0.0
        %v2655 = vmax.f32 %v2527, 0.0
        %v2656 = vmax.f32 %v2528, 0.0
        %v2657 = vmax.f32 %v2529, 0.0
        %v2658 = vmax.f32 %v2530, 0.0
        %v2659 = vmax.f32 %v2531, 0.0
        %v2660 = vmax.f32 %v2532, 0.0
        %v2661 = vmax.f32 %v2533, 0.0
        %v2662 = vmax.f32 %v2534, 0.0
        %v2663 = vmax.f32 %v2535, 0.0
        %v2664 = vmax.f32 %v2536, 0.0
        %v2665 = vmax.f32 %v2537, 0.0
        %v2666 = vmax.f32 %v2538, 0.0
        %v2667 = vmax.f32 %v2539, 0.0
        %v2668 = vmax.f32 %v2540, 0.0
        %v2669 = vmax.f32 %v2541, 0.0
        %v2670 = vmax.f32 %v2542, 0.0
        %v2671 = vmax.f32 %v2543, 0.0
        %v2672 = vmax.f32 %v2544, 0.0
        %v2673 = vmax.f32 %v2545, 0.0
        %v2674 = vmax.f32 %v2546, 0.0
        %v2675 = vmax.f32 %v2547, 0.0
        %v2676 = vmax.f32 %v2548, 0.0
        %v2677 = vmax.f32 %v2549, 0.0
        %v2678 = vmax.f32 %v2550, 0.0
        %v2679 = vmax.f32 %v2551, 0.0
        %v2680 = vmax.f32 %v2552, 0.0
        %v2681 = vmax.f32 %v2553, 0.0
        %v2682 = vmax.f32 %v2554, 0.0
        %v2683 = vmax.f32 %v2555, 0.0
        %v2684 = vmax.f32 %v2556, 0.0
        %v2685 = vmax.f32 %v2557, 0.0
        %v2686 = vmax.f32 %v2558, 0.0
        %v2687 = vmax.f32 %v2559, 0.0
        %v2688 = vmax.f32 %v2560, 0.0
        %v2689 = vmax.f32 %v2561, 0.0
        %v2690 = vmax.f32 %v2562, 0.0
        %v2691 = vmax.f32 %v2563, 0.0
        %v2692 = vmax.f32 %v2564, 0.0
        %v2693 = vmax.f32 %v2565, 0.0
        %v2694 = vmax.f32 %v2566, 0.0
        %v2695 = vmax.f32 %v2567, 0.0
        %v2696 = vmax.f32 %v2568, 0.0
        %v2697 = vmax.f32 %v2569, 0.0
        %v2698 = vmax.f32 %v2570, 0.0
        %v2699 = vmax.f32 %v2571, 0.0
        %v2700 = vmax.f32 %v2572, 0.0
        %v2701 = vmax.f32 %v2573, 0.0
        %v2702 = vmax.f32 %v2574, 0.0
        %v2703 = vmax.f32 %v2575, 0.0
        %v2704 = vmax.f32 %v2576, 0.0
        %v2705 = vmax.f32 %v2577, 0.0
        %v2706 = vmax.f32 %v2578, 0.0
        %v2707 = vmax.f32 %v2579, 0.0
        %v2708 = vmax.f32 %v2580, 0.0
        %v2709 = vmax.f32 %v2581, 0.0
        %v2710 = vmax.f32 %v2582, 0.0
        %v2711 = vmax.f32 %v2583, 0.0
        %v2712 = vmax.f32 %v2584, 0.0
        %v2713 = vmax.f32 %v2585, 0.0
        %v2714 = vmax.f32 %v2586, 0.0
        %v2715 = vmax.f32 %v2587, 0.0
        %v2716 = vmax.f32 %v2588, 0.0
        %v2717 = vmax.f32 %v2589, 0.0
        %v2718 = vmax.f32 %v2590, 0.0
        %v2719 = vmax.f32 %v2591, 0.0
        %v2720 = vmax.f32 %v2592, 0.0
        %v2721 = vmax.f32 %v2593, 0.0
        %v2722 = vmax.f32 %v2594, 0.0
        %v2723 = vmax.f32 %v2595, 0.0
        %v2724 = vmax.f32 %v2596, 0.0
        %v2725 = vmax.f32 %v2597, 0.0
        %v2726 = vmax.f32 %v2598, 0.0
        %v2727 = vmax.f32 %v2599, 0.0
        %v2728 = vmax.f32 %v2600, 0.0
        %v2729 = vmax.f32 %v2601, 0.0
        %v2730 = vmax.f32 %v2602, 0.0
        %v2731 = vmax.f32 %v2603, 0.0
        %v2732 = vmax.f32 %v2604, 0.0
        %v2733 = vmax.f32 %v2605, 0.0
        %v2734 = vmax.f32 %v2606, 0.0
        %v2735 = vmax.f32 %v2607, 0.0
        %v2736 = vmax.f32 %v2608, 0.0
        %v2737 = vmax.f32 %v2609, 0.0
        %v2738 = vmax.f32 %v2610, 0.0
        %v2739 = vmax.f32 %v2611, 0.0
        %v2740 = vmax.f32 %v2612, 0.0
        %v2741 = vmax.f32 %v2613, 0.0
        %v2742 = vmax.f32 %v2614, 0.0
        %v2743 = vmax.f32 %v2615, 0.0
        %v2744 = vpack.c.bf16 %v2618, %v2616
        %v2745 = vpack.c.bf16 %v2619, %v2617
        %v2746 = vpack.c.bf16 %v2622, %v2620
        %v2747 = vpack.c.bf16 %v2623, %v2621
        %v2748 = vpack.c.bf16 %v2626, %v2624
        %v2749 = vpack.c.bf16 %v2627, %v2625
        %v2750 = vpack.c.bf16 %v2630, %v2628
        %v2751 = vpack.c.bf16 %v2631, %v2629
        %v2752 = vpack.c.bf16 %v2634, %v2632
        %v2753 = vpack.c.bf16 %v2635, %v2633
        %v2754 = vpack.c.bf16 %v2638, %v2636
        %v2755 = vpack.c.bf16 %v2639, %v2637
        %v2756 = vpack.c.bf16 %v2642, %v2640
        %v2757 = vpack.c.bf16 %v2643, %v2641
        %v2758 = vpack.c.bf16 %v2646, %v2644
        %v2759 = vpack.c.bf16 %v2647, %v2645
        %v2760 = vpack.c.bf16 %v2650, %v2648
        %v2761 = vpack.c.bf16 %v2651, %v2649
        %v2762 = vpack.c.bf16 %v2654, %v2652
        %v2763 = vpack.c.bf16 %v2655, %v2653
        %v2764 = vpack.c.bf16 %v2658, %v2656
        %v2765 = vpack.c.bf16 %v2659, %v2657
        %v2766 = vpack.c.bf16 %v2662, %v2660
        %v2767 = vpack.c.bf16 %v2663, %v2661
        %v2768 = vpack.c.bf16 %v2666, %v2664
        %v2769 = vpack.c.bf16 %v2667, %v2665
        %v2770 = vpack.c.bf16 %v2670, %v2668
        %v2771 = vpack.c.bf16 %v2671, %v2669
        %v2772 = vpack.c.bf16 %v2674, %v2672
        %v2773 = vpack.c.bf16 %v2675, %v2673
        %v2774 = vpack.c.bf16 %v2678, %v2676
        %v2775 = vpack.c.bf16 %v2679, %v2677
        %v2776 = vpack.c.bf16 %v2682, %v2680
        %v2777 = vpack.c.bf16 %v2683, %v2681
        %v2778 = vpack.c.bf16 %v2686, %v2684
        %v2779 = vpack.c.bf16 %v2687, %v2685
        %v2780 = vpack.c.bf16 %v2690, %v2688
        %v2781 = vpack.c.bf16 %v2691, %v2689
        %v2782 = vpack.c.bf16 %v2694, %v2692
        %v2783 = vpack.c.bf16 %v2695, %v2693
        %v2784 = vpack.c.bf16 %v2698, %v2696
        %v2785 = vpack.c.bf16 %v2699, %v2697
        %v2786 = vpack.c.bf16 %v2702, %v2700
        %v2787 = vpack.c.bf16 %v2703, %v2701
        %v2788 = vpack.c.bf16 %v2706, %v2704
        %v2789 = vpack.c.bf16 %v2707, %v2705
        %v2790 = vpack.c.bf16 %v2710, %v2708
        %v2791 = vpack.c.bf16 %v2711, %v2709
        %v2792 = vpack.c.bf16 %v2714, %v2712
        %v2793 = vpack.c.bf16 %v2715, %v2713
        %v2794 = vpack.c.bf16 %v2718, %v2716
        %v2795 = vpack.c.bf16 %v2719, %v2717
        %v2796 = vpack.c.bf16 %v2722, %v2720
        %v2797 = vpack.c.bf16 %v2723, %v2721
        %v2798 = vpack.c.bf16 %v2726, %v2724
        %v2799 = vpack.c.bf16 %v2727, %v2725
        %v2800 = vpack.c.bf16 %v2730, %v2728
        %v2801 = vpack.c.bf16 %v2731, %v2729
        %v2802 = vpack.c.bf16 %v2734, %v2732
        %v2803 = vpack.c.bf16 %v2735, %v2733
        %v2804 = vpack.c.bf16 %v2738, %v2736
        %v2805 = vpack.c.bf16 %v2739, %v2737
        %v2806 = vpack.c.bf16 %v2742, %v2740
        %v2807 = vpack.c.bf16 %v2743, %v2741
        %v2808 = vld [vmem:[#allocation2] sm:$0xff]
        %v2809 = vld [vmem:[#allocation2 + $0x8] sm:$0xff]
        %v2810 = vld [vmem:[#allocation2 + $0x10] sm:$0xff]
        %v2811 = vld [vmem:[#allocation2 + $0x18] sm:$0xff]
        %v2812 = vld [vmem:[#allocation2 + $0x20] sm:$0xff]
        %v2813 = vld [vmem:[#allocation2 + $0x28] sm:$0xff]
        %v2814 = vld [vmem:[#allocation2 + $0x30] sm:$0xff]
        %v2815 = vld [vmem:[#allocation2 + $0x38] sm:$0xff]
        %v2816 = vld [vmem:[#allocation2 + $0x40] sm:$0xff]
        %v2817 = vld [vmem:[#allocation2 + $0x48] sm:$0xff]
        %v2818 = vld [vmem:[#allocation2 + $0x50] sm:$0xff]
        %v2819 = vld [vmem:[#allocation2 + $0x58] sm:$0xff]
        %v2820 = vld [vmem:[#allocation2 + $0x60] sm:$0xff]
        %v2821 = vld [vmem:[#allocation2 + $0x68] sm:$0xff]
        %v2822 = vld [vmem:[#allocation2 + $0x70] sm:$0xff]
        %v2823 = vld [vmem:[#allocation2 + $0x78] sm:$0xff]
        %v2824 = vld [vmem:[#allocation2 + $0x80] sm:$0xff]
        %v2825 = vld [vmem:[#allocation2 + $0x88] sm:$0xff]
        %v2826 = vld [vmem:[#allocation2 + $0x90] sm:$0xff]
        %v2827 = vld [vmem:[#allocation2 + $0x98] sm:$0xff]
        %v2828 = vld [vmem:[#allocation2 + $0xa0] sm:$0xff]
        %v2829 = vld [vmem:[#allocation2 + $0xa8] sm:$0xff]
        %v2830 = vld [vmem:[#allocation2 + $0xb0] sm:$0xff]
        %v2831 = vld [vmem:[#allocation2 + $0xb8] sm:$0xff]
        %v2832 = vld [vmem:[#allocation2 + $0xc0] sm:$0xff]
        %v2833 = vld [vmem:[#allocation2 + $0xc8] sm:$0xff]
        %v2834 = vld [vmem:[#allocation2 + $0xd0] sm:$0xff]
        %v2835 = vld [vmem:[#allocation2 + $0xd8] sm:$0xff]
        %v2836 = vld [vmem:[#allocation2 + $0xe0] sm:$0xff]
        %v2837 = vld [vmem:[#allocation2 + $0xe8] sm:$0xff]
        %v2838 = vld [vmem:[#allocation2 + $0xf0] sm:$0xff]
        %v2839 = vld [vmem:[#allocation2 + $0xf8] sm:$0xff]
        %v2840 = vlaneseq
        %v2841 = vshrl.u32 %v2840, 7
        %v2842 = vsub.s32 1, %v2841
        %v2843 = vrot.slane %v647, %v2842
        %v2844 = vlaneseq
        %v2845 = vshrl.u32 %v2844, 7
        %v2846 = vsub.s32 5, %v2845
        %v2847 = vrot.slane %v647, %v2846
        %v2850 = vlaneseq
        %v2851 = vshrl.u32 %v2850, 7
        %v2852 = vsub.s32 1, %v2851
        %v2853 = vrot.slane %v2843, %v2852
        %v2854 = vlaneseq
        %v2855 = vshrl.u32 %v2854, 7
        %v2856 = vsub.s32 1, %v2855
        %v2857 = vrot.slane %v2847, %v2856
        %v2890 = vunpack.c.l.b16 %v2808
        %v2891 = vunpack.c.h.b16 %v2808
        %v2892 = vunpack.c.l.b16 %v2809
        %v2893 = vunpack.c.h.b16 %v2809
        %v2894 = vunpack.c.l.b16 %v2810
        %v2895 = vunpack.c.h.b16 %v2810
        %v2896 = vunpack.c.l.b16 %v2811
        %v2897 = vunpack.c.h.b16 %v2811
        %v2898 = vunpack.c.l.b16 %v2812
        %v2899 = vunpack.c.h.b16 %v2812
        %v2900 = vunpack.c.l.b16 %v2813
        %v2901 = vunpack.c.h.b16 %v2813
        %v2902 = vunpack.c.l.b16 %v2814
        %v2903 = vunpack.c.h.b16 %v2814
        %v2904 = vunpack.c.l.b16 %v2815
        %v2905 = vunpack.c.h.b16 %v2815
        %v2906 = vunpack.c.l.b16 %v2816
        %v2907 = vunpack.c.h.b16 %v2816
        %v2908 = vunpack.c.l.b16 %v2817
        %v2909 = vunpack.c.h.b16 %v2817
        %v2910 = vunpack.c.l.b16 %v2818
        %v2911 = vunpack.c.h.b16 %v2818
        %v2912 = vunpack.c.l.b16 %v2819
        %v2913 = vunpack.c.h.b16 %v2819
        %v2914 = vunpack.c.l.b16 %v2820
        %v2915 = vunpack.c.h.b16 %v2820
        %v2916 = vunpack.c.l.b16 %v2821
        %v2917 = vunpack.c.h.b16 %v2821
        %v2918 = vunpack.c.l.b16 %v2822
        %v2919 = vunpack.c.h.b16 %v2822
        %v2920 = vunpack.c.l.b16 %v2823
        %v2921 = vunpack.c.h.b16 %v2823
        %v2922 = vunpack.c.l.b16 %v2824
        %v2923 = vunpack.c.h.b16 %v2824
        %v2924 = vunpack.c.l.b16 %v2825
        %v2925 = vunpack.c.h.b16 %v2825
        %v2926 = vunpack.c.l.b16 %v2826
        %v2927 = vunpack.c.h.b16 %v2826
        %v2928 = vunpack.c.l.b16 %v2827
        %v2929 = vunpack.c.h.b16 %v2827
        %v2930 = vunpack.c.l.b16 %v2828
        %v2931 = vunpack.c.h.b16 %v2828
        %v2932 = vunpack.c.l.b16 %v2829
        %v2933 = vunpack.c.h.b16 %v2829
        %v2934 = vunpack.c.l.b16 %v2830
        %v2935 = vunpack.c.h.b16 %v2830
        %v2936 = vunpack.c.l.b16 %v2831
        %v2937 = vunpack.c.h.b16 %v2831
        %v2938 = vunpack.c.l.b16 %v2832
        %v2939 = vunpack.c.h.b16 %v2832
        %v2940 = vunpack.c.l.b16 %v2833
        %v2941 = vunpack.c.h.b16 %v2833
        %v2942 = vunpack.c.l.b16 %v2834
        %v2943 = vunpack.c.h.b16 %v2834
        %v2944 = vunpack.c.l.b16 %v2835
        %v2945 = vunpack.c.h.b16 %v2835
        %v2946 = vunpack.c.l.b16 %v2836
        %v2947 = vunpack.c.h.b16 %v2836
        %v2948 = vunpack.c.l.b16 %v2837
        %v2949 = vunpack.c.h.b16 %v2837
        %v2950 = vunpack.c.l.b16 %v2838
        %v2951 = vunpack.c.h.b16 %v2838
        %v2952 = vunpack.c.l.b16 %v2839
        %v2953 = vunpack.c.h.b16 %v2839
        %v2954 = vpack.c.b16 %v2892, %v2890
        %v2955 = vpack.c.b16 %v2893, %v2891
        %v2956 = vpack.c.b16 %v2896, %v2894
        %v2957 = vpack.c.b16 %v2897, %v2895
        %v2958 = vpack.c.b16 %v2900, %v2898
        %v2959 = vpack.c.b16 %v2901, %v2899
        %v2960 = vpack.c.b16 %v2904, %v2902
        %v2961 = vpack.c.b16 %v2905, %v2903
        %v2962 = vpack.c.b16 %v2908, %v2906
        %v2963 = vpack.c.b16 %v2909, %v2907
        %v2964 = vpack.c.b16 %v2912, %v2910
        %v2965 = vpack.c.b16 %v2913, %v2911
        %v2966 = vpack.c.b16 %v2916, %v2914
        %v2967 = vpack.c.b16 %v2917, %v2915
        %v2968 = vpack.c.b16 %v2920, %v2918
        %v2969 = vpack.c.b16 %v2921, %v2919
        %v2970 = vpack.c.b16 %v2924, %v2922
        %v2971 = vpack.c.b16 %v2925, %v2923
        %v2972 = vpack.c.b16 %v2928, %v2926
        %v2973 = vpack.c.b16 %v2929, %v2927
        %v2974 = vpack.c.b16 %v2932, %v2930
        %v2975 = vpack.c.b16 %v2933, %v2931
        %v2976 = vpack.c.b16 %v2936, %v2934
        %v2977 = vpack.c.b16 %v2937, %v2935
        %v2978 = vpack.c.b16 %v2940, %v2938
        %v2979 = vpack.c.b16 %v2941, %v2939
        %v2980 = vpack.c.b16 %v2944, %v2942
        %v2981 = vpack.c.b16 %v2945, %v2943
        %v2982 = vpack.c.b16 %v2948, %v2946
        %v2983 = vpack.c.b16 %v2949, %v2947
        %v2984 = vpack.c.b16 %v2952, %v2950
        %v2985 = vpack.c.b16 %v2953, %v2951
        %3018 = vmatprep.subr.bf16.mxu0 %v2955
        %3019 = vmatpush1.bf16.msra.mxu0 %v2954
        %3020 = vmatprep.subr.bf16.mxu0 %v2957
        %3021 = vmatpush1.bf16.msra.mxu0 %v2956
        %3022 = vmatprep.subr.bf16.mxu0 %v2959
        %3023 = vmatpush1.bf16.msra.mxu0 %v2958
        %3024 = vmatprep.subr.bf16.mxu0 %v2961
        %3025 = vmatpush1.bf16.msra.mxu0 %v2960
        %3026 = vmatprep.subr.bf16.mxu0 %v2963
        %3027 = vmatpush1.bf16.msra.mxu0 %v2962
        %3028 = vmatprep.subr.bf16.mxu0 %v2965
        %3029 = vmatpush1.bf16.msra.mxu0 %v2964
        %3030 = vmatprep.subr.bf16.mxu0 %v2967
        %3031 = vmatpush1.bf16.msra.mxu0 %v2966
        %3032 = vmatprep.subr.bf16.mxu0 %v2969
        %3033 = vmatpush1.bf16.msra.mxu0 %v2968
        %3034 = vmatprep.subr.bf16.mxu0 %v2971
        %3035 = vmatpush1.bf16.msra.mxu0 %v2970
        %3036 = vmatprep.subr.bf16.mxu0 %v2973
        %3037 = vmatpush1.bf16.msra.mxu0 %v2972
        %3038 = vmatprep.subr.bf16.mxu0 %v2975
        %3039 = vmatpush1.bf16.msra.mxu0 %v2974
        %3040 = vmatprep.subr.bf16.mxu0 %v2977
        %3041 = vmatpush1.bf16.msra.mxu0 %v2976
        %3042 = vmatprep.subr.bf16.mxu0 %v2979
        %3043 = vmatpush1.bf16.msra.mxu0 %v2978
        %3044 = vmatprep.subr.bf16.mxu0 %v2981
        %3045 = vmatpush1.bf16.msra.mxu0 %v2980
        %3046 = vmatprep.subr.bf16.mxu0 %v2983
        %3047 = vmatpush1.bf16.msra.mxu0 %v2982
        %3048 = vmatprep.subr.bf16.mxu0 %v2985
        %3049 = vmatpush1.bf16.msra.mxu0 %v2984
        %3050 = vmatprep.mubr.bf16.mxu0 %v2745
        %3051 = vmatmul.mubr.bf16.gmra.mrb[0].mxu0 %v2744
        %v3052 = vpop.f32.mrb[0].mxu0
        %v3053 = vadd.f32 %v2853, %v3052
        %v3054 = vpop.f32.mrb[0].mxu0
        %v3055 = vadd.f32 %v2857, %v3054
        %v3056 = vpop.f32.mrb[0].mxu0
        %v3057 = vadd.f32 %v2853, %v3056
        %v3058 = vpop.f32.mrb[0].mxu0
        %v3059 = vadd.f32 %v2857, %v3058
        %3060 = vmatprep.mubr.bf16.mxu0 %v2747
        %3061 = vmatmul.mubr.bf16.gmra.mrb[0].mxu0 %v2746
        %v3062 = vpop.f32.mrb[0].mxu0
        %v3063 = vadd.f32 %v2853, %v3062
        %v3064 = vpop.f32.mrb[0].mxu0
        %v3065 = vadd.f32 %v2857, %v3064
        %v3066 = vpop.f32.mrb[0].mxu0
        %v3067 = vadd.f32 %v2853, %v3066
        %v3068 = vpop.f32.mrb[0].mxu0
        %v3069 = vadd.f32 %v2857, %v3068
        %3070 = vmatprep.mubr.bf16.mxu0 %v2749
        %3071 = vmatmul.mubr.bf16.gmra.mrb[0].mxu0 %v2748
        %v3072 = vpop.f32.mrb[0].mxu0
        %v3073 = vadd.f32 %v2853, %v3072
        %v3074 = vpop.f32.mrb[0].mxu0
        %v3075 = vadd.f32 %v2857, %v3074
        %v3076 = vpop.f32.mrb[0].mxu0
        %v3077 = vadd.f32 %v2853, %v3076
        %v3078 = vpop.f32.mrb[0].mxu0
        %v3079 = vadd.f32 %v2857, %v3078
        %3080 = vmatprep.mubr.bf16.mxu0 %v2751
        %3081 = vmatmul.mubr.bf16.gmra.mrb[0].mxu0 %v2750
        %v3082 = vpop.f32.mrb[0].mxu0
        %v3083 = vadd.f32 %v2853, %v3082
        %v3084 = vpop.f32.mrb[0].mxu0
        %v3085 = vadd.f32 %v2857, %v3084
        %v3086 = vpop.f32.mrb[0].mxu0
        %v3087 = vadd.f32 %v2853, %v3086
        %v3088 = vpop.f32.mrb[0].mxu0
        %v3089 = vadd.f32 %v2857, %v3088
        %3090 = vmatprep.mubr.bf16.mxu0 %v2753
        %3091 = vmatmul.mubr.bf16.gmra.mrb[0].mxu0 %v2752
        %v3092 = vpop.f32.mrb[0].mxu0
        %v3093 = vadd.f32 %v2853, %v3092
        %v3094 = vpop.f32.mrb[0].mxu0
        %v3095 = vadd.f32 %v2857, %v3094
        %v3096 = vpop.f32.mrb[0].mxu0
        %v3097 = vadd.f32 %v2853, %v3096
        %v3098 = vpop.f32.mrb[0].mxu0
        %v3099 = vadd.f32 %v2857, %v3098
        %3100 = vmatprep.mubr.bf16.mxu0 %v2755
        %3101 = vmatmul.mubr.bf16.gmra.mrb[0].mxu0 %v2754
        %v3102 = vpop.f32.mrb[0].mxu0
        %v3103 = vadd.f32 %v2853, %v3102
        %v3104 = vpop.f32.mrb[0].mxu0
        %v3105 = vadd.f32 %v2857, %v3104
        %v3106 = vpop.f32.mrb[0].mxu0
        %v3107 = vadd.f32 %v2853, %v3106
        %v3108 = vpop.f32.mrb[0].mxu0
        %v3109 = vadd.f32 %v2857, %v3108
        %3110 = vmatprep.mubr.bf16.mxu0 %v2757
        %3111 = vmatmul.mubr.bf16.gmra.mrb[0].mxu0 %v2756
        %v3112 = vpop.f32.mrb[0].mxu0
        %v3113 = vadd.f32 %v2853, %v3112
        %v3114 = vpop.f32.mrb[0].mxu0
        %v3115 = vadd.f32 %v2857, %v3114
        %v3116 = vpop.f32.mrb[0].mxu0
        %v3117 = vadd.f32 %v2853, %v3116
        %v3118 = vpop.f32.mrb[0].mxu0
        %v3119 = vadd.f32 %v2857, %v3118
        %3120 = vmatprep.mubr.bf16.mxu0 %v2759
        %3121 = vmatmul.mubr.bf16.gmra.mrb[0].mxu0 %v2758
        %v3122 = vpop.f32.mrb[0].mxu0
        %v3123 = vadd.f32 %v2853, %v3122
        %v3124 = vpop.f32.mrb[0].mxu0
        %v3125 = vadd.f32 %v2857, %v3124
        %v3126 = vpop.f32.mrb[0].mxu0
        %v3127 = vadd.f32 %v2853, %v3126
        %v3128 = vpop.f32.mrb[0].mxu0
        %v3129 = vadd.f32 %v2857, %v3128
        %3130 = vmatprep.mubr.bf16.mxu0 %v2761
        %3131 = vmatmul.mubr.bf16.gmra.mrb[0].mxu0 %v2760
        %v3132 = vpop.f32.mrb[0].mxu0
        %v3133 = vadd.f32 %v2853, %v3132
        %v3134 = vpop.f32.mrb[0].mxu0
        %v3135 = vadd.f32 %v2857, %v3134
        %v3136 = vpop.f32.mrb[0].mxu0
        %v3137 = vadd.f32 %v2853, %v3136
        %v3138 = vpop.f32.mrb[0].mxu0
        %v3139 = vadd.f32 %v2857, %v3138
        %3140 = vmatprep.mubr.bf16.mxu0 %v2763
        %3141 = vmatmul.mubr.bf16.gmra.mrb[0].mxu0 %v2762
        %v3142 = vpop.f32.mrb[0].mxu0
        %v3143 = vadd.f32 %v2853, %v3142
        %v3144 = vpop.f32.mrb[0].mxu0
        %v3145 = vadd.f32 %v2857, %v3144
        %v3146 = vpop.f32.mrb[0].mxu0
        %v3147 = vadd.f32 %v2853, %v3146
        %v3148 = vpop.f32.mrb[0].mxu0
        %v3149 = vadd.f32 %v2857, %v3148
        %3150 = vmatprep.mubr.bf16.mxu0 %v2765
        %3151 = vmatmul.mubr.bf16.gmra.mrb[0].mxu0 %v2764
        %v3152 = vpop.f32.mrb[0].mxu0
        %v3153 = vadd.f32 %v2853, %v3152
        %v3154 = vpop.f32.mrb[0].mxu0
        %v3155 = vadd.f32 %v2857, %v3154
        %v3156 = vpop.f32.mrb[0].mxu0
        %v3157 = vadd.f32 %v2853, %v3156
        %v3158 = vpop.f32.mrb[0].mxu0
        %v3159 = vadd.f32 %v2857, %v3158
        %3160 = vmatprep.mubr.bf16.mxu0 %v2767
        %3161 = vmatmul.mubr.bf16.gmra.mrb[0].mxu0 %v2766
        %v3162 = vpop.f32.mrb[0].mxu0
        %v3163 = vadd.f32 %v2853, %v3162
        %v3164 = vpop.f32.mrb[0].mxu0
        %v3165 = vadd.f32 %v2857, %v3164
        %v3166 = vpop.f32.mrb[0].mxu0
        %v3167 = vadd.f32 %v2853, %v3166
        %v3168 = vpop.f32.mrb[0].mxu0
        %v3169 = vadd.f32 %v2857, %v3168
        %3170 = vmatprep.mubr.bf16.mxu0 %v2769
        %3171 = vmatmul.mubr.bf16.gmra.mrb[0].mxu0 %v2768
        %v3172 = vpop.f32.mrb[0].mxu0
        %v3173 = vadd.f32 %v2853, %v3172
        %v3174 = vpop.f32.mrb[0].mxu0
        %v3175 = vadd.f32 %v2857, %v3174
        %v3176 = vpop.f32.mrb[0].mxu0
        %v3177 = vadd.f32 %v2853, %v3176
        %v3178 = vpop.f32.mrb[0].mxu0
        %v3179 = vadd.f32 %v2857, %v3178
        %3180 = vmatprep.mubr.bf16.mxu0 %v2771
        %3181 = vmatmul.mubr.bf16.gmra.mrb[0].mxu0 %v2770
        %v3182 = vpop.f32.mrb[0].mxu0
        %v3183 = vadd.f32 %v2853, %v3182
        %v3184 = vpop.f32.mrb[0].mxu0
        %v3185 = vadd.f32 %v2857, %v3184
        %v3186 = vpop.f32.mrb[0].mxu0
        %v3187 = vadd.f32 %v2853, %v3186
        %v3188 = vpop.f32.mrb[0].mxu0
        %v3189 = vadd.f32 %v2857, %v3188
        %3190 = vmatprep.mubr.bf16.mxu0 %v2773
        %3191 = vmatmul.mubr.bf16.gmra.mrb[0].mxu0 %v2772
        %v3192 = vpop.f32.mrb[0].mxu0
        %v3193 = vadd.f32 %v2853, %v3192
        %v3194 = vpop.f32.mrb[0].mxu0
        %v3195 = vadd.f32 %v2857, %v3194
        %v3196 = vpop.f32.mrb[0].mxu0
        %v3197 = vadd.f32 %v2853, %v3196
        %v3198 = vpop.f32.mrb[0].mxu0
        %v3199 = vadd.f32 %v2857, %v3198
        %3200 = vmatprep.mubr.bf16.mxu0 %v2775
        %3201 = vmatmul.mubr.bf16.gmra.mrb[0].mxu0 %v2774
        %v3202 = vpop.f32.mrb[0].mxu0
        %v3203 = vadd.f32 %v2853, %v3202
        %v3204 = vpop.f32.mrb[0].mxu0
        %v3205 = vadd.f32 %v2857, %v3204
        %v3206 = vpop.f32.mrb[0].mxu0
        %v3207 = vadd.f32 %v2853, %v3206
        %v3208 = vpop.f32.mrb[0].mxu0
        %v3209 = vadd.f32 %v2857, %v3208
        %3210 = vmatprep.mubr.bf16.mxu0 %v2777
        %3211 = vmatmul.mubr.bf16.gmra.mrb[0].mxu0 %v2776
        %v3212 = vpop.f32.mrb[0].mxu0
        %v3213 = vadd.f32 %v2853, %v3212
        %v3214 = vpop.f32.mrb[0].mxu0
        %v3215 = vadd.f32 %v2857, %v3214
        %v3216 = vpop.f32.mrb[0].mxu0
        %v3217 = vadd.f32 %v2853, %v3216
        %v3218 = vpop.f32.mrb[0].mxu0
        %v3219 = vadd.f32 %v2857, %v3218
        %3220 = vmatprep.mubr.bf16.mxu0 %v2779
        %3221 = vmatmul.mubr.bf16.gmra.mrb[0].mxu0 %v2778
        %v3222 = vpop.f32.mrb[0].mxu0
        %v3223 = vadd.f32 %v2853, %v3222
        %v3224 = vpop.f32.mrb[0].mxu0
        %v3225 = vadd.f32 %v2857, %v3224
        %v3226 = vpop.f32.mrb[0].mxu0
        %v3227 = vadd.f32 %v2853, %v3226
        %v3228 = vpop.f32.mrb[0].mxu0
        %v3229 = vadd.f32 %v2857, %v3228
        %3230 = vmatprep.mubr.bf16.mxu0 %v2781
        %3231 = vmatmul.mubr.bf16.gmra.mrb[0].mxu0 %v2780
        %v3232 = vpop.f32.mrb[0].mxu0
        %v3233 = vadd.f32 %v2853, %v3232
        %v3234 = vpop.f32.mrb[0].mxu0
        %v3235 = vadd.f32 %v2857, %v3234
        %v3236 = vpop.f32.mrb[0].mxu0
        %v3237 = vadd.f32 %v2853, %v3236
        %v3238 = vpop.f32.mrb[0].mxu0
        %v3239 = vadd.f32 %v2857, %v3238
        %3240 = vmatprep.mubr.bf16.mxu0 %v2783
        %3241 = vmatmul.mubr.bf16.gmra.mrb[0].mxu0 %v2782
        %v3242 = vpop.f32.mrb[0].mxu0
        %v3243 = vadd.f32 %v2853, %v3242
        %v3244 = vpop.f32.mrb[0].mxu0
        %v3245 = vadd.f32 %v2857, %v3244
        %v3246 = vpop.f32.mrb[0].mxu0
        %v3247 = vadd.f32 %v2853, %v3246
        %v3248 = vpop.f32.mrb[0].mxu0
        %v3249 = vadd.f32 %v2857, %v3248
        %3250 = vmatprep.mubr.bf16.mxu0 %v2785
        %3251 = vmatmul.mubr.bf16.gmra.mrb[0].mxu0 %v2784
        %v3252 = vpop.f32.mrb[0].mxu0
        %v3253 = vadd.f32 %v2853, %v3252
        %v3254 = vpop.f32.mrb[0].mxu0
        %v3255 = vadd.f32 %v2857, %v3254
        %v3256 = vpop.f32.mrb[0].mxu0
        %v3257 = vadd.f32 %v2853, %v3256
        %v3258 = vpop.f32.mrb[0].mxu0
        %v3259 = vadd.f32 %v2857, %v3258
        %3260 = vmatprep.mubr.bf16.mxu0 %v2787
        %3261 = vmatmul.mubr.bf16.gmra.mrb[0].mxu0 %v2786
        %v3262 = vpop.f32.mrb[0].mxu0
        %v3263 = vadd.f32 %v2853, %v3262
        %v3264 = vpop.f32.mrb[0].mxu0
        %v3265 = vadd.f32 %v2857, %v3264
        %v3266 = vpop.f32.mrb[0].mxu0
        %v3267 = vadd.f32 %v2853, %v3266
        %v3268 = vpop.f32.mrb[0].mxu0
        %v3269 = vadd.f32 %v2857, %v3268
        %3270 = vmatprep.mubr.bf16.mxu0 %v2789
        %3271 = vmatmul.mubr.bf16.gmra.mrb[0].mxu0 %v2788
        %v3272 = vpop.f32.mrb[0].mxu0
        %v3273 = vadd.f32 %v2853, %v3272
        %v3274 = vpop.f32.mrb[0].mxu0
        %v3275 = vadd.f32 %v2857, %v3274
        %v3276 = vpop.f32.mrb[0].mxu0
        %v3277 = vadd.f32 %v2853, %v3276
        %v3278 = vpop.f32.mrb[0].mxu0
        %v3279 = vadd.f32 %v2857, %v3278
        %3280 = vmatprep.mubr.bf16.mxu0 %v2791
        %3281 = vmatmul.mubr.bf16.gmra.mrb[0].mxu0 %v2790
        %v3282 = vpop.f32.mrb[0].mxu0
        %v3283 = vadd.f32 %v2853, %v3282
        %v3284 = vpop.f32.mrb[0].mxu0
        %v3285 = vadd.f32 %v2857, %v3284
        %v3286 = vpop.f32.mrb[0].mxu0
        %v3287 = vadd.f32 %v2853, %v3286
        %v3288 = vpop.f32.mrb[0].mxu0
        %v3289 = vadd.f32 %v2857, %v3288
        %3290 = vmatprep.mubr.bf16.mxu0 %v2793
        %3291 = vmatmul.mubr.bf16.gmra.mrb[0].mxu0 %v2792
        %v3292 = vpop.f32.mrb[0].mxu0
        %v3293 = vadd.f32 %v2853, %v3292
        %v3294 = vpop.f32.mrb[0].mxu0
        %v3295 = vadd.f32 %v2857, %v3294
        %v3296 = vpop.f32.mrb[0].mxu0
        %v3297 = vadd.f32 %v2853, %v3296
        %v3298 = vpop.f32.mrb[0].mxu0
        %v3299 = vadd.f32 %v2857, %v3298
        %3300 = vmatprep.mubr.bf16.mxu0 %v2795
        %3301 = vmatmul.mubr.bf16.gmra.mrb[0].mxu0 %v2794
        %v3302 = vpop.f32.mrb[0].mxu0
        %v3303 = vadd.f32 %v2853, %v3302
        %v3304 = vpop.f32.mrb[0].mxu0
        %v3305 = vadd.f32 %v2857, %v3304
        %v3306 = vpop.f32.mrb[0].mxu0
        %v3307 = vadd.f32 %v2853, %v3306
        %v3308 = vpop.f32.mrb[0].mxu0
        %v3309 = vadd.f32 %v2857, %v3308
        %3310 = vmatprep.mubr.bf16.mxu0 %v2797
        %3311 = vmatmul.mubr.bf16.gmra.mrb[0].mxu0 %v2796
        %v3312 = vpop.f32.mrb[0].mxu0
        %v3313 = vadd.f32 %v2853, %v3312
        %v3314 = vpop.f32.mrb[0].mxu0
        %v3315 = vadd.f32 %v2857, %v3314
        %v3316 = vpop.f32.mrb[0].mxu0
        %v3317 = vadd.f32 %v2853, %v3316
        %v3318 = vpop.f32.mrb[0].mxu0
        %v3319 = vadd.f32 %v2857, %v3318
        %3320 = vmatprep.mubr.bf16.mxu0 %v2799
        %3321 = vmatmul.mubr.bf16.gmra.mrb[0].mxu0 %v2798
        %v3322 = vpop.f32.mrb[0].mxu0
        %v3323 = vadd.f32 %v2853, %v3322
        %v3324 = vpop.f32.mrb[0].mxu0
        %v3325 = vadd.f32 %v2857, %v3324
        %v3326 = vpop.f32.mrb[0].mxu0
        %v3327 = vadd.f32 %v2853, %v3326
        %v3328 = vpop.f32.mrb[0].mxu0
        %v3329 = vadd.f32 %v2857, %v3328
        %3330 = vmatprep.mubr.bf16.mxu0 %v2801
        %3331 = vmatmul.mubr.bf16.gmra.mrb[0].mxu0 %v2800
        %v3332 = vpop.f32.mrb[0].mxu0
        %v3333 = vadd.f32 %v2853, %v3332
        %v3334 = vpop.f32.mrb[0].mxu0
        %v3335 = vadd.f32 %v2857, %v3334
        %v3336 = vpop.f32.mrb[0].mxu0
        %v3337 = vadd.f32 %v2853, %v3336
        %v3338 = vpop.f32.mrb[0].mxu0
        %v3339 = vadd.f32 %v2857, %v3338
        %3340 = vmatprep.mubr.bf16.mxu0 %v2803
        %3341 = vmatmul.mubr.bf16.gmra.mrb[0].mxu0 %v2802
        %v3342 = vpop.f32.mrb[0].mxu0
        %v3343 = vadd.f32 %v2853, %v3342
        %v3344 = vpop.f32.mrb[0].mxu0
        %v3345 = vadd.f32 %v2857, %v3344
        %v3346 = vpop.f32.mrb[0].mxu0
        %v3347 = vadd.f32 %v2853, %v3346
        %v3348 = vpop.f32.mrb[0].mxu0
        %v3349 = vadd.f32 %v2857, %v3348
        %3350 = vmatprep.mubr.bf16.mxu0 %v2805
        %3351 = vmatmul.mubr.bf16.gmra.mrb[0].mxu0 %v2804
        %v3352 = vpop.f32.mrb[0].mxu0
        %v3353 = vadd.f32 %v2853, %v3352
        %v3354 = vpop.f32.mrb[0].mxu0
        %v3355 = vadd.f32 %v2857, %v3354
        %v3356 = vpop.f32.mrb[0].mxu0
        %v3357 = vadd.f32 %v2853, %v3356
        %v3358 = vpop.f32.mrb[0].mxu0
        %v3359 = vadd.f32 %v2857, %v3358
        %3360 = vmatprep.mubr.bf16.mxu0 %v2807
        %3361 = vmatmul.mubr.bf16.gmra.mrb[0].mxu0 %v2806
        %v3362 = vpop.f32.mrb[0].mxu0
        %v3363 = vadd.f32 %v2853, %v3362
        %v3364 = vpop.f32.mrb[0].mxu0
        %v3365 = vadd.f32 %v2857, %v3364
        %v3366 = vpop.f32.mrb[0].mxu0
        %v3367 = vadd.f32 %v2853, %v3366
        %v3368 = vpop.f32.mrb[0].mxu0
        %v3369 = vadd.f32 %v2857, %v3368
        %3370 = vdwg.mxu0
        %v3371 = vmax.f32 %v3053, 0.0
        %v3372 = vmax.f32 %v3055, 0.0
        %v3373 = vmax.f32 %v3057, 0.0
        %v3374 = vmax.f32 %v3059, 0.0
        %v3375 = vmax.f32 %v3063, 0.0
        %v3376 = vmax.f32 %v3065, 0.0
        %v3377 = vmax.f32 %v3067, 0.0
        %v3378 = vmax.f32 %v3069, 0.0
        %v3379 = vmax.f32 %v3073, 0.0
        %v3380 = vmax.f32 %v3075, 0.0
        %v3381 = vmax.f32 %v3077, 0.0
        %v3382 = vmax.f32 %v3079, 0.0
        %v3383 = vmax.f32 %v3083, 0.0
        %v3384 = vmax.f32 %v3085, 0.0
        %v3385 = vmax.f32 %v3087, 0.0
        %v3386 = vmax.f32 %v3089, 0.0
        %v3387 = vmax.f32 %v3093, 0.0
        %v3388 = vmax.f32 %v3095, 0.0
        %v3389 = vmax.f32 %v3097, 0.0
        %v3390 = vmax.f32 %v3099, 0.0
        %v3391 = vmax.f32 %v3103, 0.0
        %v3392 = vmax.f32 %v3105, 0.0
        %v3393 = vmax.f32 %v3107, 0.0
        %v3394 = vmax.f32 %v3109, 0.0
        %v3395 = vmax.f32 %v3113, 0.0
        %v3396 = vmax.f32 %v3115, 0.0
        %v3397 = vmax.f32 %v3117, 0.0
        %v3398 = vmax.f32 %v3119, 0.0
        %v3399 = vmax.f32 %v3123, 0.0
        %v3400 = vmax.f32 %v3125, 0.0
        %v3401 = vmax.f32 %v3127, 0.0
        %v3402 = vmax.f32 %v3129, 0.0
        %v3403 = vmax.f32 %v3133, 0.0
        %v3404 = vmax.f32 %v3135, 0.0
        %v3405 = vmax.f32 %v3137, 0.0
        %v3406 = vmax.f32 %v3139, 0.0
        %v3407 = vmax.f32 %v3143, 0.0
        %v3408 = vmax.f32 %v3145, 0.0
        %v3409 = vmax.f32 %v3147, 0.0
        %v3410 = vmax.f32 %v3149, 0.0
        %v3411 = vmax.f32 %v3153, 0.0
        %v3412 = vmax.f32 %v3155, 0.0
        %v3413 = vmax.f32 %v3157, 0.0
        %v3414 = vmax.f32 %v3159, 0.0
        %v3415 = vmax.f32 %v3163, 0.0
        %v3416 = vmax.f32 %v3165, 0.0
        %v3417 = vmax.f32 %v3167, 0.0
        %v3418 = vmax.f32 %v3169, 0.0
        %v3419 = vmax.f32 %v3173, 0.0
        %v3420 = vmax.f32 %v3175, 0.0
        %v3421 = vmax.f32 %v3177, 0.0
        %v3422 = vmax.f32 %v3179, 0.0
        %v3423 = vmax.f32 %v3183, 0.0
        %v3424 = vmax.f32 %v3185, 0.0
        %v3425 = vmax.f32 %v3187, 0.0
        %v3426 = vmax.f32 %v3189, 0.0
        %v3427 = vmax.f32 %v3193, 0.0
        %v3428 = vmax.f32 %v3195, 0.0
        %v3429 = vmax.f32 %v3197, 0.0
        %v3430 = vmax.f32 %v3199, 0.0
        %v3431 = vmax.f32 %v3203, 0.0
        %v3432 = vmax.f32 %v3205, 0.0
        %v3433 = vmax.f32 %v3207, 0.0
        %v3434 = vmax.f32 %v3209, 0.0
        %v3435 = vmax.f32 %v3213, 0.0
        %v3436 = vmax.f32 %v3215, 0.0
        %v3437 = vmax.f32 %v3217, 0.0
        %v3438 = vmax.f32 %v3219, 0.0
        %v3439 = vmax.f32 %v3223, 0.0
        %v3440 = vmax.f32 %v3225, 0.0
        %v3441 = vmax.f32 %v3227, 0.0
        %v3442 = vmax.f32 %v3229, 0.0
        %v3443 = vmax.f32 %v3233, 0.0
        %v3444 = vmax.f32 %v3235, 0.0
        %v3445 = vmax.f32 %v3237, 0.0
        %v3446 = vmax.f32 %v3239, 0.0
        %v3447 = vmax.f32 %v3243, 0.0
        %v3448 = vmax.f32 %v3245, 0.0
        %v3449 = vmax.f32 %v3247, 0.0
        %v3450 = vmax.f32 %v3249, 0.0
        %v3451 = vmax.f32 %v3253, 0.0
        %v3452 = vmax.f32 %v3255, 0.0
        %v3453 = vmax.f32 %v3257, 0.0
        %v3454 = vmax.f32 %v3259, 0.0
        %v3455 = vmax.f32 %v3263, 0.0
        %v3456 = vmax.f32 %v3265, 0.0
        %v3457 = vmax.f32 %v3267, 0.0
        %v3458 = vmax.f32 %v3269, 0.0
        %v3459 = vmax.f32 %v3273, 0.0
        %v3460 = vmax.f32 %v3275, 0.0
        %v3461 = vmax.f32 %v3277, 0.0
        %v3462 = vmax.f32 %v3279, 0.0
        %v3463 = vmax.f32 %v3283, 0.0
        %v3464 = vmax.f32 %v3285, 0.0
        %v3465 = vmax.f32 %v3287, 0.0
        %v3466 = vmax.f32 %v3289, 0.0
        %v3467 = vmax.f32 %v3293, 0.0
        %v3468 = vmax.f32 %v3295, 0.0
        %v3469 = vmax.f32 %v3297, 0.0
        %v3470 = vmax.f32 %v3299, 0.0
        %v3471 = vmax.f32 %v3303, 0.0
        %v3472 = vmax.f32 %v3305, 0.0
        %v3473 = vmax.f32 %v3307, 0.0
        %v3474 = vmax.f32 %v3309, 0.0
        %v3475 = vmax.f32 %v3313, 0.0
        %v3476 = vmax.f32 %v3315, 0.0
        %v3477 = vmax.f32 %v3317, 0.0
        %v3478 = vmax.f32 %v3319, 0.0
        %v3479 = vmax.f32 %v3323, 0.0
        %v3480 = vmax.f32 %v3325, 0.0
        %v3481 = vmax.f32 %v3327, 0.0
        %v3482 = vmax.f32 %v3329, 0.0
        %v3483 = vmax.f32 %v3333, 0.0
        %v3484 = vmax.f32 %v3335, 0.0
        %v3485 = vmax.f32 %v3337, 0.0
        %v3486 = vmax.f32 %v3339, 0.0
        %v3487 = vmax.f32 %v3343, 0.0
        %v3488 = vmax.f32 %v3345, 0.0
        %v3489 = vmax.f32 %v3347, 0.0
        %v3490 = vmax.f32 %v3349, 0.0
        %v3491 = vmax.f32 %v3353, 0.0
        %v3492 = vmax.f32 %v3355, 0.0
        %v3493 = vmax.f32 %v3357, 0.0
        %v3494 = vmax.f32 %v3359, 0.0
        %v3495 = vmax.f32 %v3363, 0.0
        %v3496 = vmax.f32 %v3365, 0.0
        %v3497 = vmax.f32 %v3367, 0.0
        %v3498 = vmax.f32 %v3369, 0.0
        %v3499 = vpack.c.bf16 %v3373, %v3371
        %v3500 = vpack.c.bf16 %v3374, %v3372
        %v3501 = vpack.c.bf16 %v3377, %v3375
        %v3502 = vpack.c.bf16 %v3378, %v3376
        %v3503 = vpack.c.bf16 %v3381, %v3379
        %v3504 = vpack.c.bf16 %v3382, %v3380
        %v3505 = vpack.c.bf16 %v3385, %v3383
        %v3506 = vpack.c.bf16 %v3386, %v3384
        %v3507 = vpack.c.bf16 %v3389, %v3387
        %v3508 = vpack.c.bf16 %v3390, %v3388
        %v3509 = vpack.c.bf16 %v3393, %v3391
        %v3510 = vpack.c.bf16 %v3394, %v3392
        %v3511 = vpack.c.bf16 %v3397, %v3395
        %v3512 = vpack.c.bf16 %v3398, %v3396
        %v3513 = vpack.c.bf16 %v3401, %v3399
        %v3514 = vpack.c.bf16 %v3402, %v3400
        %v3515 = vpack.c.bf16 %v3405, %v3403
        %v3516 = vpack.c.bf16 %v3406, %v3404
        %v3517 = vpack.c.bf16 %v3409, %v3407
        %v3518 = vpack.c.bf16 %v3410, %v3408
        %v3519 = vpack.c.bf16 %v3413, %v3411
        %v3520 = vpack.c.bf16 %v3414, %v3412
        %v3521 = vpack.c.bf16 %v3417, %v3415
        %v3522 = vpack.c.bf16 %v3418, %v3416
        %v3523 = vpack.c.bf16 %v3421, %v3419
        %v3524 = vpack.c.bf16 %v3422, %v3420
        %v3525 = vpack.c.bf16 %v3425, %v3423
        %v3526 = vpack.c.bf16 %v3426, %v3424
        %v3527 = vpack.c.bf16 %v3429, %v3427
        %v3528 = vpack.c.bf16 %v3430, %v3428
        %v3529 = vpack.c.bf16 %v3433, %v3431
        %v3530 = vpack.c.bf16 %v3434, %v3432
        %v3531 = vpack.c.bf16 %v3437, %v3435
        %v3532 = vpack.c.bf16 %v3438, %v3436
        %v3533 = vpack.c.bf16 %v3441, %v3439
        %v3534 = vpack.c.bf16 %v3442, %v3440
        %v3535 = vpack.c.bf16 %v3445, %v3443
        %v3536 = vpack.c.bf16 %v3446, %v3444
        %v3537 = vpack.c.bf16 %v3449, %v3447
        %v3538 = vpack.c.bf16 %v3450, %v3448
        %v3539 = vpack.c.bf16 %v3453, %v3451
        %v3540 = vpack.c.bf16 %v3454, %v3452
        %v3541 = vpack.c.bf16 %v3457, %v3455
        %v3542 = vpack.c.bf16 %v3458, %v3456
        %v3543 = vpack.c.bf16 %v3461, %v3459
        %v3544 = vpack.c.bf16 %v3462, %v3460
        %v3545 = vpack.c.bf16 %v3465, %v3463
        %v3546 = vpack.c.bf16 %v3466, %v3464
        %v3547 = vpack.c.bf16 %v3469, %v3467
        %v3548 = vpack.c.bf16 %v3470, %v3468
        %v3549 = vpack.c.bf16 %v3473, %v3471
        %v3550 = vpack.c.bf16 %v3474, %v3472
        %v3551 = vpack.c.bf16 %v3477, %v3475
        %v3552 = vpack.c.bf16 %v3478, %v3476
        %v3553 = vpack.c.bf16 %v3481, %v3479
        %v3554 = vpack.c.bf16 %v3482, %v3480
        %v3555 = vpack.c.bf16 %v3485, %v3483
        %v3556 = vpack.c.bf16 %v3486, %v3484
        %v3557 = vpack.c.bf16 %v3489, %v3487
        %v3558 = vpack.c.bf16 %v3490, %v3488
        %v3559 = vpack.c.bf16 %v3493, %v3491
        %v3560 = vpack.c.bf16 %v3494, %v3492
        %v3561 = vpack.c.bf16 %v3497, %v3495
        %v3562 = vpack.c.bf16 %v3498, %v3496
        %v3563 = vld [vmem:[%s5] sm:$0xf]
        %v3564 = vld [vmem:[%s5 + $0x4] sm:$0xf]
        %v3565 = vld [vmem:[%s5 + $0x8] sm:$0xf]
        %v3566 = vld [vmem:[%s5 + $0xc] sm:$0xf]
        %v3567 = vld [vmem:[%s5 + $0x10] sm:$0xf]
        %v3568 = vld [vmem:[%s5 + $0x14] sm:$0xf]
        %v3569 = vld [vmem:[%s5 + $0x18] sm:$0xf]
        %v3570 = vld [vmem:[%s5 + $0x1c] sm:$0xf]
        %v3571 = vld [vmem:[%s5 + $0x20] sm:$0xf]
        %v3572 = vld [vmem:[%s5 + $0x24] sm:$0xf]
        %v3573 = vld [vmem:[%s5 + $0x28] sm:$0xf]
        %v3574 = vld [vmem:[%s5 + $0x2c] sm:$0xf]
        %v3575 = vld [vmem:[%s5 + $0x30] sm:$0xf]
        %v3576 = vld [vmem:[%s5 + $0x34] sm:$0xf]
        %v3577 = vld [vmem:[%s5 + $0x38] sm:$0xf]
        %v3578 = vld [vmem:[%s5 + $0x3c] sm:$0xf]
        %v3579 = vld [vmem:[%s5 + $0x40] sm:$0xf]
        %v3580 = vld [vmem:[%s5 + $0x44] sm:$0xf]
        %v3581 = vld [vmem:[%s5 + $0x48] sm:$0xf]
        %v3582 = vld [vmem:[%s5 + $0x4c] sm:$0xf]
        %v3583 = vld [vmem:[%s5 + $0x50] sm:$0xf]
        %v3584 = vld [vmem:[%s5 + $0x54] sm:$0xf]
        %v3585 = vld [vmem:[%s5 + $0x58] sm:$0xf]
        %v3586 = vld [vmem:[%s5 + $0x5c] sm:$0xf]
        %v3587 = vld [vmem:[%s5 + $0x60] sm:$0xf]
        %v3588 = vld [vmem:[%s5 + $0x64] sm:$0xf]
        %v3589 = vld [vmem:[%s5 + $0x68] sm:$0xf]
        %v3590 = vld [vmem:[%s5 + $0x6c] sm:$0xf]
        %v3591 = vld [vmem:[%s5 + $0x70] sm:$0xf]
        %v3592 = vld [vmem:[%s5 + $0x74] sm:$0xf]
        %v3593 = vld [vmem:[%s5 + $0x78] sm:$0xf]
        %v3594 = vld [vmem:[%s5 + $0x7c] sm:$0xf]
        %v3596 = vlaneseq
        %v3597 = vshrl.u32 %v3596, 7
        %v3598 = vsub.s32 0, %v3597
        %v3599 = vrot.slane %v648, %v3598
        %v3633 = vunpack.c.l.b16 %v3563
        %v3634 = vunpack.c.l.b16 %v3564
        %v3635 = vunpack.c.l.b16 %v3565
        %v3636 = vunpack.c.l.b16 %v3566
        %v3637 = vunpack.c.l.b16 %v3567
        %v3638 = vunpack.c.l.b16 %v3568
        %v3639 = vunpack.c.l.b16 %v3569
        %v3640 = vunpack.c.l.b16 %v3570
        %v3641 = vunpack.c.l.b16 %v3571
        %v3642 = vunpack.c.l.b16 %v3572
        %v3643 = vunpack.c.l.b16 %v3573
        %v3644 = vunpack.c.l.b16 %v3574
        %v3645 = vunpack.c.l.b16 %v3575
        %v3646 = vunpack.c.l.b16 %v3576
        %v3647 = vunpack.c.l.b16 %v3577
        %v3648 = vunpack.c.l.b16 %v3578
        %v3649 = vunpack.c.l.b16 %v3579
        %v3650 = vunpack.c.l.b16 %v3580
        %v3651 = vunpack.c.l.b16 %v3581
        %v3652 = vunpack.c.l.b16 %v3582
        %v3653 = vunpack.c.l.b16 %v3583
        %v3654 = vunpack.c.l.b16 %v3584
        %v3655 = vunpack.c.l.b16 %v3585
        %v3656 = vunpack.c.l.b16 %v3586
        %v3657 = vunpack.c.l.b16 %v3587
        %v3658 = vunpack.c.l.b16 %v3588
        %v3659 = vunpack.c.l.b16 %v3589
        %v3660 = vunpack.c.l.b16 %v3590
        %v3661 = vunpack.c.l.b16 %v3591
        %v3662 = vunpack.c.l.b16 %v3592
        %v3663 = vunpack.c.l.b16 %v3593
        %v3664 = vunpack.c.l.b16 %v3594
        %v3665 = vpack.c.b16 %v3634, %v3633
        %v3666 = vpack.c.b16 %v3636, %v3635
        %v3667 = vpack.c.b16 %v3638, %v3637
        %v3668 = vpack.c.b16 %v3640, %v3639
        %v3669 = vpack.c.b16 %v3642, %v3641
        %v3670 = vpack.c.b16 %v3644, %v3643
        %v3671 = vpack.c.b16 %v3646, %v3645
        %v3672 = vpack.c.b16 %v3648, %v3647
        %v3673 = vpack.c.b16 %v3650, %v3649
        %v3674 = vpack.c.b16 %v3652, %v3651
        %v3675 = vpack.c.b16 %v3654, %v3653
        %v3676 = vpack.c.b16 %v3656, %v3655
        %v3677 = vpack.c.b16 %v3658, %v3657
        %v3678 = vpack.c.b16 %v3660, %v3659
        %v3679 = vpack.c.b16 %v3662, %v3661
        %v3680 = vpack.c.b16 %v3664, %v3663
        %3697 = vmatprep.subr.bf16.mxu0 0
        %3698 = vmatpush1.bf16.msra.mxu0 %v3665
        %3699 = vmatprep.subr.bf16.mxu0 0
        %3700 = vmatpush1.bf16.msra.mxu0 %v3666
        %3701 = vmatprep.subr.bf16.mxu0 0
        %3702 = vmatpush1.bf16.msra.mxu0 %v3667
        %3703 = vmatprep.subr.bf16.mxu0 0
        %3704 = vmatpush1.bf16.msra.mxu0 %v3668
        %3705 = vmatprep.subr.bf16.mxu0 0
        %3706 = vmatpush1.bf16.msra.mxu0 %v3669
        %3707 = vmatprep.subr.bf16.mxu0 0
        %3708 = vmatpush1.bf16.msra.mxu0 %v3670
        %3709 = vmatprep.subr.bf16.mxu0 0
        %3710 = vmatpush1.bf16.msra.mxu0 %v3671
        %3711 = vmatprep.subr.bf16.mxu0 0
        %3712 = vmatpush1.bf16.msra.mxu0 %v3672
        %3713 = vmatprep.subr.bf16.mxu0 0
        %3714 = vmatpush1.bf16.msra.mxu0 %v3673
        %3715 = vmatprep.subr.bf16.mxu0 0
        %3716 = vmatpush1.bf16.msra.mxu0 %v3674
        %3717 = vmatprep.subr.bf16.mxu0 0
        %3718 = vmatpush1.bf16.msra.mxu0 %v3675
        %3719 = vmatprep.subr.bf16.mxu0 0
        %3720 = vmatpush1.bf16.msra.mxu0 %v3676
        %3721 = vmatprep.subr.bf16.mxu0 0
        %3722 = vmatpush1.bf16.msra.mxu0 %v3677
        %3723 = vmatprep.subr.bf16.mxu0 0
        %3724 = vmatpush1.bf16.msra.mxu0 %v3678
        %3725 = vmatprep.subr.bf16.mxu0 0
        %3726 = vmatpush1.bf16.msra.mxu0 %v3679
        %3727 = vmatprep.subr.bf16.mxu0 0
        %3728 = vmatpush1.bf16.msra.mxu0 %v3680
        %3729 = vmatprep.mubr.bf16.mxu0 %v3500
        %3730 = vmatmul.mubr.bf16.gmra.mrb[0].mxu0 %v3499
        %v3731 = vpop.f32.mrb[0].mxu0
        %v3732 = vadd.f32 %v3599, %v3731
        %v3733 = vpop.f32.mrb[0].mxu0
        %v3734 = vpop.f32.mrb[0].mxu0
        %v3735 = vadd.f32 %v3599, %v3734
        %v3736 = vpop.f32.mrb[0].mxu0
        %3737 = vmatprep.mubr.bf16.mxu0 %v3502
        %3738 = vmatmul.mubr.bf16.gmra.mrb[0].mxu0 %v3501
        %v3739 = vpop.f32.mrb[0].mxu0
        %v3740 = vadd.f32 %v3599, %v3739
        %v3741 = vpop.f32.mrb[0].mxu0
        %v3742 = vpop.f32.mrb[0].mxu0
        %v3743 = vadd.f32 %v3599, %v3742
        %v3744 = vpop.f32.mrb[0].mxu0
        %3745 = vmatprep.mubr.bf16.mxu0 %v3504
        %3746 = vmatmul.mubr.bf16.gmra.mrb[0].mxu0 %v3503
        %v3747 = vpop.f32.mrb[0].mxu0
        %v3748 = vadd.f32 %v3599, %v3747
        %v3749 = vpop.f32.mrb[0].mxu0
        %v3750 = vpop.f32.mrb[0].mxu0
        %v3751 = vadd.f32 %v3599, %v3750
        %v3752 = vpop.f32.mrb[0].mxu0
        %3753 = vmatprep.mubr.bf16.mxu0 %v3506
        %3754 = vmatmul.mubr.bf16.gmra.mrb[0].mxu0 %v3505
        %v3755 = vpop.f32.mrb[0].mxu0
        %v3756 = vadd.f32 %v3599, %v3755
        %v3757 = vpop.f32.mrb[0].mxu0
        %v3758 = vpop.f32.mrb[0].mxu0
        %v3759 = vadd.f32 %v3599, %v3758
        %v3760 = vpop.f32.mrb[0].mxu0
        %3761 = vmatprep.mubr.bf16.mxu0 %v3508
        %3762 = vmatmul.mubr.bf16.gmra.mrb[0].mxu0 %v3507
        %v3763 = vpop.f32.mrb[0].mxu0
        %v3764 = vadd.f32 %v3599, %v3763
        %v3765 = vpop.f32.mrb[0].mxu0
        %v3766 = vpop.f32.mrb[0].mxu0
        %v3767 = vadd.f32 %v3599, %v3766
        %v3768 = vpop.f32.mrb[0].mxu0
        %3769 = vmatprep.mubr.bf16.mxu0 %v3510
        %3770 = vmatmul.mubr.bf16.gmra.mrb[0].mxu0 %v3509
        %v3771 = vpop.f32.mrb[0].mxu0
        %v3772 = vadd.f32 %v3599, %v3771
        %v3773 = vpop.f32.mrb[0].mxu0
        %v3774 = vpop.f32.mrb[0].mxu0
        %v3775 = vadd.f32 %v3599, %v3774
        %v3776 = vpop.f32.mrb[0].mxu0
        %3777 = vmatprep.mubr.bf16.mxu0 %v3512
        %3778 = vmatmul.mubr.bf16.gmra.mrb[0].mxu0 %v3511
        %v3779 = vpop.f32.mrb[0].mxu0
        %v3780 = vadd.f32 %v3599, %v3779
        %v3781 = vpop.f32.mrb[0].mxu0
        %v3782 = vpop.f32.mrb[0].mxu0
        %v3783 = vadd.f32 %v3599, %v3782
        %v3784 = vpop.f32.mrb[0].mxu0
        %3785 = vmatprep.mubr.bf16.mxu0 %v3514
        %3786 = vmatmul.mubr.bf16.gmra.mrb[0].mxu0 %v3513
        %v3787 = vpop.f32.mrb[0].mxu0
        %v3788 = vadd.f32 %v3599, %v3787
        %v3789 = vpop.f32.mrb[0].mxu0
        %v3790 = vpop.f32.mrb[0].mxu0
        %v3791 = vadd.f32 %v3599, %v3790
        %v3792 = vpop.f32.mrb[0].mxu0
        %3793 = vmatprep.mubr.bf16.mxu0 %v3516
        %3794 = vmatmul.mubr.bf16.gmra.mrb[0].mxu0 %v3515
        %v3795 = vpop.f32.mrb[0].mxu0
        %v3796 = vadd.f32 %v3599, %v3795
        %v3797 = vpop.f32.mrb[0].mxu0
        %v3798 = vpop.f32.mrb[0].mxu0
        %v3799 = vadd.f32 %v3599, %v3798
        %v3800 = vpop.f32.mrb[0].mxu0
        %3801 = vmatprep.mubr.bf16.mxu0 %v3518
        %3802 = vmatmul.mubr.bf16.gmra.mrb[0].mxu0 %v3517
        %v3803 = vpop.f32.mrb[0].mxu0
        %v3804 = vadd.f32 %v3599, %v3803
        %v3805 = vpop.f32.mrb[0].mxu0
        %v3806 = vpop.f32.mrb[0].mxu0
        %v3807 = vadd.f32 %v3599, %v3806
        %v3808 = vpop.f32.mrb[0].mxu0
        %3809 = vmatprep.mubr.bf16.mxu0 %v3520
        %3810 = vmatmul.mubr.bf16.gmra.mrb[0].mxu0 %v3519
        %v3811 = vpop.f32.mrb[0].mxu0
        %v3812 = vadd.f32 %v3599, %v3811
        %v3813 = vpop.f32.mrb[0].mxu0
        %v3814 = vpop.f32.mrb[0].mxu0
        %v3815 = vadd.f32 %v3599, %v3814
        %v3816 = vpop.f32.mrb[0].mxu0
        %3817 = vmatprep.mubr.bf16.mxu0 %v3522
        %3818 = vmatmul.mubr.bf16.gmra.mrb[0].mxu0 %v3521
        %v3819 = vpop.f32.mrb[0].mxu0
        %v3820 = vadd.f32 %v3599, %v3819
        %v3821 = vpop.f32.mrb[0].mxu0
        %v3822 = vpop.f32.mrb[0].mxu0
        %v3823 = vadd.f32 %v3599, %v3822
        %v3824 = vpop.f32.mrb[0].mxu0
        %3825 = vmatprep.mubr.bf16.mxu0 %v3524
        %3826 = vmatmul.mubr.bf16.gmra.mrb[0].mxu0 %v3523
        %v3827 = vpop.f32.mrb[0].mxu0
        %v3828 = vadd.f32 %v3599, %v3827
        %v3829 = vpop.f32.mrb[0].mxu0
        %v3830 = vpop.f32.mrb[0].mxu0
        %v3831 = vadd.f32 %v3599, %v3830
        %v3832 = vpop.f32.mrb[0].mxu0
        %3833 = vmatprep.mubr.bf16.mxu0 %v3526
        %3834 = vmatmul.mubr.bf16.gmra.mrb[0].mxu0 %v3525
        %v3835 = vpop.f32.mrb[0].mxu0
        %v3836 = vadd.f32 %v3599, %v3835
        %v3837 = vpop.f32.mrb[0].mxu0
        %v3838 = vpop.f32.mrb[0].mxu0
        %v3839 = vadd.f32 %v3599, %v3838
        %v3840 = vpop.f32.mrb[0].mxu0
        %3841 = vmatprep.mubr.bf16.mxu0 %v3528
        %3842 = vmatmul.mubr.bf16.gmra.mrb[0].mxu0 %v3527
        %v3843 = vpop.f32.mrb[0].mxu0
        %v3844 = vadd.f32 %v3599, %v3843
        %v3845 = vpop.f32.mrb[0].mxu0
        %v3846 = vpop.f32.mrb[0].mxu0
        %v3847 = vadd.f32 %v3599, %v3846
        %v3848 = vpop.f32.mrb[0].mxu0
        %3849 = vmatprep.mubr.bf16.mxu0 %v3530
        %3850 = vmatmul.mubr.bf16.gmra.mrb[0].mxu0 %v3529
        %v3851 = vpop.f32.mrb[0].mxu0
        %v3852 = vadd.f32 %v3599, %v3851
        %v3853 = vpop.f32.mrb[0].mxu0
        %v3854 = vpop.f32.mrb[0].mxu0
        %v3855 = vadd.f32 %v3599, %v3854
        %v3856 = vpop.f32.mrb[0].mxu0
        %3857 = vmatprep.mubr.bf16.mxu0 %v3532
        %3858 = vmatmul.mubr.bf16.gmra.mrb[0].mxu0 %v3531
        %v3859 = vpop.f32.mrb[0].mxu0
        %v3860 = vadd.f32 %v3599, %v3859
        %v3861 = vpop.f32.mrb[0].mxu0
        %v3862 = vpop.f32.mrb[0].mxu0
        %v3863 = vadd.f32 %v3599, %v3862
        %v3864 = vpop.f32.mrb[0].mxu0
        %3865 = vmatprep.mubr.bf16.mxu0 %v3534
        %3866 = vmatmul.mubr.bf16.gmra.mrb[0].mxu0 %v3533
        %v3867 = vpop.f32.mrb[0].mxu0
        %v3868 = vadd.f32 %v3599, %v3867
        %v3869 = vpop.f32.mrb[0].mxu0
        %v3870 = vpop.f32.mrb[0].mxu0
        %v3871 = vadd.f32 %v3599, %v3870
        %v3872 = vpop.f32.mrb[0].mxu0
        %3873 = vmatprep.mubr.bf16.mxu0 %v3536
        %3874 = vmatmul.mubr.bf16.gmra.mrb[0].mxu0 %v3535
        %v3875 = vpop.f32.mrb[0].mxu0
        %v3876 = vadd.f32 %v3599, %v3875
        %v3877 = vpop.f32.mrb[0].mxu0
        %v3878 = vpop.f32.mrb[0].mxu0
        %v3879 = vadd.f32 %v3599, %v3878
        %v3880 = vpop.f32.mrb[0].mxu0
        %3881 = vmatprep.mubr.bf16.mxu0 %v3538
        %3882 = vmatmul.mubr.bf16.gmra.mrb[0].mxu0 %v3537
        %v3883 = vpop.f32.mrb[0].mxu0
        %v3884 = vadd.f32 %v3599, %v3883
        %v3885 = vpop.f32.mrb[0].mxu0
        %v3886 = vpop.f32.mrb[0].mxu0
        %v3887 = vadd.f32 %v3599, %v3886
        %v3888 = vpop.f32.mrb[0].mxu0
        %3889 = vmatprep.mubr.bf16.mxu0 %v3540
        %3890 = vmatmul.mubr.bf16.gmra.mrb[0].mxu0 %v3539
        %v3891 = vpop.f32.mrb[0].mxu0
        %v3892 = vadd.f32 %v3599, %v3891
        %v3893 = vpop.f32.mrb[0].mxu0
        %v3894 = vpop.f32.mrb[0].mxu0
        %v3895 = vadd.f32 %v3599, %v3894
        %v3896 = vpop.f32.mrb[0].mxu0
        %3897 = vmatprep.mubr.bf16.mxu0 %v3542
        %3898 = vmatmul.mubr.bf16.gmra.mrb[0].mxu0 %v3541
        %v3899 = vpop.f32.mrb[0].mxu0
        %v3900 = vadd.f32 %v3599, %v3899
        %v3901 = vpop.f32.mrb[0].mxu0
        %v3902 = vpop.f32.mrb[0].mxu0
        %v3903 = vadd.f32 %v3599, %v3902
        %v3904 = vpop.f32.mrb[0].mxu0
        %3905 = vmatprep.mubr.bf16.mxu0 %v3544
        %3906 = vmatmul.mubr.bf16.gmra.mrb[0].mxu0 %v3543
        %v3907 = vpop.f32.mrb[0].mxu0
        %v3908 = vadd.f32 %v3599, %v3907
        %v3909 = vpop.f32.mrb[0].mxu0
        %v3910 = vpop.f32.mrb[0].mxu0
        %v3911 = vadd.f32 %v3599, %v3910
        %v3912 = vpop.f32.mrb[0].mxu0
        %3913 = vmatprep.mubr.bf16.mxu0 %v3546
        %3914 = vmatmul.mubr.bf16.gmra.mrb[0].mxu0 %v3545
        %v3915 = vpop.f32.mrb[0].mxu0
        %v3916 = vadd.f32 %v3599, %v3915
        %v3917 = vpop.f32.mrb[0].mxu0
        %v3918 = vpop.f32.mrb[0].mxu0
        %v3919 = vadd.f32 %v3599, %v3918
        %v3920 = vpop.f32.mrb[0].mxu0
        %3921 = vmatprep.mubr.bf16.mxu0 %v3548
        %3922 = vmatmul.mubr.bf16.gmra.mrb[0].mxu0 %v3547
        %v3923 = vpop.f32.mrb[0].mxu0
        %v3924 = vadd.f32 %v3599, %v3923
        %v3925 = vpop.f32.mrb[0].mxu0
        %v3926 = vpop.f32.mrb[0].mxu0
        %v3927 = vadd.f32 %v3599, %v3926
        %v3928 = vpop.f32.mrb[0].mxu0
        %3929 = vmatprep.mubr.bf16.mxu0 %v3550
        %3930 = vmatmul.mubr.bf16.gmra.mrb[0].mxu0 %v3549
        %v3931 = vpop.f32.mrb[0].mxu0
        %v3932 = vadd.f32 %v3599, %v3931
        %v3933 = vpop.f32.mrb[0].mxu0
        %v3934 = vpop.f32.mrb[0].mxu0
        %v3935 = vadd.f32 %v3599, %v3934
        %v3936 = vpop.f32.mrb[0].mxu0
        %3937 = vmatprep.mubr.bf16.mxu0 %v3552
        %3938 = vmatmul.mubr.bf16.gmra.mrb[0].mxu0 %v3551
        %v3939 = vpop.f32.mrb[0].mxu0
        %v3940 = vadd.f32 %v3599, %v3939
        %v3941 = vpop.f32.mrb[0].mxu0
        %v3942 = vpop.f32.mrb[0].mxu0
        %v3943 = vadd.f32 %v3599, %v3942
        %v3944 = vpop.f32.mrb[0].mxu0
        %3945 = vmatprep.mubr.bf16.mxu0 %v3554
        %3946 = vmatmul.mubr.bf16.gmra.mrb[0].mxu0 %v3553
        %v3947 = vpop.f32.mrb[0].mxu0
        %v3948 = vadd.f32 %v3599, %v3947
        %v3949 = vpop.f32.mrb[0].mxu0
        %v3950 = vpop.f32.mrb[0].mxu0
        %v3951 = vadd.f32 %v3599, %v3950
        %v3952 = vpop.f32.mrb[0].mxu0
        %3953 = vmatprep.mubr.bf16.mxu0 %v3556
        %3954 = vmatmul.mubr.bf16.gmra.mrb[0].mxu0 %v3555
        %v3955 = vpop.f32.mrb[0].mxu0
        %v3956 = vadd.f32 %v3599, %v3955
        %v3957 = vpop.f32.mrb[0].mxu0
        %v3958 = vpop.f32.mrb[0].mxu0
        %v3959 = vadd.f32 %v3599, %v3958
        %v3960 = vpop.f32.mrb[0].mxu0
        %3961 = vmatprep.mubr.bf16.mxu0 %v3558
        %3962 = vmatmul.mubr.bf16.gmra.mrb[0].mxu0 %v3557
        %v3963 = vpop.f32.mrb[0].mxu0
        %v3964 = vadd.f32 %v3599, %v3963
        %v3965 = vpop.f32.mrb[0].mxu0
        %v3966 = vpop.f32.mrb[0].mxu0
        %v3967 = vadd.f32 %v3599, %v3966
        %v3968 = vpop.f32.mrb[0].mxu0
        %3969 = vmatprep.mubr.bf16.mxu0 %v3560
        %3970 = vmatmul.mubr.bf16.gmra.mrb[0].mxu0 %v3559
        %v3971 = vpop.f32.mrb[0].mxu0
        %v3972 = vadd.f32 %v3599, %v3971
        %v3973 = vpop.f32.mrb[0].mxu0
        %v3974 = vpop.f32.mrb[0].mxu0
        %v3975 = vadd.f32 %v3599, %v3974
        %v3976 = vpop.f32.mrb[0].mxu0
        %3977 = vmatprep.mubr.bf16.mxu0 %v3562
        %3978 = vmatmul.mubr.bf16.gmra.mrb[0].mxu0 %v3561
        %v3979 = vpop.f32.mrb[0].mxu0
        %v3980 = vadd.f32 %v3599, %v3979
        %v3981 = vpop.f32.mrb[0].mxu0
        %v3982 = vpop.f32.mrb[0].mxu0
        %v3983 = vadd.f32 %v3599, %v3982
        %v3984 = vpop.f32.mrb[0].mxu0
        %3985 = vdwg.mxu0
        %v3986 = vand.u32 2147483647, %v3732
        %v3987 = vand.u32 2147483647, %v3735
        %v3988 = vand.u32 2147483647, %v3740
        %v3989 = vand.u32 2147483647, %v3743
        %v3990 = vand.u32 2147483647, %v3748
        %v3991 = vand.u32 2147483647, %v3751
        %v3992 = vand.u32 2147483647, %v3756
        %v3993 = vand.u32 2147483647, %v3759
        %v3994 = vand.u32 2147483647, %v3764
        %v3995 = vand.u32 2147483647, %v3767
        %v3996 = vand.u32 2147483647, %v3772
        %v3997 = vand.u32 2147483647, %v3775
        %v3998 = vand.u32 2147483647, %v3780
        %v3999 = vand.u32 2147483647, %v3783
        %v4000 = vand.u32 2147483647, %v3788
        %v4001 = vand.u32 2147483647, %v3791
        %v4002 = vand.u32 2147483647, %v3796
        %v4003 = vand.u32 2147483647, %v3799
        %v4004 = vand.u32 2147483647, %v3804
        %v4005 = vand.u32 2147483647, %v3807
        %v4006 = vand.u32 2147483647, %v3812
        %v4007 = vand.u32 2147483647, %v3815
        %v4008 = vand.u32 2147483647, %v3820
        %v4009 = vand.u32 2147483647, %v3823
        %v4010 = vand.u32 2147483647, %v3828
        %v4011 = vand.u32 2147483647, %v3831
        %v4012 = vand.u32 2147483647, %v3836
        %v4013 = vand.u32 2147483647, %v3839
        %v4014 = vand.u32 2147483647, %v3844
        %v4015 = vand.u32 2147483647, %v3847
        %v4016 = vand.u32 2147483647, %v3852
        %v4017 = vand.u32 2147483647, %v3855
        %v4018 = vand.u32 2147483647, %v3860
        %v4019 = vand.u32 2147483647, %v3863
        %v4020 = vand.u32 2147483647, %v3868
        %v4021 = vand.u32 2147483647, %v3871
        %v4022 = vand.u32 2147483647, %v3876
        %v4023 = vand.u32 2147483647, %v3879
        %v4024 = vand.u32 2147483647, %v3884
        %v4025 = vand.u32 2147483647, %v3887
        %v4026 = vand.u32 2147483647, %v3892
        %v4027 = vand.u32 2147483647, %v3895
        %v4028 = vand.u32 2147483647, %v3900
        %v4029 = vand.u32 2147483647, %v3903
        %v4030 = vand.u32 2147483647, %v3908
        %v4031 = vand.u32 2147483647, %v3911
        %v4032 = vand.u32 2147483647, %v3916
        %v4033 = vand.u32 2147483647, %v3919
        %v4034 = vand.u32 2147483647, %v3924
        %v4035 = vand.u32 2147483647, %v3927
        %v4036 = vand.u32 2147483647, %v3932
        %v4037 = vand.u32 2147483647, %v3935
        %v4038 = vand.u32 2147483647, %v3940
        %v4039 = vand.u32 2147483647, %v3943
        %v4040 = vand.u32 2147483647, %v3948
        %v4041 = vand.u32 2147483647, %v3951
        %v4042 = vand.u32 2147483647, %v3956
        %v4043 = vand.u32 2147483647, %v3959
        %v4044 = vand.u32 2147483647, %v3964
        %v4045 = vand.u32 2147483647, %v3967
        %v4046 = vand.u32 2147483647, %v3972
        %v4047 = vand.u32 2147483647, %v3975
        %v4048 = vand.u32 2147483647, %v3980
        %v4049 = vand.u32 2147483647, %v3983
        %v4050 = vsub.f32 0.0, %v3986
        %v4051 = vsub.f32 0.0, %v3987
        %v4052 = vsub.f32 0.0, %v3988
        %v4053 = vsub.f32 0.0, %v3989
        %v4054 = vsub.f32 0.0, %v3990
        %v4055 = vsub.f32 0.0, %v3991
        %v4056 = vsub.f32 0.0, %v3992
        %v4057 = vsub.f32 0.0, %v3993
        %v4058 = vsub.f32 0.0, %v3994
        %v4059 = vsub.f32 0.0, %v3995
        %v4060 = vsub.f32 0.0, %v3996
        %v4061 = vsub.f32 0.0, %v3997
        %v4062 = vsub.f32 0.0, %v3998
        %v4063 = vsub.f32 0.0, %v3999
        %v4064 = vsub.f32 0.0, %v4000
        %v4065 = vsub.f32 0.0, %v4001
        %v4066 = vsub.f32 0.0, %v4002
        %v4067 = vsub.f32 0.0, %v4003
        %v4068 = vsub.f32 0.0, %v4004
        %v4069 = vsub.f32 0.0, %v4005
        %v4070 = vsub.f32 0.0, %v4006
        %v4071 = vsub.f32 0.0, %v4007
        %v4072 = vsub.f32 0.0, %v4008
        %v4073 = vsub.f32 0.0, %v4009
        %v4074 = vsub.f32 0.0, %v4010
        %v4075 = vsub.f32 0.0, %v4011
        %v4076 = vsub.f32 0.0, %v4012
        %v4077 = vsub.f32 0.0, %v4013
        %v4078 = vsub.f32 0.0, %v4014
        %v4079 = vsub.f32 0.0, %v4015
        %v4080 = vsub.f32 0.0, %v4016
        %v4081 = vsub.f32 0.0, %v4017
        %v4082 = vsub.f32 0.0, %v4018
        %v4083 = vsub.f32 0.0, %v4019
        %v4084 = vsub.f32 0.0, %v4020
        %v4085 = vsub.f32 0.0, %v4021
        %v4086 = vsub.f32 0.0, %v4022
        %v4087 = vsub.f32 0.0, %v4023
        %v4088 = vsub.f32 0.0, %v4024
        %v4089 = vsub.f32 0.0, %v4025
        %v4090 = vsub.f32 0.0, %v4026
        %v4091 = vsub.f32 0.0, %v4027
        %v4092 = vsub.f32 0.0, %v4028
        %v4093 = vsub.f32 0.0, %v4029
        %v4094 = vsub.f32 0.0, %v4030
        %v4095 = vsub.f32 0.0, %v4031
        %v4096 = vsub.f32 0.0, %v4032
        %v4097 = vsub.f32 0.0, %v4033
        %v4098 = vsub.f32 0.0, %v4034
        %v4099 = vsub.f32 0.0, %v4035
        %v4100 = vsub.f32 0.0, %v4036
        %v4101 = vsub.f32 0.0, %v4037
        %v4102 = vsub.f32 0.0, %v4038
        %v4103 = vsub.f32 0.0, %v4039
        %v4104 = vsub.f32 0.0, %v4040
        %v4105 = vsub.f32 0.0, %v4041
        %v4106 = vsub.f32 0.0, %v4042
        %v4107 = vsub.f32 0.0, %v4043
        %v4108 = vsub.f32 0.0, %v4044
        %v4109 = vsub.f32 0.0, %v4045
        %v4110 = vsub.f32 0.0, %v4046
        %v4111 = vsub.f32 0.0, %v4047
        %v4112 = vsub.f32 0.0, %v4048
        %v4113 = vsub.f32 0.0, %v4049
        %v4114 = vmul.f32 %v4050, 1.442695
        %v4115 = vpow.pop %v4114
        %v4116 = vmul.f32 %v4051, 1.442695
        %v4117 = vpow.pop %v4116
        %v4118 = vmul.f32 %v4052, 1.442695
        %v4119 = vpow.pop %v4118
        %v4120 = vmul.f32 %v4053, 1.442695
        %v4121 = vpow.pop %v4120
        %v4122 = vmul.f32 %v4054, 1.442695
        %v4123 = vpow.pop %v4122
        %v4124 = vmul.f32 %v4055, 1.442695
        %v4125 = vpow.pop %v4124
        %v4126 = vmul.f32 %v4056, 1.442695
        %v4127 = vpow.pop %v4126
        %v4128 = vmul.f32 %v4057, 1.442695
        %v4129 = vpow.pop %v4128
        %v4130 = vmul.f32 %v4058, 1.442695
        %v4131 = vpow.pop %v4130
        %v4132 = vmul.f32 %v4059, 1.442695
        %v4133 = vpow.pop %v4132
        %v4134 = vmul.f32 %v4060, 1.442695
        %v4135 = vpow.pop %v4134
        %v4136 = vmul.f32 %v4061, 1.442695
        %v4137 = vpow.pop %v4136
        %v4138 = vmul.f32 %v4062, 1.442695
        %v4139 = vpow.pop %v4138
        %v4140 = vmul.f32 %v4063, 1.442695
        %v4141 = vpow.pop %v4140
        %v4142 = vmul.f32 %v4064, 1.442695
        %v4143 = vpow.pop %v4142
        %v4144 = vmul.f32 %v4065, 1.442695
        %v4145 = vpow.pop %v4144
        %v4146 = vmul.f32 %v4066, 1.442695
        %v4147 = vpow.pop %v4146
        %v4148 = vmul.f32 %v4067, 1.442695
        %v4149 = vpow.pop %v4148
        %v4150 = vmul.f32 %v4068, 1.442695
        %v4151 = vpow.pop %v4150
        %v4152 = vmul.f32 %v4069, 1.442695
        %v4153 = vpow.pop %v4152
        %v4154 = vmul.f32 %v4070, 1.442695
        %v4155 = vpow.pop %v4154
        %v4156 = vmul.f32 %v4071, 1.442695
        %v4157 = vpow.pop %v4156
        %v4158 = vmul.f32 %v4072, 1.442695
        %v4159 = vpow.pop %v4158
        %v4160 = vmul.f32 %v4073, 1.442695
        %v4161 = vpow.pop %v4160
        %v4162 = vmul.f32 %v4074, 1.442695
        %v4163 = vpow.pop %v4162
        %v4164 = vmul.f32 %v4075, 1.442695
        %v4165 = vpow.pop %v4164
        %v4166 = vmul.f32 %v4076, 1.442695
        %v4167 = vpow.pop %v4166
        %v4168 = vmul.f32 %v4077, 1.442695
        %v4169 = vpow.pop %v4168
        %v4170 = vmul.f32 %v4078, 1.442695
        %v4171 = vpow.pop %v4170
        %v4172 = vmul.f32 %v4079, 1.442695
        %v4173 = vpow.pop %v4172
        %v4174 = vmul.f32 %v4080, 1.442695
        %v4175 = vpow.pop %v4174
        %v4176 = vmul.f32 %v4081, 1.442695
        %v4177 = vpow.pop %v4176
        %v4178 = vmul.f32 %v4082, 1.442695
        %v4179 = vpow.pop %v4178
        %v4180 = vmul.f32 %v4083, 1.442695
        %v4181 = vpow.pop %v4180
        %v4182 = vmul.f32 %v4084, 1.442695
        %v4183 = vpow.pop %v4182
        %v4184 = vmul.f32 %v4085, 1.442695
        %v4185 = vpow.pop %v4184
        %v4186 = vmul.f32 %v4086, 1.442695
        %v4187 = vpow.pop %v4186
        %v4188 = vmul.f32 %v4087, 1.442695
        %v4189 = vpow.pop %v4188
        %v4190 = vmul.f32 %v4088, 1.442695
        %v4191 = vpow.pop %v4190
        %v4192 = vmul.f32 %v4089, 1.442695
        %v4193 = vpow.pop %v4192
        %v4194 = vmul.f32 %v4090, 1.442695
        %v4195 = vpow.pop %v4194
        %v4196 = vmul.f32 %v4091, 1.442695
        %v4197 = vpow.pop %v4196
        %v4198 = vmul.f32 %v4092, 1.442695
        %v4199 = vpow.pop %v4198
        %v4200 = vmul.f32 %v4093, 1.442695
        %v4201 = vpow.pop %v4200
        %v4202 = vmul.f32 %v4094, 1.442695
        %v4203 = vpow.pop %v4202
        %v4204 = vmul.f32 %v4095, 1.442695
        %v4205 = vpow.pop %v4204
        %v4206 = vmul.f32 %v4096, 1.442695
        %v4207 = vpow.pop %v4206
        %v4208 = vmul.f32 %v4097, 1.442695
        %v4209 = vpow.pop %v4208
        %v4210 = vmul.f32 %v4098, 1.442695
        %v4211 = vpow.pop %v4210
        %v4212 = vmul.f32 %v4099, 1.442695
        %v4213 = vpow.pop %v4212
        %v4214 = vmul.f32 %v4100, 1.442695
        %v4215 = vpow.pop %v4214
        %v4216 = vmul.f32 %v4101, 1.442695
        %v4217 = vpow.pop %v4216
        %v4218 = vmul.f32 %v4102, 1.442695
        %v4219 = vpow.pop %v4218
        %v4220 = vmul.f32 %v4103, 1.442695
        %v4221 = vpow.pop %v4220
        %v4222 = vmul.f32 %v4104, 1.442695
        %v4223 = vpow.pop %v4222
        %v4224 = vmul.f32 %v4105, 1.442695
        %v4225 = vpow.pop %v4224
        %v4226 = vmul.f32 %v4106, 1.442695
        %v4227 = vpow.pop %v4226
        %v4228 = vmul.f32 %v4107, 1.442695
        %v4229 = vpow.pop %v4228
        %v4230 = vmul.f32 %v4108, 1.442695
        %v4231 = vpow.pop %v4230
        %v4232 = vmul.f32 %v4109, 1.442695
        %v4233 = vpow.pop %v4232
        %v4234 = vmul.f32 %v4110, 1.442695
        %v4235 = vpow.pop %v4234
        %v4236 = vmul.f32 %v4111, 1.442695
        %v4237 = vpow.pop %v4236
        %v4238 = vmul.f32 %v4112, 1.442695
        %v4239 = vpow.pop %v4238
        %v4240 = vmul.f32 %v4113, 1.442695
        %v4241 = vpow.pop %v4240
        %v4242 = vadd.f32 %v4115, 1.0
        %v4243 = vadd.f32 %v4117, 1.0
        %v4244 = vadd.f32 %v4119, 1.0
        %v4245 = vadd.f32 %v4121, 1.0
        %v4246 = vadd.f32 %v4123, 1.0
        %v4247 = vadd.f32 %v4125, 1.0
        %v4248 = vadd.f32 %v4127, 1.0
        %v4249 = vadd.f32 %v4129, 1.0
        %v4250 = vadd.f32 %v4131, 1.0
        %v4251 = vadd.f32 %v4133, 1.0
        %v4252 = vadd.f32 %v4135, 1.0
        %v4253 = vadd.f32 %v4137, 1.0
        %v4254 = vadd.f32 %v4139, 1.0
        %v4255 = vadd.f32 %v4141, 1.0
        %v4256 = vadd.f32 %v4143, 1.0
        %v4257 = vadd.f32 %v4145, 1.0
        %v4258 = vadd.f32 %v4147, 1.0
        %v4259 = vadd.f32 %v4149, 1.0
        %v4260 = vadd.f32 %v4151, 1.0
        %v4261 = vadd.f32 %v4153, 1.0
        %v4262 = vadd.f32 %v4155, 1.0
        %v4263 = vadd.f32 %v4157, 1.0
        %v4264 = vadd.f32 %v4159, 1.0
        %v4265 = vadd.f32 %v4161, 1.0
        %v4266 = vadd.f32 %v4163, 1.0
        %v4267 = vadd.f32 %v4165, 1.0
        %v4268 = vadd.f32 %v4167, 1.0
        %v4269 = vadd.f32 %v4169, 1.0
        %v4270 = vadd.f32 %v4171, 1.0
        %v4271 = vadd.f32 %v4173, 1.0
        %v4272 = vadd.f32 %v4175, 1.0
        %v4273 = vadd.f32 %v4177, 1.0
        %v4274 = vadd.f32 %v4179, 1.0
        %v4275 = vadd.f32 %v4181, 1.0
        %v4276 = vadd.f32 %v4183, 1.0
        %v4277 = vadd.f32 %v4185, 1.0
        %v4278 = vadd.f32 %v4187, 1.0
        %v4279 = vadd.f32 %v4189, 1.0
        %v4280 = vadd.f32 %v4191, 1.0
        %v4281 = vadd.f32 %v4193, 1.0
        %v4282 = vadd.f32 %v4195, 1.0
        %v4283 = vadd.f32 %v4197, 1.0
        %v4284 = vadd.f32 %v4199, 1.0
        %v4285 = vadd.f32 %v4201, 1.0
        %v4286 = vadd.f32 %v4203, 1.0
        %v4287 = vadd.f32 %v4205, 1.0
        %v4288 = vadd.f32 %v4207, 1.0
        %v4289 = vadd.f32 %v4209, 1.0
        %v4290 = vadd.f32 %v4211, 1.0
        %v4291 = vadd.f32 %v4213, 1.0
        %v4292 = vadd.f32 %v4215, 1.0
        %v4293 = vadd.f32 %v4217, 1.0
        %v4294 = vadd.f32 %v4219, 1.0
        %v4295 = vadd.f32 %v4221, 1.0
        %v4296 = vadd.f32 %v4223, 1.0
        %v4297 = vadd.f32 %v4225, 1.0
        %v4298 = vadd.f32 %v4227, 1.0
        %v4299 = vadd.f32 %v4229, 1.0
        %v4300 = vadd.f32 %v4231, 1.0
        %v4301 = vadd.f32 %v4233, 1.0
        %v4302 = vadd.f32 %v4235, 1.0
        %v4303 = vadd.f32 %v4237, 1.0
        %v4304 = vadd.f32 %v4239, 1.0
        %v4305 = vadd.f32 %v4241, 1.0
        %v4306 = vrcp.pop %v4242
        %v4307 = vrcp.pop %v4243
        %v4308 = vrcp.pop %v4244
        %v4309 = vrcp.pop %v4245
        %v4310 = vrcp.pop %v4246
        %v4311 = vrcp.pop %v4247
        %v4312 = vrcp.pop %v4248
        %v4313 = vrcp.pop %v4249
        %v4314 = vrcp.pop %v4250
        %v4315 = vrcp.pop %v4251
        %v4316 = vrcp.pop %v4252
        %v4317 = vrcp.pop %v4253
        %v4318 = vrcp.pop %v4254
        %v4319 = vrcp.pop %v4255
        %v4320 = vrcp.pop %v4256
        %v4321 = vrcp.pop %v4257
        %v4322 = vrcp.pop %v4258
        %v4323 = vrcp.pop %v4259
        %v4324 = vrcp.pop %v4260
        %v4325 = vrcp.pop %v4261
        %v4326 = vrcp.pop %v4262
        %v4327 = vrcp.pop %v4263
        %v4328 = vrcp.pop %v4264
        %v4329 = vrcp.pop %v4265
        %v4330 = vrcp.pop %v4266
        %v4331 = vrcp.pop %v4267
        %v4332 = vrcp.pop %v4268
        %v4333 = vrcp.pop %v4269
        %v4334 = vrcp.pop %v4270
        %v4335 = vrcp.pop %v4271
        %v4336 = vrcp.pop %v4272
        %v4337 = vrcp.pop %v4273
        %v4338 = vrcp.pop %v4274
        %v4339 = vrcp.pop %v4275
        %v4340 = vrcp.pop %v4276
        %v4341 = vrcp.pop %v4277
        %v4342 = vrcp.pop %v4278
        %v4343 = vrcp.pop %v4279
        %v4344 = vrcp.pop %v4280
        %v4345 = vrcp.pop %v4281
        %v4346 = vrcp.pop %v4282
        %v4347 = vrcp.pop %v4283
        %v4348 = vrcp.pop %v4284
        %v4349 = vrcp.pop %v4285
        %v4350 = vrcp.pop %v4286
        %v4351 = vrcp.pop %v4287
        %v4352 = vrcp.pop %v4288
        %v4353 = vrcp.pop %v4289
        %v4354 = vrcp.pop %v4290
        %v4355 = vrcp.pop %v4291
        %v4356 = vrcp.pop %v4292
        %v4357 = vrcp.pop %v4293
        %v4358 = vrcp.pop %v4294
        %v4359 = vrcp.pop %v4295
        %v4360 = vrcp.pop %v4296
        %v4361 = vrcp.pop %v4297
        %v4362 = vrcp.pop %v4298
        %v4363 = vrcp.pop %v4299
        %v4364 = vrcp.pop %v4300
        %v4365 = vrcp.pop %v4301
        %v4366 = vrcp.pop %v4302
        %v4367 = vrcp.pop %v4303
        %v4368 = vrcp.pop %v4304
        %v4369 = vrcp.pop %v4305
        %vm4370 = vcmp.ge.f32.partialorder %v3732, 0.0
        %vm4371 = vcmp.ge.f32.partialorder %v3735, 0.0
        %vm4372 = vcmp.ge.f32.partialorder %v3740, 0.0
        %vm4373 = vcmp.ge.f32.partialorder %v3743, 0.0
        %vm4374 = vcmp.ge.f32.partialorder %v3748, 0.0
        %vm4375 = vcmp.ge.f32.partialorder %v3751, 0.0
        %vm4376 = vcmp.ge.f32.partialorder %v3756, 0.0
        %vm4377 = vcmp.ge.f32.partialorder %v3759, 0.0
        %vm4378 = vcmp.ge.f32.partialorder %v3764, 0.0
        %vm4379 = vcmp.ge.f32.partialorder %v3767, 0.0
        %vm4380 = vcmp.ge.f32.partialorder %v3772, 0.0
        %vm4381 = vcmp.ge.f32.partialorder %v3775, 0.0
        %vm4382 = vcmp.ge.f32.partialorder %v3780, 0.0
        %vm4383 = vcmp.ge.f32.partialorder %v3783, 0.0
        %vm4384 = vcmp.ge.f32.partialorder %v3788, 0.0
        %vm4385 = vcmp.ge.f32.partialorder %v3791, 0.0
        %vm4386 = vcmp.ge.f32.partialorder %v3796, 0.0
        %vm4387 = vcmp.ge.f32.partialorder %v3799, 0.0
        %vm4388 = vcmp.ge.f32.partialorder %v3804, 0.0
        %vm4389 = vcmp.ge.f32.partialorder %v3807, 0.0
        %vm4390 = vcmp.ge.f32.partialorder %v3812, 0.0
        %vm4391 = vcmp.ge.f32.partialorder %v3815, 0.0
        %vm4392 = vcmp.ge.f32.partialorder %v3820, 0.0
        %vm4393 = vcmp.ge.f32.partialorder %v3823, 0.0
        %vm4394 = vcmp.ge.f32.partialorder %v3828, 0.0
        %vm4395 = vcmp.ge.f32.partialorder %v3831, 0.0
        %vm4396 = vcmp.ge.f32.partialorder %v3836, 0.0
        %vm4397 = vcmp.ge.f32.partialorder %v3839, 0.0
        %vm4398 = vcmp.ge.f32.partialorder %v3844, 0.0
        %vm4399 = vcmp.ge.f32.partialorder %v3847, 0.0
        %vm4400 = vcmp.ge.f32.partialorder %v3852, 0.0
        %vm4401 = vcmp.ge.f32.partialorder %v3855, 0.0
        %vm4402 = vcmp.ge.f32.partialorder %v3860, 0.0
        %vm4403 = vcmp.ge.f32.partialorder %v3863, 0.0
        %vm4404 = vcmp.ge.f32.partialorder %v3868, 0.0
        %vm4405 = vcmp.ge.f32.partialorder %v3871, 0.0
        %vm4406 = vcmp.ge.f32.partialorder %v3876, 0.0
        %vm4407 = vcmp.ge.f32.partialorder %v3879, 0.0
        %vm4408 = vcmp.ge.f32.partialorder %v3884, 0.0
        %vm4409 = vcmp.ge.f32.partialorder %v3887, 0.0
        %vm4410 = vcmp.ge.f32.partialorder %v3892, 0.0
        %vm4411 = vcmp.ge.f32.partialorder %v3895, 0.0
        %vm4412 = vcmp.ge.f32.partialorder %v3900, 0.0
        %vm4413 = vcmp.ge.f32.partialorder %v3903, 0.0
        %vm4414 = vcmp.ge.f32.partialorder %v3908, 0.0
        %vm4415 = vcmp.ge.f32.partialorder %v3911, 0.0
        %vm4416 = vcmp.ge.f32.partialorder %v3916, 0.0
        %vm4417 = vcmp.ge.f32.partialorder %v3919, 0.0
        %vm4418 = vcmp.ge.f32.partialorder %v3924, 0.0
        %vm4419 = vcmp.ge.f32.partialorder %v3927, 0.0
        %vm4420 = vcmp.ge.f32.partialorder %v3932, 0.0
        %vm4421 = vcmp.ge.f32.partialorder %v3935, 0.0
        %vm4422 = vcmp.ge.f32.partialorder %v3940, 0.0
        %vm4423 = vcmp.ge.f32.partialorder %v3943, 0.0
        %vm4424 = vcmp.ge.f32.partialorder %v3948, 0.0
        %vm4425 = vcmp.ge.f32.partialorder %v3951, 0.0
        %vm4426 = vcmp.ge.f32.partialorder %v3956, 0.0
        %vm4427 = vcmp.ge.f32.partialorder %v3959, 0.0
        %vm4428 = vcmp.ge.f32.partialorder %v3964, 0.0
        %vm4429 = vcmp.ge.f32.partialorder %v3967, 0.0
        %vm4430 = vcmp.ge.f32.partialorder %v3972, 0.0
        %vm4431 = vcmp.ge.f32.partialorder %v3975, 0.0
        %vm4432 = vcmp.ge.f32.partialorder %v3980, 0.0
        %vm4433 = vcmp.ge.f32.partialorder %v3983, 0.0
        %v4434 = vmul.f32 %v4115, %v4306
        %v4435 = vmul.f32 %v4117, %v4307
        %v4436 = vmul.f32 %v4119, %v4308
        %v4437 = vmul.f32 %v4121, %v4309
        %v4438 = vmul.f32 %v4123, %v4310
        %v4439 = vmul.f32 %v4125, %v4311
        %v4440 = vmul.f32 %v4127, %v4312
        %v4441 = vmul.f32 %v4129, %v4313
        %v4442 = vmul.f32 %v4131, %v4314
        %v4443 = vmul.f32 %v4133, %v4315
        %v4444 = vmul.f32 %v4135, %v4316
        %v4445 = vmul.f32 %v4137, %v4317
        %v4446 = vmul.f32 %v4139, %v4318
        %v4447 = vmul.f32 %v4141, %v4319
        %v4448 = vmul.f32 %v4143, %v4320
        %v4449 = vmul.f32 %v4145, %v4321
        %v4450 = vmul.f32 %v4147, %v4322
        %v4451 = vmul.f32 %v4149, %v4323
        %v4452 = vmul.f32 %v4151, %v4324
        %v4453 = vmul.f32 %v4153, %v4325
        %v4454 = vmul.f32 %v4155, %v4326
        %v4455 = vmul.f32 %v4157, %v4327
        %v4456 = vmul.f32 %v4159, %v4328
        %v4457 = vmul.f32 %v4161, %v4329
        %v4458 = vmul.f32 %v4163, %v4330
        %v4459 = vmul.f32 %v4165, %v4331
        %v4460 = vmul.f32 %v4167, %v4332
        %v4461 = vmul.f32 %v4169, %v4333
        %v4462 = vmul.f32 %v4171, %v4334
        %v4463 = vmul.f32 %v4173, %v4335
        %v4464 = vmul.f32 %v4175, %v4336
        %v4465 = vmul.f32 %v4177, %v4337
        %v4466 = vmul.f32 %v4179, %v4338
        %v4467 = vmul.f32 %v4181, %v4339
        %v4468 = vmul.f32 %v4183, %v4340
        %v4469 = vmul.f32 %v4185, %v4341
        %v4470 = vmul.f32 %v4187, %v4342
        %v4471 = vmul.f32 %v4189, %v4343
        %v4472 = vmul.f32 %v4191, %v4344
        %v4473 = vmul.f32 %v4193, %v4345
        %v4474 = vmul.f32 %v4195, %v4346
        %v4475 = vmul.f32 %v4197, %v4347
        %v4476 = vmul.f32 %v4199, %v4348
        %v4477 = vmul.f32 %v4201, %v4349
        %v4478 = vmul.f32 %v4203, %v4350
        %v4479 = vmul.f32 %v4205, %v4351
        %v4480 = vmul.f32 %v4207, %v4352
        %v4481 = vmul.f32 %v4209, %v4353
        %v4482 = vmul.f32 %v4211, %v4354
        %v4483 = vmul.f32 %v4213, %v4355
        %v4484 = vmul.f32 %v4215, %v4356
        %v4485 = vmul.f32 %v4217, %v4357
        %v4486 = vmul.f32 %v4219, %v4358
        %v4487 = vmul.f32 %v4221, %v4359
        %v4488 = vmul.f32 %v4223, %v4360
        %v4489 = vmul.f32 %v4225, %v4361
        %v4490 = vmul.f32 %v4227, %v4362
        %v4491 = vmul.f32 %v4229, %v4363
        %v4492 = vmul.f32 %v4231, %v4364
        %v4493 = vmul.f32 %v4233, %v4365
        %v4494 = vmul.f32 %v4235, %v4366
        %v4495 = vmul.f32 %v4237, %v4367
        %v4496 = vmul.f32 %v4239, %v4368
        %v4497 = vmul.f32 %v4241, %v4369
        %v4498 = vsel %vm4370, %v4306, %v4434
        %v4499 = vsel %vm4371, %v4307, %v4435
        %v4500 = vsel %vm4372, %v4308, %v4436
        %v4501 = vsel %vm4373, %v4309, %v4437
        %v4502 = vsel %vm4374, %v4310, %v4438
        %v4503 = vsel %vm4375, %v4311, %v4439
        %v4504 = vsel %vm4376, %v4312, %v4440
        %v4505 = vsel %vm4377, %v4313, %v4441
        %v4506 = vsel %vm4378, %v4314, %v4442
        %v4507 = vsel %vm4379, %v4315, %v4443
        %v4508 = vsel %vm4380, %v4316, %v4444
        %v4509 = vsel %vm4381, %v4317, %v4445
        %v4510 = vsel %vm4382, %v4318, %v4446
        %v4511 = vsel %vm4383, %v4319, %v4447
        %v4512 = vsel %vm4384, %v4320, %v4448
        %v4513 = vsel %vm4385, %v4321, %v4449
        %v4514 = vsel %vm4386, %v4322, %v4450
        %v4515 = vsel %vm4387, %v4323, %v4451
        %v4516 = vsel %vm4388, %v4324, %v4452
        %v4517 = vsel %vm4389, %v4325, %v4453
        %v4518 = vsel %vm4390, %v4326, %v4454
        %v4519 = vsel %vm4391, %v4327, %v4455
        %v4520 = vsel %vm4392, %v4328, %v4456
        %v4521 = vsel %vm4393, %v4329, %v4457
        %v4522 = vsel %vm4394, %v4330, %v4458
        %v4523 = vsel %vm4395, %v4331, %v4459
        %v4524 = vsel %vm4396, %v4332, %v4460
        %v4525 = vsel %vm4397, %v4333, %v4461
        %v4526 = vsel %vm4398, %v4334, %v4462
        %v4527 = vsel %vm4399, %v4335, %v4463
        %v4528 = vsel %vm4400, %v4336, %v4464
        %v4529 = vsel %vm4401, %v4337, %v4465
        %v4530 = vsel %vm4402, %v4338, %v4466
        %v4531 = vsel %vm4403, %v4339, %v4467
        %v4532 = vsel %vm4404, %v4340, %v4468
        %v4533 = vsel %vm4405, %v4341, %v4469
        %v4534 = vsel %vm4406, %v4342, %v4470
        %v4535 = vsel %vm4407, %v4343, %v4471
        %v4536 = vsel %vm4408, %v4344, %v4472
        %v4537 = vsel %vm4409, %v4345, %v4473
        %v4538 = vsel %vm4410, %v4346, %v4474
        %v4539 = vsel %vm4411, %v4347, %v4475
        %v4540 = vsel %vm4412, %v4348, %v4476
        %v4541 = vsel %vm4413, %v4349, %v4477
        %v4542 = vsel %vm4414, %v4350, %v4478
        %v4543 = vsel %vm4415, %v4351, %v4479
        %v4544 = vsel %vm4416, %v4352, %v4480
        %v4545 = vsel %vm4417, %v4353, %v4481
        %v4546 = vsel %vm4418, %v4354, %v4482
        %v4547 = vsel %vm4419, %v4355, %v4483
        %v4548 = vsel %vm4420, %v4356, %v4484
        %v4549 = vsel %vm4421, %v4357, %v4485
        %v4550 = vsel %vm4422, %v4358, %v4486
        %v4551 = vsel %vm4423, %v4359, %v4487
        %v4552 = vsel %vm4424, %v4360, %v4488
        %v4553 = vsel %vm4425, %v4361, %v4489
        %v4554 = vsel %vm4426, %v4362, %v4490
        %v4555 = vsel %vm4427, %v4363, %v4491
        %v4556 = vsel %vm4428, %v4364, %v4492
        %v4557 = vsel %vm4429, %v4365, %v4493
        %v4558 = vsel %vm4430, %v4366, %v4494
        %v4559 = vsel %vm4431, %v4367, %v4495
        %v4560 = vsel %vm4432, %v4368, %v4496
        %v4561 = vsel %vm4433, %v4369, %v4497
        %v4562 = vpack.c.bf16 %v4499, %v4498
        %v4563 = vpack.c.bf16 %v4501, %v4500
        %v4564 = vpack.c.bf16 %v4503, %v4502
        %v4565 = vpack.c.bf16 %v4505, %v4504
        %v4566 = vpack.c.bf16 %v4507, %v4506
        %v4567 = vpack.c.bf16 %v4509, %v4508
        %v4568 = vpack.c.bf16 %v4511, %v4510
        %v4569 = vpack.c.bf16 %v4513, %v4512
        %v4570 = vpack.c.bf16 %v4515, %v4514
        %v4571 = vpack.c.bf16 %v4517, %v4516
        %v4572 = vpack.c.bf16 %v4519, %v4518
        %v4573 = vpack.c.bf16 %v4521, %v4520
        %v4574 = vpack.c.bf16 %v4523, %v4522
        %v4575 = vpack.c.bf16 %v4525, %v4524
        %v4576 = vpack.c.bf16 %v4527, %v4526
        %v4577 = vpack.c.bf16 %v4529, %v4528
        %v4578 = vpack.c.bf16 %v4531, %v4530
        %v4579 = vpack.c.bf16 %v4533, %v4532
        %v4580 = vpack.c.bf16 %v4535, %v4534
        %v4581 = vpack.c.bf16 %v4537, %v4536
        %v4582 = vpack.c.bf16 %v4539, %v4538
        %v4583 = vpack.c.bf16 %v4541, %v4540
        %v4584 = vpack.c.bf16 %v4543, %v4542
        %v4585 = vpack.c.bf16 %v4545, %v4544
        %v4586 = vpack.c.bf16 %v4547, %v4546
        %v4587 = vpack.c.bf16 %v4549, %v4548
        %v4588 = vpack.c.bf16 %v4551, %v4550
        %v4589 = vpack.c.bf16 %v4553, %v4552
        %v4590 = vpack.c.bf16 %v4555, %v4554
        %v4591 = vpack.c.bf16 %v4557, %v4556
        %v4592 = vpack.c.bf16 %v4559, %v4558
        %v4593 = vpack.c.bf16 %v4561, %v4560
        %v4594 = vld [vmem:[%s6] sm:$0xf]
        %v4597 = vunpack.c.l.s4 1983009808
        %v4598 = vunpack.c.0.s8 %v4597
        %v4599 = vlaneseq
        %v4600 = vshrl.u32 %v4599, 7
        %v4601 = vsub.s32 %v4598, %v4600
        %v4602 = vrot.slane %v4594, %v4601
        %v4603 = vcombine.high %v4602, %v4602
        %vm4604 = vcmask 23552
        %v4606 = vsel %vm4604, %v4562, 0
        %v4609 = vsel %vm4604, %v4563, 0
        %v4612 = vsel %vm4604, %v4564, 0
        %v4615 = vsel %vm4604, %v4565, 0
        %v4618 = vsel %vm4604, %v4566, 0
        %v4621 = vsel %vm4604, %v4567, 0
        %v4624 = vsel %vm4604, %v4568, 0
        %v4627 = vsel %vm4604, %v4569, 0
        %v4630 = vsel %vm4604, %v4570, 0
        %v4633 = vsel %vm4604, %v4571, 0
        %v4636 = vsel %vm4604, %v4572, 0
        %v4639 = vsel %vm4604, %v4573, 0
        %v4642 = vsel %vm4604, %v4574, 0
        %v4645 = vsel %vm4604, %v4575, 0
        %v4648 = vsel %vm4604, %v4576, 0
        %v4651 = vsel %vm4604, %v4577, 0
        %v4654 = vsel %vm4604, %v4578, 0
        %v4657 = vsel %vm4604, %v4579, 0
        %v4660 = vsel %vm4604, %v4580, 0
        %v4663 = vsel %vm4604, %v4581, 0
        %v4666 = vsel %vm4604, %v4582, 0
        %v4669 = vsel %vm4604, %v4583, 0
        %v4672 = vsel %vm4604, %v4584, 0
        %v4675 = vsel %vm4604, %v4585, 0
        %v4678 = vsel %vm4604, %v4586, 0
        %v4681 = vsel %vm4604, %v4587, 0
        %v4684 = vsel %vm4604, %v4588, 0
        %v4687 = vsel %vm4604, %v4589, 0
        %v4690 = vsel %vm4604, %v4590, 0
        %v4693 = vsel %vm4604, %v4591, 0
        %v4696 = vsel %vm4604, %v4592, 0
        %v4699 = vsel %vm4604, %v4593, 0
        %vm4701 = vcmask 1040384
        %vm4702 = vcmask 1041408
        %v4703 = vsel %vm4701, 4294967295, 65535
        %v4704 = vsel %vm4702, %v4703, 0
        %v4706 = vand.u32 %v4602, %v4704
        %v4709 = vand.u32 %v4603, %v4704
        %4711 = vmatprep.subr.bf16.mxu0 %v4709
        %4712 = vmatpush1.bf16.msra.mxu0 %v4706
        %4713 = vmatprep.subr.bf16.mxu0 0
        %4714 = vmatpush1.bf16.msra.mxu0 0
        %4715 = vmatprep.subr.bf16.mxu0 0
        %4716 = vmatpush1.bf16.msra.mxu0 0
        %4717 = vmatprep.subr.bf16.mxu0 0
        %4718 = vmatpush1.bf16.msra.mxu0 0
        %4719 = vmatprep.subr.bf16.mxu0 0
        %4720 = vmatpush1.bf16.msra.mxu0 0
        %4721 = vmatprep.subr.bf16.mxu0 0
        %4722 = vmatpush1.bf16.msra.mxu0 0
        %4723 = vmatprep.subr.bf16.mxu0 0
        %4724 = vmatpush1.bf16.msra.mxu0 0
        %4725 = vmatprep.subr.bf16.mxu0 0
        %4726 = vmatpush1.bf16.msra.mxu0 0
        %4727 = vmatprep.subr.bf16.mxu0 0
        %4728 = vmatpush1.bf16.msra.mxu0 0
        %4729 = vmatprep.subr.bf16.mxu0 0
        %4730 = vmatpush1.bf16.msra.mxu0 0
        %4731 = vmatprep.subr.bf16.mxu0 0
        %4732 = vmatpush1.bf16.msra.mxu0 0
        %4733 = vmatprep.subr.bf16.mxu0 0
        %4734 = vmatpush1.bf16.msra.mxu0 0
        %4735 = vmatprep.subr.bf16.mxu0 0
        %4736 = vmatpush1.bf16.msra.mxu0 0
        %4737 = vmatprep.subr.bf16.mxu0 0
        %4738 = vmatpush1.bf16.msra.mxu0 0
        %4739 = vmatprep.subr.bf16.mxu0 0
        %4740 = vmatpush1.bf16.msra.mxu0 0
        %4741 = vmatprep.subr.bf16.mxu0 0
        %4742 = vmatpush1.bf16.msra.mxu0 0
        %4743 = vmatprep.mubr.bf16.mxu0 0
        %4744 = vmatmul.mubr.bf16.gmra.mrb[0].mxu0 %v4606
        %v4745 = vpop.f32.mrb[0].mxu0
        %v4746 = vadd.f32 0.0, %v4745
        %v4747 = vpop.f32.mrb[0].mxu0
        %v4748 = vadd.f32 0.0, %v4747
        %v4749 = vpop.f32.mrb[0].mxu0
        %v4750 = vadd.f32 0.0, %v4749
        %v4751 = vpop.f32.mrb[0].mxu0
        %v4752 = vadd.f32 0.0, %v4751
        %4753 = vmatprep.mubr.bf16.mxu0 0
        %4754 = vmatmul.mubr.bf16.gmra.mrb[0].mxu0 %v4609
        %v4755 = vpop.f32.mrb[0].mxu0
        %v4756 = vadd.f32 0.0, %v4755
        %v4757 = vpop.f32.mrb[0].mxu0
        %v4758 = vadd.f32 0.0, %v4757
        %v4759 = vpop.f32.mrb[0].mxu0
        %v4760 = vadd.f32 0.0, %v4759
        %v4761 = vpop.f32.mrb[0].mxu0
        %v4762 = vadd.f32 0.0, %v4761
        %4763 = vmatprep.mubr.bf16.mxu0 0
        %4764 = vmatmul.mubr.bf16.gmra.mrb[0].mxu0 %v4612
        %v4765 = vpop.f32.mrb[0].mxu0
        %v4766 = vadd.f32 0.0, %v4765
        %v4767 = vpop.f32.mrb[0].mxu0
        %v4768 = vadd.f32 0.0, %v4767
        %v4769 = vpop.f32.mrb[0].mxu0
        %v4770 = vadd.f32 0.0, %v4769
        %v4771 = vpop.f32.mrb[0].mxu0
        %v4772 = vadd.f32 0.0, %v4771
        %4773 = vmatprep.mubr.bf16.mxu0 0
        %4774 = vmatmul.mubr.bf16.gmra.mrb[0].mxu0 %v4615
        %v4775 = vpop.f32.mrb[0].mxu0
        %v4776 = vadd.f32 0.0, %v4775
        %v4777 = vpop.f32.mrb[0].mxu0
        %v4778 = vadd.f32 0.0, %v4777
        %v4779 = vpop.f32.mrb[0].mxu0
        %v4780 = vadd.f32 0.0, %v4779
        %v4781 = vpop.f32.mrb[0].mxu0
        %v4782 = vadd.f32 0.0, %v4781
        %4783 = vmatprep.mubr.bf16.mxu0 0
        %4784 = vmatmul.mubr.bf16.gmra.mrb[0].mxu0 %v4618
        %v4785 = vpop.f32.mrb[0].mxu0
        %v4786 = vadd.f32 0.0, %v4785
        %v4787 = vpop.f32.mrb[0].mxu0
        %v4788 = vadd.f32 0.0, %v4787
        %v4789 = vpop.f32.mrb[0].mxu0
        %v4790 = vadd.f32 0.0, %v4789
        %v4791 = vpop.f32.mrb[0].mxu0
        %v4792 = vadd.f32 0.0, %v4791
        %4793 = vmatprep.mubr.bf16.mxu0 0
        %4794 = vmatmul.mubr.bf16.gmra.mrb[0].mxu0 %v4621
        %v4795 = vpop.f32.mrb[0].mxu0
        %v4796 = vadd.f32 0.0, %v4795
        %v4797 = vpop.f32.mrb[0].mxu0
        %v4798 = vadd.f32 0.0, %v4797
        %v4799 = vpop.f32.mrb[0].mxu0
        %v4800 = vadd.f32 0.0, %v4799
        %v4801 = vpop.f32.mrb[0].mxu0
        %v4802 = vadd.f32 0.0, %v4801
        %4803 = vmatprep.mubr.bf16.mxu0 0
        %4804 = vmatmul.mubr.bf16.gmra.mrb[0].mxu0 %v4624
        %v4805 = vpop.f32.mrb[0].mxu0
        %v4806 = vadd.f32 0.0, %v4805
        %v4807 = vpop.f32.mrb[0].mxu0
        %v4808 = vadd.f32 0.0, %v4807
        %v4809 = vpop.f32.mrb[0].mxu0
        %v4810 = vadd.f32 0.0, %v4809
        %v4811 = vpop.f32.mrb[0].mxu0
        %v4812 = vadd.f32 0.0, %v4811
        %4813 = vmatprep.mubr.bf16.mxu0 0
        %4814 = vmatmul.mubr.bf16.gmra.mrb[0].mxu0 %v4627
        %v4815 = vpop.f32.mrb[0].mxu0
        %v4816 = vadd.f32 0.0, %v4815
        %v4817 = vpop.f32.mrb[0].mxu0
        %v4818 = vadd.f32 0.0, %v4817
        %v4819 = vpop.f32.mrb[0].mxu0
        %v4820 = vadd.f32 0.0, %v4819
        %v4821 = vpop.f32.mrb[0].mxu0
        %v4822 = vadd.f32 0.0, %v4821
        %4823 = vmatprep.mubr.bf16.mxu0 0
        %4824 = vmatmul.mubr.bf16.gmra.mrb[0].mxu0 %v4630
        %v4825 = vpop.f32.mrb[0].mxu0
        %v4826 = vadd.f32 0.0, %v4825
        %v4827 = vpop.f32.mrb[0].mxu0
        %v4828 = vadd.f32 0.0, %v4827
        %v4829 = vpop.f32.mrb[0].mxu0
        %v4830 = vadd.f32 0.0, %v4829
        %v4831 = vpop.f32.mrb[0].mxu0
        %v4832 = vadd.f32 0.0, %v4831
        %4833 = vmatprep.mubr.bf16.mxu0 0
        %4834 = vmatmul.mubr.bf16.gmra.mrb[0].mxu0 %v4633
        %v4835 = vpop.f32.mrb[0].mxu0
        %v4836 = vadd.f32 0.0, %v4835
        %v4837 = vpop.f32.mrb[0].mxu0
        %v4838 = vadd.f32 0.0, %v4837
        %v4839 = vpop.f32.mrb[0].mxu0
        %v4840 = vadd.f32 0.0, %v4839
        %v4841 = vpop.f32.mrb[0].mxu0
        %v4842 = vadd.f32 0.0, %v4841
        %4843 = vmatprep.mubr.bf16.mxu0 0
        %4844 = vmatmul.mubr.bf16.gmra.mrb[0].mxu0 %v4636
        %v4845 = vpop.f32.mrb[0].mxu0
        %v4846 = vadd.f32 0.0, %v4845
        %v4847 = vpop.f32.mrb[0].mxu0
        %v4848 = vadd.f32 0.0, %v4847
        %v4849 = vpop.f32.mrb[0].mxu0
        %v4850 = vadd.f32 0.0, %v4849
        %v4851 = vpop.f32.mrb[0].mxu0
        %v4852 = vadd.f32 0.0, %v4851
        %4853 = vmatprep.mubr.bf16.mxu0 0
        %4854 = vmatmul.mubr.bf16.gmra.mrb[0].mxu0 %v4639
        %v4855 = vpop.f32.mrb[0].mxu0
        %v4856 = vadd.f32 0.0, %v4855
        %v4857 = vpop.f32.mrb[0].mxu0
        %v4858 = vadd.f32 0.0, %v4857
        %v4859 = vpop.f32.mrb[0].mxu0
        %v4860 = vadd.f32 0.0, %v4859
        %v4861 = vpop.f32.mrb[0].mxu0
        %v4862 = vadd.f32 0.0, %v4861
        %4863 = vmatprep.mubr.bf16.mxu0 0
        %4864 = vmatmul.mubr.bf16.gmra.mrb[0].mxu0 %v4642
        %v4865 = vpop.f32.mrb[0].mxu0
        %v4866 = vadd.f32 0.0, %v4865
        %v4867 = vpop.f32.mrb[0].mxu0
        %v4868 = vadd.f32 0.0, %v4867
        %v4869 = vpop.f32.mrb[0].mxu0
        %v4870 = vadd.f32 0.0, %v4869
        %v4871 = vpop.f32.mrb[0].mxu0
        %v4872 = vadd.f32 0.0, %v4871
        %4873 = vmatprep.mubr.bf16.mxu0 0
        %4874 = vmatmul.mubr.bf16.gmra.mrb[0].mxu0 %v4645
        %v4875 = vpop.f32.mrb[0].mxu0
        %v4876 = vadd.f32 0.0, %v4875
        %v4877 = vpop.f32.mrb[0].mxu0
        %v4878 = vadd.f32 0.0, %v4877
        %v4879 = vpop.f32.mrb[0].mxu0
        %v4880 = vadd.f32 0.0, %v4879
        %v4881 = vpop.f32.mrb[0].mxu0
        %v4882 = vadd.f32 0.0, %v4881
        %4883 = vmatprep.mubr.bf16.mxu0 0
        %4884 = vmatmul.mubr.bf16.gmra.mrb[0].mxu0 %v4648
        %v4885 = vpop.f32.mrb[0].mxu0
        %v4886 = vadd.f32 0.0, %v4885
        %v4887 = vpop.f32.mrb[0].mxu0
        %v4888 = vadd.f32 0.0, %v4887
        %v4889 = vpop.f32.mrb[0].mxu0
        %v4890 = vadd.f32 0.0, %v4889
        %v4891 = vpop.f32.mrb[0].mxu0
        %v4892 = vadd.f32 0.0, %v4891
        %4893 = vmatprep.mubr.bf16.mxu0 0
        %4894 = vmatmul.mubr.bf16.gmra.mrb[0].mxu0 %v4651
        %v4895 = vpop.f32.mrb[0].mxu0
        %v4896 = vadd.f32 0.0, %v4895
        %v4897 = vpop.f32.mrb[0].mxu0
        %v4898 = vadd.f32 0.0, %v4897
        %v4899 = vpop.f32.mrb[0].mxu0
        %v4900 = vadd.f32 0.0, %v4899
        %v4901 = vpop.f32.mrb[0].mxu0
        %v4902 = vadd.f32 0.0, %v4901
        %4903 = vmatprep.mubr.bf16.mxu0 0
        %4904 = vmatmul.mubr.bf16.gmra.mrb[0].mxu0 %v4654
        %v4905 = vpop.f32.mrb[0].mxu0
        %v4906 = vadd.f32 0.0, %v4905
        %v4907 = vpop.f32.mrb[0].mxu0
        %v4908 = vadd.f32 0.0, %v4907
        %v4909 = vpop.f32.mrb[0].mxu0
        %v4910 = vadd.f32 0.0, %v4909
        %v4911 = vpop.f32.mrb[0].mxu0
        %v4912 = vadd.f32 0.0, %v4911
        %4913 = vmatprep.mubr.bf16.mxu0 0
        %4914 = vmatmul.mubr.bf16.gmra.mrb[0].mxu0 %v4657
        %v4915 = vpop.f32.mrb[0].mxu0
        %v4916 = vadd.f32 0.0, %v4915
        %v4917 = vpop.f32.mrb[0].mxu0
        %v4918 = vadd.f32 0.0, %v4917
        %v4919 = vpop.f32.mrb[0].mxu0
        %v4920 = vadd.f32 0.0, %v4919
        %v4921 = vpop.f32.mrb[0].mxu0
        %v4922 = vadd.f32 0.0, %v4921
        %4923 = vmatprep.mubr.bf16.mxu0 0
        %4924 = vmatmul.mubr.bf16.gmra.mrb[0].mxu0 %v4660
        %v4925 = vpop.f32.mrb[0].mxu0
        %v4926 = vadd.f32 0.0, %v4925
        %v4927 = vpop.f32.mrb[0].mxu0
        %v4928 = vadd.f32 0.0, %v4927
        %v4929 = vpop.f32.mrb[0].mxu0
        %v4930 = vadd.f32 0.0, %v4929
        %v4931 = vpop.f32.mrb[0].mxu0
        %v4932 = vadd.f32 0.0, %v4931
        %4933 = vmatprep.mubr.bf16.mxu0 0
        %4934 = vmatmul.mubr.bf16.gmra.mrb[0].mxu0 %v4663
        %v4935 = vpop.f32.mrb[0].mxu0
        %v4936 = vadd.f32 0.0, %v4935
        %v4937 = vpop.f32.mrb[0].mxu0
        %v4938 = vadd.f32 0.0, %v4937
        %v4939 = vpop.f32.mrb[0].mxu0
        %v4940 = vadd.f32 0.0, %v4939
        %v4941 = vpop.f32.mrb[0].mxu0
        %v4942 = vadd.f32 0.0, %v4941
        %4943 = vmatprep.mubr.bf16.mxu0 0
        %4944 = vmatmul.mubr.bf16.gmra.mrb[0].mxu0 %v4666
        %v4945 = vpop.f32.mrb[0].mxu0
        %v4946 = vadd.f32 0.0, %v4945
        %v4947 = vpop.f32.mrb[0].mxu0
        %v4948 = vadd.f32 0.0, %v4947
        %v4949 = vpop.f32.mrb[0].mxu0
        %v4950 = vadd.f32 0.0, %v4949
        %v4951 = vpop.f32.mrb[0].mxu0
        %v4952 = vadd.f32 0.0, %v4951
        %4953 = vmatprep.mubr.bf16.mxu0 0
        %4954 = vmatmul.mubr.bf16.gmra.mrb[0].mxu0 %v4669
        %v4955 = vpop.f32.mrb[0].mxu0
        %v4956 = vadd.f32 0.0, %v4955
        %v4957 = vpop.f32.mrb[0].mxu0
        %v4958 = vadd.f32 0.0, %v4957
        %v4959 = vpop.f32.mrb[0].mxu0
        %v4960 = vadd.f32 0.0, %v4959
        %v4961 = vpop.f32.mrb[0].mxu0
        %v4962 = vadd.f32 0.0, %v4961
        %4963 = vmatprep.mubr.bf16.mxu0 0
        %4964 = vmatmul.mubr.bf16.gmra.mrb[0].mxu0 %v4672
        %v4965 = vpop.f32.mrb[0].mxu0
        %v4966 = vadd.f32 0.0, %v4965
        %v4967 = vpop.f32.mrb[0].mxu0
        %v4968 = vadd.f32 0.0, %v4967
        %v4969 = vpop.f32.mrb[0].mxu0
        %v4970 = vadd.f32 0.0, %v4969
        %v4971 = vpop.f32.mrb[0].mxu0
        %v4972 = vadd.f32 0.0, %v4971
        %4973 = vmatprep.mubr.bf16.mxu0 0
        %4974 = vmatmul.mubr.bf16.gmra.mrb[0].mxu0 %v4675
        %v4975 = vpop.f32.mrb[0].mxu0
        %v4976 = vadd.f32 0.0, %v4975
        %v4977 = vpop.f32.mrb[0].mxu0
        %v4978 = vadd.f32 0.0, %v4977
        %v4979 = vpop.f32.mrb[0].mxu0
        %v4980 = vadd.f32 0.0, %v4979
        %v4981 = vpop.f32.mrb[0].mxu0
        %v4982 = vadd.f32 0.0, %v4981
        %4983 = vmatprep.mubr.bf16.mxu0 0
        %4984 = vmatmul.mubr.bf16.gmra.mrb[0].mxu0 %v4678
        %v4985 = vpop.f32.mrb[0].mxu0
        %v4986 = vadd.f32 0.0, %v4985
        %v4987 = vpop.f32.mrb[0].mxu0
        %v4988 = vadd.f32 0.0, %v4987
        %v4989 = vpop.f32.mrb[0].mxu0
        %v4990 = vadd.f32 0.0, %v4989
        %v4991 = vpop.f32.mrb[0].mxu0
        %v4992 = vadd.f32 0.0, %v4991
        %4993 = vmatprep.mubr.bf16.mxu0 0
        %4994 = vmatmul.mubr.bf16.gmra.mrb[0].mxu0 %v4681
        %v4995 = vpop.f32.mrb[0].mxu0
        %v4996 = vadd.f32 0.0, %v4995
        %v4997 = vpop.f32.mrb[0].mxu0
        %v4998 = vadd.f32 0.0, %v4997
        %v4999 = vpop.f32.mrb[0].mxu0
        %v5000 = vadd.f32 0.0, %v4999
        %v5001 = vpop.f32.mrb[0].mxu0
        %v5002 = vadd.f32 0.0, %v5001
        %5003 = vmatprep.mubr.bf16.mxu0 0
        %5004 = vmatmul.mubr.bf16.gmra.mrb[0].mxu0 %v4684
        %v5005 = vpop.f32.mrb[0].mxu0
        %v5006 = vadd.f32 0.0, %v5005
        %v5007 = vpop.f32.mrb[0].mxu0
        %v5008 = vadd.f32 0.0, %v5007
        %v5009 = vpop.f32.mrb[0].mxu0
        %v5010 = vadd.f32 0.0, %v5009
        %v5011 = vpop.f32.mrb[0].mxu0
        %v5012 = vadd.f32 0.0, %v5011
        %5013 = vmatprep.mubr.bf16.mxu0 0
        %5014 = vmatmul.mubr.bf16.gmra.mrb[0].mxu0 %v4687
        %v5015 = vpop.f32.mrb[0].mxu0
        %v5016 = vadd.f32 0.0, %v5015
        %v5017 = vpop.f32.mrb[0].mxu0
        %v5018 = vadd.f32 0.0, %v5017
        %v5019 = vpop.f32.mrb[0].mxu0
        %v5020 = vadd.f32 0.0, %v5019
        %v5021 = vpop.f32.mrb[0].mxu0
        %v5022 = vadd.f32 0.0, %v5021
        %5023 = vmatprep.mubr.bf16.mxu0 0
        %5024 = vmatmul.mubr.bf16.gmra.mrb[0].mxu0 %v4690
        %v5025 = vpop.f32.mrb[0].mxu0
        %v5026 = vadd.f32 0.0, %v5025
        %v5027 = vpop.f32.mrb[0].mxu0
        %v5028 = vadd.f32 0.0, %v5027
        %v5029 = vpop.f32.mrb[0].mxu0
        %v5030 = vadd.f32 0.0, %v5029
        %v5031 = vpop.f32.mrb[0].mxu0
        %v5032 = vadd.f32 0.0, %v5031
        %5033 = vmatprep.mubr.bf16.mxu0 0
        %5034 = vmatmul.mubr.bf16.gmra.mrb[0].mxu0 %v4693
        %v5035 = vpop.f32.mrb[0].mxu0
        %v5036 = vadd.f32 0.0, %v5035
        %v5037 = vpop.f32.mrb[0].mxu0
        %v5038 = vadd.f32 0.0, %v5037
        %v5039 = vpop.f32.mrb[0].mxu0
        %v5040 = vadd.f32 0.0, %v5039
        %v5041 = vpop.f32.mrb[0].mxu0
        %v5042 = vadd.f32 0.0, %v5041
        %5043 = vmatprep.mubr.bf16.mxu0 0
        %5044 = vmatmul.mubr.bf16.gmra.mrb[0].mxu0 %v4696
        %v5045 = vpop.f32.mrb[0].mxu0
        %v5046 = vadd.f32 0.0, %v5045
        %v5047 = vpop.f32.mrb[0].mxu0
        %v5048 = vadd.f32 0.0, %v5047
        %v5049 = vpop.f32.mrb[0].mxu0
        %v5050 = vadd.f32 0.0, %v5049
        %v5051 = vpop.f32.mrb[0].mxu0
        %v5052 = vadd.f32 0.0, %v5051
        %5053 = vmatprep.mubr.bf16.mxu0 0
        %5054 = vmatmul.mubr.bf16.gmra.mrb[0].mxu0 %v4699
        %v5055 = vpop.f32.mrb[0].mxu0
        %v5056 = vadd.f32 0.0, %v5055
        %v5057 = vpop.f32.mrb[0].mxu0
        %v5058 = vadd.f32 0.0, %v5057
        %v5059 = vpop.f32.mrb[0].mxu0
        %v5060 = vadd.f32 0.0, %v5059
        %v5061 = vpop.f32.mrb[0].mxu0
        %v5062 = vadd.f32 0.0, %v5061
        %5063 = vdwg.mxu0
        %v5064 = vadd.f32 %v1158, %v4746
        %v5065 = vadd.f32 %v1160, %v4748
        %v5066 = vadd.f32 %v1162, %v4750
        %v5067 = vadd.f32 %v1164, %v4752
        %v5068 = vadd.f32 %v1168, %v4756
        %v5069 = vadd.f32 %v1170, %v4758
        %v5070 = vadd.f32 %v1172, %v4760
        %v5071 = vadd.f32 %v1174, %v4762
        %v5072 = vadd.f32 %v1178, %v4766
        %v5073 = vadd.f32 %v1180, %v4768
        %v5074 = vadd.f32 %v1182, %v4770
        %v5075 = vadd.f32 %v1184, %v4772
        %v5076 = vadd.f32 %v1188, %v4776
        %v5077 = vadd.f32 %v1190, %v4778
        %v5078 = vadd.f32 %v1192, %v4780
        %v5079 = vadd.f32 %v1194, %v4782
        %v5080 = vadd.f32 %v1198, %v4786
        %v5081 = vadd.f32 %v1200, %v4788
        %v5082 = vadd.f32 %v1202, %v4790
        %v5083 = vadd.f32 %v1204, %v4792
        %v5084 = vadd.f32 %v1208, %v4796
        %v5085 = vadd.f32 %v1210, %v4798
        %v5086 = vadd.f32 %v1212, %v4800
        %v5087 = vadd.f32 %v1214, %v4802
        %v5088 = vadd.f32 %v1218, %v4806
        %v5089 = vadd.f32 %v1220, %v4808
        %v5090 = vadd.f32 %v1222, %v4810
        %v5091 = vadd.f32 %v1224, %v4812
        %v5092 = vadd.f32 %v1228, %v4816
        %v5093 = vadd.f32 %v1230, %v4818
        %v5094 = vadd.f32 %v1232, %v4820
        %v5095 = vadd.f32 %v1234, %v4822
        %v5096 = vadd.f32 %v1238, %v4826
        %v5097 = vadd.f32 %v1240, %v4828
        %v5098 = vadd.f32 %v1242, %v4830
        %v5099 = vadd.f32 %v1244, %v4832
        %v5100 = vadd.f32 %v1248, %v4836
        %v5101 = vadd.f32 %v1250, %v4838
        %v5102 = vadd.f32 %v1252, %v4840
        %v5103 = vadd.f32 %v1254, %v4842
        %v5104 = vadd.f32 %v1258, %v4846
        %v5105 = vadd.f32 %v1260, %v4848
        %v5106 = vadd.f32 %v1262, %v4850
        %v5107 = vadd.f32 %v1264, %v4852
        %v5108 = vadd.f32 %v1268, %v4856
        %v5109 = vadd.f32 %v1270, %v4858
        %v5110 = vadd.f32 %v1272, %v4860
        %v5111 = vadd.f32 %v1274, %v4862
        %v5112 = vadd.f32 %v1278, %v4866
        %v5113 = vadd.f32 %v1280, %v4868
        %v5114 = vadd.f32 %v1282, %v4870
        %v5115 = vadd.f32 %v1284, %v4872
        %v5116 = vadd.f32 %v1288, %v4876
        %v5117 = vadd.f32 %v1290, %v4878
        %v5118 = vadd.f32 %v1292, %v4880
        %v5119 = vadd.f32 %v1294, %v4882
        %v5120 = vadd.f32 %v1298, %v4886
        %v5121 = vadd.f32 %v1300, %v4888
        %v5122 = vadd.f32 %v1302, %v4890
        %v5123 = vadd.f32 %v1304, %v4892
        %v5124 = vadd.f32 %v1308, %v4896
        %v5125 = vadd.f32 %v1310, %v4898
        %v5126 = vadd.f32 %v1312, %v4900
        %v5127 = vadd.f32 %v1314, %v4902
        %v5128 = vadd.f32 %v1318, %v4906
        %v5129 = vadd.f32 %v1320, %v4908
        %v5130 = vadd.f32 %v1322, %v4910
        %v5131 = vadd.f32 %v1324, %v4912
        %v5132 = vadd.f32 %v1328, %v4916
        %v5133 = vadd.f32 %v1330, %v4918
        %v5134 = vadd.f32 %v1332, %v4920
        %v5135 = vadd.f32 %v1334, %v4922
        %v5136 = vadd.f32 %v1338, %v4926
        %v5137 = vadd.f32 %v1340, %v4928
        %v5138 = vadd.f32 %v1342, %v4930
        %v5139 = vadd.f32 %v1344, %v4932
        %v5140 = vadd.f32 %v1348, %v4936
        %v5141 = vadd.f32 %v1350, %v4938
        %v5142 = vadd.f32 %v1352, %v4940
        %v5143 = vadd.f32 %v1354, %v4942
        %v5144 = vadd.f32 %v1358, %v4946
        %v5145 = vadd.f32 %v1360, %v4948
        %v5146 = vadd.f32 %v1362, %v4950
        %v5147 = vadd.f32 %v1364, %v4952
        %v5148 = vadd.f32 %v1368, %v4956
        %v5149 = vadd.f32 %v1370, %v4958
        %v5150 = vadd.f32 %v1372, %v4960
        %v5151 = vadd.f32 %v1374, %v4962
        %v5152 = vadd.f32 %v1378, %v4966
        %v5153 = vadd.f32 %v1380, %v4968
        %v5154 = vadd.f32 %v1382, %v4970
        %v5155 = vadd.f32 %v1384, %v4972
        %v5156 = vadd.f32 %v1388, %v4976
        %v5157 = vadd.f32 %v1390, %v4978
        %v5158 = vadd.f32 %v1392, %v4980
        %v5159 = vadd.f32 %v1394, %v4982
        %v5160 = vadd.f32 %v1398, %v4986
        %v5161 = vadd.f32 %v1400, %v4988
        %v5162 = vadd.f32 %v1402, %v4990
        %v5163 = vadd.f32 %v1404, %v4992
        %v5164 = vadd.f32 %v1408, %v4996
        %v5165 = vadd.f32 %v1410, %v4998
        %v5166 = vadd.f32 %v1412, %v5000
        %v5167 = vadd.f32 %v1414, %v5002
        %v5168 = vadd.f32 %v1418, %v5006
        %v5169 = vadd.f32 %v1420, %v5008
        %v5170 = vadd.f32 %v1422, %v5010
        %v5171 = vadd.f32 %v1424, %v5012
        %v5172 = vadd.f32 %v1428, %v5016
        %v5173 = vadd.f32 %v1430, %v5018
        %v5174 = vadd.f32 %v1432, %v5020
        %v5175 = vadd.f32 %v1434, %v5022
        %v5176 = vadd.f32 %v1438, %v5026
        %v5177 = vadd.f32 %v1440, %v5028
        %v5178 = vadd.f32 %v1442, %v5030
        %v5179 = vadd.f32 %v1444, %v5032
        %v5180 = vadd.f32 %v1448, %v5036
        %v5181 = vadd.f32 %v1450, %v5038
        %v5182 = vadd.f32 %v1452, %v5040
        %v5183 = vadd.f32 %v1454, %v5042
        %v5184 = vadd.f32 %v1458, %v5046
        %v5185 = vadd.f32 %v1460, %v5048
        %v5186 = vadd.f32 %v1462, %v5050
        %v5187 = vadd.f32 %v1464, %v5052
        %v5188 = vadd.f32 %v1468, %v5056
        %v5189 = vadd.f32 %v1470, %v5058
        %v5190 = vadd.f32 %v1472, %v5060
        %v5191 = vadd.f32 %v1474, %v5062
        %v5192 = vld [vmem:[#allocation4] sm:$0xff]
        %v5193 = vld [vmem:[#allocation4 + $0x8] sm:$0xff]
        %v5194 = vld [vmem:[#allocation4 + $0x10] sm:$0xff]
        %v5195 = vld [vmem:[#allocation4 + $0x18] sm:$0xff]
        %v5196 = vld [vmem:[#allocation4 + $0x20] sm:$0xff]
        %v5197 = vld [vmem:[#allocation4 + $0x28] sm:$0xff]
        %v5198 = vld [vmem:[#allocation4 + $0x30] sm:$0xff]
        %v5199 = vld [vmem:[#allocation4 + $0x38] sm:$0xff]
        %v5200 = vld [vmem:[#allocation4 + $0x40] sm:$0xff]
        %v5201 = vld [vmem:[#allocation4 + $0x48] sm:$0xff]
        %v5202 = vld [vmem:[#allocation4 + $0x50] sm:$0xff]
        %v5203 = vld [vmem:[#allocation4 + $0x58] sm:$0xff]
        %v5204 = vld [vmem:[#allocation4 + $0x60] sm:$0xff]
        %v5205 = vld [vmem:[#allocation4 + $0x68] sm:$0xff]
        %v5206 = vld [vmem:[#allocation4 + $0x70] sm:$0xff]
        %v5207 = vld [vmem:[#allocation4 + $0x78] sm:$0xff]
        %v5208 = vld [vmem:[#allocation4 + $0x80] sm:$0xff]
        %v5209 = vld [vmem:[#allocation4 + $0x88] sm:$0xff]
        %v5210 = vld [vmem:[#allocation4 + $0x90] sm:$0xff]
        %v5211 = vld [vmem:[#allocation4 + $0x98] sm:$0xff]
        %v5212 = vld [vmem:[#allocation4 + $0xa0] sm:$0xff]
        %v5213 = vld [vmem:[#allocation4 + $0xa8] sm:$0xff]
        %v5214 = vld [vmem:[#allocation4 + $0xb0] sm:$0xff]
        %v5215 = vld [vmem:[#allocation4 + $0xb8] sm:$0xff]
        %v5216 = vld [vmem:[#allocation4 + $0xc0] sm:$0xff]
        %v5217 = vld [vmem:[#allocation4 + $0xc8] sm:$0xff]
        %v5218 = vld [vmem:[#allocation4 + $0xd0] sm:$0xff]
        %v5219 = vld [vmem:[#allocation4 + $0xd8] sm:$0xff]
        %v5220 = vld [vmem:[#allocation4 + $0xe0] sm:$0xff]
        %v5221 = vld [vmem:[#allocation4 + $0xe8] sm:$0xff]
        %v5222 = vld [vmem:[#allocation4 + $0xf0] sm:$0xff]
        %v5223 = vld [vmem:[#allocation4 + $0xf8] sm:$0xff]
        %v5256 = vunpack.c.l.b16 %v5192
        %v5257 = vunpack.c.h.b16 %v5192
        %v5258 = vunpack.c.l.b16 %v5193
        %v5259 = vunpack.c.h.b16 %v5193
        %v5260 = vunpack.c.l.b16 %v5194
        %v5261 = vunpack.c.h.b16 %v5194
        %v5262 = vunpack.c.l.b16 %v5195
        %v5263 = vunpack.c.h.b16 %v5195
        %v5264 = vunpack.c.l.b16 %v5196
        %v5265 = vunpack.c.h.b16 %v5196
        %v5266 = vunpack.c.l.b16 %v5197
        %v5267 = vunpack.c.h.b16 %v5197
        %v5268 = vunpack.c.l.b16 %v5198
        %v5269 = vunpack.c.h.b16 %v5198
        %v5270 = vunpack.c.l.b16 %v5199
        %v5271 = vunpack.c.h.b16 %v5199
        %v5272 = vunpack.c.l.b16 %v5200
        %v5273 = vunpack.c.h.b16 %v5200
        %v5274 = vunpack.c.l.b16 %v5201
        %v5275 = vunpack.c.h.b16 %v5201
        %v5276 = vunpack.c.l.b16 %v5202
        %v5277 = vunpack.c.h.b16 %v5202
        %v5278 = vunpack.c.l.b16 %v5203
        %v5279 = vunpack.c.h.b16 %v5203
        %v5280 = vunpack.c.l.b16 %v5204
        %v5281 = vunpack.c.h.b16 %v5204
        %v5282 = vunpack.c.l.b16 %v5205
        %v5283 = vunpack.c.h.b16 %v5205
        %v5284 = vunpack.c.l.b16 %v5206
        %v5285 = vunpack.c.h.b16 %v5206
        %v5286 = vunpack.c.l.b16 %v5207
        %v5287 = vunpack.c.h.b16 %v5207
        %v5288 = vunpack.c.l.b16 %v5208
        %v5289 = vunpack.c.h.b16 %v5208
        %v5290 = vunpack.c.l.b16 %v5209
        %v5291 = vunpack.c.h.b16 %v5209
        %v5292 = vunpack.c.l.b16 %v5210
        %v5293 = vunpack.c.h.b16 %v5210
        %v5294 = vunpack.c.l.b16 %v5211
        %v5295 = vunpack.c.h.b16 %v5211
        %v5296 = vunpack.c.l.b16 %v5212
        %v5297 = vunpack.c.h.b16 %v5212
        %v5298 = vunpack.c.l.b16 %v5213
        %v5299 = vunpack.c.h.b16 %v5213
        %v5300 = vunpack.c.l.b16 %v5214
        %v5301 = vunpack.c.h.b16 %v5214
        %v5302 = vunpack.c.l.b16 %v5215
        %v5303 = vunpack.c.h.b16 %v5215
        %v5304 = vunpack.c.l.b16 %v5216
        %v5305 = vunpack.c.h.b16 %v5216
        %v5306 = vunpack.c.l.b16 %v5217
        %v5307 = vunpack.c.h.b16 %v5217
        %v5308 = vunpack.c.l.b16 %v5218
        %v5309 = vunpack.c.h.b16 %v5218
        %v5310 = vunpack.c.l.b16 %v5219
        %v5311 = vunpack.c.h.b16 %v5219
        %v5312 = vunpack.c.l.b16 %v5220
        %v5313 = vunpack.c.h.b16 %v5220
        %v5314 = vunpack.c.l.b16 %v5221
        %v5315 = vunpack.c.h.b16 %v5221
        %v5316 = vunpack.c.l.b16 %v5222
        %v5317 = vunpack.c.h.b16 %v5222
        %v5318 = vunpack.c.l.b16 %v5223
        %v5319 = vunpack.c.h.b16 %v5223
        %v5320 = vpack.c.b16 %v5258, %v5256
        %v5321 = vpack.c.b16 %v5259, %v5257
        %v5322 = vpack.c.b16 %v5262, %v5260
        %v5323 = vpack.c.b16 %v5263, %v5261
        %v5324 = vpack.c.b16 %v5266, %v5264
        %v5325 = vpack.c.b16 %v5267, %v5265
        %v5326 = vpack.c.b16 %v5270, %v5268
        %v5327 = vpack.c.b16 %v5271, %v5269
        %v5328 = vpack.c.b16 %v5274, %v5272
        %v5329 = vpack.c.b16 %v5275, %v5273
        %v5330 = vpack.c.b16 %v5278, %v5276
        %v5331 = vpack.c.b16 %v5279, %v5277
        %v5332 = vpack.c.b16 %v5282, %v5280
        %v5333 = vpack.c.b16 %v5283, %v5281
        %v5334 = vpack.c.b16 %v5286, %v5284
        %v5335 = vpack.c.b16 %v5287, %v5285
        %v5336 = vpack.c.b16 %v5290, %v5288
        %v5337 = vpack.c.b16 %v5291, %v5289
        %v5338 = vpack.c.b16 %v5294, %v5292
        %v5339 = vpack.c.b16 %v5295, %v5293
        %v5340 = vpack.c.b16 %v5298, %v5296
        %v5341 = vpack.c.b16 %v5299, %v5297
        %v5342 = vpack.c.b16 %v5302, %v5300
        %v5343 = vpack.c.b16 %v5303, %v5301
        %v5344 = vpack.c.b16 %v5306, %v5304
        %v5345 = vpack.c.b16 %v5307, %v5305
        %v5346 = vpack.c.b16 %v5310, %v5308
        %v5347 = vpack.c.b16 %v5311, %v5309
        %v5348 = vpack.c.b16 %v5314, %v5312
        %v5349 = vpack.c.b16 %v5315, %v5313
        %v5350 = vpack.c.b16 %v5318, %v5316
        %v5351 = vpack.c.b16 %v5319, %v5317
        %5384 = vmatprep.subr.bf16.mxu0 %v5321
        %5385 = vmatpush1.bf16.msra.mxu0 %v5320
        %5386 = vmatprep.subr.bf16.mxu0 %v5323
        %5387 = vmatpush1.bf16.msra.mxu0 %v5322
        %5388 = vmatprep.subr.bf16.mxu0 %v5325
        %5389 = vmatpush1.bf16.msra.mxu0 %v5324
        %5390 = vmatprep.subr.bf16.mxu0 %v5327
        %5391 = vmatpush1.bf16.msra.mxu0 %v5326
        %5392 = vmatprep.subr.bf16.mxu0 %v5329
        %5393 = vmatpush1.bf16.msra.mxu0 %v5328
        %5394 = vmatprep.subr.bf16.mxu0 %v5331
        %5395 = vmatpush1.bf16.msra.mxu0 %v5330
        %5396 = vmatprep.subr.bf16.mxu0 %v5333
        %5397 = vmatpush1.bf16.msra.mxu0 %v5332
        %5398 = vmatprep.subr.bf16.mxu0 %v5335
        %5399 = vmatpush1.bf16.msra.mxu0 %v5334
        %5400 = vmatprep.subr.bf16.mxu0 %v5337
        %5401 = vmatpush1.bf16.msra.mxu0 %v5336
        %5402 = vmatprep.subr.bf16.mxu0 %v5339
        %5403 = vmatpush1.bf16.msra.mxu0 %v5338
        %5404 = vmatprep.subr.bf16.mxu0 %v5341
        %5405 = vmatpush1.bf16.msra.mxu0 %v5340
        %5406 = vmatprep.subr.bf16.mxu0 %v5343
        %5407 = vmatpush1.bf16.msra.mxu0 %v5342
        %5408 = vmatprep.subr.bf16.mxu0 %v5345
        %5409 = vmatpush1.bf16.msra.mxu0 %v5344
        %5410 = vmatprep.subr.bf16.mxu0 %v5347
        %5411 = vmatpush1.bf16.msra.mxu0 %v5346
        %5412 = vmatprep.subr.bf16.mxu0 %v5349
        %5413 = vmatpush1.bf16.msra.mxu0 %v5348
        %5414 = vmatprep.subr.bf16.mxu0 %v5351
        %5415 = vmatpush1.bf16.msra.mxu0 %v5350
        %5416 = vmatprep.mubr.bf16.mxu0 %v3500
        %5417 = vmatmul.mubr.bf16.gmra.mrb[0].mxu0 %v3499
        %v5418 = vpop.f32.mrb[0].mxu0
        %v5419 = vadd.f32 0.0, %v5418
        %v5420 = vpop.f32.mrb[0].mxu0
        %v5421 = vadd.f32 0.0, %v5420
        %v5422 = vpop.f32.mrb[0].mxu0
        %v5423 = vadd.f32 0.0, %v5422
        %v5424 = vpop.f32.mrb[0].mxu0
        %v5425 = vadd.f32 0.0, %v5424
        %5426 = vmatprep.mubr.bf16.mxu0 %v3502
        %5427 = vmatmul.mubr.bf16.gmra.mrb[0].mxu0 %v3501
        %v5428 = vpop.f32.mrb[0].mxu0
        %v5429 = vadd.f32 0.0, %v5428
        %v5430 = vpop.f32.mrb[0].mxu0
        %v5431 = vadd.f32 0.0, %v5430
        %v5432 = vpop.f32.mrb[0].mxu0
        %v5433 = vadd.f32 0.0, %v5432
        %v5434 = vpop.f32.mrb[0].mxu0
        %v5435 = vadd.f32 0.0, %v5434
        %5436 = vmatprep.mubr.bf16.mxu0 %v3504
        %5437 = vmatmul.mubr.bf16.gmra.mrb[0].mxu0 %v3503
        %v5438 = vpop.f32.mrb[0].mxu0
        %v5439 = vadd.f32 0.0, %v5438
        %v5440 = vpop.f32.mrb[0].mxu0
        %v5441 = vadd.f32 0.0, %v5440
        %v5442 = vpop.f32.mrb[0].mxu0
        %v5443 = vadd.f32 0.0, %v5442
        %v5444 = vpop.f32.mrb[0].mxu0
        %v5445 = vadd.f32 0.0, %v5444
        %5446 = vmatprep.mubr.bf16.mxu0 %v3506
        %5447 = vmatmul.mubr.bf16.gmra.mrb[0].mxu0 %v3505
        %v5448 = vpop.f32.mrb[0].mxu0
        %v5449 = vadd.f32 0.0, %v5448
        %v5450 = vpop.f32.mrb[0].mxu0
        %v5451 = vadd.f32 0.0, %v5450
        %v5452 = vpop.f32.mrb[0].mxu0
        %v5453 = vadd.f32 0.0, %v5452
        %v5454 = vpop.f32.mrb[0].mxu0
        %v5455 = vadd.f32 0.0, %v5454
        %5456 = vmatprep.mubr.bf16.mxu0 %v3508
        %5457 = vmatmul.mubr.bf16.gmra.mrb[0].mxu0 %v3507
        %v5458 = vpop.f32.mrb[0].mxu0
        %v5459 = vadd.f32 0.0, %v5458
        %v5460 = vpop.f32.mrb[0].mxu0
        %v5461 = vadd.f32 0.0, %v5460
        %v5462 = vpop.f32.mrb[0].mxu0
        %v5463 = vadd.f32 0.0, %v5462
        %v5464 = vpop.f32.mrb[0].mxu0
        %v5465 = vadd.f32 0.0, %v5464
        %5466 = vmatprep.mubr.bf16.mxu0 %v3510
        %5467 = vmatmul.mubr.bf16.gmra.mrb[0].mxu0 %v3509
        %v5468 = vpop.f32.mrb[0].mxu0
        %v5469 = vadd.f32 0.0, %v5468
        %v5470 = vpop.f32.mrb[0].mxu0
        %v5471 = vadd.f32 0.0, %v5470
        %v5472 = vpop.f32.mrb[0].mxu0
        %v5473 = vadd.f32 0.0, %v5472
        %v5474 = vpop.f32.mrb[0].mxu0
        %v5475 = vadd.f32 0.0, %v5474
        %5476 = vmatprep.mubr.bf16.mxu0 %v3512
        %5477 = vmatmul.mubr.bf16.gmra.mrb[0].mxu0 %v3511
        %v5478 = vpop.f32.mrb[0].mxu0
        %v5479 = vadd.f32 0.0, %v5478
        %v5480 = vpop.f32.mrb[0].mxu0
        %v5481 = vadd.f32 0.0, %v5480
        %v5482 = vpop.f32.mrb[0].mxu0
        %v5483 = vadd.f32 0.0, %v5482
        %v5484 = vpop.f32.mrb[0].mxu0
        %v5485 = vadd.f32 0.0, %v5484
        %5486 = vmatprep.mubr.bf16.mxu0 %v3514
        %5487 = vmatmul.mubr.bf16.gmra.mrb[0].mxu0 %v3513
        %v5488 = vpop.f32.mrb[0].mxu0
        %v5489 = vadd.f32 0.0, %v5488
        %v5490 = vpop.f32.mrb[0].mxu0
        %v5491 = vadd.f32 0.0, %v5490
        %v5492 = vpop.f32.mrb[0].mxu0
        %v5493 = vadd.f32 0.0, %v5492
        %v5494 = vpop.f32.mrb[0].mxu0
        %v5495 = vadd.f32 0.0, %v5494
        %5496 = vmatprep.mubr.bf16.mxu0 %v3516
        %5497 = vmatmul.mubr.bf16.gmra.mrb[0].mxu0 %v3515
        %v5498 = vpop.f32.mrb[0].mxu0
        %v5499 = vadd.f32 0.0, %v5498
        %v5500 = vpop.f32.mrb[0].mxu0
        %v5501 = vadd.f32 0.0, %v5500
        %v5502 = vpop.f32.mrb[0].mxu0
        %v5503 = vadd.f32 0.0, %v5502
        %v5504 = vpop.f32.mrb[0].mxu0
        %v5505 = vadd.f32 0.0, %v5504
        %5506 = vmatprep.mubr.bf16.mxu0 %v3518
        %5507 = vmatmul.mubr.bf16.gmra.mrb[0].mxu0 %v3517
        %v5508 = vpop.f32.mrb[0].mxu0
        %v5509 = vadd.f32 0.0, %v5508
        %v5510 = vpop.f32.mrb[0].mxu0
        %v5511 = vadd.f32 0.0, %v5510
        %v5512 = vpop.f32.mrb[0].mxu0
        %v5513 = vadd.f32 0.0, %v5512
        %v5514 = vpop.f32.mrb[0].mxu0
        %v5515 = vadd.f32 0.0, %v5514
        %5516 = vmatprep.mubr.bf16.mxu0 %v3520
        %5517 = vmatmul.mubr.bf16.gmra.mrb[0].mxu0 %v3519
        %v5518 = vpop.f32.mrb[0].mxu0
        %v5519 = vadd.f32 0.0, %v5518
        %v5520 = vpop.f32.mrb[0].mxu0
        %v5521 = vadd.f32 0.0, %v5520
        %v5522 = vpop.f32.mrb[0].mxu0
        %v5523 = vadd.f32 0.0, %v5522
        %v5524 = vpop.f32.mrb[0].mxu0
        %v5525 = vadd.f32 0.0, %v5524
        %5526 = vmatprep.mubr.bf16.mxu0 %v3522
        %5527 = vmatmul.mubr.bf16.gmra.mrb[0].mxu0 %v3521
        %v5528 = vpop.f32.mrb[0].mxu0
        %v5529 = vadd.f32 0.0, %v5528
        %v5530 = vpop.f32.mrb[0].mxu0
        %v5531 = vadd.f32 0.0, %v5530
        %v5532 = vpop.f32.mrb[0].mxu0
        %v5533 = vadd.f32 0.0, %v5532
        %v5534 = vpop.f32.mrb[0].mxu0
        %v5535 = vadd.f32 0.0, %v5534
        %5536 = vmatprep.mubr.bf16.mxu0 %v3524
        %5537 = vmatmul.mubr.bf16.gmra.mrb[0].mxu0 %v3523
        %v5538 = vpop.f32.mrb[0].mxu0
        %v5539 = vadd.f32 0.0, %v5538
        %v5540 = vpop.f32.mrb[0].mxu0
        %v5541 = vadd.f32 0.0, %v5540
        %v5542 = vpop.f32.mrb[0].mxu0
        %v5543 = vadd.f32 0.0, %v5542
        %v5544 = vpop.f32.mrb[0].mxu0
        %v5545 = vadd.f32 0.0, %v5544
        %5546 = vmatprep.mubr.bf16.mxu0 %v3526
        %5547 = vmatmul.mubr.bf16.gmra.mrb[0].mxu0 %v3525
        %v5548 = vpop.f32.mrb[0].mxu0
        %v5549 = vadd.f32 0.0, %v5548
        %v5550 = vpop.f32.mrb[0].mxu0
        %v5551 = vadd.f32 0.0, %v5550
        %v5552 = vpop.f32.mrb[0].mxu0
        %v5553 = vadd.f32 0.0, %v5552
        %v5554 = vpop.f32.mrb[0].mxu0
        %v5555 = vadd.f32 0.0, %v5554
        %5556 = vmatprep.mubr.bf16.mxu0 %v3528
        %5557 = vmatmul.mubr.bf16.gmra.mrb[0].mxu0 %v3527
        %v5558 = vpop.f32.mrb[0].mxu0
        %v5559 = vadd.f32 0.0, %v5558
        %v5560 = vpop.f32.mrb[0].mxu0
        %v5561 = vadd.f32 0.0, %v5560
        %v5562 = vpop.f32.mrb[0].mxu0
        %v5563 = vadd.f32 0.0, %v5562
        %v5564 = vpop.f32.mrb[0].mxu0
        %v5565 = vadd.f32 0.0, %v5564
        %5566 = vmatprep.mubr.bf16.mxu0 %v3530
        %5567 = vmatmul.mubr.bf16.gmra.mrb[0].mxu0 %v3529
        %v5568 = vpop.f32.mrb[0].mxu0
        %v5569 = vadd.f32 0.0, %v5568
        %v5570 = vpop.f32.mrb[0].mxu0
        %v5571 = vadd.f32 0.0, %v5570
        %v5572 = vpop.f32.mrb[0].mxu0
        %v5573 = vadd.f32 0.0, %v5572
        %v5574 = vpop.f32.mrb[0].mxu0
        %v5575 = vadd.f32 0.0, %v5574
        %5576 = vmatprep.mubr.bf16.mxu0 %v3532
        %5577 = vmatmul.mubr.bf16.gmra.mrb[0].mxu0 %v3531
        %v5578 = vpop.f32.mrb[0].mxu0
        %v5579 = vadd.f32 0.0, %v5578
        %v5580 = vpop.f32.mrb[0].mxu0
        %v5581 = vadd.f32 0.0, %v5580
        %v5582 = vpop.f32.mrb[0].mxu0
        %v5583 = vadd.f32 0.0, %v5582
        %v5584 = vpop.f32.mrb[0].mxu0
        %v5585 = vadd.f32 0.0, %v5584
        %5586 = vmatprep.mubr.bf16.mxu0 %v3534
        %5587 = vmatmul.mubr.bf16.gmra.mrb[0].mxu0 %v3533
        %v5588 = vpop.f32.mrb[0].mxu0
        %v5589 = vadd.f32 0.0, %v5588
        %v5590 = vpop.f32.mrb[0].mxu0
        %v5591 = vadd.f32 0.0, %v5590
        %v5592 = vpop.f32.mrb[0].mxu0
        %v5593 = vadd.f32 0.0, %v5592
        %v5594 = vpop.f32.mrb[0].mxu0
        %v5595 = vadd.f32 0.0, %v5594
        %5596 = vmatprep.mubr.bf16.mxu0 %v3536
        %5597 = vmatmul.mubr.bf16.gmra.mrb[0].mxu0 %v3535
        %v5598 = vpop.f32.mrb[0].mxu0
        %v5599 = vadd.f32 0.0, %v5598
        %v5600 = vpop.f32.mrb[0].mxu0
        %v5601 = vadd.f32 0.0, %v5600
        %v5602 = vpop.f32.mrb[0].mxu0
        %v5603 = vadd.f32 0.0, %v5602
        %v5604 = vpop.f32.mrb[0].mxu0
        %v5605 = vadd.f32 0.0, %v5604
        %5606 = vmatprep.mubr.bf16.mxu0 %v3538
        %5607 = vmatmul.mubr.bf16.gmra.mrb[0].mxu0 %v3537
        %v5608 = vpop.f32.mrb[0].mxu0
        %v5609 = vadd.f32 0.0, %v5608
        %v5610 = vpop.f32.mrb[0].mxu0
        %v5611 = vadd.f32 0.0, %v5610
        %v5612 = vpop.f32.mrb[0].mxu0
        %v5613 = vadd.f32 0.0, %v5612
        %v5614 = vpop.f32.mrb[0].mxu0
        %v5615 = vadd.f32 0.0, %v5614
        %5616 = vmatprep.mubr.bf16.mxu0 %v3540
        %5617 = vmatmul.mubr.bf16.gmra.mrb[0].mxu0 %v3539
        %v5618 = vpop.f32.mrb[0].mxu0
        %v5619 = vadd.f32 0.0, %v5618
        %v5620 = vpop.f32.mrb[0].mxu0
        %v5621 = vadd.f32 0.0, %v5620
        %v5622 = vpop.f32.mrb[0].mxu0
        %v5623 = vadd.f32 0.0, %v5622
        %v5624 = vpop.f32.mrb[0].mxu0
        %v5625 = vadd.f32 0.0, %v5624
        %5626 = vmatprep.mubr.bf16.mxu0 %v3542
        %5627 = vmatmul.mubr.bf16.gmra.mrb[0].mxu0 %v3541
        %v5628 = vpop.f32.mrb[0].mxu0
        %v5629 = vadd.f32 0.0, %v5628
        %v5630 = vpop.f32.mrb[0].mxu0
        %v5631 = vadd.f32 0.0, %v5630
        %v5632 = vpop.f32.mrb[0].mxu0
        %v5633 = vadd.f32 0.0, %v5632
        %v5634 = vpop.f32.mrb[0].mxu0
        %v5635 = vadd.f32 0.0, %v5634
        %5636 = vmatprep.mubr.bf16.mxu0 %v3544
        %5637 = vmatmul.mubr.bf16.gmra.mrb[0].mxu0 %v3543
        %v5638 = vpop.f32.mrb[0].mxu0
        %v5639 = vadd.f32 0.0, %v5638
        %v5640 = vpop.f32.mrb[0].mxu0
        %v5641 = vadd.f32 0.0, %v5640
        %v5642 = vpop.f32.mrb[0].mxu0
        %v5643 = vadd.f32 0.0, %v5642
        %v5644 = vpop.f32.mrb[0].mxu0
        %v5645 = vadd.f32 0.0, %v5644
        %5646 = vmatprep.mubr.bf16.mxu0 %v3546
        %5647 = vmatmul.mubr.bf16.gmra.mrb[0].mxu0 %v3545
        %v5648 = vpop.f32.mrb[0].mxu0
        %v5649 = vadd.f32 0.0, %v5648
        %v5650 = vpop.f32.mrb[0].mxu0
        %v5651 = vadd.f32 0.0, %v5650
        %v5652 = vpop.f32.mrb[0].mxu0
        %v5653 = vadd.f32 0.0, %v5652
        %v5654 = vpop.f32.mrb[0].mxu0
        %v5655 = vadd.f32 0.0, %v5654
        %5656 = vmatprep.mubr.bf16.mxu0 %v3548
        %5657 = vmatmul.mubr.bf16.gmra.mrb[0].mxu0 %v3547
        %v5658 = vpop.f32.mrb[0].mxu0
        %v5659 = vadd.f32 0.0, %v5658
        %v5660 = vpop.f32.mrb[0].mxu0
        %v5661 = vadd.f32 0.0, %v5660
        %v5662 = vpop.f32.mrb[0].mxu0
        %v5663 = vadd.f32 0.0, %v5662
        %v5664 = vpop.f32.mrb[0].mxu0
        %v5665 = vadd.f32 0.0, %v5664
        %5666 = vmatprep.mubr.bf16.mxu0 %v3550
        %5667 = vmatmul.mubr.bf16.gmra.mrb[0].mxu0 %v3549
        %v5668 = vpop.f32.mrb[0].mxu0
        %v5669 = vadd.f32 0.0, %v5668
        %v5670 = vpop.f32.mrb[0].mxu0
        %v5671 = vadd.f32 0.0, %v5670
        %v5672 = vpop.f32.mrb[0].mxu0
        %v5673 = vadd.f32 0.0, %v5672
        %v5674 = vpop.f32.mrb[0].mxu0
        %v5675 = vadd.f32 0.0, %v5674
        %5676 = vmatprep.mubr.bf16.mxu0 %v3552
        %5677 = vmatmul.mubr.bf16.gmra.mrb[0].mxu0 %v3551
        %v5678 = vpop.f32.mrb[0].mxu0
        %v5679 = vadd.f32 0.0, %v5678
        %v5680 = vpop.f32.mrb[0].mxu0
        %v5681 = vadd.f32 0.0, %v5680
        %v5682 = vpop.f32.mrb[0].mxu0
        %v5683 = vadd.f32 0.0, %v5682
        %v5684 = vpop.f32.mrb[0].mxu0
        %v5685 = vadd.f32 0.0, %v5684
        %5686 = vmatprep.mubr.bf16.mxu0 %v3554
        %5687 = vmatmul.mubr.bf16.gmra.mrb[0].mxu0 %v3553
        %v5688 = vpop.f32.mrb[0].mxu0
        %v5689 = vadd.f32 0.0, %v5688
        %v5690 = vpop.f32.mrb[0].mxu0
        %v5691 = vadd.f32 0.0, %v5690
        %v5692 = vpop.f32.mrb[0].mxu0
        %v5693 = vadd.f32 0.0, %v5692
        %v5694 = vpop.f32.mrb[0].mxu0
        %v5695 = vadd.f32 0.0, %v5694
        %5696 = vmatprep.mubr.bf16.mxu0 %v3556
        %5697 = vmatmul.mubr.bf16.gmra.mrb[0].mxu0 %v3555
        %v5698 = vpop.f32.mrb[0].mxu0
        %v5699 = vadd.f32 0.0, %v5698
        %v5700 = vpop.f32.mrb[0].mxu0
        %v5701 = vadd.f32 0.0, %v5700
        %v5702 = vpop.f32.mrb[0].mxu0
        %v5703 = vadd.f32 0.0, %v5702
        %v5704 = vpop.f32.mrb[0].mxu0
        %v5705 = vadd.f32 0.0, %v5704
        %5706 = vmatprep.mubr.bf16.mxu0 %v3558
        %5707 = vmatmul.mubr.bf16.gmra.mrb[0].mxu0 %v3557
        %v5708 = vpop.f32.mrb[0].mxu0
        %v5709 = vadd.f32 0.0, %v5708
        %v5710 = vpop.f32.mrb[0].mxu0
        %v5711 = vadd.f32 0.0, %v5710
        %v5712 = vpop.f32.mrb[0].mxu0
        %v5713 = vadd.f32 0.0, %v5712
        %v5714 = vpop.f32.mrb[0].mxu0
        %v5715 = vadd.f32 0.0, %v5714
        %5716 = vmatprep.mubr.bf16.mxu0 %v3560
        %5717 = vmatmul.mubr.bf16.gmra.mrb[0].mxu0 %v3559
        %v5718 = vpop.f32.mrb[0].mxu0
        %v5719 = vadd.f32 0.0, %v5718
        %v5720 = vpop.f32.mrb[0].mxu0
        %v5721 = vadd.f32 0.0, %v5720
        %v5722 = vpop.f32.mrb[0].mxu0
        %v5723 = vadd.f32 0.0, %v5722
        %v5724 = vpop.f32.mrb[0].mxu0
        %v5725 = vadd.f32 0.0, %v5724
        %5726 = vmatprep.mubr.bf16.mxu0 %v3562
        %5727 = vmatmul.mubr.bf16.gmra.mrb[0].mxu0 %v3561
        %v5728 = vpop.f32.mrb[0].mxu0
        %v5729 = vadd.f32 0.0, %v5728
        %v5730 = vpop.f32.mrb[0].mxu0
        %v5731 = vadd.f32 0.0, %v5730
        %v5732 = vpop.f32.mrb[0].mxu0
        %v5733 = vadd.f32 0.0, %v5732
        %v5734 = vpop.f32.mrb[0].mxu0
        %v5735 = vadd.f32 0.0, %v5734
        %5736 = vdwg.mxu0
        %v5737 = vadd.f32 %v5064, %v5419
        %v5738 = vadd.f32 %v5065, %v5421
        %v5739 = vadd.f32 %v5066, %v5423
        %v5740 = vadd.f32 %v5067, %v5425
        %v5741 = vadd.f32 %v5068, %v5429
        %v5742 = vadd.f32 %v5069, %v5431
        %v5743 = vadd.f32 %v5070, %v5433
        %v5744 = vadd.f32 %v5071, %v5435
        %v5745 = vadd.f32 %v5072, %v5439
        %v5746 = vadd.f32 %v5073, %v5441
        %v5747 = vadd.f32 %v5074, %v5443
        %v5748 = vadd.f32 %v5075, %v5445
        %v5749 = vadd.f32 %v5076, %v5449
        %v5750 = vadd.f32 %v5077, %v5451
        %v5751 = vadd.f32 %v5078, %v5453
        %v5752 = vadd.f32 %v5079, %v5455
        %v5753 = vadd.f32 %v5080, %v5459
        %v5754 = vadd.f32 %v5081, %v5461
        %v5755 = vadd.f32 %v5082, %v5463
        %v5756 = vadd.f32 %v5083, %v5465
        %v5757 = vadd.f32 %v5084, %v5469
        %v5758 = vadd.f32 %v5085, %v5471
        %v5759 = vadd.f32 %v5086, %v5473
        %v5760 = vadd.f32 %v5087, %v5475
        %v5761 = vadd.f32 %v5088, %v5479
        %v5762 = vadd.f32 %v5089, %v5481
        %v5763 = vadd.f32 %v5090, %v5483
        %v5764 = vadd.f32 %v5091, %v5485
        %v5765 = vadd.f32 %v5092, %v5489
        %v5766 = vadd.f32 %v5093, %v5491
        %v5767 = vadd.f32 %v5094, %v5493
        %v5768 = vadd.f32 %v5095, %v5495
        %v5769 = vadd.f32 %v5096, %v5499
        %v5770 = vadd.f32 %v5097, %v5501
        %v5771 = vadd.f32 %v5098, %v5503
        %v5772 = vadd.f32 %v5099, %v5505
        %v5773 = vadd.f32 %v5100, %v5509
        %v5774 = vadd.f32 %v5101, %v5511
        %v5775 = vadd.f32 %v5102, %v5513
        %v5776 = vadd.f32 %v5103, %v5515
        %v5777 = vadd.f32 %v5104, %v5519
        %v5778 = vadd.f32 %v5105, %v5521
        %v5779 = vadd.f32 %v5106, %v5523
        %v5780 = vadd.f32 %v5107, %v5525
        %v5781 = vadd.f32 %v5108, %v5529
        %v5782 = vadd.f32 %v5109, %v5531
        %v5783 = vadd.f32 %v5110, %v5533
        %v5784 = vadd.f32 %v5111, %v5535
        %v5785 = vadd.f32 %v5112, %v5539
        %v5786 = vadd.f32 %v5113, %v5541
        %v5787 = vadd.f32 %v5114, %v5543
        %v5788 = vadd.f32 %v5115, %v5545
        %v5789 = vadd.f32 %v5116, %v5549
        %v5790 = vadd.f32 %v5117, %v5551
        %v5791 = vadd.f32 %v5118, %v5553
        %v5792 = vadd.f32 %v5119, %v5555
        %v5793 = vadd.f32 %v5120, %v5559
        %v5794 = vadd.f32 %v5121, %v5561
        %v5795 = vadd.f32 %v5122, %v5563
        %v5796 = vadd.f32 %v5123, %v5565
        %v5797 = vadd.f32 %v5124, %v5569
        %v5798 = vadd.f32 %v5125, %v5571
        %v5799 = vadd.f32 %v5126, %v5573
        %v5800 = vadd.f32 %v5127, %v5575
        %v5801 = vadd.f32 %v5128, %v5579
        %v5802 = vadd.f32 %v5129, %v5581
        %v5803 = vadd.f32 %v5130, %v5583
        %v5804 = vadd.f32 %v5131, %v5585
        %v5805 = vadd.f32 %v5132, %v5589
        %v5806 = vadd.f32 %v5133, %v5591
        %v5807 = vadd.f32 %v5134, %v5593
        %v5808 = vadd.f32 %v5135, %v5595
        %v5809 = vadd.f32 %v5136, %v5599
        %v5810 = vadd.f32 %v5137, %v5601
        %v5811 = vadd.f32 %v5138, %v5603
        %v5812 = vadd.f32 %v5139, %v5605
        %v5813 = vadd.f32 %v5140, %v5609
        %v5814 = vadd.f32 %v5141, %v5611
        %v5815 = vadd.f32 %v5142, %v5613
        %v5816 = vadd.f32 %v5143, %v5615
        %v5817 = vadd.f32 %v5144, %v5619
        %v5818 = vadd.f32 %v5145, %v5621
        %v5819 = vadd.f32 %v5146, %v5623
        %v5820 = vadd.f32 %v5147, %v5625
        %v5821 = vadd.f32 %v5148, %v5629
        %v5822 = vadd.f32 %v5149, %v5631
        %v5823 = vadd.f32 %v5150, %v5633
        %v5824 = vadd.f32 %v5151, %v5635
        %v5825 = vadd.f32 %v5152, %v5639
        %v5826 = vadd.f32 %v5153, %v5641
        %v5827 = vadd.f32 %v5154, %v5643
        %v5828 = vadd.f32 %v5155, %v5645
        %v5829 = vadd.f32 %v5156, %v5649
        %v5830 = vadd.f32 %v5157, %v5651
        %v5831 = vadd.f32 %v5158, %v5653
        %v5832 = vadd.f32 %v5159, %v5655
        %v5833 = vadd.f32 %v5160, %v5659
        %v5834 = vadd.f32 %v5161, %v5661
        %v5835 = vadd.f32 %v5162, %v5663
        %v5836 = vadd.f32 %v5163, %v5665
        %v5837 = vadd.f32 %v5164, %v5669
        %v5838 = vadd.f32 %v5165, %v5671
        %v5839 = vadd.f32 %v5166, %v5673
        %v5840 = vadd.f32 %v5167, %v5675
        %v5841 = vadd.f32 %v5168, %v5679
        %v5842 = vadd.f32 %v5169, %v5681
        %v5843 = vadd.f32 %v5170, %v5683
        %v5844 = vadd.f32 %v5171, %v5685
        %v5845 = vadd.f32 %v5172, %v5689
        %v5846 = vadd.f32 %v5173, %v5691
        %v5847 = vadd.f32 %v5174, %v5693
        %v5848 = vadd.f32 %v5175, %v5695
        %v5849 = vadd.f32 %v5176, %v5699
        %v5850 = vadd.f32 %v5177, %v5701
        %v5851 = vadd.f32 %v5178, %v5703
        %v5852 = vadd.f32 %v5179, %v5705
        %v5853 = vadd.f32 %v5180, %v5709
        %v5854 = vadd.f32 %v5181, %v5711
        %v5855 = vadd.f32 %v5182, %v5713
        %v5856 = vadd.f32 %v5183, %v5715
        %v5857 = vadd.f32 %v5184, %v5719
        %v5858 = vadd.f32 %v5185, %v5721
        %v5859 = vadd.f32 %v5186, %v5723
        %v5860 = vadd.f32 %v5187, %v5725
        %v5861 = vadd.f32 %v5188, %v5729
        %v5862 = vadd.f32 %v5189, %v5731
        %v5863 = vadd.f32 %v5190, %v5733
        %v5864 = vadd.f32 %v5191, %v5735
        %v5865 = vlaneseq
        %v5866 = vshrl.u32 %v5865, 7
        %v5867 = vsub.s32 2, %v5866
        %v5868 = vrot.slane %v647, %v5867
        %v5869 = vlaneseq
        %v5870 = vshrl.u32 %v5869, 7
        %v5871 = vsub.s32 6, %v5870
        %v5872 = vrot.slane %v647, %v5871
        %v5875 = vlaneseq
        %v5876 = vshrl.u32 %v5875, 7
        %v5877 = vsub.s32 2, %v5876
        %v5878 = vrot.slane %v5868, %v5877
        %v5879 = vlaneseq
        %v5880 = vshrl.u32 %v5879, 7
        %v5881 = vsub.s32 2, %v5880
        %v5882 = vrot.slane %v5872, %v5881
        %v5883 = vadd.f32 %v5737, %v5878
        %v5884 = vadd.f32 %v5738, %v5882
        %v5885 = vadd.f32 %v5739, %v5878
        %v5886 = vadd.f32 %v5740, %v5882
        %v5887 = vadd.f32 %v5741, %v5878
        %v5888 = vadd.f32 %v5742, %v5882
        %v5889 = vadd.f32 %v5743, %v5878
        %v5890 = vadd.f32 %v5744, %v5882
        %v5891 = vadd.f32 %v5745, %v5878
        %v5892 = vadd.f32 %v5746, %v5882
        %v5893 = vadd.f32 %v5747, %v5878
        %v5894 = vadd.f32 %v5748, %v5882
        %v5895 = vadd.f32 %v5749, %v5878
        %v5896 = vadd.f32 %v5750, %v5882
        %v5897 = vadd.f32 %v5751, %v5878
        %v5898 = vadd.f32 %v5752, %v5882
        %v5899 = vadd.f32 %v5753, %v5878
        %v5900 = vadd.f32 %v5754, %v5882
        %v5901 = vadd.f32 %v5755, %v5878
        %v5902 = vadd.f32 %v5756, %v5882
        %v5903 = vadd.f32 %v5757, %v5878
        %v5904 = vadd.f32 %v5758, %v5882
        %v5905 = vadd.f32 %v5759, %v5878
        %v5906 = vadd.f32 %v5760, %v5882
        %v5907 = vadd.f32 %v5761, %v5878
        %v5908 = vadd.f32 %v5762, %v5882
        %v5909 = vadd.f32 %v5763, %v5878
        %v5910 = vadd.f32 %v5764, %v5882
        %v5911 = vadd.f32 %v5765, %v5878
        %v5912 = vadd.f32 %v5766, %v5882
        %v5913 = vadd.f32 %v5767, %v5878
        %v5914 = vadd.f32 %v5768, %v5882
        %v5915 = vadd.f32 %v5769, %v5878
        %v5916 = vadd.f32 %v5770, %v5882
        %v5917 = vadd.f32 %v5771, %v5878
        %v5918 = vadd.f32 %v5772, %v5882
        %v5919 = vadd.f32 %v5773, %v5878
        %v5920 = vadd.f32 %v5774, %v5882
        %v5921 = vadd.f32 %v5775, %v5878
        %v5922 = vadd.f32 %v5776, %v5882
        %v5923 = vadd.f32 %v5777, %v5878
        %v5924 = vadd.f32 %v5778, %v5882
        %v5925 = vadd.f32 %v5779, %v5878
        %v5926 = vadd.f32 %v5780, %v5882
        %v5927 = vadd.f32 %v5781, %v5878
        %v5928 = vadd.f32 %v5782, %v5882
        %v5929 = vadd.f32 %v5783, %v5878
        %v5930 = vadd.f32 %v5784, %v5882
        %v5931 = vadd.f32 %v5785, %v5878
        %v5932 = vadd.f32 %v5786, %v5882
        %v5933 = vadd.f32 %v5787, %v5878
        %v5934 = vadd.f32 %v5788, %v5882
        %v5935 = vadd.f32 %v5789, %v5878
        %v5936 = vadd.f32 %v5790, %v5882
        %v5937 = vadd.f32 %v5791, %v5878
        %v5938 = vadd.f32 %v5792, %v5882
        %v5939 = vadd.f32 %v5793, %v5878
        %v5940 = vadd.f32 %v5794, %v5882
        %v5941 = vadd.f32 %v5795, %v5878
        %v5942 = vadd.f32 %v5796, %v5882
        %v5943 = vadd.f32 %v5797, %v5878
        %v5944 = vadd.f32 %v5798, %v5882
        %v5945 = vadd.f32 %v5799, %v5878
        %v5946 = vadd.f32 %v5800, %v5882
        %v5947 = vadd.f32 %v5801, %v5878
        %v5948 = vadd.f32 %v5802, %v5882
        %v5949 = vadd.f32 %v5803, %v5878
        %v5950 = vadd.f32 %v5804, %v5882
        %v5951 = vadd.f32 %v5805, %v5878
        %v5952 = vadd.f32 %v5806, %v5882
        %v5953 = vadd.f32 %v5807, %v5878
        %v5954 = vadd.f32 %v5808, %v5882
        %v5955 = vadd.f32 %v5809, %v5878
        %v5956 = vadd.f32 %v5810, %v5882
        %v5957 = vadd.f32 %v5811, %v5878
        %v5958 = vadd.f32 %v5812, %v5882
        %v5959 = vadd.f32 %v5813, %v5878
        %v5960 = vadd.f32 %v5814, %v5882
        %v5961 = vadd.f32 %v5815, %v5878
        %v5962 = vadd.f32 %v5816, %v5882
        %v5963 = vadd.f32 %v5817, %v5878
        %v5964 = vadd.f32 %v5818, %v5882
        %v5965 = vadd.f32 %v5819, %v5878
        %v5966 = vadd.f32 %v5820, %v5882
        %v5967 = vadd.f32 %v5821, %v5878
        %v5968 = vadd.f32 %v5822, %v5882
        %v5969 = vadd.f32 %v5823, %v5878
        %v5970 = vadd.f32 %v5824, %v5882
        %v5971 = vadd.f32 %v5825, %v5878
        %v5972 = vadd.f32 %v5826, %v5882
        %v5973 = vadd.f32 %v5827, %v5878
        %v5974 = vadd.f32 %v5828, %v5882
        %v5975 = vadd.f32 %v5829, %v5878
        %v5976 = vadd.f32 %v5830, %v5882
        %v5977 = vadd.f32 %v5831, %v5878
        %v5978 = vadd.f32 %v5832, %v5882
        %v5979 = vadd.f32 %v5833, %v5878
        %v5980 = vadd.f32 %v5834, %v5882
        %v5981 = vadd.f32 %v5835, %v5878
        %v5982 = vadd.f32 %v5836, %v5882
        %v5983 = vadd.f32 %v5837, %v5878
        %v5984 = vadd.f32 %v5838, %v5882
        %v5985 = vadd.f32 %v5839, %v5878
        %v5986 = vadd.f32 %v5840, %v5882
        %v5987 = vadd.f32 %v5841, %v5878
        %v5988 = vadd.f32 %v5842, %v5882
        %v5989 = vadd.f32 %v5843, %v5878
        %v5990 = vadd.f32 %v5844, %v5882
        %v5991 = vadd.f32 %v5845, %v5878
        %v5992 = vadd.f32 %v5846, %v5882
        %v5993 = vadd.f32 %v5847, %v5878
        %v5994 = vadd.f32 %v5848, %v5882
        %v5995 = vadd.f32 %v5849, %v5878
        %v5996 = vadd.f32 %v5850, %v5882
        %v5997 = vadd.f32 %v5851, %v5878
        %v5998 = vadd.f32 %v5852, %v5882
        %v5999 = vadd.f32 %v5853, %v5878
        %v6000 = vadd.f32 %v5854, %v5882
        %v6001 = vadd.f32 %v5855, %v5878
        %v6002 = vadd.f32 %v5856, %v5882
        %v6003 = vadd.f32 %v5857, %v5878
        %v6004 = vadd.f32 %v5858, %v5882
        %v6005 = vadd.f32 %v5859, %v5878
        %v6006 = vadd.f32 %v5860, %v5882
        %v6007 = vadd.f32 %v5861, %v5878
        %v6008 = vadd.f32 %v5862, %v5882
        %v6009 = vadd.f32 %v5863, %v5878
        %v6010 = vadd.f32 %v5864, %v5882
        %v6011 = vmax.f32 %v5883, 0.0
        %v6012 = vmax.f32 %v5884, 0.0
        %v6013 = vmax.f32 %v5885, 0.0
        %v6014 = vmax.f32 %v5886, 0.0
        %v6015 = vmax.f32 %v5887, 0.0
        %v6016 = vmax.f32 %v5888, 0.0
        %v6017 = vmax.f32 %v5889, 0.0
        %v6018 = vmax.f32 %v5890, 0.0
        %v6019 = vmax.f32 %v5891, 0.0
        %v6020 = vmax.f32 %v5892, 0.0
        %v6021 = vmax.f32 %v5893, 0.0
        %v6022 = vmax.f32 %v5894, 0.0
        %v6023 = vmax.f32 %v5895, 0.0
        %v6024 = vmax.f32 %v5896, 0.0
        %v6025 = vmax.f32 %v5897, 0.0
        %v6026 = vmax.f32 %v5898, 0.0
        %v6027 = vmax.f32 %v5899, 0.0
        %v6028 = vmax.f32 %v5900, 0.0
        %v6029 = vmax.f32 %v5901, 0.0
        %v6030 = vmax.f32 %v5902, 0.0
        %v6031 = vmax.f32 %v5903, 0.0
        %v6032 = vmax.f32 %v5904, 0.0
        %v6033 = vmax.f32 %v5905, 0.0
        %v6034 = vmax.f32 %v5906, 0.0
        %v6035 = vmax.f32 %v5907, 0.0
        %v6036 = vmax.f32 %v5908, 0.0
        %v6037 = vmax.f32 %v5909, 0.0
        %v6038 = vmax.f32 %v5910, 0.0
        %v6039 = vmax.f32 %v5911, 0.0
        %v6040 = vmax.f32 %v5912, 0.0
        %v6041 = vmax.f32 %v5913, 0.0
        %v6042 = vmax.f32 %v5914, 0.0
        %v6043 = vmax.f32 %v5915, 0.0
        %v6044 = vmax.f32 %v5916, 0.0
        %v6045 = vmax.f32 %v5917, 0.0
        %v6046 = vmax.f32 %v5918, 0.0
        %v6047 = vmax.f32 %v5919, 0.0
        %v6048 = vmax.f32 %v5920, 0.0
        %v6049 = vmax.f32 %v5921, 0.0
        %v6050 = vmax.f32 %v5922, 0.0
        %v6051 = vmax.f32 %v5923, 0.0
        %v6052 = vmax.f32 %v5924, 0.0
        %v6053 = vmax.f32 %v5925, 0.0
        %v6054 = vmax.f32 %v5926, 0.0
        %v6055 = vmax.f32 %v5927, 0.0
        %v6056 = vmax.f32 %v5928, 0.0
        %v6057 = vmax.f32 %v5929, 0.0
        %v6058 = vmax.f32 %v5930, 0.0
        %v6059 = vmax.f32 %v5931, 0.0
        %v6060 = vmax.f32 %v5932, 0.0
        %v6061 = vmax.f32 %v5933, 0.0
        %v6062 = vmax.f32 %v5934, 0.0
        %v6063 = vmax.f32 %v5935, 0.0
        %v6064 = vmax.f32 %v5936, 0.0
        %v6065 = vmax.f32 %v5937, 0.0
        %v6066 = vmax.f32 %v5938, 0.0
        %v6067 = vmax.f32 %v5939, 0.0
        %v6068 = vmax.f32 %v5940, 0.0
        %v6069 = vmax.f32 %v5941, 0.0
        %v6070 = vmax.f32 %v5942, 0.0
        %v6071 = vmax.f32 %v5943, 0.0
        %v6072 = vmax.f32 %v5944, 0.0
        %v6073 = vmax.f32 %v5945, 0.0
        %v6074 = vmax.f32 %v5946, 0.0
        %v6075 = vmax.f32 %v5947, 0.0
        %v6076 = vmax.f32 %v5948, 0.0
        %v6077 = vmax.f32 %v5949, 0.0
        %v6078 = vmax.f32 %v5950, 0.0
        %v6079 = vmax.f32 %v5951, 0.0
        %v6080 = vmax.f32 %v5952, 0.0
        %v6081 = vmax.f32 %v5953, 0.0
        %v6082 = vmax.f32 %v5954, 0.0
        %v6083 = vmax.f32 %v5955, 0.0
        %v6084 = vmax.f32 %v5956, 0.0
        %v6085 = vmax.f32 %v5957, 0.0
        %v6086 = vmax.f32 %v5958, 0.0
        %v6087 = vmax.f32 %v5959, 0.0
        %v6088 = vmax.f32 %v5960, 0.0
        %v6089 = vmax.f32 %v5961, 0.0
        %v6090 = vmax.f32 %v5962, 0.0
        %v6091 = vmax.f32 %v5963, 0.0
        %v6092 = vmax.f32 %v5964, 0.0
        %v6093 = vmax.f32 %v5965, 0.0
        %v6094 = vmax.f32 %v5966, 0.0
        %v6095 = vmax.f32 %v5967, 0.0
        %v6096 = vmax.f32 %v5968, 0.0
        %v6097 = vmax.f32 %v5969, 0.0
        %v6098 = vmax.f32 %v5970, 0.0
        %v6099 = vmax.f32 %v5971, 0.0
        %v6100 = vmax.f32 %v5972, 0.0
        %v6101 = vmax.f32 %v5973, 0.0
        %v6102 = vmax.f32 %v5974, 0.0
        %v6103 = vmax.f32 %v5975, 0.0
        %v6104 = vmax.f32 %v5976, 0.0
        %v6105 = vmax.f32 %v5977, 0.0
        %v6106 = vmax.f32 %v5978, 0.0
        %v6107 = vmax.f32 %v5979, 0.0
        %v6108 = vmax.f32 %v5980, 0.0
        %v6109 = vmax.f32 %v5981, 0.0
        %v6110 = vmax.f32 %v5982, 0.0
        %v6111 = vmax.f32 %v5983, 0.0
        %v6112 = vmax.f32 %v5984, 0.0
        %v6113 = vmax.f32 %v5985, 0.0
        %v6114 = vmax.f32 %v5986, 0.0
        %v6115 = vmax.f32 %v5987, 0.0
        %v6116 = vmax.f32 %v5988, 0.0
        %v6117 = vmax.f32 %v5989, 0.0
        %v6118 = vmax.f32 %v5990, 0.0
        %v6119 = vmax.f32 %v5991, 0.0
        %v6120 = vmax.f32 %v5992, 0.0
        %v6121 = vmax.f32 %v5993, 0.0
        %v6122 = vmax.f32 %v5994, 0.0
        %v6123 = vmax.f32 %v5995, 0.0
        %v6124 = vmax.f32 %v5996, 0.0
        %v6125 = vmax.f32 %v5997, 0.0
        %v6126 = vmax.f32 %v5998, 0.0
        %v6127 = vmax.f32 %v5999, 0.0
        %v6128 = vmax.f32 %v6000, 0.0
        %v6129 = vmax.f32 %v6001, 0.0
        %v6130 = vmax.f32 %v6002, 0.0
        %v6131 = vmax.f32 %v6003, 0.0
        %v6132 = vmax.f32 %v6004, 0.0
        %v6133 = vmax.f32 %v6005, 0.0
        %v6134 = vmax.f32 %v6006, 0.0
        %v6135 = vmax.f32 %v6007, 0.0
        %v6136 = vmax.f32 %v6008, 0.0
        %v6137 = vmax.f32 %v6009, 0.0
        %v6138 = vmax.f32 %v6010, 0.0
        %v6139 = vpack.c.bf16 %v6013, %v6011
        %v6140 = vpack.c.bf16 %v6014, %v6012
        %v6141 = vpack.c.bf16 %v6017, %v6015
        %v6142 = vpack.c.bf16 %v6018, %v6016
        %v6143 = vpack.c.bf16 %v6021, %v6019
        %v6144 = vpack.c.bf16 %v6022, %v6020
        %v6145 = vpack.c.bf16 %v6025, %v6023
        %v6146 = vpack.c.bf16 %v6026, %v6024
        %v6147 = vpack.c.bf16 %v6029, %v6027
        %v6148 = vpack.c.bf16 %v6030, %v6028
        %v6149 = vpack.c.bf16 %v6033, %v6031
        %v6150 = vpack.c.bf16 %v6034, %v6032
        %v6151 = vpack.c.bf16 %v6037, %v6035
        %v6152 = vpack.c.bf16 %v6038, %v6036
        %v6153 = vpack.c.bf16 %v6041, %v6039
        %v6154 = vpack.c.bf16 %v6042, %v6040
        %v6155 = vpack.c.bf16 %v6045, %v6043
        %v6156 = vpack.c.bf16 %v6046, %v6044
        %v6157 = vpack.c.bf16 %v6049, %v6047
        %v6158 = vpack.c.bf16 %v6050, %v6048
        %v6159 = vpack.c.bf16 %v6053, %v6051
        %v6160 = vpack.c.bf16 %v6054, %v6052
        %v6161 = vpack.c.bf16 %v6057, %v6055
        %v6162 = vpack.c.bf16 %v6058, %v6056
        %v6163 = vpack.c.bf16 %v6061, %v6059
        %v6164 = vpack.c.bf16 %v6062, %v6060
        %v6165 = vpack.c.bf16 %v6065, %v6063
        %v6166 = vpack.c.bf16 %v6066, %v6064
        %v6167 = vpack.c.bf16 %v6069, %v6067
        %v6168 = vpack.c.bf16 %v6070, %v6068
        %v6169 = vpack.c.bf16 %v6073, %v6071
        %v6170 = vpack.c.bf16 %v6074, %v6072
        %v6171 = vpack.c.bf16 %v6077, %v6075
        %v6172 = vpack.c.bf16 %v6078, %v6076
        %v6173 = vpack.c.bf16 %v6081, %v6079
        %v6174 = vpack.c.bf16 %v6082, %v6080
        %v6175 = vpack.c.bf16 %v6085, %v6083
        %v6176 = vpack.c.bf16 %v6086, %v6084
        %v6177 = vpack.c.bf16 %v6089, %v6087
        %v6178 = vpack.c.bf16 %v6090, %v6088
        %v6179 = vpack.c.bf16 %v6093, %v6091
        %v6180 = vpack.c.bf16 %v6094, %v6092
        %v6181 = vpack.c.bf16 %v6097, %v6095
        %v6182 = vpack.c.bf16 %v6098, %v6096
        %v6183 = vpack.c.bf16 %v6101, %v6099
        %v6184 = vpack.c.bf16 %v6102, %v6100
        %v6185 = vpack.c.bf16 %v6105, %v6103
        %v6186 = vpack.c.bf16 %v6106, %v6104
        %v6187 = vpack.c.bf16 %v6109, %v6107
        %v6188 = vpack.c.bf16 %v6110, %v6108
        %v6189 = vpack.c.bf16 %v6113, %v6111
        %v6190 = vpack.c.bf16 %v6114, %v6112
        %v6191 = vpack.c.bf16 %v6117, %v6115
        %v6192 = vpack.c.bf16 %v6118, %v6116
        %v6193 = vpack.c.bf16 %v6121, %v6119
        %v6194 = vpack.c.bf16 %v6122, %v6120
        %v6195 = vpack.c.bf16 %v6125, %v6123
        %v6196 = vpack.c.bf16 %v6126, %v6124
        %v6197 = vpack.c.bf16 %v6129, %v6127
        %v6198 = vpack.c.bf16 %v6130, %v6128
        %v6199 = vpack.c.bf16 %v6133, %v6131
        %v6200 = vpack.c.bf16 %v6134, %v6132
        %v6201 = vpack.c.bf16 %v6137, %v6135
        %v6202 = vpack.c.bf16 %v6138, %v6136
        %v6203 = vld [vmem:[#allocation6] sm:$0xff]
        %v6204 = vld [vmem:[#allocation6 + $0x8] sm:$0xff]
        %v6205 = vld [vmem:[#allocation6 + $0x10] sm:$0xff]
        %v6206 = vld [vmem:[#allocation6 + $0x18] sm:$0xff]
        %v6207 = vld [vmem:[#allocation6 + $0x20] sm:$0xff]
        %v6208 = vld [vmem:[#allocation6 + $0x28] sm:$0xff]
        %v6209 = vld [vmem:[#allocation6 + $0x30] sm:$0xff]
        %v6210 = vld [vmem:[#allocation6 + $0x38] sm:$0xff]
        %v6211 = vld [vmem:[#allocation6 + $0x40] sm:$0xff]
        %v6212 = vld [vmem:[#allocation6 + $0x48] sm:$0xff]
        %v6213 = vld [vmem:[#allocation6 + $0x50] sm:$0xff]
        %v6214 = vld [vmem:[#allocation6 + $0x58] sm:$0xff]
        %v6215 = vld [vmem:[#allocation6 + $0x60] sm:$0xff]
        %v6216 = vld [vmem:[#allocation6 + $0x68] sm:$0xff]
        %v6217 = vld [vmem:[#allocation6 + $0x70] sm:$0xff]
        %v6218 = vld [vmem:[#allocation6 + $0x78] sm:$0xff]
        %v6219 = vld [vmem:[#allocation6 + $0x80] sm:$0xff]
        %v6220 = vld [vmem:[#allocation6 + $0x88] sm:$0xff]
        %v6221 = vld [vmem:[#allocation6 + $0x90] sm:$0xff]
        %v6222 = vld [vmem:[#allocation6 + $0x98] sm:$0xff]
        %v6223 = vld [vmem:[#allocation6 + $0xa0] sm:$0xff]
        %v6224 = vld [vmem:[#allocation6 + $0xa8] sm:$0xff]
        %v6225 = vld [vmem:[#allocation6 + $0xb0] sm:$0xff]
        %v6226 = vld [vmem:[#allocation6 + $0xb8] sm:$0xff]
        %v6227 = vld [vmem:[#allocation6 + $0xc0] sm:$0xff]
        %v6228 = vld [vmem:[#allocation6 + $0xc8] sm:$0xff]
        %v6229 = vld [vmem:[#allocation6 + $0xd0] sm:$0xff]
        %v6230 = vld [vmem:[#allocation6 + $0xd8] sm:$0xff]
        %v6231 = vld [vmem:[#allocation6 + $0xe0] sm:$0xff]
        %v6232 = vld [vmem:[#allocation6 + $0xe8] sm:$0xff]
        %v6233 = vld [vmem:[#allocation6 + $0xf0] sm:$0xff]
        %v6234 = vld [vmem:[#allocation6 + $0xf8] sm:$0xff]
        %v6235 = vlaneseq
        %v6236 = vshrl.u32 %v6235, 7
        %v6237 = vsub.s32 3, %v6236
        %v6238 = vrot.slane %v647, %v6237
        %v6239 = vlaneseq
        %v6240 = vshrl.u32 %v6239, 7
        %v6241 = vsub.s32 7, %v6240
        %v6242 = vrot.slane %v647, %v6241
        %v6245 = vlaneseq
        %v6246 = vshrl.u32 %v6245, 7
        %v6247 = vsub.s32 3, %v6246
        %v6248 = vrot.slane %v6238, %v6247
        %v6249 = vlaneseq
        %v6250 = vshrl.u32 %v6249, 7
        %v6251 = vsub.s32 3, %v6250
        %v6252 = vrot.slane %v6242, %v6251
        %v6285 = vunpack.c.l.b16 %v6203
        %v6286 = vunpack.c.h.b16 %v6203
        %v6287 = vunpack.c.l.b16 %v6204
        %v6288 = vunpack.c.h.b16 %v6204
        %v6289 = vunpack.c.l.b16 %v6205
        %v6290 = vunpack.c.h.b16 %v6205
        %v6291 = vunpack.c.l.b16 %v6206
        %v6292 = vunpack.c.h.b16 %v6206
        %v6293 = vunpack.c.l.b16 %v6207
        %v6294 = vunpack.c.h.b16 %v6207
        %v6295 = vunpack.c.l.b16 %v6208
        %v6296 = vunpack.c.h.b16 %v6208
        %v6297 = vunpack.c.l.b16 %v6209
        %v6298 = vunpack.c.h.b16 %v6209
        %v6299 = vunpack.c.l.b16 %v6210
        %v6300 = vunpack.c.h.b16 %v6210
        %v6301 = vunpack.c.l.b16 %v6211
        %v6302 = vunpack.c.h.b16 %v6211
        %v6303 = vunpack.c.l.b16 %v6212
        %v6304 = vunpack.c.h.b16 %v6212
        %v6305 = vunpack.c.l.b16 %v6213
        %v6306 = vunpack.c.h.b16 %v6213
        %v6307 = vunpack.c.l.b16 %v6214
        %v6308 = vunpack.c.h.b16 %v6214
        %v6309 = vunpack.c.l.b16 %v6215
        %v6310 = vunpack.c.h.b16 %v6215
        %v6311 = vunpack.c.l.b16 %v6216
        %v6312 = vunpack.c.h.b16 %v6216
        %v6313 = vunpack.c.l.b16 %v6217
        %v6314 = vunpack.c.h.b16 %v6217
        %v6315 = vunpack.c.l.b16 %v6218
        %v6316 = vunpack.c.h.b16 %v6218
        %v6317 = vunpack.c.l.b16 %v6219
        %v6318 = vunpack.c.h.b16 %v6219
        %v6319 = vunpack.c.l.b16 %v6220
        %v6320 = vunpack.c.h.b16 %v6220
        %v6321 = vunpack.c.l.b16 %v6221
        %v6322 = vunpack.c.h.b16 %v6221
        %v6323 = vunpack.c.l.b16 %v6222
        %v6324 = vunpack.c.h.b16 %v6222
        %v6325 = vunpack.c.l.b16 %v6223
        %v6326 = vunpack.c.h.b16 %v6223
        %v6327 = vunpack.c.l.b16 %v6224
        %v6328 = vunpack.c.h.b16 %v6224
        %v6329 = vunpack.c.l.b16 %v6225
        %v6330 = vunpack.c.h.b16 %v6225
        %v6331 = vunpack.c.l.b16 %v6226
        %v6332 = vunpack.c.h.b16 %v6226
        %v6333 = vunpack.c.l.b16 %v6227
        %v6334 = vunpack.c.h.b16 %v6227
        %v6335 = vunpack.c.l.b16 %v6228
        %v6336 = vunpack.c.h.b16 %v6228
        %v6337 = vunpack.c.l.b16 %v6229
        %v6338 = vunpack.c.h.b16 %v6229
        %v6339 = vunpack.c.l.b16 %v6230
        %v6340 = vunpack.c.h.b16 %v6230
        %v6341 = vunpack.c.l.b16 %v6231
        %v6342 = vunpack.c.h.b16 %v6231
        %v6343 = vunpack.c.l.b16 %v6232
        %v6344 = vunpack.c.h.b16 %v6232
        %v6345 = vunpack.c.l.b16 %v6233
        %v6346 = vunpack.c.h.b16 %v6233
        %v6347 = vunpack.c.l.b16 %v6234
        %v6348 = vunpack.c.h.b16 %v6234
        %v6349 = vpack.c.b16 %v6287, %v6285
        %v6350 = vpack.c.b16 %v6288, %v6286
        %v6351 = vpack.c.b16 %v6291, %v6289
        %v6352 = vpack.c.b16 %v6292, %v6290
        %v6353 = vpack.c.b16 %v6295, %v6293
        %v6354 = vpack.c.b16 %v6296, %v6294
        %v6355 = vpack.c.b16 %v6299, %v6297
        %v6356 = vpack.c.b16 %v6300, %v6298
        %v6357 = vpack.c.b16 %v6303, %v6301
        %v6358 = vpack.c.b16 %v6304, %v6302
        %v6359 = vpack.c.b16 %v6307, %v6305
        %v6360 = vpack.c.b16 %v6308, %v6306
        %v6361 = vpack.c.b16 %v6311, %v6309
        %v6362 = vpack.c.b16 %v6312, %v6310
        %v6363 = vpack.c.b16 %v6315, %v6313
        %v6364 = vpack.c.b16 %v6316, %v6314
        %v6365 = vpack.c.b16 %v6319, %v6317
        %v6366 = vpack.c.b16 %v6320, %v6318
        %v6367 = vpack.c.b16 %v6323, %v6321
        %v6368 = vpack.c.b16 %v6324, %v6322
        %v6369 = vpack.c.b16 %v6327, %v6325
        %v6370 = vpack.c.b16 %v6328, %v6326
        %v6371 = vpack.c.b16 %v6331, %v6329
        %v6372 = vpack.c.b16 %v6332, %v6330
        %v6373 = vpack.c.b16 %v6335, %v6333
        %v6374 = vpack.c.b16 %v6336, %v6334
        %v6375 = vpack.c.b16 %v6339, %v6337
        %v6376 = vpack.c.b16 %v6340, %v6338
        %v6377 = vpack.c.b16 %v6343, %v6341
        %v6378 = vpack.c.b16 %v6344, %v6342
        %v6379 = vpack.c.b16 %v6347, %v6345
        %v6380 = vpack.c.b16 %v6348, %v6346
        %6413 = vmatprep.subr.bf16.mxu0 %v6350
        %6414 = vmatpush1.bf16.msra.mxu0 %v6349
        %6415 = vmatprep.subr.bf16.mxu0 %v6352
        %6416 = vmatpush1.bf16.msra.mxu0 %v6351
        %6417 = vmatprep.subr.bf16.mxu0 %v6354
        %6418 = vmatpush1.bf16.msra.mxu0 %v6353
        %6419 = vmatprep.subr.bf16.mxu0 %v6356
        %6420 = vmatpush1.bf16.msra.mxu0 %v6355
        %6421 = vmatprep.subr.bf16.mxu0 %v6358
        %6422 = vmatpush1.bf16.msra.mxu0 %v6357
        %6423 = vmatprep.subr.bf16.mxu0 %v6360
        %6424 = vmatpush1.bf16.msra.mxu0 %v6359
        %6425 = vmatprep.subr.bf16.mxu0 %v6362
        %6426 = vmatpush1.bf16.msra.mxu0 %v6361
        %6427 = vmatprep.subr.bf16.mxu0 %v6364
        %6428 = vmatpush1.bf16.msra.mxu0 %v6363
        %6429 = vmatprep.subr.bf16.mxu0 %v6366
        %6430 = vmatpush1.bf16.msra.mxu0 %v6365
        %6431 = vmatprep.subr.bf16.mxu0 %v6368
        %6432 = vmatpush1.bf16.msra.mxu0 %v6367
        %6433 = vmatprep.subr.bf16.mxu0 %v6370
        %6434 = vmatpush1.bf16.msra.mxu0 %v6369
        %6435 = vmatprep.subr.bf16.mxu0 %v6372
        %6436 = vmatpush1.bf16.msra.mxu0 %v6371
        %6437 = vmatprep.subr.bf16.mxu0 %v6374
        %6438 = vmatpush1.bf16.msra.mxu0 %v6373
        %6439 = vmatprep.subr.bf16.mxu0 %v6376
        %6440 = vmatpush1.bf16.msra.mxu0 %v6375
        %6441 = vmatprep.subr.bf16.mxu0 %v6378
        %6442 = vmatpush1.bf16.msra.mxu0 %v6377
        %6443 = vmatprep.subr.bf16.mxu0 %v6380
        %6444 = vmatpush1.bf16.msra.mxu0 %v6379
        %6445 = vmatprep.mubr.bf16.mxu0 %v6140
        %6446 = vmatmul.mubr.bf16.gmra.mrb[0].mxu0 %v6139
        %v6447 = vpop.f32.mrb[0].mxu0
        %v6448 = vadd.f32 %v6248, %v6447
        %v6449 = vpop.f32.mrb[0].mxu0
        %v6450 = vadd.f32 %v6252, %v6449
        %v6451 = vpop.f32.mrb[0].mxu0
        %v6452 = vadd.f32 %v6248, %v6451
        %v6453 = vpop.f32.mrb[0].mxu0
        %v6454 = vadd.f32 %v6252, %v6453
        %6455 = vmatprep.mubr.bf16.mxu0 %v6142
        %6456 = vmatmul.mubr.bf16.gmra.mrb[0].mxu0 %v6141
        %v6457 = vpop.f32.mrb[0].mxu0
        %v6458 = vadd.f32 %v6248, %v6457
        %v6459 = vpop.f32.mrb[0].mxu0
        %v6460 = vadd.f32 %v6252, %v6459
        %v6461 = vpop.f32.mrb[0].mxu0
        %v6462 = vadd.f32 %v6248, %v6461
        %v6463 = vpop.f32.mrb[0].mxu0
        %v6464 = vadd.f32 %v6252, %v6463
        %6465 = vmatprep.mubr.bf16.mxu0 %v6144
        %6466 = vmatmul.mubr.bf16.gmra.mrb[0].mxu0 %v6143
        %v6467 = vpop.f32.mrb[0].mxu0
        %v6468 = vadd.f32 %v6248, %v6467
        %v6469 = vpop.f32.mrb[0].mxu0
        %v6470 = vadd.f32 %v6252, %v6469
        %v6471 = vpop.f32.mrb[0].mxu0
        %v6472 = vadd.f32 %v6248, %v6471
        %v6473 = vpop.f32.mrb[0].mxu0
        %v6474 = vadd.f32 %v6252, %v6473
        %6475 = vmatprep.mubr.bf16.mxu0 %v6146
        %6476 = vmatmul.mubr.bf16.gmra.mrb[0].mxu0 %v6145
        %v6477 = vpop.f32.mrb[0].mxu0
        %v6478 = vadd.f32 %v6248, %v6477
        %v6479 = vpop.f32.mrb[0].mxu0
        %v6480 = vadd.f32 %v6252, %v6479
        %v6481 = vpop.f32.mrb[0].mxu0
        %v6482 = vadd.f32 %v6248, %v6481
        %v6483 = vpop.f32.mrb[0].mxu0
        %v6484 = vadd.f32 %v6252, %v6483
        %6485 = vmatprep.mubr.bf16.mxu0 %v6148
        %6486 = vmatmul.mubr.bf16.gmra.mrb[0].mxu0 %v6147
        %v6487 = vpop.f32.mrb[0].mxu0
        %v6488 = vadd.f32 %v6248, %v6487
        %v6489 = vpop.f32.mrb[0].mxu0
        %v6490 = vadd.f32 %v6252, %v6489
        %v6491 = vpop.f32.mrb[0].mxu0
        %v6492 = vadd.f32 %v6248, %v6491
        %v6493 = vpop.f32.mrb[0].mxu0
        %v6494 = vadd.f32 %v6252, %v6493
        %6495 = vmatprep.mubr.bf16.mxu0 %v6150
        %6496 = vmatmul.mubr.bf16.gmra.mrb[0].mxu0 %v6149
        %v6497 = vpop.f32.mrb[0].mxu0
        %v6498 = vadd.f32 %v6248, %v6497
        %v6499 = vpop.f32.mrb[0].mxu0
        %v6500 = vadd.f32 %v6252, %v6499
        %v6501 = vpop.f32.mrb[0].mxu0
        %v6502 = vadd.f32 %v6248, %v6501
        %v6503 = vpop.f32.mrb[0].mxu0
        %v6504 = vadd.f32 %v6252, %v6503
        %6505 = vmatprep.mubr.bf16.mxu0 %v6152
        %6506 = vmatmul.mubr.bf16.gmra.mrb[0].mxu0 %v6151
        %v6507 = vpop.f32.mrb[0].mxu0
        %v6508 = vadd.f32 %v6248, %v6507
        %v6509 = vpop.f32.mrb[0].mxu0
        %v6510 = vadd.f32 %v6252, %v6509
        %v6511 = vpop.f32.mrb[0].mxu0
        %v6512 = vadd.f32 %v6248, %v6511
        %v6513 = vpop.f32.mrb[0].mxu0
        %v6514 = vadd.f32 %v6252, %v6513
        %6515 = vmatprep.mubr.bf16.mxu0 %v6154
        %6516 = vmatmul.mubr.bf16.gmra.mrb[0].mxu0 %v6153
        %v6517 = vpop.f32.mrb[0].mxu0
        %v6518 = vadd.f32 %v6248, %v6517
        %v6519 = vpop.f32.mrb[0].mxu0
        %v6520 = vadd.f32 %v6252, %v6519
        %v6521 = vpop.f32.mrb[0].mxu0
        %v6522 = vadd.f32 %v6248, %v6521
        %v6523 = vpop.f32.mrb[0].mxu0
        %v6524 = vadd.f32 %v6252, %v6523
        %6525 = vmatprep.mubr.bf16.mxu0 %v6156
        %6526 = vmatmul.mubr.bf16.gmra.mrb[0].mxu0 %v6155
        %v6527 = vpop.f32.mrb[0].mxu0
        %v6528 = vadd.f32 %v6248, %v6527
        %v6529 = vpop.f32.mrb[0].mxu0
        %v6530 = vadd.f32 %v6252, %v6529
        %v6531 = vpop.f32.mrb[0].mxu0
        %v6532 = vadd.f32 %v6248, %v6531
        %v6533 = vpop.f32.mrb[0].mxu0
        %v6534 = vadd.f32 %v6252, %v6533
        %6535 = vmatprep.mubr.bf16.mxu0 %v6158
        %6536 = vmatmul.mubr.bf16.gmra.mrb[0].mxu0 %v6157
        %v6537 = vpop.f32.mrb[0].mxu0
        %v6538 = vadd.f32 %v6248, %v6537
        %v6539 = vpop.f32.mrb[0].mxu0
        %v6540 = vadd.f32 %v6252, %v6539
        %v6541 = vpop.f32.mrb[0].mxu0
        %v6542 = vadd.f32 %v6248, %v6541
        %v6543 = vpop.f32.mrb[0].mxu0
        %v6544 = vadd.f32 %v6252, %v6543
        %6545 = vmatprep.mubr.bf16.mxu0 %v6160
        %6546 = vmatmul.mubr.bf16.gmra.mrb[0].mxu0 %v6159
        %v6547 = vpop.f32.mrb[0].mxu0
        %v6548 = vadd.f32 %v6248, %v6547
        %v6549 = vpop.f32.mrb[0].mxu0
        %v6550 = vadd.f32 %v6252, %v6549
        %v6551 = vpop.f32.mrb[0].mxu0
        %v6552 = vadd.f32 %v6248, %v6551
        %v6553 = vpop.f32.mrb[0].mxu0
        %v6554 = vadd.f32 %v6252, %v6553
        %6555 = vmatprep.mubr.bf16.mxu0 %v6162
        %6556 = vmatmul.mubr.bf16.gmra.mrb[0].mxu0 %v6161
        %v6557 = vpop.f32.mrb[0].mxu0
        %v6558 = vadd.f32 %v6248, %v6557
        %v6559 = vpop.f32.mrb[0].mxu0
        %v6560 = vadd.f32 %v6252, %v6559
        %v6561 = vpop.f32.mrb[0].mxu0
        %v6562 = vadd.f32 %v6248, %v6561
        %v6563 = vpop.f32.mrb[0].mxu0
        %v6564 = vadd.f32 %v6252, %v6563
        %6565 = vmatprep.mubr.bf16.mxu0 %v6164
        %6566 = vmatmul.mubr.bf16.gmra.mrb[0].mxu0 %v6163
        %v6567 = vpop.f32.mrb[0].mxu0
        %v6568 = vadd.f32 %v6248, %v6567
        %v6569 = vpop.f32.mrb[0].mxu0
        %v6570 = vadd.f32 %v6252, %v6569
        %v6571 = vpop.f32.mrb[0].mxu0
        %v6572 = vadd.f32 %v6248, %v6571
        %v6573 = vpop.f32.mrb[0].mxu0
        %v6574 = vadd.f32 %v6252, %v6573
        %6575 = vmatprep.mubr.bf16.mxu0 %v6166
        %6576 = vmatmul.mubr.bf16.gmra.mrb[0].mxu0 %v6165
        %v6577 = vpop.f32.mrb[0].mxu0
        %v6578 = vadd.f32 %v6248, %v6577
        %v6579 = vpop.f32.mrb[0].mxu0
        %v6580 = vadd.f32 %v6252, %v6579
        %v6581 = vpop.f32.mrb[0].mxu0
        %v6582 = vadd.f32 %v6248, %v6581
        %v6583 = vpop.f32.mrb[0].mxu0
        %v6584 = vadd.f32 %v6252, %v6583
        %6585 = vmatprep.mubr.bf16.mxu0 %v6168
        %6586 = vmatmul.mubr.bf16.gmra.mrb[0].mxu0 %v6167
        %v6587 = vpop.f32.mrb[0].mxu0
        %v6588 = vadd.f32 %v6248, %v6587
        %v6589 = vpop.f32.mrb[0].mxu0
        %v6590 = vadd.f32 %v6252, %v6589
        %v6591 = vpop.f32.mrb[0].mxu0
        %v6592 = vadd.f32 %v6248, %v6591
        %v6593 = vpop.f32.mrb[0].mxu0
        %v6594 = vadd.f32 %v6252, %v6593
        %6595 = vmatprep.mubr.bf16.mxu0 %v6170
        %6596 = vmatmul.mubr.bf16.gmra.mrb[0].mxu0 %v6169
        %v6597 = vpop.f32.mrb[0].mxu0
        %v6598 = vadd.f32 %v6248, %v6597
        %v6599 = vpop.f32.mrb[0].mxu0
        %v6600 = vadd.f32 %v6252, %v6599
        %v6601 = vpop.f32.mrb[0].mxu0
        %v6602 = vadd.f32 %v6248, %v6601
        %v6603 = vpop.f32.mrb[0].mxu0
        %v6604 = vadd.f32 %v6252, %v6603
        %6605 = vmatprep.mubr.bf16.mxu0 %v6172
        %6606 = vmatmul.mubr.bf16.gmra.mrb[0].mxu0 %v6171
        %v6607 = vpop.f32.mrb[0].mxu0
        %v6608 = vadd.f32 %v6248, %v6607
        %v6609 = vpop.f32.mrb[0].mxu0
        %v6610 = vadd.f32 %v6252, %v6609
        %v6611 = vpop.f32.mrb[0].mxu0
        %v6612 = vadd.f32 %v6248, %v6611
        %v6613 = vpop.f32.mrb[0].mxu0
        %v6614 = vadd.f32 %v6252, %v6613
        %6615 = vmatprep.mubr.bf16.mxu0 %v6174
        %6616 = vmatmul.mubr.bf16.gmra.mrb[0].mxu0 %v6173
        %v6617 = vpop.f32.mrb[0].mxu0
        %v6618 = vadd.f32 %v6248, %v6617
        %v6619 = vpop.f32.mrb[0].mxu0
        %v6620 = vadd.f32 %v6252, %v6619
        %v6621 = vpop.f32.mrb[0].mxu0
        %v6622 = vadd.f32 %v6248, %v6621
        %v6623 = vpop.f32.mrb[0].mxu0
        %v6624 = vadd.f32 %v6252, %v6623
        %6625 = vmatprep.mubr.bf16.mxu0 %v6176
        %6626 = vmatmul.mubr.bf16.gmra.mrb[0].mxu0 %v6175
        %v6627 = vpop.f32.mrb[0].mxu0
        %v6628 = vadd.f32 %v6248, %v6627
        %v6629 = vpop.f32.mrb[0].mxu0
        %v6630 = vadd.f32 %v6252, %v6629
        %v6631 = vpop.f32.mrb[0].mxu0
        %v6632 = vadd.f32 %v6248, %v6631
        %v6633 = vpop.f32.mrb[0].mxu0
        %v6634 = vadd.f32 %v6252, %v6633
        %6635 = vmatprep.mubr.bf16.mxu0 %v6178
        %6636 = vmatmul.mubr.bf16.gmra.mrb[0].mxu0 %v6177
        %v6637 = vpop.f32.mrb[0].mxu0
        %v6638 = vadd.f32 %v6248, %v6637
        %v6639 = vpop.f32.mrb[0].mxu0
        %v6640 = vadd.f32 %v6252, %v6639
        %v6641 = vpop.f32.mrb[0].mxu0
        %v6642 = vadd.f32 %v6248, %v6641
        %v6643 = vpop.f32.mrb[0].mxu0
        %v6644 = vadd.f32 %v6252, %v6643
        %6645 = vmatprep.mubr.bf16.mxu0 %v6180
        %6646 = vmatmul.mubr.bf16.gmra.mrb[0].mxu0 %v6179
        %v6647 = vpop.f32.mrb[0].mxu0
        %v6648 = vadd.f32 %v6248, %v6647
        %v6649 = vpop.f32.mrb[0].mxu0
        %v6650 = vadd.f32 %v6252, %v6649
        %v6651 = vpop.f32.mrb[0].mxu0
        %v6652 = vadd.f32 %v6248, %v6651
        %v6653 = vpop.f32.mrb[0].mxu0
        %v6654 = vadd.f32 %v6252, %v6653
        %6655 = vmatprep.mubr.bf16.mxu0 %v6182
        %6656 = vmatmul.mubr.bf16.gmra.mrb[0].mxu0 %v6181
        %v6657 = vpop.f32.mrb[0].mxu0
        %v6658 = vadd.f32 %v6248, %v6657
        %v6659 = vpop.f32.mrb[0].mxu0
        %v6660 = vadd.f32 %v6252, %v6659
        %v6661 = vpop.f32.mrb[0].mxu0
        %v6662 = vadd.f32 %v6248, %v6661
        %v6663 = vpop.f32.mrb[0].mxu0
        %v6664 = vadd.f32 %v6252, %v6663
        %6665 = vmatprep.mubr.bf16.mxu0 %v6184
        %6666 = vmatmul.mubr.bf16.gmra.mrb[0].mxu0 %v6183
        %v6667 = vpop.f32.mrb[0].mxu0
        %v6668 = vadd.f32 %v6248, %v6667
        %v6669 = vpop.f32.mrb[0].mxu0
        %v6670 = vadd.f32 %v6252, %v6669
        %v6671 = vpop.f32.mrb[0].mxu0
        %v6672 = vadd.f32 %v6248, %v6671
        %v6673 = vpop.f32.mrb[0].mxu0
        %v6674 = vadd.f32 %v6252, %v6673
        %6675 = vmatprep.mubr.bf16.mxu0 %v6186
        %6676 = vmatmul.mubr.bf16.gmra.mrb[0].mxu0 %v6185
        %v6677 = vpop.f32.mrb[0].mxu0
        %v6678 = vadd.f32 %v6248, %v6677
        %v6679 = vpop.f32.mrb[0].mxu0
        %v6680 = vadd.f32 %v6252, %v6679
        %v6681 = vpop.f32.mrb[0].mxu0
        %v6682 = vadd.f32 %v6248, %v6681
        %v6683 = vpop.f32.mrb[0].mxu0
        %v6684 = vadd.f32 %v6252, %v6683
        %6685 = vmatprep.mubr.bf16.mxu0 %v6188
        %6686 = vmatmul.mubr.bf16.gmra.mrb[0].mxu0 %v6187
        %v6687 = vpop.f32.mrb[0].mxu0
        %v6688 = vadd.f32 %v6248, %v6687
        %v6689 = vpop.f32.mrb[0].mxu0
        %v6690 = vadd.f32 %v6252, %v6689
        %v6691 = vpop.f32.mrb[0].mxu0
        %v6692 = vadd.f32 %v6248, %v6691
        %v6693 = vpop.f32.mrb[0].mxu0
        %v6694 = vadd.f32 %v6252, %v6693
        %6695 = vmatprep.mubr.bf16.mxu0 %v6190
        %6696 = vmatmul.mubr.bf16.gmra.mrb[0].mxu0 %v6189
        %v6697 = vpop.f32.mrb[0].mxu0
        %v6698 = vadd.f32 %v6248, %v6697
        %v6699 = vpop.f32.mrb[0].mxu0
        %v6700 = vadd.f32 %v6252, %v6699
        %v6701 = vpop.f32.mrb[0].mxu0
        %v6702 = vadd.f32 %v6248, %v6701
        %v6703 = vpop.f32.mrb[0].mxu0
        %v6704 = vadd.f32 %v6252, %v6703
        %6705 = vmatprep.mubr.bf16.mxu0 %v6192
        %6706 = vmatmul.mubr.bf16.gmra.mrb[0].mxu0 %v6191
        %v6707 = vpop.f32.mrb[0].mxu0
        %v6708 = vadd.f32 %v6248, %v6707
        %v6709 = vpop.f32.mrb[0].mxu0
        %v6710 = vadd.f32 %v6252, %v6709
        %v6711 = vpop.f32.mrb[0].mxu0
        %v6712 = vadd.f32 %v6248, %v6711
        %v6713 = vpop.f32.mrb[0].mxu0
        %v6714 = vadd.f32 %v6252, %v6713
        %6715 = vmatprep.mubr.bf16.mxu0 %v6194
        %6716 = vmatmul.mubr.bf16.gmra.mrb[0].mxu0 %v6193
        %v6717 = vpop.f32.mrb[0].mxu0
        %v6718 = vadd.f32 %v6248, %v6717
        %v6719 = vpop.f32.mrb[0].mxu0
        %v6720 = vadd.f32 %v6252, %v6719
        %v6721 = vpop.f32.mrb[0].mxu0
        %v6722 = vadd.f32 %v6248, %v6721
        %v6723 = vpop.f32.mrb[0].mxu0
        %v6724 = vadd.f32 %v6252, %v6723
        %6725 = vmatprep.mubr.bf16.mxu0 %v6196
        %6726 = vmatmul.mubr.bf16.gmra.mrb[0].mxu0 %v6195
        %v6727 = vpop.f32.mrb[0].mxu0
        %v6728 = vadd.f32 %v6248, %v6727
        %v6729 = vpop.f32.mrb[0].mxu0
        %v6730 = vadd.f32 %v6252, %v6729
        %v6731 = vpop.f32.mrb[0].mxu0
        %v6732 = vadd.f32 %v6248, %v6731
        %v6733 = vpop.f32.mrb[0].mxu0
        %v6734 = vadd.f32 %v6252, %v6733
        %6735 = vmatprep.mubr.bf16.mxu0 %v6198
        %6736 = vmatmul.mubr.bf16.gmra.mrb[0].mxu0 %v6197
        %v6737 = vpop.f32.mrb[0].mxu0
        %v6738 = vadd.f32 %v6248, %v6737
        %v6739 = vpop.f32.mrb[0].mxu0
        %v6740 = vadd.f32 %v6252, %v6739
        %v6741 = vpop.f32.mrb[0].mxu0
        %v6742 = vadd.f32 %v6248, %v6741
        %v6743 = vpop.f32.mrb[0].mxu0
        %v6744 = vadd.f32 %v6252, %v6743
        %6745 = vmatprep.mubr.bf16.mxu0 %v6200
        %6746 = vmatmul.mubr.bf16.gmra.mrb[0].mxu0 %v6199
        %v6747 = vpop.f32.mrb[0].mxu0
        %v6748 = vadd.f32 %v6248, %v6747
        %v6749 = vpop.f32.mrb[0].mxu0
        %v6750 = vadd.f32 %v6252, %v6749
        %v6751 = vpop.f32.mrb[0].mxu0
        %v6752 = vadd.f32 %v6248, %v6751
        %v6753 = vpop.f32.mrb[0].mxu0
        %v6754 = vadd.f32 %v6252, %v6753
        %6755 = vmatprep.mubr.bf16.mxu0 %v6202
        %6756 = vmatmul.mubr.bf16.gmra.mrb[0].mxu0 %v6201
        %v6757 = vpop.f32.mrb[0].mxu0
        %v6758 = vadd.f32 %v6248, %v6757
        %v6759 = vpop.f32.mrb[0].mxu0
        %v6760 = vadd.f32 %v6252, %v6759
        %v6761 = vpop.f32.mrb[0].mxu0
        %v6762 = vadd.f32 %v6248, %v6761
        %v6763 = vpop.f32.mrb[0].mxu0
        %v6764 = vadd.f32 %v6252, %v6763
        %6765 = vdwg.mxu0
        %v6766 = vmax.f32 %v6448, 0.0
        %v6767 = vmax.f32 %v6450, 0.0
        %v6768 = vmax.f32 %v6452, 0.0
        %v6769 = vmax.f32 %v6454, 0.0
        %v6770 = vmax.f32 %v6458, 0.0
        %v6771 = vmax.f32 %v6460, 0.0
        %v6772 = vmax.f32 %v6462, 0.0
        %v6773 = vmax.f32 %v6464, 0.0
        %v6774 = vmax.f32 %v6468, 0.0
        %v6775 = vmax.f32 %v6470, 0.0
        %v6776 = vmax.f32 %v6472, 0.0
        %v6777 = vmax.f32 %v6474, 0.0
        %v6778 = vmax.f32 %v6478, 0.0
        %v6779 = vmax.f32 %v6480, 0.0
        %v6780 = vmax.f32 %v6482, 0.0
        %v6781 = vmax.f32 %v6484, 0.0
        %v6782 = vmax.f32 %v6488, 0.0
        %v6783 = vmax.f32 %v6490, 0.0
        %v6784 = vmax.f32 %v6492, 0.0
        %v6785 = vmax.f32 %v6494, 0.0
        %v6786 = vmax.f32 %v6498, 0.0
        %v6787 = vmax.f32 %v6500, 0.0
        %v6788 = vmax.f32 %v6502, 0.0
        %v6789 = vmax.f32 %v6504, 0.0
        %v6790 = vmax.f32 %v6508, 0.0
        %v6791 = vmax.f32 %v6510, 0.0
        %v6792 = vmax.f32 %v6512, 0.0
        %v6793 = vmax.f32 %v6514, 0.0
        %v6794 = vmax.f32 %v6518, 0.0
        %v6795 = vmax.f32 %v6520, 0.0
        %v6796 = vmax.f32 %v6522, 0.0
        %v6797 = vmax.f32 %v6524, 0.0
        %v6798 = vmax.f32 %v6528, 0.0
        %v6799 = vmax.f32 %v6530, 0.0
        %v6800 = vmax.f32 %v6532, 0.0
        %v6801 = vmax.f32 %v6534, 0.0
        %v6802 = vmax.f32 %v6538, 0.0
        %v6803 = vmax.f32 %v6540, 0.0
        %v6804 = vmax.f32 %v6542, 0.0
        %v6805 = vmax.f32 %v6544, 0.0
        %v6806 = vmax.f32 %v6548, 0.0
        %v6807 = vmax.f32 %v6550, 0.0
        %v6808 = vmax.f32 %v6552, 0.0
        %v6809 = vmax.f32 %v6554, 0.0
        %v6810 = vmax.f32 %v6558, 0.0
        %v6811 = vmax.f32 %v6560, 0.0
        %v6812 = vmax.f32 %v6562, 0.0
        %v6813 = vmax.f32 %v6564, 0.0
        %v6814 = vmax.f32 %v6568, 0.0
        %v6815 = vmax.f32 %v6570, 0.0
        %v6816 = vmax.f32 %v6572, 0.0
        %v6817 = vmax.f32 %v6574, 0.0
        %v6818 = vmax.f32 %v6578, 0.0
        %v6819 = vmax.f32 %v6580, 0.0
        %v6820 = vmax.f32 %v6582, 0.0
        %v6821 = vmax.f32 %v6584, 0.0
        %v6822 = vmax.f32 %v6588, 0.0
        %v6823 = vmax.f32 %v6590, 0.0
        %v6824 = vmax.f32 %v6592, 0.0
        %v6825 = vmax.f32 %v6594, 0.0
        %v6826 = vmax.f32 %v6598, 0.0
        %v6827 = vmax.f32 %v6600, 0.0
        %v6828 = vmax.f32 %v6602, 0.0
        %v6829 = vmax.f32 %v6604, 0.0
        %v6830 = vmax.f32 %v6608, 0.0
        %v6831 = vmax.f32 %v6610, 0.0
        %v6832 = vmax.f32 %v6612, 0.0
        %v6833 = vmax.f32 %v6614, 0.0
        %v6834 = vmax.f32 %v6618, 0.0
        %v6835 = vmax.f32 %v6620, 0.0
        %v6836 = vmax.f32 %v6622, 0.0
        %v6837 = vmax.f32 %v6624, 0.0
        %v6838 = vmax.f32 %v6628, 0.0
        %v6839 = vmax.f32 %v6630, 0.0
        %v6840 = vmax.f32 %v6632, 0.0
        %v6841 = vmax.f32 %v6634, 0.0
        %v6842 = vmax.f32 %v6638, 0.0
        %v6843 = vmax.f32 %v6640, 0.0
        %v6844 = vmax.f32 %v6642, 0.0
        %v6845 = vmax.f32 %v6644, 0.0
        %v6846 = vmax.f32 %v6648, 0.0
        %v6847 = vmax.f32 %v6650, 0.0
        %v6848 = vmax.f32 %v6652, 0.0
        %v6849 = vmax.f32 %v6654, 0.0
        %v6850 = vmax.f32 %v6658, 0.0
        %v6851 = vmax.f32 %v6660, 0.0
        %v6852 = vmax.f32 %v6662, 0.0
        %v6853 = vmax.f32 %v6664, 0.0
        %v6854 = vmax.f32 %v6668, 0.0
        %v6855 = vmax.f32 %v6670, 0.0
        %v6856 = vmax.f32 %v6672, 0.0
        %v6857 = vmax.f32 %v6674, 0.0
        %v6858 = vmax.f32 %v6678, 0.0
        %v6859 = vmax.f32 %v6680, 0.0
        %v6860 = vmax.f32 %v6682, 0.0
        %v6861 = vmax.f32 %v6684, 0.0
        %v6862 = vmax.f32 %v6688, 0.0
        %v6863 = vmax.f32 %v6690, 0.0
        %v6864 = vmax.f32 %v6692, 0.0
        %v6865 = vmax.f32 %v6694, 0.0
        %v6866 = vmax.f32 %v6698, 0.0
        %v6867 = vmax.f32 %v6700, 0.0
        %v6868 = vmax.f32 %v6702, 0.0
        %v6869 = vmax.f32 %v6704, 0.0
        %v6870 = vmax.f32 %v6708, 0.0
        %v6871 = vmax.f32 %v6710, 0.0
        %v6872 = vmax.f32 %v6712, 0.0
        %v6873 = vmax.f32 %v6714, 0.0
        %v6874 = vmax.f32 %v6718, 0.0
        %v6875 = vmax.f32 %v6720, 0.0
        %v6876 = vmax.f32 %v6722, 0.0
        %v6877 = vmax.f32 %v6724, 0.0
        %v6878 = vmax.f32 %v6728, 0.0
        %v6879 = vmax.f32 %v6730, 0.0
        %v6880 = vmax.f32 %v6732, 0.0
        %v6881 = vmax.f32 %v6734, 0.0
        %v6882 = vmax.f32 %v6738, 0.0
        %v6883 = vmax.f32 %v6740, 0.0
        %v6884 = vmax.f32 %v6742, 0.0
        %v6885 = vmax.f32 %v6744, 0.0
        %v6886 = vmax.f32 %v6748, 0.0
        %v6887 = vmax.f32 %v6750, 0.0
        %v6888 = vmax.f32 %v6752, 0.0
        %v6889 = vmax.f32 %v6754, 0.0
        %v6890 = vmax.f32 %v6758, 0.0
        %v6891 = vmax.f32 %v6760, 0.0
        %v6892 = vmax.f32 %v6762, 0.0
        %v6893 = vmax.f32 %v6764, 0.0
        %v6894 = vpack.c.bf16 %v6768, %v6766
        %v6895 = vpack.c.bf16 %v6769, %v6767
        %v6896 = vpack.c.bf16 %v6772, %v6770
        %v6897 = vpack.c.bf16 %v6773, %v6771
        %v6898 = vpack.c.bf16 %v6776, %v6774
        %v6899 = vpack.c.bf16 %v6777, %v6775
        %v6900 = vpack.c.bf16 %v6780, %v6778
        %v6901 = vpack.c.bf16 %v6781, %v6779
        %v6902 = vpack.c.bf16 %v6784, %v6782
        %v6903 = vpack.c.bf16 %v6785, %v6783
        %v6904 = vpack.c.bf16 %v6788, %v6786
        %v6905 = vpack.c.bf16 %v6789, %v6787
        %v6906 = vpack.c.bf16 %v6792, %v6790
        %v6907 = vpack.c.bf16 %v6793, %v6791
        %v6908 = vpack.c.bf16 %v6796, %v6794
        %v6909 = vpack.c.bf16 %v6797, %v6795
        %v6910 = vpack.c.bf16 %v6800, %v6798
        %v6911 = vpack.c.bf16 %v6801, %v6799
        %v6912 = vpack.c.bf16 %v6804, %v6802
        %v6913 = vpack.c.bf16 %v6805, %v6803
        %v6914 = vpack.c.bf16 %v6808, %v6806
        %v6915 = vpack.c.bf16 %v6809, %v6807
        %v6916 = vpack.c.bf16 %v6812, %v6810
        %v6917 = vpack.c.bf16 %v6813, %v6811
        %v6918 = vpack.c.bf16 %v6816, %v6814
        %v6919 = vpack.c.bf16 %v6817, %v6815
        %v6920 = vpack.c.bf16 %v6820, %v6818
        %v6921 = vpack.c.bf16 %v6821, %v6819
        %v6922 = vpack.c.bf16 %v6824, %v6822
        %v6923 = vpack.c.bf16 %v6825, %v6823
        %v6924 = vpack.c.bf16 %v6828, %v6826
        %v6925 = vpack.c.bf16 %v6829, %v6827
        %v6926 = vpack.c.bf16 %v6832, %v6830
        %v6927 = vpack.c.bf16 %v6833, %v6831
        %v6928 = vpack.c.bf16 %v6836, %v6834
        %v6929 = vpack.c.bf16 %v6837, %v6835
        %v6930 = vpack.c.bf16 %v6840, %v6838
        %v6931 = vpack.c.bf16 %v6841, %v6839
        %v6932 = vpack.c.bf16 %v6844, %v6842
        %v6933 = vpack.c.bf16 %v6845, %v6843
        %v6934 = vpack.c.bf16 %v6848, %v6846
        %v6935 = vpack.c.bf16 %v6849, %v6847
        %v6936 = vpack.c.bf16 %v6852, %v6850
        %v6937 = vpack.c.bf16 %v6853, %v6851
        %v6938 = vpack.c.bf16 %v6856, %v6854
        %v6939 = vpack.c.bf16 %v6857, %v6855
        %v6940 = vpack.c.bf16 %v6860, %v6858
        %v6941 = vpack.c.bf16 %v6861, %v6859
        %v6942 = vpack.c.bf16 %v6864, %v6862
        %v6943 = vpack.c.bf16 %v6865, %v6863
        %v6944 = vpack.c.bf16 %v6868, %v6866
        %v6945 = vpack.c.bf16 %v6869, %v6867
        %v6946 = vpack.c.bf16 %v6872, %v6870
        %v6947 = vpack.c.bf16 %v6873, %v6871
        %v6948 = vpack.c.bf16 %v6876, %v6874
        %v6949 = vpack.c.bf16 %v6877, %v6875
        %v6950 = vpack.c.bf16 %v6880, %v6878
        %v6951 = vpack.c.bf16 %v6881, %v6879
        %v6952 = vpack.c.bf16 %v6884, %v6882
        %v6953 = vpack.c.bf16 %v6885, %v6883
        %v6954 = vpack.c.bf16 %v6888, %v6886
        %v6955 = vpack.c.bf16 %v6889, %v6887
        %v6956 = vpack.c.bf16 %v6892, %v6890
        %v6957 = vpack.c.bf16 %v6893, %v6891
        %v6958 = vld [vmem:[%s9] sm:$0xf]
        %v6959 = vld [vmem:[%s9 + $0x4] sm:$0xf]
        %v6960 = vld [vmem:[%s9 + $0x8] sm:$0xf]
        %v6961 = vld [vmem:[%s9 + $0xc] sm:$0xf]
        %v6962 = vld [vmem:[%s9 + $0x10] sm:$0xf]
        %v6963 = vld [vmem:[%s9 + $0x14] sm:$0xf]
        %v6964 = vld [vmem:[%s9 + $0x18] sm:$0xf]
        %v6965 = vld [vmem:[%s9 + $0x1c] sm:$0xf]
        %v6966 = vld [vmem:[%s9 + $0x20] sm:$0xf]
        %v6967 = vld [vmem:[%s9 + $0x24] sm:$0xf]
        %v6968 = vld [vmem:[%s9 + $0x28] sm:$0xf]
        %v6969 = vld [vmem:[%s9 + $0x2c] sm:$0xf]
        %v6970 = vld [vmem:[%s9 + $0x30] sm:$0xf]
        %v6971 = vld [vmem:[%s9 + $0x34] sm:$0xf]
        %v6972 = vld [vmem:[%s9 + $0x38] sm:$0xf]
        %v6973 = vld [vmem:[%s9 + $0x3c] sm:$0xf]
        %v6974 = vld [vmem:[%s9 + $0x40] sm:$0xf]
        %v6975 = vld [vmem:[%s9 + $0x44] sm:$0xf]
        %v6976 = vld [vmem:[%s9 + $0x48] sm:$0xf]
        %v6977 = vld [vmem:[%s9 + $0x4c] sm:$0xf]
        %v6978 = vld [vmem:[%s9 + $0x50] sm:$0xf]
        %v6979 = vld [vmem:[%s9 + $0x54] sm:$0xf]
        %v6980 = vld [vmem:[%s9 + $0x58] sm:$0xf]
        %v6981 = vld [vmem:[%s9 + $0x5c] sm:$0xf]
        %v6982 = vld [vmem:[%s9 + $0x60] sm:$0xf]
        %v6983 = vld [vmem:[%s9 + $0x64] sm:$0xf]
        %v6984 = vld [vmem:[%s9 + $0x68] sm:$0xf]
        %v6985 = vld [vmem:[%s9 + $0x6c] sm:$0xf]
        %v6986 = vld [vmem:[%s9 + $0x70] sm:$0xf]
        %v6987 = vld [vmem:[%s9 + $0x74] sm:$0xf]
        %v6988 = vld [vmem:[%s9 + $0x78] sm:$0xf]
        %v6989 = vld [vmem:[%s9 + $0x7c] sm:$0xf]
        %v7022 = vunpack.c.l.b16 %v6958
        %v7023 = vunpack.c.l.b16 %v6959
        %v7024 = vunpack.c.l.b16 %v6960
        %v7025 = vunpack.c.l.b16 %v6961
        %v7026 = vunpack.c.l.b16 %v6962
        %v7027 = vunpack.c.l.b16 %v6963
        %v7028 = vunpack.c.l.b16 %v6964
        %v7029 = vunpack.c.l.b16 %v6965
        %v7030 = vunpack.c.l.b16 %v6966
        %v7031 = vunpack.c.l.b16 %v6967
        %v7032 = vunpack.c.l.b16 %v6968
        %v7033 = vunpack.c.l.b16 %v6969
        %v7034 = vunpack.c.l.b16 %v6970
        %v7035 = vunpack.c.l.b16 %v6971
        %v7036 = vunpack.c.l.b16 %v6972
        %v7037 = vunpack.c.l.b16 %v6973
        %v7038 = vunpack.c.l.b16 %v6974
        %v7039 = vunpack.c.l.b16 %v6975
        %v7040 = vunpack.c.l.b16 %v6976
        %v7041 = vunpack.c.l.b16 %v6977
        %v7042 = vunpack.c.l.b16 %v6978
        %v7043 = vunpack.c.l.b16 %v6979
        %v7044 = vunpack.c.l.b16 %v6980
        %v7045 = vunpack.c.l.b16 %v6981
        %v7046 = vunpack.c.l.b16 %v6982
        %v7047 = vunpack.c.l.b16 %v6983
        %v7048 = vunpack.c.l.b16 %v6984
        %v7049 = vunpack.c.l.b16 %v6985
        %v7050 = vunpack.c.l.b16 %v6986
        %v7051 = vunpack.c.l.b16 %v6987
        %v7052 = vunpack.c.l.b16 %v6988
        %v7053 = vunpack.c.l.b16 %v6989
        %v7054 = vpack.c.b16 %v7023, %v7022
        %v7055 = vpack.c.b16 %v7025, %v7024
        %v7056 = vpack.c.b16 %v7027, %v7026
        %v7057 = vpack.c.b16 %v7029, %v7028
        %v7058 = vpack.c.b16 %v7031, %v7030
        %v7059 = vpack.c.b16 %v7033, %v7032
        %v7060 = vpack.c.b16 %v7035, %v7034
        %v7061 = vpack.c.b16 %v7037, %v7036
        %v7062 = vpack.c.b16 %v7039, %v7038
        %v7063 = vpack.c.b16 %v7041, %v7040
        %v7064 = vpack.c.b16 %v7043, %v7042
        %v7065 = vpack.c.b16 %v7045, %v7044
        %v7066 = vpack.c.b16 %v7047, %v7046
        %v7067 = vpack.c.b16 %v7049, %v7048
        %v7068 = vpack.c.b16 %v7051, %v7050
        %v7069 = vpack.c.b16 %v7053, %v7052
        %7086 = vrot.lane.b32.xlu0 %v3599, 125
        %v7087 = vpop.permute.xlu0 %7086
        %7089 = vmatprep.subr.bf16.mxu0 0
        %7090 = vmatpush1.bf16.msra.mxu0 %v7054
        %7091 = vmatprep.subr.bf16.mxu0 0
        %7092 = vmatpush1.bf16.msra.mxu0 %v7055
        %7093 = vmatprep.subr.bf16.mxu0 0
        %7094 = vmatpush1.bf16.msra.mxu0 %v7056
        %7095 = vmatprep.subr.bf16.mxu0 0
        %7096 = vmatpush1.bf16.msra.mxu0 %v7057
        %7097 = vmatprep.subr.bf16.mxu0 0
        %7098 = vmatpush1.bf16.msra.mxu0 %v7058
        %7099 = vmatprep.subr.bf16.mxu0 0
        %7100 = vmatpush1.bf16.msra.mxu0 %v7059
        %7101 = vmatprep.subr.bf16.mxu0 0
        %7102 = vmatpush1.bf16.msra.mxu0 %v7060
        %7103 = vmatprep.subr.bf16.mxu0 0
        %7104 = vmatpush1.bf16.msra.mxu0 %v7061
        %7105 = vmatprep.subr.bf16.mxu0 0
        %7106 = vmatpush1.bf16.msra.mxu0 %v7062
        %7107 = vmatprep.subr.bf16.mxu0 0
        %7108 = vmatpush1.bf16.msra.mxu0 %v7063
        %7109 = vmatprep.subr.bf16.mxu0 0
        %7110 = vmatpush1.bf16.msra.mxu0 %v7064
        %7111 = vmatprep.subr.bf16.mxu0 0
        %7112 = vmatpush1.bf16.msra.mxu0 %v7065
        %7113 = vmatprep.subr.bf16.mxu0 0
        %7114 = vmatpush1.bf16.msra.mxu0 %v7066
        %7115 = vmatprep.subr.bf16.mxu0 0
        %7116 = vmatpush1.bf16.msra.mxu0 %v7067
        %7117 = vmatprep.subr.bf16.mxu0 0
        %7118 = vmatpush1.bf16.msra.mxu0 %v7068
        %7119 = vmatprep.subr.bf16.mxu0 0
        %7120 = vmatpush1.bf16.msra.mxu0 %v7069
        %7121 = vmatprep.mubr.bf16.mxu0 %v6895
        %7122 = vmatmul.mubr.bf16.gmra.mrb[0].mxu0 %v6894
        %v7123 = vpop.f32.mrb[0].mxu0
        %v7124 = vadd.f32 %v7087, %v7123
        %v7125 = vpop.f32.mrb[0].mxu0
        %v7126 = vpop.f32.mrb[0].mxu0
        %v7127 = vadd.f32 %v7087, %v7126
        %v7128 = vpop.f32.mrb[0].mxu0
        %7129 = vmatprep.mubr.bf16.mxu0 %v6897
        %7130 = vmatmul.mubr.bf16.gmra.mrb[0].mxu0 %v6896
        %v7131 = vpop.f32.mrb[0].mxu0
        %v7132 = vadd.f32 %v7087, %v7131
        %v7133 = vpop.f32.mrb[0].mxu0
        %v7134 = vpop.f32.mrb[0].mxu0
        %v7135 = vadd.f32 %v7087, %v7134
        %v7136 = vpop.f32.mrb[0].mxu0
        %7137 = vmatprep.mubr.bf16.mxu0 %v6899
        %7138 = vmatmul.mubr.bf16.gmra.mrb[0].mxu0 %v6898
        %v7139 = vpop.f32.mrb[0].mxu0
        %v7140 = vadd.f32 %v7087, %v7139
        %v7141 = vpop.f32.mrb[0].mxu0
        %v7142 = vpop.f32.mrb[0].mxu0
        %v7143 = vadd.f32 %v7087, %v7142
        %v7144 = vpop.f32.mrb[0].mxu0
        %7145 = vmatprep.mubr.bf16.mxu0 %v6901
        %7146 = vmatmul.mubr.bf16.gmra.mrb[0].mxu0 %v6900
        %v7147 = vpop.f32.mrb[0].mxu0
        %v7148 = vadd.f32 %v7087, %v7147
        %v7149 = vpop.f32.mrb[0].mxu0
        %v7150 = vpop.f32.mrb[0].mxu0
        %v7151 = vadd.f32 %v7087, %v7150
        %v7152 = vpop.f32.mrb[0].mxu0
        %7153 = vmatprep.mubr.bf16.mxu0 %v6903
        %7154 = vmatmul.mubr.bf16.gmra.mrb[0].mxu0 %v6902
        %v7155 = vpop.f32.mrb[0].mxu0
        %v7156 = vadd.f32 %v7087, %v7155
        %v7157 = vpop.f32.mrb[0].mxu0
        %v7158 = vpop.f32.mrb[0].mxu0
        %v7159 = vadd.f32 %v7087, %v7158
        %v7160 = vpop.f32.mrb[0].mxu0
        %7161 = vmatprep.mubr.bf16.mxu0 %v6905
        %7162 = vmatmul.mubr.bf16.gmra.mrb[0].mxu0 %v6904
        %v7163 = vpop.f32.mrb[0].mxu0
        %v7164 = vadd.f32 %v7087, %v7163
        %v7165 = vpop.f32.mrb[0].mxu0
        %v7166 = vpop.f32.mrb[0].mxu0
        %v7167 = vadd.f32 %v7087, %v7166
        %v7168 = vpop.f32.mrb[0].mxu0
        %7169 = vmatprep.mubr.bf16.mxu0 %v6907
        %7170 = vmatmul.mubr.bf16.gmra.mrb[0].mxu0 %v6906
        %v7171 = vpop.f32.mrb[0].mxu0
        %v7172 = vadd.f32 %v7087, %v7171
        %v7173 = vpop.f32.mrb[0].mxu0
        %v7174 = vpop.f32.mrb[0].mxu0
        %v7175 = vadd.f32 %v7087, %v7174
        %v7176 = vpop.f32.mrb[0].mxu0
        %7177 = vmatprep.mubr.bf16.mxu0 %v6909
        %7178 = vmatmul.mubr.bf16.gmra.mrb[0].mxu0 %v6908
        %v7179 = vpop.f32.mrb[0].mxu0
        %v7180 = vadd.f32 %v7087, %v7179
        %v7181 = vpop.f32.mrb[0].mxu0
        %v7182 = vpop.f32.mrb[0].mxu0
        %v7183 = vadd.f32 %v7087, %v7182
        %v7184 = vpop.f32.mrb[0].mxu0
        %7185 = vmatprep.mubr.bf16.mxu0 %v6911
        %7186 = vmatmul.mubr.bf16.gmra.mrb[0].mxu0 %v6910
        %v7187 = vpop.f32.mrb[0].mxu0
        %v7188 = vadd.f32 %v7087, %v7187
        %v7189 = vpop.f32.mrb[0].mxu0
        %v7190 = vpop.f32.mrb[0].mxu0
        %v7191 = vadd.f32 %v7087, %v7190
        %v7192 = vpop.f32.mrb[0].mxu0
        %7193 = vmatprep.mubr.bf16.mxu0 %v6913
        %7194 = vmatmul.mubr.bf16.gmra.mrb[0].mxu0 %v6912
        %v7195 = vpop.f32.mrb[0].mxu0
        %v7196 = vadd.f32 %v7087, %v7195
        %v7197 = vpop.f32.mrb[0].mxu0
        %v7198 = vpop.f32.mrb[0].mxu0
        %v7199 = vadd.f32 %v7087, %v7198
        %v7200 = vpop.f32.mrb[0].mxu0
        %7201 = vmatprep.mubr.bf16.mxu0 %v6915
        %7202 = vmatmul.mubr.bf16.gmra.mrb[0].mxu0 %v6914
        %v7203 = vpop.f32.mrb[0].mxu0
        %v7204 = vadd.f32 %v7087, %v7203
        %v7205 = vpop.f32.mrb[0].mxu0
        %v7206 = vpop.f32.mrb[0].mxu0
        %v7207 = vadd.f32 %v7087, %v7206
        %v7208 = vpop.f32.mrb[0].mxu0
        %7209 = vmatprep.mubr.bf16.mxu0 %v6917
        %7210 = vmatmul.mubr.bf16.gmra.mrb[0].mxu0 %v6916
        %v7211 = vpop.f32.mrb[0].mxu0
        %v7212 = vadd.f32 %v7087, %v7211
        %v7213 = vpop.f32.mrb[0].mxu0
        %v7214 = vpop.f32.mrb[0].mxu0
        %v7215 = vadd.f32 %v7087, %v7214
        %v7216 = vpop.f32.mrb[0].mxu0
        %7217 = vmatprep.mubr.bf16.mxu0 %v6919
        %7218 = vmatmul.mubr.bf16.gmra.mrb[0].mxu0 %v6918
        %v7219 = vpop.f32.mrb[0].mxu0
        %v7220 = vadd.f32 %v7087, %v7219
        %v7221 = vpop.f32.mrb[0].mxu0
        %v7222 = vpop.f32.mrb[0].mxu0
        %v7223 = vadd.f32 %v7087, %v7222
        %v7224 = vpop.f32.mrb[0].mxu0
        %7225 = vmatprep.mubr.bf16.mxu0 %v6921
        %7226 = vmatmul.mubr.bf16.gmra.mrb[0].mxu0 %v6920
        %v7227 = vpop.f32.mrb[0].mxu0
        %v7228 = vadd.f32 %v7087, %v7227
        %v7229 = vpop.f32.mrb[0].mxu0
        %v7230 = vpop.f32.mrb[0].mxu0
        %v7231 = vadd.f32 %v7087, %v7230
        %v7232 = vpop.f32.mrb[0].mxu0
        %7233 = vmatprep.mubr.bf16.mxu0 %v6923
        %7234 = vmatmul.mubr.bf16.gmra.mrb[0].mxu0 %v6922
        %v7235 = vpop.f32.mrb[0].mxu0
        %v7236 = vadd.f32 %v7087, %v7235
        %v7237 = vpop.f32.mrb[0].mxu0
        %v7238 = vpop.f32.mrb[0].mxu0
        %v7239 = vadd.f32 %v7087, %v7238
        %v7240 = vpop.f32.mrb[0].mxu0
        %7241 = vmatprep.mubr.bf16.mxu0 %v6925
        %7242 = vmatmul.mubr.bf16.gmra.mrb[0].mxu0 %v6924
        %v7243 = vpop.f32.mrb[0].mxu0
        %v7244 = vadd.f32 %v7087, %v7243
        %v7245 = vpop.f32.mrb[0].mxu0
        %v7246 = vpop.f32.mrb[0].mxu0
        %v7247 = vadd.f32 %v7087, %v7246
        %v7248 = vpop.f32.mrb[0].mxu0
        %7249 = vmatprep.mubr.bf16.mxu0 %v6927
        %7250 = vmatmul.mubr.bf16.gmra.mrb[0].mxu0 %v6926
        %v7251 = vpop.f32.mrb[0].mxu0
        %v7252 = vadd.f32 %v7087, %v7251
        %v7253 = vpop.f32.mrb[0].mxu0
        %v7254 = vpop.f32.mrb[0].mxu0
        %v7255 = vadd.f32 %v7087, %v7254
        %v7256 = vpop.f32.mrb[0].mxu0
        %7257 = vmatprep.mubr.bf16.mxu0 %v6929
        %7258 = vmatmul.mubr.bf16.gmra.mrb[0].mxu0 %v6928
        %v7259 = vpop.f32.mrb[0].mxu0
        %v7260 = vadd.f32 %v7087, %v7259
        %v7261 = vpop.f32.mrb[0].mxu0
        %v7262 = vpop.f32.mrb[0].mxu0
        %v7263 = vadd.f32 %v7087, %v7262
        %v7264 = vpop.f32.mrb[0].mxu0
        %7265 = vmatprep.mubr.bf16.mxu0 %v6931
        %7266 = vmatmul.mubr.bf16.gmra.mrb[0].mxu0 %v6930
        %v7267 = vpop.f32.mrb[0].mxu0
        %v7268 = vadd.f32 %v7087, %v7267
        %v7269 = vpop.f32.mrb[0].mxu0
        %v7270 = vpop.f32.mrb[0].mxu0
        %v7271 = vadd.f32 %v7087, %v7270
        %v7272 = vpop.f32.mrb[0].mxu0
        %7273 = vmatprep.mubr.bf16.mxu0 %v6933
        %7274 = vmatmul.mubr.bf16.gmra.mrb[0].mxu0 %v6932
        %v7275 = vpop.f32.mrb[0].mxu0
        %v7276 = vadd.f32 %v7087, %v7275
        %v7277 = vpop.f32.mrb[0].mxu0
        %v7278 = vpop.f32.mrb[0].mxu0
        %v7279 = vadd.f32 %v7087, %v7278
        %v7280 = vpop.f32.mrb[0].mxu0
        %7281 = vmatprep.mubr.bf16.mxu0 %v6935
        %7282 = vmatmul.mubr.bf16.gmra.mrb[0].mxu0 %v6934
        %v7283 = vpop.f32.mrb[0].mxu0
        %v7284 = vadd.f32 %v7087, %v7283
        %v7285 = vpop.f32.mrb[0].mxu0
        %v7286 = vpop.f32.mrb[0].mxu0
        %v7287 = vadd.f32 %v7087, %v7286
        %v7288 = vpop.f32.mrb[0].mxu0
        %7289 = vmatprep.mubr.bf16.mxu0 %v6937
        %7290 = vmatmul.mubr.bf16.gmra.mrb[0].mxu0 %v6936
        %v7291 = vpop.f32.mrb[0].mxu0
        %v7292 = vadd.f32 %v7087, %v7291
        %v7293 = vpop.f32.mrb[0].mxu0
        %v7294 = vpop.f32.mrb[0].mxu0
        %v7295 = vadd.f32 %v7087, %v7294
        %v7296 = vpop.f32.mrb[0].mxu0
        %7297 = vmatprep.mubr.bf16.mxu0 %v6939
        %7298 = vmatmul.mubr.bf16.gmra.mrb[0].mxu0 %v6938
        %v7299 = vpop.f32.mrb[0].mxu0
        %v7300 = vadd.f32 %v7087, %v7299
        %v7301 = vpop.f32.mrb[0].mxu0
        %v7302 = vpop.f32.mrb[0].mxu0
        %v7303 = vadd.f32 %v7087, %v7302
        %v7304 = vpop.f32.mrb[0].mxu0
        %7305 = vmatprep.mubr.bf16.mxu0 %v6941
        %7306 = vmatmul.mubr.bf16.gmra.mrb[0].mxu0 %v6940
        %v7307 = vpop.f32.mrb[0].mxu0
        %v7308 = vadd.f32 %v7087, %v7307
        %v7309 = vpop.f32.mrb[0].mxu0
        %v7310 = vpop.f32.mrb[0].mxu0
        %v7311 = vadd.f32 %v7087, %v7310
        %v7312 = vpop.f32.mrb[0].mxu0
        %7313 = vmatprep.mubr.bf16.mxu0 %v6943
        %7314 = vmatmul.mubr.bf16.gmra.mrb[0].mxu0 %v6942
        %v7315 = vpop.f32.mrb[0].mxu0
        %v7316 = vadd.f32 %v7087, %v7315
        %v7317 = vpop.f32.mrb[0].mxu0
        %v7318 = vpop.f32.mrb[0].mxu0
        %v7319 = vadd.f32 %v7087, %v7318
        %v7320 = vpop.f32.mrb[0].mxu0
        %7321 = vmatprep.mubr.bf16.mxu0 %v6945
        %7322 = vmatmul.mubr.bf16.gmra.mrb[0].mxu0 %v6944
        %v7323 = vpop.f32.mrb[0].mxu0
        %v7324 = vadd.f32 %v7087, %v7323
        %v7325 = vpop.f32.mrb[0].mxu0
        %v7326 = vpop.f32.mrb[0].mxu0
        %v7327 = vadd.f32 %v7087, %v7326
        %v7328 = vpop.f32.mrb[0].mxu0
        %7329 = vmatprep.mubr.bf16.mxu0 %v6947
        %7330 = vmatmul.mubr.bf16.gmra.mrb[0].mxu0 %v6946
        %v7331 = vpop.f32.mrb[0].mxu0
        %v7332 = vadd.f32 %v7087, %v7331
        %v7333 = vpop.f32.mrb[0].mxu0
        %v7334 = vpop.f32.mrb[0].mxu0
        %v7335 = vadd.f32 %v7087, %v7334
        %v7336 = vpop.f32.mrb[0].mxu0
        %7337 = vmatprep.mubr.bf16.mxu0 %v6949
        %7338 = vmatmul.mubr.bf16.gmra.mrb[0].mxu0 %v6948
        %v7339 = vpop.f32.mrb[0].mxu0
        %v7340 = vadd.f32 %v7087, %v7339
        %v7341 = vpop.f32.mrb[0].mxu0
        %v7342 = vpop.f32.mrb[0].mxu0
        %v7343 = vadd.f32 %v7087, %v7342
        %v7344 = vpop.f32.mrb[0].mxu0
        %7345 = vmatprep.mubr.bf16.mxu0 %v6951
        %7346 = vmatmul.mubr.bf16.gmra.mrb[0].mxu0 %v6950
        %v7347 = vpop.f32.mrb[0].mxu0
        %v7348 = vadd.f32 %v7087, %v7347
        %v7349 = vpop.f32.mrb[0].mxu0
        %v7350 = vpop.f32.mrb[0].mxu0
        %v7351 = vadd.f32 %v7087, %v7350
        %v7352 = vpop.f32.mrb[0].mxu0
        %7353 = vmatprep.mubr.bf16.mxu0 %v6953
        %7354 = vmatmul.mubr.bf16.gmra.mrb[0].mxu0 %v6952
        %v7355 = vpop.f32.mrb[0].mxu0
        %v7356 = vadd.f32 %v7087, %v7355
        %v7357 = vpop.f32.mrb[0].mxu0
        %v7358 = vpop.f32.mrb[0].mxu0
        %v7359 = vadd.f32 %v7087, %v7358
        %v7360 = vpop.f32.mrb[0].mxu0
        %7361 = vmatprep.mubr.bf16.mxu0 %v6955
        %7362 = vmatmul.mubr.bf16.gmra.mrb[0].mxu0 %v6954
        %v7363 = vpop.f32.mrb[0].mxu0
        %v7364 = vadd.f32 %v7087, %v7363
        %v7365 = vpop.f32.mrb[0].mxu0
        %v7366 = vpop.f32.mrb[0].mxu0
        %v7367 = vadd.f32 %v7087, %v7366
        %v7368 = vpop.f32.mrb[0].mxu0
        %7369 = vmatprep.mubr.bf16.mxu0 %v6957
        %7370 = vmatmul.mubr.bf16.gmra.mrb[0].mxu0 %v6956
        %v7371 = vpop.f32.mrb[0].mxu0
        %v7372 = vadd.f32 %v7087, %v7371
        %v7373 = vpop.f32.mrb[0].mxu0
        %v7374 = vpop.f32.mrb[0].mxu0
        %v7375 = vadd.f32 %v7087, %v7374
        %v7376 = vpop.f32.mrb[0].mxu0
        %7377 = vdwg.mxu0
        %v7378 = vlaneseq
        %v7379 = vand.u32 %v7378, 127
        %vm7380 = vcmp.lt.s32.totalorder %v7379, 3
        %v7381 = vand.u32 2147483647, %v7124
        %v7382 = vand.u32 2147483647, %v7127
        %v7383 = vand.u32 2147483647, %v7132
        %v7384 = vand.u32 2147483647, %v7135
        %v7385 = vand.u32 2147483647, %v7140
        %v7386 = vand.u32 2147483647, %v7143
        %v7387 = vand.u32 2147483647, %v7148
        %v7388 = vand.u32 2147483647, %v7151
        %v7389 = vand.u32 2147483647, %v7156
        %v7390 = vand.u32 2147483647, %v7159
        %v7391 = vand.u32 2147483647, %v7164
        %v7392 = vand.u32 2147483647, %v7167
        %v7393 = vand.u32 2147483647, %v7172
        %v7394 = vand.u32 2147483647, %v7175
        %v7395 = vand.u32 2147483647, %v7180
        %v7396 = vand.u32 2147483647, %v7183
        %v7397 = vand.u32 2147483647, %v7188
        %v7398 = vand.u32 2147483647, %v7191
        %v7399 = vand.u32 2147483647, %v7196
        %v7400 = vand.u32 2147483647, %v7199
        %v7401 = vand.u32 2147483647, %v7204
        %v7402 = vand.u32 2147483647, %v7207
        %v7403 = vand.u32 2147483647, %v7212
        %v7404 = vand.u32 2147483647, %v7215
        %v7405 = vand.u32 2147483647, %v7220
        %v7406 = vand.u32 2147483647, %v7223
        %v7407 = vand.u32 2147483647, %v7228
        %v7408 = vand.u32 2147483647, %v7231
        %v7409 = vand.u32 2147483647, %v7236
        %v7410 = vand.u32 2147483647, %v7239
        %v7411 = vand.u32 2147483647, %v7244
        %v7412 = vand.u32 2147483647, %v7247
        %v7413 = vand.u32 2147483647, %v7252
        %v7414 = vand.u32 2147483647, %v7255
        %v7415 = vand.u32 2147483647, %v7260
        %v7416 = vand.u32 2147483647, %v7263
        %v7417 = vand.u32 2147483647, %v7268
        %v7418 = vand.u32 2147483647, %v7271
        %v7419 = vand.u32 2147483647, %v7276
        %v7420 = vand.u32 2147483647, %v7279
        %v7421 = vand.u32 2147483647, %v7284
        %v7422 = vand.u32 2147483647, %v7287
        %v7423 = vand.u32 2147483647, %v7292
        %v7424 = vand.u32 2147483647, %v7295
        %v7425 = vand.u32 2147483647, %v7300
        %v7426 = vand.u32 2147483647, %v7303
        %v7427 = vand.u32 2147483647, %v7308
        %v7428 = vand.u32 2147483647, %v7311
        %v7429 = vand.u32 2147483647, %v7316
        %v7430 = vand.u32 2147483647, %v7319
        %v7431 = vand.u32 2147483647, %v7324
        %v7432 = vand.u32 2147483647, %v7327
        %v7433 = vand.u32 2147483647, %v7332
        %v7434 = vand.u32 2147483647, %v7335
        %v7435 = vand.u32 2147483647, %v7340
        %v7436 = vand.u32 2147483647, %v7343
        %v7437 = vand.u32 2147483647, %v7348
        %v7438 = vand.u32 2147483647, %v7351
        %v7439 = vand.u32 2147483647, %v7356
        %v7440 = vand.u32 2147483647, %v7359
        %v7441 = vand.u32 2147483647, %v7364
        %v7442 = vand.u32 2147483647, %v7367
        %v7443 = vand.u32 2147483647, %v7372
        %v7444 = vand.u32 2147483647, %v7375
        %v7445 = vsub.f32 0.0, %v7381
        %v7446 = vsub.f32 0.0, %v7382
        %v7447 = vsub.f32 0.0, %v7383
        %v7448 = vsub.f32 0.0, %v7384
        %v7449 = vsub.f32 0.0, %v7385
        %v7450 = vsub.f32 0.0, %v7386
        %v7451 = vsub.f32 0.0, %v7387
        %v7452 = vsub.f32 0.0, %v7388
        %v7453 = vsub.f32 0.0, %v7389
        %v7454 = vsub.f32 0.0, %v7390
        %v7455 = vsub.f32 0.0, %v7391
        %v7456 = vsub.f32 0.0, %v7392
        %v7457 = vsub.f32 0.0, %v7393
        %v7458 = vsub.f32 0.0, %v7394
        %v7459 = vsub.f32 0.0, %v7395
        %v7460 = vsub.f32 0.0, %v7396
        %v7461 = vsub.f32 0.0, %v7397
        %v7462 = vsub.f32 0.0, %v7398
        %v7463 = vsub.f32 0.0, %v7399
        %v7464 = vsub.f32 0.0, %v7400
        %v7465 = vsub.f32 0.0, %v7401
        %v7466 = vsub.f32 0.0, %v7402
        %v7467 = vsub.f32 0.0, %v7403
        %v7468 = vsub.f32 0.0, %v7404
        %v7469 = vsub.f32 0.0, %v7405
        %v7470 = vsub.f32 0.0, %v7406
        %v7471 = vsub.f32 0.0, %v7407
        %v7472 = vsub.f32 0.0, %v7408
        %v7473 = vsub.f32 0.0, %v7409
        %v7474 = vsub.f32 0.0, %v7410
        %v7475 = vsub.f32 0.0, %v7411
        %v7476 = vsub.f32 0.0, %v7412
        %v7477 = vsub.f32 0.0, %v7413
        %v7478 = vsub.f32 0.0, %v7414
        %v7479 = vsub.f32 0.0, %v7415
        %v7480 = vsub.f32 0.0, %v7416
        %v7481 = vsub.f32 0.0, %v7417
        %v7482 = vsub.f32 0.0, %v7418
        %v7483 = vsub.f32 0.0, %v7419
        %v7484 = vsub.f32 0.0, %v7420
        %v7485 = vsub.f32 0.0, %v7421
        %v7486 = vsub.f32 0.0, %v7422
        %v7487 = vsub.f32 0.0, %v7423
        %v7488 = vsub.f32 0.0, %v7424
        %v7489 = vsub.f32 0.0, %v7425
        %v7490 = vsub.f32 0.0, %v7426
        %v7491 = vsub.f32 0.0, %v7427
        %v7492 = vsub.f32 0.0, %v7428
        %v7493 = vsub.f32 0.0, %v7429
        %v7494 = vsub.f32 0.0, %v7430
        %v7495 = vsub.f32 0.0, %v7431
        %v7496 = vsub.f32 0.0, %v7432
        %v7497 = vsub.f32 0.0, %v7433
        %v7498 = vsub.f32 0.0, %v7434
        %v7499 = vsub.f32 0.0, %v7435
        %v7500 = vsub.f32 0.0, %v7436
        %v7501 = vsub.f32 0.0, %v7437
        %v7502 = vsub.f32 0.0, %v7438
        %v7503 = vsub.f32 0.0, %v7439
        %v7504 = vsub.f32 0.0, %v7440
        %v7505 = vsub.f32 0.0, %v7441
        %v7506 = vsub.f32 0.0, %v7442
        %v7507 = vsub.f32 0.0, %v7443
        %v7508 = vsub.f32 0.0, %v7444
        %v7509 = vmul.f32 %v7445, 1.442695
        %v7510 = vpow.pop %v7509
        %v7511 = vmul.f32 %v7446, 1.442695
        %v7512 = vpow.pop %v7511
        %v7513 = vmul.f32 %v7447, 1.442695
        %v7514 = vpow.pop %v7513
        %v7515 = vmul.f32 %v7448, 1.442695
        %v7516 = vpow.pop %v7515
        %v7517 = vmul.f32 %v7449, 1.442695
        %v7518 = vpow.pop %v7517
        %v7519 = vmul.f32 %v7450, 1.442695
        %v7520 = vpow.pop %v7519
        %v7521 = vmul.f32 %v7451, 1.442695
        %v7522 = vpow.pop %v7521
        %v7523 = vmul.f32 %v7452, 1.442695
        %v7524 = vpow.pop %v7523
        %v7525 = vmul.f32 %v7453, 1.442695
        %v7526 = vpow.pop %v7525
        %v7527 = vmul.f32 %v7454, 1.442695
        %v7528 = vpow.pop %v7527
        %v7529 = vmul.f32 %v7455, 1.442695
        %v7530 = vpow.pop %v7529
        %v7531 = vmul.f32 %v7456, 1.442695
        %v7532 = vpow.pop %v7531
        %v7533 = vmul.f32 %v7457, 1.442695
        %v7534 = vpow.pop %v7533
        %v7535 = vmul.f32 %v7458, 1.442695
        %v7536 = vpow.pop %v7535
        %v7537 = vmul.f32 %v7459, 1.442695
        %v7538 = vpow.pop %v7537
        %v7539 = vmul.f32 %v7460, 1.442695
        %v7540 = vpow.pop %v7539
        %v7541 = vmul.f32 %v7461, 1.442695
        %v7542 = vpow.pop %v7541
        %v7543 = vmul.f32 %v7462, 1.442695
        %v7544 = vpow.pop %v7543
        %v7545 = vmul.f32 %v7463, 1.442695
        %v7546 = vpow.pop %v7545
        %v7547 = vmul.f32 %v7464, 1.442695
        %v7548 = vpow.pop %v7547
        %v7549 = vmul.f32 %v7465, 1.442695
        %v7550 = vpow.pop %v7549
        %v7551 = vmul.f32 %v7466, 1.442695
        %v7552 = vpow.pop %v7551
        %v7553 = vmul.f32 %v7467, 1.442695
        %v7554 = vpow.pop %v7553
        %v7555 = vmul.f32 %v7468, 1.442695
        %v7556 = vpow.pop %v7555
        %v7557 = vmul.f32 %v7469, 1.442695
        %v7558 = vpow.pop %v7557
        %v7559 = vmul.f32 %v7470, 1.442695
        %v7560 = vpow.pop %v7559
        %v7561 = vmul.f32 %v7471, 1.442695
        %v7562 = vpow.pop %v7561
        %v7563 = vmul.f32 %v7472, 1.442695
        %v7564 = vpow.pop %v7563
        %v7565 = vmul.f32 %v7473, 1.442695
        %v7566 = vpow.pop %v7565
        %v7567 = vmul.f32 %v7474, 1.442695
        %v7568 = vpow.pop %v7567
        %v7569 = vmul.f32 %v7475, 1.442695
        %v7570 = vpow.pop %v7569
        %v7571 = vmul.f32 %v7476, 1.442695
        %v7572 = vpow.pop %v7571
        %v7573 = vmul.f32 %v7477, 1.442695
        %v7574 = vpow.pop %v7573
        %v7575 = vmul.f32 %v7478, 1.442695
        %v7576 = vpow.pop %v7575
        %v7577 = vmul.f32 %v7479, 1.442695
        %v7578 = vpow.pop %v7577
        %v7579 = vmul.f32 %v7480, 1.442695
        %v7580 = vpow.pop %v7579
        %v7581 = vmul.f32 %v7481, 1.442695
        %v7582 = vpow.pop %v7581
        %v7583 = vmul.f32 %v7482, 1.442695
        %v7584 = vpow.pop %v7583
        %v7585 = vmul.f32 %v7483, 1.442695
        %v7586 = vpow.pop %v7585
        %v7587 = vmul.f32 %v7484, 1.442695
        %v7588 = vpow.pop %v7587
        %v7589 = vmul.f32 %v7485, 1.442695
        %v7590 = vpow.pop %v7589
        %v7591 = vmul.f32 %v7486, 1.442695
        %v7592 = vpow.pop %v7591
        %v7593 = vmul.f32 %v7487, 1.442695
        %v7594 = vpow.pop %v7593
        %v7595 = vmul.f32 %v7488, 1.442695
        %v7596 = vpow.pop %v7595
        %v7597 = vmul.f32 %v7489, 1.442695
        %v7598 = vpow.pop %v7597
        %v7599 = vmul.f32 %v7490, 1.442695
        %v7600 = vpow.pop %v7599
        %v7601 = vmul.f32 %v7491, 1.442695
        %v7602 = vpow.pop %v7601
        %v7603 = vmul.f32 %v7492, 1.442695
        %v7604 = vpow.pop %v7603
        %v7605 = vmul.f32 %v7493, 1.442695
        %v7606 = vpow.pop %v7605
        %v7607 = vmul.f32 %v7494, 1.442695
        %v7608 = vpow.pop %v7607
        %v7609 = vmul.f32 %v7495, 1.442695
        %v7610 = vpow.pop %v7609
        %v7611 = vmul.f32 %v7496, 1.442695
        %v7612 = vpow.pop %v7611
        %v7613 = vmul.f32 %v7497, 1.442695
        %v7614 = vpow.pop %v7613
        %v7615 = vmul.f32 %v7498, 1.442695
        %v7616 = vpow.pop %v7615
        %v7617 = vmul.f32 %v7499, 1.442695
        %v7618 = vpow.pop %v7617
        %v7619 = vmul.f32 %v7500, 1.442695
        %v7620 = vpow.pop %v7619
        %v7621 = vmul.f32 %v7501, 1.442695
        %v7622 = vpow.pop %v7621
        %v7623 = vmul.f32 %v7502, 1.442695
        %v7624 = vpow.pop %v7623
        %v7625 = vmul.f32 %v7503, 1.442695
        %v7626 = vpow.pop %v7625
        %v7627 = vmul.f32 %v7504, 1.442695
        %v7628 = vpow.pop %v7627
        %v7629 = vmul.f32 %v7505, 1.442695
        %v7630 = vpow.pop %v7629
        %v7631 = vmul.f32 %v7506, 1.442695
        %v7632 = vpow.pop %v7631
        %v7633 = vmul.f32 %v7507, 1.442695
        %v7634 = vpow.pop %v7633
        %v7635 = vmul.f32 %v7508, 1.442695
        %v7636 = vpow.pop %v7635
        %v7637 = vadd.f32 %v7510, 1.0
        %v7638 = vadd.f32 %v7512, 1.0
        %v7639 = vadd.f32 %v7514, 1.0
        %v7640 = vadd.f32 %v7516, 1.0
        %v7641 = vadd.f32 %v7518, 1.0
        %v7642 = vadd.f32 %v7520, 1.0
        %v7643 = vadd.f32 %v7522, 1.0
        %v7644 = vadd.f32 %v7524, 1.0
        %v7645 = vadd.f32 %v7526, 1.0
        %v7646 = vadd.f32 %v7528, 1.0
        %v7647 = vadd.f32 %v7530, 1.0
        %v7648 = vadd.f32 %v7532, 1.0
        %v7649 = vadd.f32 %v7534, 1.0
        %v7650 = vadd.f32 %v7536, 1.0
        %v7651 = vadd.f32 %v7538, 1.0
        %v7652 = vadd.f32 %v7540, 1.0
        %v7653 = vadd.f32 %v7542, 1.0
        %v7654 = vadd.f32 %v7544, 1.0
        %v7655 = vadd.f32 %v7546, 1.0
        %v7656 = vadd.f32 %v7548, 1.0
        %v7657 = vadd.f32 %v7550, 1.0
        %v7658 = vadd.f32 %v7552, 1.0
        %v7659 = vadd.f32 %v7554, 1.0
        %v7660 = vadd.f32 %v7556, 1.0
        %v7661 = vadd.f32 %v7558, 1.0
        %v7662 = vadd.f32 %v7560, 1.0
        %v7663 = vadd.f32 %v7562, 1.0
        %v7664 = vadd.f32 %v7564, 1.0
        %v7665 = vadd.f32 %v7566, 1.0
        %v7666 = vadd.f32 %v7568, 1.0
        %v7667 = vadd.f32 %v7570, 1.0
        %v7668 = vadd.f32 %v7572, 1.0
        %v7669 = vadd.f32 %v7574, 1.0
        %v7670 = vadd.f32 %v7576, 1.0
        %v7671 = vadd.f32 %v7578, 1.0
        %v7672 = vadd.f32 %v7580, 1.0
        %v7673 = vadd.f32 %v7582, 1.0
        %v7674 = vadd.f32 %v7584, 1.0
        %v7675 = vadd.f32 %v7586, 1.0
        %v7676 = vadd.f32 %v7588, 1.0
        %v7677 = vadd.f32 %v7590, 1.0
        %v7678 = vadd.f32 %v7592, 1.0
        %v7679 = vadd.f32 %v7594, 1.0
        %v7680 = vadd.f32 %v7596, 1.0
        %v7681 = vadd.f32 %v7598, 1.0
        %v7682 = vadd.f32 %v7600, 1.0
        %v7683 = vadd.f32 %v7602, 1.0
        %v7684 = vadd.f32 %v7604, 1.0
        %v7685 = vadd.f32 %v7606, 1.0
        %v7686 = vadd.f32 %v7608, 1.0
        %v7687 = vadd.f32 %v7610, 1.0
        %v7688 = vadd.f32 %v7612, 1.0
        %v7689 = vadd.f32 %v7614, 1.0
        %v7690 = vadd.f32 %v7616, 1.0
        %v7691 = vadd.f32 %v7618, 1.0
        %v7692 = vadd.f32 %v7620, 1.0
        %v7693 = vadd.f32 %v7622, 1.0
        %v7694 = vadd.f32 %v7624, 1.0
        %v7695 = vadd.f32 %v7626, 1.0
        %v7696 = vadd.f32 %v7628, 1.0
        %v7697 = vadd.f32 %v7630, 1.0
        %v7698 = vadd.f32 %v7632, 1.0
        %v7699 = vadd.f32 %v7634, 1.0
        %v7700 = vadd.f32 %v7636, 1.0
        %v7701 = vrcp.pop %v7637
        %v7702 = vrcp.pop %v7638
        %v7703 = vrcp.pop %v7639
        %v7704 = vrcp.pop %v7640
        %v7705 = vrcp.pop %v7641
        %v7706 = vrcp.pop %v7642
        %v7707 = vrcp.pop %v7643
        %v7708 = vrcp.pop %v7644
        %v7709 = vrcp.pop %v7645
        %v7710 = vrcp.pop %v7646
        %v7711 = vrcp.pop %v7647
        %v7712 = vrcp.pop %v7648
        %v7713 = vrcp.pop %v7649
        %v7714 = vrcp.pop %v7650
        %v7715 = vrcp.pop %v7651
        %v7716 = vrcp.pop %v7652
        %v7717 = vrcp.pop %v7653
        %v7718 = vrcp.pop %v7654
        %v7719 = vrcp.pop %v7655
        %v7720 = vrcp.pop %v7656
        %v7721 = vrcp.pop %v7657
        %v7722 = vrcp.pop %v7658
        %v7723 = vrcp.pop %v7659
        %v7724 = vrcp.pop %v7660
        %v7725 = vrcp.pop %v7661
        %v7726 = vrcp.pop %v7662
        %v7727 = vrcp.pop %v7663
        %v7728 = vrcp.pop %v7664
        %v7729 = vrcp.pop %v7665
        %v7730 = vrcp.pop %v7666
        %v7731 = vrcp.pop %v7667
        %v7732 = vrcp.pop %v7668
        %v7733 = vrcp.pop %v7669
        %v7734 = vrcp.pop %v7670
        %v7735 = vrcp.pop %v7671
        %v7736 = vrcp.pop %v7672
        %v7737 = vrcp.pop %v7673
        %v7738 = vrcp.pop %v7674
        %v7739 = vrcp.pop %v7675
        %v7740 = vrcp.pop %v7676
        %v7741 = vrcp.pop %v7677
        %v7742 = vrcp.pop %v7678
        %v7743 = vrcp.pop %v7679
        %v7744 = vrcp.pop %v7680
        %v7745 = vrcp.pop %v7681
        %v7746 = vrcp.pop %v7682
        %v7747 = vrcp.pop %v7683
        %v7748 = vrcp.pop %v7684
        %v7749 = vrcp.pop %v7685
        %v7750 = vrcp.pop %v7686
        %v7751 = vrcp.pop %v7687
        %v7752 = vrcp.pop %v7688
        %v7753 = vrcp.pop %v7689
        %v7754 = vrcp.pop %v7690
        %v7755 = vrcp.pop %v7691
        %v7756 = vrcp.pop %v7692
        %v7757 = vrcp.pop %v7693
        %v7758 = vrcp.pop %v7694
        %v7759 = vrcp.pop %v7695
        %v7760 = vrcp.pop %v7696
        %v7761 = vrcp.pop %v7697
        %v7762 = vrcp.pop %v7698
        %v7763 = vrcp.pop %v7699
        %v7764 = vrcp.pop %v7700
        %vm7765 = vcmp.ge.f32.partialorder %v7124, 0.0
        %vm7766 = vcmp.ge.f32.partialorder %v7127, 0.0
        %vm7767 = vcmp.ge.f32.partialorder %v7132, 0.0
        %vm7768 = vcmp.ge.f32.partialorder %v7135, 0.0
        %vm7769 = vcmp.ge.f32.partialorder %v7140, 0.0
        %vm7770 = vcmp.ge.f32.partialorder %v7143, 0.0
        %vm7771 = vcmp.ge.f32.partialorder %v7148, 0.0
        %vm7772 = vcmp.ge.f32.partialorder %v7151, 0.0
        %vm7773 = vcmp.ge.f32.partialorder %v7156, 0.0
        %vm7774 = vcmp.ge.f32.partialorder %v7159, 0.0
        %vm7775 = vcmp.ge.f32.partialorder %v7164, 0.0
        %vm7776 = vcmp.ge.f32.partialorder %v7167, 0.0
        %vm7777 = vcmp.ge.f32.partialorder %v7172, 0.0
        %vm7778 = vcmp.ge.f32.partialorder %v7175, 0.0
        %vm7779 = vcmp.ge.f32.partialorder %v7180, 0.0
        %vm7780 = vcmp.ge.f32.partialorder %v7183, 0.0
        %vm7781 = vcmp.ge.f32.partialorder %v7188, 0.0
        %vm7782 = vcmp.ge.f32.partialorder %v7191, 0.0
        %vm7783 = vcmp.ge.f32.partialorder %v7196, 0.0
        %vm7784 = vcmp.ge.f32.partialorder %v7199, 0.0
        %vm7785 = vcmp.ge.f32.partialorder %v7204, 0.0
        %vm7786 = vcmp.ge.f32.partialorder %v7207, 0.0
        %vm7787 = vcmp.ge.f32.partialorder %v7212, 0.0
        %vm7788 = vcmp.ge.f32.partialorder %v7215, 0.0
        %vm7789 = vcmp.ge.f32.partialorder %v7220, 0.0
        %vm7790 = vcmp.ge.f32.partialorder %v7223, 0.0
        %vm7791 = vcmp.ge.f32.partialorder %v7228, 0.0
        %vm7792 = vcmp.ge.f32.partialorder %v7231, 0.0
        %vm7793 = vcmp.ge.f32.partialorder %v7236, 0.0
        %vm7794 = vcmp.ge.f32.partialorder %v7239, 0.0
        %vm7795 = vcmp.ge.f32.partialorder %v7244, 0.0
        %vm7796 = vcmp.ge.f32.partialorder %v7247, 0.0
        %vm7797 = vcmp.ge.f32.partialorder %v7252, 0.0
        %vm7798 = vcmp.ge.f32.partialorder %v7255, 0.0
        %vm7799 = vcmp.ge.f32.partialorder %v7260, 0.0
        %vm7800 = vcmp.ge.f32.partialorder %v7263, 0.0
        %vm7801 = vcmp.ge.f32.partialorder %v7268, 0.0
        %vm7802 = vcmp.ge.f32.partialorder %v7271, 0.0
        %vm7803 = vcmp.ge.f32.partialorder %v7276, 0.0
        %vm7804 = vcmp.ge.f32.partialorder %v7279, 0.0
        %vm7805 = vcmp.ge.f32.partialorder %v7284, 0.0
        %vm7806 = vcmp.ge.f32.partialorder %v7287, 0.0
        %vm7807 = vcmp.ge.f32.partialorder %v7292, 0.0
        %vm7808 = vcmp.ge.f32.partialorder %v7295, 0.0
        %vm7809 = vcmp.ge.f32.partialorder %v7300, 0.0
        %vm7810 = vcmp.ge.f32.partialorder %v7303, 0.0
        %vm7811 = vcmp.ge.f32.partialorder %v7308, 0.0
        %vm7812 = vcmp.ge.f32.partialorder %v7311, 0.0
        %vm7813 = vcmp.ge.f32.partialorder %v7316, 0.0
        %vm7814 = vcmp.ge.f32.partialorder %v7319, 0.0
        %vm7815 = vcmp.ge.f32.partialorder %v7324, 0.0
        %vm7816 = vcmp.ge.f32.partialorder %v7327, 0.0
        %vm7817 = vcmp.ge.f32.partialorder %v7332, 0.0
        %vm7818 = vcmp.ge.f32.partialorder %v7335, 0.0
        %vm7819 = vcmp.ge.f32.partialorder %v7340, 0.0
        %vm7820 = vcmp.ge.f32.partialorder %v7343, 0.0
        %vm7821 = vcmp.ge.f32.partialorder %v7348, 0.0
        %vm7822 = vcmp.ge.f32.partialorder %v7351, 0.0
        %vm7823 = vcmp.ge.f32.partialorder %v7356, 0.0
        %vm7824 = vcmp.ge.f32.partialorder %v7359, 0.0
        %vm7825 = vcmp.ge.f32.partialorder %v7364, 0.0
        %vm7826 = vcmp.ge.f32.partialorder %v7367, 0.0
        %vm7827 = vcmp.ge.f32.partialorder %v7372, 0.0
        %vm7828 = vcmp.ge.f32.partialorder %v7375, 0.0
        %v7829 = vmul.f32 %v7510, %v7701
        %v7830 = vmul.f32 %v7512, %v7702
        %v7831 = vmul.f32 %v7514, %v7703
        %v7832 = vmul.f32 %v7516, %v7704
        %v7833 = vmul.f32 %v7518, %v7705
        %v7834 = vmul.f32 %v7520, %v7706
        %v7835 = vmul.f32 %v7522, %v7707
        %v7836 = vmul.f32 %v7524, %v7708
        %v7837 = vmul.f32 %v7526, %v7709
        %v7838 = vmul.f32 %v7528, %v7710
        %v7839 = vmul.f32 %v7530, %v7711
        %v7840 = vmul.f32 %v7532, %v7712
        %v7841 = vmul.f32 %v7534, %v7713
        %v7842 = vmul.f32 %v7536, %v7714
        %v7843 = vmul.f32 %v7538, %v7715
        %v7844 = vmul.f32 %v7540, %v7716
        %v7845 = vmul.f32 %v7542, %v7717
        %v7846 = vmul.f32 %v7544, %v7718
        %v7847 = vmul.f32 %v7546, %v7719
        %v7848 = vmul.f32 %v7548, %v7720
        %v7849 = vmul.f32 %v7550, %v7721
        %v7850 = vmul.f32 %v7552, %v7722
        %v7851 = vmul.f32 %v7554, %v7723
        %v7852 = vmul.f32 %v7556, %v7724
        %v7853 = vmul.f32 %v7558, %v7725
        %v7854 = vmul.f32 %v7560, %v7726
        %v7855 = vmul.f32 %v7562, %v7727
        %v7856 = vmul.f32 %v7564, %v7728
        %v7857 = vmul.f32 %v7566, %v7729
        %v7858 = vmul.f32 %v7568, %v7730
        %v7859 = vmul.f32 %v7570, %v7731
        %v7860 = vmul.f32 %v7572, %v7732
        %v7861 = vmul.f32 %v7574, %v7733
        %v7862 = vmul.f32 %v7576, %v7734
        %v7863 = vmul.f32 %v7578, %v7735
        %v7864 = vmul.f32 %v7580, %v7736
        %v7865 = vmul.f32 %v7582, %v7737
        %v7866 = vmul.f32 %v7584, %v7738
        %v7867 = vmul.f32 %v7586, %v7739
        %v7868 = vmul.f32 %v7588, %v7740
        %v7869 = vmul.f32 %v7590, %v7741
        %v7870 = vmul.f32 %v7592, %v7742
        %v7871 = vmul.f32 %v7594, %v7743
        %v7872 = vmul.f32 %v7596, %v7744
        %v7873 = vmul.f32 %v7598, %v7745
        %v7874 = vmul.f32 %v7600, %v7746
        %v7875 = vmul.f32 %v7602, %v7747
        %v7876 = vmul.f32 %v7604, %v7748
        %v7877 = vmul.f32 %v7606, %v7749
        %v7878 = vmul.f32 %v7608, %v7750
        %v7879 = vmul.f32 %v7610, %v7751
        %v7880 = vmul.f32 %v7612, %v7752
        %v7881 = vmul.f32 %v7614, %v7753
        %v7882 = vmul.f32 %v7616, %v7754
        %v7883 = vmul.f32 %v7618, %v7755
        %v7884 = vmul.f32 %v7620, %v7756
        %v7885 = vmul.f32 %v7622, %v7757
        %v7886 = vmul.f32 %v7624, %v7758
        %v7887 = vmul.f32 %v7626, %v7759
        %v7888 = vmul.f32 %v7628, %v7760
        %v7889 = vmul.f32 %v7630, %v7761
        %v7890 = vmul.f32 %v7632, %v7762
        %v7891 = vmul.f32 %v7634, %v7763
        %v7892 = vmul.f32 %v7636, %v7764
        %v7893 = vsel %vm7765, %v7701, %v7829
        %v7894 = vsel %vm7766, %v7702, %v7830
        %v7895 = vsel %vm7767, %v7703, %v7831
        %v7896 = vsel %vm7768, %v7704, %v7832
        %v7897 = vsel %vm7769, %v7705, %v7833
        %v7898 = vsel %vm7770, %v7706, %v7834
        %v7899 = vsel %vm7771, %v7707, %v7835
        %v7900 = vsel %vm7772, %v7708, %v7836
        %v7901 = vsel %vm7773, %v7709, %v7837
        %v7902 = vsel %vm7774, %v7710, %v7838
        %v7903 = vsel %vm7775, %v7711, %v7839
        %v7904 = vsel %vm7776, %v7712, %v7840
        %v7905 = vsel %vm7777, %v7713, %v7841
        %v7906 = vsel %vm7778, %v7714, %v7842
        %v7907 = vsel %vm7779, %v7715, %v7843
        %v7908 = vsel %vm7780, %v7716, %v7844
        %v7909 = vsel %vm7781, %v7717, %v7845
        %v7910 = vsel %vm7782, %v7718, %v7846
        %v7911 = vsel %vm7783, %v7719, %v7847
        %v7912 = vsel %vm7784, %v7720, %v7848
        %v7913 = vsel %vm7785, %v7721, %v7849
        %v7914 = vsel %vm7786, %v7722, %v7850
        %v7915 = vsel %vm7787, %v7723, %v7851
        %v7916 = vsel %vm7788, %v7724, %v7852
        %v7917 = vsel %vm7789, %v7725, %v7853
        %v7918 = vsel %vm7790, %v7726, %v7854
        %v7919 = vsel %vm7791, %v7727, %v7855
        %v7920 = vsel %vm7792, %v7728, %v7856
        %v7921 = vsel %vm7793, %v7729, %v7857
        %v7922 = vsel %vm7794, %v7730, %v7858
        %v7923 = vsel %vm7795, %v7731, %v7859
        %v7924 = vsel %vm7796, %v7732, %v7860
        %v7925 = vsel %vm7797, %v7733, %v7861
        %v7926 = vsel %vm7798, %v7734, %v7862
        %v7927 = vsel %vm7799, %v7735, %v7863
        %v7928 = vsel %vm7800, %v7736, %v7864
        %v7929 = vsel %vm7801, %v7737, %v7865
        %v7930 = vsel %vm7802, %v7738, %v7866
        %v7931 = vsel %vm7803, %v7739, %v7867
        %v7932 = vsel %vm7804, %v7740, %v7868
        %v7933 = vsel %vm7805, %v7741, %v7869
        %v7934 = vsel %vm7806, %v7742, %v7870
        %v7935 = vsel %vm7807, %v7743, %v7871
        %v7936 = vsel %vm7808, %v7744, %v7872
        %v7937 = vsel %vm7809, %v7745, %v7873
        %v7938 = vsel %vm7810, %v7746, %v7874
        %v7939 = vsel %vm7811, %v7747, %v7875
        %v7940 = vsel %vm7812, %v7748, %v7876
        %v7941 = vsel %vm7813, %v7749, %v7877
        %v7942 = vsel %vm7814, %v7750, %v7878
        %v7943 = vsel %vm7815, %v7751, %v7879
        %v7944 = vsel %vm7816, %v7752, %v7880
        %v7945 = vsel %vm7817, %v7753, %v7881
        %v7946 = vsel %vm7818, %v7754, %v7882
        %v7947 = vsel %vm7819, %v7755, %v7883
        %v7948 = vsel %vm7820, %v7756, %v7884
        %v7949 = vsel %vm7821, %v7757, %v7885
        %v7950 = vsel %vm7822, %v7758, %v7886
        %v7951 = vsel %vm7823, %v7759, %v7887
        %v7952 = vsel %vm7824, %v7760, %v7888
        %v7953 = vsel %vm7825, %v7761, %v7889
        %v7954 = vsel %vm7826, %v7762, %v7890
        %v7955 = vsel %vm7827, %v7763, %v7891
        %v7956 = vsel %vm7828, %v7764, %v7892
        %v7957 = vsel %vm7380, %v7893, %v7124
        %v7958 = vsel %vm7380, %v7894, %v7127
        %v7959 = vsel %vm7380, %v7895, %v7132
        %v7960 = vsel %vm7380, %v7896, %v7135
        %v7961 = vsel %vm7380, %v7897, %v7140
        %v7962 = vsel %vm7380, %v7898, %v7143
        %v7963 = vsel %vm7380, %v7899, %v7148
        %v7964 = vsel %vm7380, %v7900, %v7151
        %v7965 = vsel %vm7380, %v7901, %v7156
        %v7966 = vsel %vm7380, %v7902, %v7159
        %v7967 = vsel %vm7380, %v7903, %v7164
        %v7968 = vsel %vm7380, %v7904, %v7167
        %v7969 = vsel %vm7380, %v7905, %v7172
        %v7970 = vsel %vm7380, %v7906, %v7175
        %v7971 = vsel %vm7380, %v7907, %v7180
        %v7972 = vsel %vm7380, %v7908, %v7183
        %v7973 = vsel %vm7380, %v7909, %v7188
        %v7974 = vsel %vm7380, %v7910, %v7191
        %v7975 = vsel %vm7380, %v7911, %v7196
        %v7976 = vsel %vm7380, %v7912, %v7199
        %v7977 = vsel %vm7380, %v7913, %v7204
        %v7978 = vsel %vm7380, %v7914, %v7207
        %v7979 = vsel %vm7380, %v7915, %v7212
        %v7980 = vsel %vm7380, %v7916, %v7215
        %v7981 = vsel %vm7380, %v7917, %v7220
        %v7982 = vsel %vm7380, %v7918, %v7223
        %v7983 = vsel %vm7380, %v7919, %v7228
        %v7984 = vsel %vm7380, %v7920, %v7231
        %v7985 = vsel %vm7380, %v7921, %v7236
        %v7986 = vsel %vm7380, %v7922, %v7239
        %v7987 = vsel %vm7380, %v7923, %v7244
        %v7988 = vsel %vm7380, %v7924, %v7247
        %v7989 = vsel %vm7380, %v7925, %v7252
        %v7990 = vsel %vm7380, %v7926, %v7255
        %v7991 = vsel %vm7380, %v7927, %v7260
        %v7992 = vsel %vm7380, %v7928, %v7263
        %v7993 = vsel %vm7380, %v7929, %v7268
        %v7994 = vsel %vm7380, %v7930, %v7271
        %v7995 = vsel %vm7380, %v7931, %v7276
        %v7996 = vsel %vm7380, %v7932, %v7279
        %v7997 = vsel %vm7380, %v7933, %v7284
        %v7998 = vsel %vm7380, %v7934, %v7287
        %v7999 = vsel %vm7380, %v7935, %v7292
        %v8000 = vsel %vm7380, %v7936, %v7295
        %v8001 = vsel %vm7380, %v7937, %v7300
        %v8002 = vsel %vm7380, %v7938, %v7303
        %v8003 = vsel %vm7380, %v7939, %v7308
        %v8004 = vsel %vm7380, %v7940, %v7311
        %v8005 = vsel %vm7380, %v7941, %v7316
        %v8006 = vsel %vm7380, %v7942, %v7319
        %v8007 = vsel %vm7380, %v7943, %v7324
        %v8008 = vsel %vm7380, %v7944, %v7327
        %v8009 = vsel %vm7380, %v7945, %v7332
        %v8010 = vsel %vm7380, %v7946, %v7335
        %v8011 = vsel %vm7380, %v7947, %v7340
        %v8012 = vsel %vm7380, %v7948, %v7343
        %v8013 = vsel %vm7380, %v7949, %v7348
        %v8014 = vsel %vm7380, %v7950, %v7351
        %v8015 = vsel %vm7380, %v7951, %v7356
        %v8016 = vsel %vm7380, %v7952, %v7359
        %v8017 = vsel %vm7380, %v7953, %v7364
        %v8018 = vsel %vm7380, %v7954, %v7367
        %v8019 = vsel %vm7380, %v7955, %v7372
        %v8020 = vsel %vm7380, %v7956, %v7375
        %8085 = vrot.lane.b32.xlu0 %v7957, 3
        %v8086 = vpop.permute.xlu0 %8085
        %8087 = vrot.lane.b32.xlu0 %v7958, 3
        %v8088 = vpop.permute.xlu0 %8087
        %8089 = vrot.lane.b32.xlu0 %v7959, 3
        %v8090 = vpop.permute.xlu0 %8089
        %8091 = vrot.lane.b32.xlu0 %v7960, 3
        %v8092 = vpop.permute.xlu0 %8091
        %8093 = vrot.lane.b32.xlu0 %v7961, 3
        %v8094 = vpop.permute.xlu0 %8093
        %8095 = vrot.lane.b32.xlu0 %v7962, 3
        %v8096 = vpop.permute.xlu0 %8095
        %8097 = vrot.lane.b32.xlu0 %v7963, 3
        %v8098 = vpop.permute.xlu0 %8097
        %8099 = vrot.lane.b32.xlu0 %v7964, 3
        %v8100 = vpop.permute.xlu0 %8099
        %8101 = vrot.lane.b32.xlu0 %v7965, 3
        %v8102 = vpop.permute.xlu0 %8101
        %8103 = vrot.lane.b32.xlu0 %v7966, 3
        %v8104 = vpop.permute.xlu0 %8103
        %8105 = vrot.lane.b32.xlu0 %v7967, 3
        %v8106 = vpop.permute.xlu0 %8105
        %8107 = vrot.lane.b32.xlu0 %v7968, 3
        %v8108 = vpop.permute.xlu0 %8107
        %8109 = vrot.lane.b32.xlu0 %v7969, 3
        %v8110 = vpop.permute.xlu0 %8109
        %8111 = vrot.lane.b32.xlu0 %v7970, 3
        %v8112 = vpop.permute.xlu0 %8111
        %8113 = vrot.lane.b32.xlu0 %v7971, 3
        %v8114 = vpop.permute.xlu0 %8113
        %8115 = vrot.lane.b32.xlu0 %v7972, 3
        %v8116 = vpop.permute.xlu0 %8115
        %8117 = vrot.lane.b32.xlu0 %v7973, 3
        %v8118 = vpop.permute.xlu0 %8117
        %8119 = vrot.lane.b32.xlu0 %v7974, 3
        %v8120 = vpop.permute.xlu0 %8119
        %8121 = vrot.lane.b32.xlu0 %v7975, 3
        %v8122 = vpop.permute.xlu0 %8121
        %8123 = vrot.lane.b32.xlu0 %v7976, 3
        %v8124 = vpop.permute.xlu0 %8123
        %8125 = vrot.lane.b32.xlu0 %v7977, 3
        %v8126 = vpop.permute.xlu0 %8125
        %8127 = vrot.lane.b32.xlu0 %v7978, 3
        %v8128 = vpop.permute.xlu0 %8127
        %8129 = vrot.lane.b32.xlu0 %v7979, 3
        %v8130 = vpop.permute.xlu0 %8129
        %8131 = vrot.lane.b32.xlu0 %v7980, 3
        %v8132 = vpop.permute.xlu0 %8131
        %8133 = vrot.lane.b32.xlu0 %v7981, 3
        %v8134 = vpop.permute.xlu0 %8133
        %8135 = vrot.lane.b32.xlu0 %v7982, 3
        %v8136 = vpop.permute.xlu0 %8135
        %8137 = vrot.lane.b32.xlu0 %v7983, 3
        %v8138 = vpop.permute.xlu0 %8137
        %8139 = vrot.lane.b32.xlu0 %v7984, 3
        %v8140 = vpop.permute.xlu0 %8139
        %8141 = vrot.lane.b32.xlu0 %v7985, 3
        %v8142 = vpop.permute.xlu0 %8141
        %8143 = vrot.lane.b32.xlu0 %v7986, 3
        %v8144 = vpop.permute.xlu0 %8143
        %8145 = vrot.lane.b32.xlu0 %v7987, 3
        %v8146 = vpop.permute.xlu0 %8145
        %8147 = vrot.lane.b32.xlu0 %v7988, 3
        %v8148 = vpop.permute.xlu0 %8147
        %8149 = vrot.lane.b32.xlu0 %v7989, 3
        %v8150 = vpop.permute.xlu0 %8149
        %8151 = vrot.lane.b32.xlu0 %v7990, 3
        %v8152 = vpop.permute.xlu0 %8151
        %8153 = vrot.lane.b32.xlu0 %v7991, 3
        %v8154 = vpop.permute.xlu0 %8153
        %8155 = vrot.lane.b32.xlu0 %v7992, 3
        %v8156 = vpop.permute.xlu0 %8155
        %8157 = vrot.lane.b32.xlu0 %v7993, 3
        %v8158 = vpop.permute.xlu0 %8157
        %8159 = vrot.lane.b32.xlu0 %v7994, 3
        %v8160 = vpop.permute.xlu0 %8159
        %8161 = vrot.lane.b32.xlu0 %v7995, 3
        %v8162 = vpop.permute.xlu0 %8161
        %8163 = vrot.lane.b32.xlu0 %v7996, 3
        %v8164 = vpop.permute.xlu0 %8163
        %8165 = vrot.lane.b32.xlu0 %v7997, 3
        %v8166 = vpop.permute.xlu0 %8165
        %8167 = vrot.lane.b32.xlu0 %v7998, 3
        %v8168 = vpop.permute.xlu0 %8167
        %8169 = vrot.lane.b32.xlu0 %v7999, 3
        %v8170 = vpop.permute.xlu0 %8169
        %8171 = vrot.lane.b32.xlu0 %v8000, 3
        %v8172 = vpop.permute.xlu0 %8171
        %8173 = vrot.lane.b32.xlu0 %v8001, 3
        %v8174 = vpop.permute.xlu0 %8173
        %8175 = vrot.lane.b32.xlu0 %v8002, 3
        %v8176 = vpop.permute.xlu0 %8175
        %8177 = vrot.lane.b32.xlu0 %v8003, 3
        %v8178 = vpop.permute.xlu0 %8177
        %8179 = vrot.lane.b32.xlu0 %v8004, 3
        %v8180 = vpop.permute.xlu0 %8179
        %8181 = vrot.lane.b32.xlu0 %v8005, 3
        %v8182 = vpop.permute.xlu0 %8181
        %8183 = vrot.lane.b32.xlu0 %v8006, 3
        %v8184 = vpop.permute.xlu0 %8183
        %8185 = vrot.lane.b32.xlu0 %v8007, 3
        %v8186 = vpop.permute.xlu0 %8185
        %8187 = vrot.lane.b32.xlu0 %v8008, 3
        %v8188 = vpop.permute.xlu0 %8187
        %8189 = vrot.lane.b32.xlu0 %v8009, 3
        %v8190 = vpop.permute.xlu0 %8189
        %8191 = vrot.lane.b32.xlu0 %v8010, 3
        %v8192 = vpop.permute.xlu0 %8191
        %8193 = vrot.lane.b32.xlu0 %v8011, 3
        %v8194 = vpop.permute.xlu0 %8193
        %8195 = vrot.lane.b32.xlu0 %v8012, 3
        %v8196 = vpop.permute.xlu0 %8195
        %8197 = vrot.lane.b32.xlu0 %v8013, 3
        %v8198 = vpop.permute.xlu0 %8197
        %8199 = vrot.lane.b32.xlu0 %v8014, 3
        %v8200 = vpop.permute.xlu0 %8199
        %8201 = vrot.lane.b32.xlu0 %v8015, 3
        %v8202 = vpop.permute.xlu0 %8201
        %8203 = vrot.lane.b32.xlu0 %v8016, 3
        %v8204 = vpop.permute.xlu0 %8203
        %8205 = vrot.lane.b32.xlu0 %v8017, 3
        %v8206 = vpop.permute.xlu0 %8205
        %8207 = vrot.lane.b32.xlu0 %v8018, 3
        %v8208 = vpop.permute.xlu0 %8207
        %8209 = vrot.lane.b32.xlu0 %v8019, 3
        %v8210 = vpop.permute.xlu0 %8209
        %8211 = vrot.lane.b32.xlu0 %v8020, 3
        %v8212 = vpop.permute.xlu0 %8211
        %v8277 = vsel %vm4604, %v4498, %v8086
        %v8278 = vsel %vm4604, %v4499, %v8088
        %v8279 = vsel %vm4604, %v4500, %v8090
        %v8280 = vsel %vm4604, %v4501, %v8092
        %v8281 = vsel %vm4604, %v4502, %v8094
        %v8282 = vsel %vm4604, %v4503, %v8096
        %v8283 = vsel %vm4604, %v4504, %v8098
        %v8284 = vsel %vm4604, %v4505, %v8100
        %v8285 = vsel %vm4604, %v4506, %v8102
        %v8286 = vsel %vm4604, %v4507, %v8104
        %v8287 = vsel %vm4604, %v4508, %v8106
        %v8288 = vsel %vm4604, %v4509, %v8108
        %v8289 = vsel %vm4604, %v4510, %v8110
        %v8290 = vsel %vm4604, %v4511, %v8112
        %v8291 = vsel %vm4604, %v4512, %v8114
        %v8292 = vsel %vm4604, %v4513, %v8116
        %v8293 = vsel %vm4604, %v4514, %v8118
        %v8294 = vsel %vm4604, %v4515, %v8120
        %v8295 = vsel %vm4604, %v4516, %v8122
        %v8296 = vsel %vm4604, %v4517, %v8124
        %v8297 = vsel %vm4604, %v4518, %v8126
        %v8298 = vsel %vm4604, %v4519, %v8128
        %v8299 = vsel %vm4604, %v4520, %v8130
        %v8300 = vsel %vm4604, %v4521, %v8132
        %v8301 = vsel %vm4604, %v4522, %v8134
        %v8302 = vsel %vm4604, %v4523, %v8136
        %v8303 = vsel %vm4604, %v4524, %v8138
        %v8304 = vsel %vm4604, %v4525, %v8140
        %v8305 = vsel %vm4604, %v4526, %v8142
        %v8306 = vsel %vm4604, %v4527, %v8144
        %v8307 = vsel %vm4604, %v4528, %v8146
        %v8308 = vsel %vm4604, %v4529, %v8148
        %v8309 = vsel %vm4604, %v4530, %v8150
        %v8310 = vsel %vm4604, %v4531, %v8152
        %v8311 = vsel %vm4604, %v4532, %v8154
        %v8312 = vsel %vm4604, %v4533, %v8156
        %v8313 = vsel %vm4604, %v4534, %v8158
        %v8314 = vsel %vm4604, %v4535, %v8160
        %v8315 = vsel %vm4604, %v4536, %v8162
        %v8316 = vsel %vm4604, %v4537, %v8164
        %v8317 = vsel %vm4604, %v4538, %v8166
        %v8318 = vsel %vm4604, %v4539, %v8168
        %v8319 = vsel %vm4604, %v4540, %v8170
        %v8320 = vsel %vm4604, %v4541, %v8172
        %v8321 = vsel %vm4604, %v4542, %v8174
        %v8322 = vsel %vm4604, %v4543, %v8176
        %v8323 = vsel %vm4604, %v4544, %v8178
        %v8324 = vsel %vm4604, %v4545, %v8180
        %v8325 = vsel %vm4604, %v4546, %v8182
        %v8326 = vsel %vm4604, %v4547, %v8184
        %v8327 = vsel %vm4604, %v4548, %v8186
        %v8328 = vsel %vm4604, %v4549, %v8188
        %v8329 = vsel %vm4604, %v4550, %v8190
        %v8330 = vsel %vm4604, %v4551, %v8192
        %v8331 = vsel %vm4604, %v4552, %v8194
        %v8332 = vsel %vm4604, %v4553, %v8196
        %v8333 = vsel %vm4604, %v4554, %v8198
        %v8334 = vsel %vm4604, %v4555, %v8200
        %v8335 = vsel %vm4604, %v4556, %v8202
        %v8336 = vsel %vm4604, %v4557, %v8204
        %v8337 = vsel %vm4604, %v4558, %v8206
        %v8338 = vsel %vm4604, %v4559, %v8208
        %v8339 = vsel %vm4604, %v4560, %v8210
        %v8340 = vsel %vm4604, %v4561, %v8212
        %8341 = vst.msk [vmem:[%s484] sm:$0xff] %vm673, %v8277
        %8342 = vst.msk [vmem:[%s484 + $0x8] sm:$0xff] %vm673, %v8278
        %8343 = vst.msk [vmem:[%s484 + $0x10] sm:$0xff] %vm673, %v8279
        %8344 = vst.msk [vmem:[%s484 + $0x18] sm:$0xff] %vm673, %v8280
        %8345 = vst.msk [vmem:[%s484 + $0x20] sm:$0xff] %vm673, %v8281
        %8346 = vst.msk [vmem:[%s484 + $0x28] sm:$0xff] %vm673, %v8282
        %8347 = vst.msk [vmem:[%s484 + $0x30] sm:$0xff] %vm673, %v8283
        %8348 = vst.msk [vmem:[%s484 + $0x38] sm:$0xff] %vm673, %v8284
        %8349 = vst.msk [vmem:[%s484 + $0x40] sm:$0xff] %vm673, %v8285
        %8350 = vst.msk [vmem:[%s484 + $0x48] sm:$0xff] %vm673, %v8286
        %8351 = vst.msk [vmem:[%s484 + $0x50] sm:$0xff] %vm673, %v8287
        %8352 = vst.msk [vmem:[%s484 + $0x58] sm:$0xff] %vm673, %v8288
        %8353 = vst.msk [vmem:[%s484 + $0x60] sm:$0xff] %vm673, %v8289
        %8354 = vst.msk [vmem:[%s484 + $0x68] sm:$0xff] %vm673, %v8290
        %8355 = vst.msk [vmem:[%s484 + $0x70] sm:$0xff] %vm673, %v8291
        %8356 = vst.msk [vmem:[%s484 + $0x78] sm:$0xff] %vm673, %v8292
        %8357 = vst.msk [vmem:[%s484 + $0x80] sm:$0xff] %vm673, %v8293
        %8358 = vst.msk [vmem:[%s484 + $0x88] sm:$0xff] %vm673, %v8294
        %8359 = vst.msk [vmem:[%s484 + $0x90] sm:$0xff] %vm673, %v8295
        %8360 = vst.msk [vmem:[%s484 + $0x98] sm:$0xff] %vm673, %v8296
        %8361 = vst.msk [vmem:[%s484 + $0xa0] sm:$0xff] %vm673, %v8297
        %8362 = vst.msk [vmem:[%s484 + $0xa8] sm:$0xff] %vm673, %v8298
        %8363 = vst.msk [vmem:[%s484 + $0xb0] sm:$0xff] %vm673, %v8299
        %8364 = vst.msk [vmem:[%s484 + $0xb8] sm:$0xff] %vm673, %v8300
        %8365 = vst.msk [vmem:[%s484 + $0xc0] sm:$0xff] %vm673, %v8301
        %8366 = vst.msk [vmem:[%s484 + $0xc8] sm:$0xff] %vm673, %v8302
        %8367 = vst.msk [vmem:[%s484 + $0xd0] sm:$0xff] %vm673, %v8303
        %8368 = vst.msk [vmem:[%s484 + $0xd8] sm:$0xff] %vm673, %v8304
        %8369 = vst.msk [vmem:[%s484 + $0xe0] sm:$0xff] %vm673, %v8305
        %8370 = vst.msk [vmem:[%s484 + $0xe8] sm:$0xff] %vm673, %v8306
        %8371 = vst.msk [vmem:[%s484 + $0xf0] sm:$0xff] %vm673, %v8307
        %8372 = vst.msk [vmem:[%s484 + $0xf8] sm:$0xff] %vm673, %v8308
        %8373 = vst.msk [vmem:[%s484 + $0x100] sm:$0xff] %vm673, %v8309
        %8374 = vst.msk [vmem:[%s484 + $0x108] sm:$0xff] %vm673, %v8310
        %8375 = vst.msk [vmem:[%s484 + $0x110] sm:$0xff] %vm673, %v8311
        %8376 = vst.msk [vmem:[%s484 + $0x118] sm:$0xff] %vm673, %v8312
        %8377 = vst.msk [vmem:[%s484 + $0x120] sm:$0xff] %vm673, %v8313
        %8378 = vst.msk [vmem:[%s484 + $0x128] sm:$0xff] %vm673, %v8314
        %8379 = vst.msk [vmem:[%s484 + $0x130] sm:$0xff] %vm673, %v8315
        %8380 = vst.msk [vmem:[%s484 + $0x138] sm:$0xff] %vm673, %v8316
        %8381 = vst.msk [vmem:[%s484 + $0x140] sm:$0xff] %vm673, %v8317
        %8382 = vst.msk [vmem:[%s484 + $0x148] sm:$0xff] %vm673, %v8318
        %8383 = vst.msk [vmem:[%s484 + $0x150] sm:$0xff] %vm673, %v8319
        %8384 = vst.msk [vmem:[%s484 + $0x158] sm:$0xff] %vm673, %v8320
        %8385 = vst.msk [vmem:[%s484 + $0x160] sm:$0xff] %vm673, %v8321
        %8386 = vst.msk [vmem:[%s484 + $0x168] sm:$0xff] %vm673, %v8322
        %8387 = vst.msk [vmem:[%s484 + $0x170] sm:$0xff] %vm673, %v8323
        %8388 = vst.msk [vmem:[%s484 + $0x178] sm:$0xff] %vm673, %v8324
        %8389 = vst.msk [vmem:[%s484 + $0x180] sm:$0xff] %vm673, %v8325
        %8390 = vst.msk [vmem:[%s484 + $0x188] sm:$0xff] %vm673, %v8326
        %8391 = vst.msk [vmem:[%s484 + $0x190] sm:$0xff] %vm673, %v8327
        %8392 = vst.msk [vmem:[%s484 + $0x198] sm:$0xff] %vm673, %v8328
        %8393 = vst.msk [vmem:[%s484 + $0x1a0] sm:$0xff] %vm673, %v8329
        %8394 = vst.msk [vmem:[%s484 + $0x1a8] sm:$0xff] %vm673, %v8330
        %8395 = vst.msk [vmem:[%s484 + $0x1b0] sm:$0xff] %vm673, %v8331
        %8396 = vst.msk [vmem:[%s484 + $0x1b8] sm:$0xff] %vm673, %v8332
        %8397 = vst.msk [vmem:[%s484 + $0x1c0] sm:$0xff] %vm673, %v8333
        %8398 = vst.msk [vmem:[%s484 + $0x1c8] sm:$0xff] %vm673, %v8334
        %8399 = vst.msk [vmem:[%s484 + $0x1d0] sm:$0xff] %vm673, %v8335
        %8400 = vst.msk [vmem:[%s484 + $0x1d8] sm:$0xff] %vm673, %v8336
        %8401 = vst.msk [vmem:[%s484 + $0x1e0] sm:$0xff] %vm673, %v8337
        %8402 = vst.msk [vmem:[%s484 + $0x1e8] sm:$0xff] %vm673, %v8338
        %8403 = vst.msk [vmem:[%s484 + $0x1f0] sm:$0xff] %vm673, %v8339
        %8404 = vst.msk [vmem:[%s484 + $0x1f8] sm:$0xff] %vm673, %v8340
        %s8405 = smul.u32 64, %s25
        %p8406 = scmp.lt.s32.totalorder %s8405, 127
        %s8407 = scalar_select %p8406, %s8405, 127
        %s8408 = smul.addr %s8407, 8
        %s8409 = scalar_lea.vmem %s12, %s8408
        // Predicated region
        $region81: #{tpu_custom_call.1} parent=67 // pred_check
          %p8410 = pneg %p305
        $region82: #{tpu_custom_call.1} parent=67 // pred_check_branch
          %8412 = sbr.rel (%p8410) target = $region84
        $region83: #{tpu_custom_call.1} parent=67 // pred_region
          %s8413 = smul.u32 64, %s25
        $region84: #{tpu_custom_call.1} parent=67 // pred_fallthru
          _
      $region68: #{tpu_custom_call.1} parent=5 // pred_fallthru
        _
      %p8414 = scmp.le.s32.totalorder 2, %s20
      // Predicated region
      $region85: #{tpu_custom_call.1} parent=5 // pred_check
        %p8415 = pneg %p8414
      $region86: #{tpu_custom_call.1} parent=5 // pred_check_branch
        %8417 = sbr.rel (%p8415) target = $region88
      $region87: #{tpu_custom_call.1} parent=5 // pred_region
        %s8418 = ssub.s32 %s20, 2
        // Predicated region
        $region89: #{tpu_custom_call.1} parent=87 // pred_check
          %p8419 = pneg %p311
        $region90: #{tpu_custom_call.1} parent=87 // pred_check_branch
          %8421 = sbr.rel (%p8419) target = $region92
        $region91: #{tpu_custom_call.1} parent=87 // pred_region
          %s8422 = smul.u32 64, %s26
          %p8423 = scmp.lt.s32.totalorder %s8422, 127
          %s8424 = scalar_select %p8423, %s8422, 127
          %s8425 = smul.addr %s8424, 8
          %s8426 = scalar_lea.vmem %s12, %s8425
        $region92: #{tpu_custom_call.1} parent=87 // pred_fallthru
          _
      $region88: #{tpu_custom_call.1} parent=5 // pred_fallthru
        _
    $region6: #{tpu_custom_call.1} parent=1 // loop_footer
      %s24 = sadd.s32 1, %s20
    $region7: #{tpu_custom_call.1} parent=1 // loop_footer_branch
      %19 = sbr.rel target = $region3
    $region8: #{tpu_custom_call.1} parent=1 // loop_exit
      _
    %8427 = vsyncpa [#allocation3], 1
    %s8428 = scalar_lea.sflag [#allocation3], 1
    %8429 = vsyncpa %s8428, 1
    %8430 = vsyncpa [#allocation5], 1

</llo_original>
